<compile_context>
chip_gen: v7x
topology: tpu7x:2x2x1
jax: 0.10.0
libtpu: 0.0.40
codegen_flags: <defaults>
</compile_context>

<pallas_src>
import math
import jax
import jax.numpy as jnp
from jax.experimental import pallas as pl
from jax.experimental.pallas import tpu as pltpu

INPUT_DIM = 22          # per-timestep feature dim
D_MODEL = 32
N_HEADS = 8
D_K = D_MODEL // N_HEADS
D_FF = 2048
N_LAYERS = 6
IW = 14 * 2             # input sequence length  (28)
OW = 14                 # output sequence length (14)
LN_EPS = 1e-6


# ----------------------------------------------------------------------------
# in-kernel helpers
# ----------------------------------------------------------------------------
def _layernorm(x, gamma, beta):
    # Matches the custom torch LayerNorm: unbiased std (ddof=1), eps added to std.
    d = x.shape[-1]
    mean = jnp.mean(x, axis=-1, keepdims=True)
    diff = x - mean
    var = jnp.sum(diff * diff, axis=-1, keepdims=True) * (1.0 / (d - 1))
    std = jnp.sqrt(var)
    inv = pl.reciprocal(std + LN_EPS, approx=True)      # keep eps-on-std semantics
    return gamma * (diff * inv) + beta


def _softmax(x):
    m = jnp.max(x, axis=-1, keepdims=True)
    e = jnp.exp(x - m)
    return e * pl.reciprocal(jnp.sum(e, axis=-1, keepdims=True), approx=True)


# ----------------------------------------------------------------------------
# single fused kernel: Linear1+pos  ->  6 encoder layers  ->  LN+Linear2
#                      ->  (implicit transpose)  ->  Linear3  ->  output
# grid = (N_LAYERS,)  [arbitrary];  x_scratch carries the activation.
# ----------------------------------------------------------------------------
def fused_tf_kernel(
    src_ref, pe_ref, mask_ref,
    l1w1, l1b1, l1w2, l1b2,
    ln1g, ln1b, wq, bq, wk, bk, wv, bv, wo,
    ln2g, ln2b, fw1, fb1, fw2, fb2,
    encg, encb,
    l2w1, l2b1, l2w2, l2b2,
    l3w1t, l3b1, l3w2t, l3b2,
    o_ref,
    x_scratch,
):
    layer = pl.program_id(0)
    B = o_ref.shape[0]
    BS = src_ref.shape[0]
    S = BS // B

    # ---- prologue (layer 0): Linear1 (22 -> 16 -> relu -> 32) + pos encoding ----
    @pl.when(layer == 0)
    def _():
        src = src_ref[...]                                               # (BS, 22)
        h = jnp.maximum(
            jnp.dot(src, l1w1[...], preferred_element_type=jnp.float32) + l1b1[...], 0.0)
        x0 = jnp.dot(h, l1w2[...], preferred_element_type=jnp.float32) + l1b2[...]
        x_scratch[...] = x0 + pe_ref[...]                                # (BS, 32)

    x = x_scratch[...]                                                   # (BS, 32)

    # ---- self-attention sublayer: x + MHA(LN(x)) ----
    xn = _layernorm(x, ln1g[0], ln1b[0])
    q = jnp.dot(xn, wq[0], preferred_element_type=jnp.float32) + bq[0]
    k = jnp.dot(xn, wk[0], preferred_element_type=jnp.float32) + bk[0]
    v = jnp.dot(xn, wv[0], preferred_element_type=jnp.float32) + bv[0]
    wo_full = wo[0]                                                      # (32, 32)
    bias = mask_ref[...]           # (BS, BS) block-diagonal 0 / -1e30: keeps batches separate

    scale = 1.0 / math.sqrt(D_K)
    attn = jnp.zeros((BS, D_MODEL), jnp.float32)
    for hi in range(N_HEADS):                                            # static unroll
        sl = slice(hi * D_K, (hi + 1) * D_K)
        qh, kh, vh = q[:, sl], k[:, sl], v[:, sl]                        # (BS, d_k)
        s = jnp.einsum('id,jd->ij', qh, kh,
                       preferred_element_type=jnp.float32) * scale + bias
        p = _softmax(s)                # torch src_mask is never applied (faithful)
        ctx = jnp.dot(p, vh, preferred_element_type=jnp.float32)         # (BS, d_k)
        # fold this head's slice of the output projection -> no concat needed
        attn = attn + jnp.dot(ctx, wo_full[sl, :], preferred_element_type=jnp.float32)
    x = x + attn

    # ---- feed-forward sublayer: x + FF(LN(x)); bf16 weights, f32 accumulation ----
    xn2 = _layernorm(x, ln2g[0], ln2b[0])
    hff = jnp.dot(xn2.astype(jnp.bfloat16), fw1[0],
                  preferred_element_type=jnp.float32) + fb1[0]
    hff = jnp.maximum(hff, 0.0)
    ff = jnp.dot(hff.astype(jnp.bfloat16), fw2[0],
                 preferred_element_type=jnp.float32) + fb2[0]
    x_new = x + ff
    x_scratch[...] = x_new

    # ---- epilogue (last layer): final LN + Linear2 + time-axis Linear3 ----
    @pl.when(layer == pl.num_programs(0) - 1)
    def _():
        xnf = _layernorm(x_new, encg[...], encb[...])
        h2 = jnp.maximum(
            jnp.dot(xnf, l2w1[...], preferred_element_type=jnp.float32) + l2b1[...], 0.0)
        y = jnp.dot(h2, l2w2[...], preferred_element_type=jnp.float32) + l2b2[...]  # (BS, 22)
        # Linear3 acts on the time axis; weights are stored pre-transposed so no
        # data transpose is materialized (channels stay in the lane dim).
        for b in range(B):                                               # static unroll
            yb = y[b * S:(b + 1) * S, :]                                 # (S, 22)
            h3 = jnp.maximum(
                jnp.dot(l3w1t[...], yb, preferred_element_type=jnp.float32) + l3b1[...], 0.0)
            zb = jnp.dot(l3w2t[...], h3, preferred_element_type=jnp.float32) + l3b2[...]
            o_ref[b] = zb                                                # (OW, 22)


# ----------------------------------------------------------------------------
# pallas_call wrapper
# ----------------------------------------------------------------------------
def _const_spec(arr):
    zeros = (0,) * arr.ndim
    return pl.BlockSpec(arr.shape, lambda l: zeros)


def _layer_spec(arr):                     # stacked per-layer params, leading dim = layer
    return pl.BlockSpec((1,) + arr.shape[1:], lambda l: (l, 0, 0))


ENC_ORDER = ['ln1_g', 'ln1_b', 'wq', 'bq', 'wk', 'bk', 'wv', 'bv', 'wo',
             'ln2_g', 'ln2_b', 'fw1', 'fb1', 'fw2', 'fb2']


def tf_forward(src, src_mask, p, pe):
    del src_mask  # PyTorch Attention.forward never applies the mask it receives.
    B, S, _ = src.shape
    src2 = src.reshape(B * S, INPUT_DIM).astype(jnp.float32)
    pe2 = jnp.tile(pe[:S], (B, 1))                                       # (B*S, 32)
    bid = jnp.repeat(jnp.arange(B, dtype=jnp.int32), S)
    attn_bias = jnp.where(bid[:, None] == bid[None, :], 0.0, -1e30).astype(jnp.float32)

    enc = p['enc']
    layer_arrs = [enc[k] for k in ENC_ORDER]
    const_pre = [src2, pe2, attn_bias,
                 p['l1_w1'], p['l1_b1'], p['l1_w2'], p['l1_b2']]
    const_post = [p['enc_norm_g'], p['enc_norm_b'],
                  p['l2_w1'], p['l2_b1'], p['l2_w2'], p['l2_b2'],
                  p['l3_w1t'], p['l3_b1'], p['l3_w2t'], p['l3_b2']]

    in_specs = ([_const_spec(a) for a in const_pre]
                + [_layer_spec(a) for a in layer_arrs]
                + [_const_spec(a) for a in const_post])

    return pl.pallas_call(
        fused_tf_kernel,
        out_shape=jax.ShapeDtypeStruct((B, OW, INPUT_DIM), jnp.float32),
        grid=(N_LAYERS,),
        in_specs=in_specs,
        out_specs=pl.BlockSpec((B, OW, INPUT_DIM), lambda l: (0, 0, 0)),
        scratch_shapes=[pltpu.VMEM((B * S, D_MODEL), jnp.float32)],
        compiler_params=pltpu.CompilerParams(
            dimension_semantics=("arbitrary",),
            vmem_limit_bytes=32 * 1024 * 1024,
        ),
    )(*const_pre, *layer_arrs, *const_post)


# ----------------------------------------------------------------------------
# deterministic parameter / buffer construction (synthetic init)
# ----------------------------------------------------------------------------
def make_positional_encoding(max_len, d_model):
    position = jnp.arange(max_len, dtype=jnp.float32)[:, None]
    div_term = jnp.exp(jnp.arange(0, d_model, 2, dtype=jnp.float32)
                       * (-math.log(10000.0) / d_model))
    pe = jnp.zeros((max_len, d_model), jnp.float32)
    pe = pe.at[:, 0::2].set(jnp.sin(position * div_term))
    pe = pe.at[:, 1::2].set(jnp.cos(position * div_term))
    return pe


def generate_square_subsequent_mask(sz):
    lower = jnp.tril(jnp.ones((sz, sz), dtype=bool))
    return jnp.where(lower, 0.0, -jnp.inf).astype(jnp.float32)


def init_params(key):
    keys = iter(jax.random.split(key, 64))

    def lin(in_f, out_f):
        bound = 1.0 / math.sqrt(in_f)
        w = jax.random.uniform(next(keys), (in_f, out_f), jnp.float32, -bound, bound)
        b = jax.random.uniform(next(keys), (1, out_f), jnp.float32, -bound, bound)
        return w, b

    def lin_t(in_f, out_f):
        # torch-orientation (out, in) weight + (out, 1) bias, for the time-axis Linear3
        bound = 1.0 / math.sqrt(in_f)
        w = jax.random.uniform(next(keys), (out_f, in_f), jnp.float32, -bound, bound)
        b = jax.random.uniform(next(keys), (out_f, 1), jnp.float32, -bound, bound)
        return w, b

    p = {}
    # Linear1: 22 -> 16 -> 32
    p['l1_w1'], p['l1_b1'] = lin(INPUT_DIM, D_MODEL // 2)
    p['l1_w2'], p['l1_b2'] = lin(D_MODEL // 2, D_MODEL)
    # Linear2: 32 -> 16 -> 22
    p['l2_w1'], p['l2_b1'] = lin(D_MODEL, D_MODEL // 2)
    p['l2_w2'], p['l2_b2'] = lin(D_MODEL // 2, INPUT_DIM)
    # Linear3 (over the time axis): 28 -> 21 -> 14, stored pre-transposed (out, in)
    p['l3_w1t'], p['l3_b1'] = lin_t(IW, (IW + OW) // 2)
    p['l3_w2t'], p['l3_b2'] = lin_t((IW + OW) // 2, OW)
    # Encoder final LayerNorm
    p['enc_norm_g'] = jnp.ones((1, D_MODEL), jnp.float32)
    p['enc_norm_b'] = jnp.zeros((1, D_MODEL), jnp.float32)

    # One EncoderLayer (torch Encoder deepcopies the same layer 6 times, so all
    # layers share identical initial weights); stack it N_LAYERS times.
    layer = {}
    layer['ln1_g'] = jnp.ones((1, D_MODEL), jnp.float32)
    layer['ln1_b'] = jnp.zeros((1, D_MODEL), jnp.float32)
    layer['wq'], layer['bq'] = lin(D_MODEL, D_MODEL)
    layer['wk'], layer['bk'] = lin(D_MODEL, D_MODEL)
    layer['wv'], layer['bv'] = lin(D_MODEL, D_MODEL)
    layer['wo'], _ = lin(D_MODEL, D_MODEL)      # final_linear has bias=False
    layer['ln2_g'] = jnp.ones((1, D_MODEL), jnp.float32)
    layer['ln2_b'] = jnp.zeros((1, D_MODEL), jnp.float32)
    fw1, fb1 = lin(D_MODEL, D_FF)
    fw2, fb2 = lin(D_FF, D_MODEL)
    layer['fw1'], layer['fb1'] = fw1.astype(jnp.bfloat16), fb1   # bf16 FFN weights
    layer['fw2'], layer['fb2'] = fw2.astype(jnp.bfloat16), fb2

    p['enc'] = {k2: jnp.stack([v] * N_LAYERS, axis=0) for k2, v in layer.items()}
    return p


# ----------------------------------------------------------------------------
if __name__ == "__main__":
    key = jax.random.PRNGKey(0)
    k_param, k_data = jax.random.split(key)

    params = init_params(k_param)
    pe = make_positional_encoding(IW, D_MODEL)               # pe buffer, sliced to seq len

    B = 2
    src = jax.random.normal(k_data, (B, IW, INPUT_DIM), jnp.float32)   # (2, 28, 22)
    src_mask = generate_square_subsequent_mask(IW)           # built but unused (as in torch)

    out = jax.jit(tf_forward)(src, src_mask, params, pe)
    out = jax.block_until_ready(out)

    assert out.shape == (B, OW, INPUT_DIM), out.shape        # (2, 14, 22)
    assert bool(jnp.all(jnp.isfinite(out)))
    print("KERNEL_OK")
</pallas_src>

<mosaic_0001>
module attributes {stable_mosaic.version = 11 : i64} {
  func.func @fused_tf_kernel(%arg0: i32, %arg1: memref<56x22xf32, #tpu.memory_space<vmem>>, %arg2: memref<56x32xf32, #tpu.memory_space<vmem>>, %arg3: memref<56x56xf32, #tpu.memory_space<vmem>>, %arg4: memref<22x16xf32, #tpu.memory_space<vmem>>, %arg5: memref<1x16xf32, #tpu.memory_space<vmem>>, %arg6: memref<16x32xf32, #tpu.memory_space<vmem>>, %arg7: memref<1x32xf32, #tpu.memory_space<vmem>>, %arg8: memref<1x1x32xf32, #tpu.memory_space<vmem>>, %arg9: memref<1x1x32xf32, #tpu.memory_space<vmem>>, %arg10: memref<1x32x32xf32, #tpu.memory_space<vmem>>, %arg11: memref<1x1x32xf32, #tpu.memory_space<vmem>>, %arg12: memref<1x32x32xf32, #tpu.memory_space<vmem>>, %arg13: memref<1x1x32xf32, #tpu.memory_space<vmem>>, %arg14: memref<1x32x32xf32, #tpu.memory_space<vmem>>, %arg15: memref<1x1x32xf32, #tpu.memory_space<vmem>>, %arg16: memref<1x32x32xf32, #tpu.memory_space<vmem>>, %arg17: memref<1x1x32xf32, #tpu.memory_space<vmem>>, %arg18: memref<1x1x32xf32, #tpu.memory_space<vmem>>, %arg19: memref<1x32x2048xbf16, #tpu.memory_space<vmem>>, %arg20: memref<1x1x2048xf32, #tpu.memory_space<vmem>>, %arg21: memref<1x2048x32xbf16, #tpu.memory_space<vmem>>, %arg22: memref<1x1x32xf32, #tpu.memory_space<vmem>>, %arg23: memref<1x32xf32, #tpu.memory_space<vmem>>, %arg24: memref<1x32xf32, #tpu.memory_space<vmem>>, %arg25: memref<32x16xf32, #tpu.memory_space<vmem>>, %arg26: memref<1x16xf32, #tpu.memory_space<vmem>>, %arg27: memref<16x22xf32, #tpu.memory_space<vmem>>, %arg28: memref<1x22xf32, #tpu.memory_space<vmem>>, %arg29: memref<21x28xf32, #tpu.memory_space<vmem>>, %arg30: memref<21x1xf32, #tpu.memory_space<vmem>>, %arg31: memref<14x21xf32, #tpu.memory_space<vmem>>, %arg32: memref<14x1xf32, #tpu.memory_space<vmem>>, %arg33: memref<2x14x22xf32, #tpu.memory_space<vmem>>, %arg34: memref<56x32xf32, #tpu.memory_space<vmem>>) attributes {dimension_semantics = [#tpu.dimension_semantics<arbitrary>], iteration_bounds = array<i64: 6>, scalar_prefetch = 0 : i64, scratch_operands = 1 : i64, tpu.core_type = #tpu.core_type<tc>, window_params = [{pipeline_mode = #tpu.pipeline_mode<synchronous>, transform_indices = @transform_0, window_bounds = array<i64: 56, 22>}, {pipeline_mode = #tpu.pipeline_mode<synchronous>, transform_indices = @transform_1, window_bounds = array<i64: 56, 32>}, {pipeline_mode = #tpu.pipeline_mode<synchronous>, transform_indices = @transform_2, window_bounds = array<i64: 56, 56>}, {pipeline_mode = #tpu.pipeline_mode<synchronous>, transform_indices = @transform_3, window_bounds = array<i64: 22, 16>}, {pipeline_mode = #tpu.pipeline_mode<synchronous>, transform_indices = @transform_4, window_bounds = array<i64: 1, 16>}, {pipeline_mode = #tpu.pipeline_mode<synchronous>, transform_indices = @transform_5, window_bounds = array<i64: 16, 32>}, {pipeline_mode = #tpu.pipeline_mode<synchronous>, transform_indices = @transform_6, window_bounds = array<i64: 1, 32>}, {transform_indices = @transform_7, window_bounds = array<i64: 1, 1, 32>}, {transform_indices = @transform_8, window_bounds = array<i64: 1, 1, 32>}, {transform_indices = @transform_9, window_bounds = array<i64: 1, 32, 32>}, {transform_indices = @transform_10, window_bounds = array<i64: 1, 1, 32>}, {transform_indices = @transform_11, window_bounds = array<i64: 1, 32, 32>}, {transform_indices = @transform_12, window_bounds = array<i64: 1, 1, 32>}, {transform_indices = @transform_13, window_bounds = array<i64: 1, 32, 32>}, {transform_indices = @transform_14, window_bounds = array<i64: 1, 1, 32>}, {transform_indices = @transform_15, window_bounds = array<i64: 1, 32, 32>}, {transform_indices = @transform_16, window_bounds = array<i64: 1, 1, 32>}, {transform_indices = @transform_17, window_bounds = array<i64: 1, 1, 32>}, {transform_indices = @transform_18, window_bounds = array<i64: 1, 32, 2048>}, {transform_indices = @transform_19, window_bounds = array<i64: 1, 1, 2048>}, {transform_indices = @transform_20, window_bounds = array<i64: 1, 2048, 32>}, {transform_indices = @transform_21, window_bounds = array<i64: 1, 1, 32>}, {pipeline_mode = #tpu.pipeline_mode<synchronous>, transform_indices = @transform_22, window_bounds = array<i64: 1, 32>}, {pipeline_mode = #tpu.pipeline_mode<synchronous>, transform_indices = @transform_23, window_bounds = array<i64: 1, 32>}, {pipeline_mode = #tpu.pipeline_mode<synchronous>, transform_indices = @transform_24, window_bounds = array<i64: 32, 16>}, {pipeline_mode = #tpu.pipeline_mode<synchronous>, transform_indices = @transform_25, window_bounds = array<i64: 1, 16>}, {pipeline_mode = #tpu.pipeline_mode<synchronous>, transform_indices = @transform_26, window_bounds = array<i64: 16, 22>}, {pipeline_mode = #tpu.pipeline_mode<synchronous>, transform_indices = @transform_27, window_bounds = array<i64: 1, 22>}, {pipeline_mode = #tpu.pipeline_mode<synchronous>, transform_indices = @transform_28, window_bounds = array<i64: 21, 28>}, {pipeline_mode = #tpu.pipeline_mode<synchronous>, transform_indices = @transform_29, window_bounds = array<i64: 21, 1>}, {pipeline_mode = #tpu.pipeline_mode<synchronous>, transform_indices = @transform_30, window_bounds = array<i64: 14, 21>}, {pipeline_mode = #tpu.pipeline_mode<synchronous>, transform_indices = @transform_31, window_bounds = array<i64: 14, 1>}, {pipeline_mode = #tpu.pipeline_mode<synchronous>, transform_indices = @transform_32, window_bounds = array<i64: 2, 14, 22>}]} {
    %c0_i32 = arith.constant 0 : i32
    %0 = arith.cmpi eq, %arg0, %c0_i32 : i32
    %1 = arith.extui %0 : i1 to i32
    %c0_i32_0 = arith.constant 0 : i32
    %2 = arith.cmpi ne, %1, %c0_i32_0 : i32
    scf.if %2 {
      %c0_116 = arith.constant 0 : index
      %c0_117 = arith.constant 0 : index
      %271 = vector.load %arg1[%c0_116, %c0_117] : memref<56x22xf32, #tpu.memory_space<vmem>>, vector<56x22xf32>
      %c0_118 = arith.constant 0 : index
      %c0_119 = arith.constant 0 : index
      %272 = vector.load %arg4[%c0_118, %c0_119] : memref<22x16xf32, #tpu.memory_space<vmem>>, vector<22x16xf32>
      %cst_120 = arith.constant dense<0.000000e+00> : vector<56x16xf32>
      %273 = tpu.matmul %271, %272, %cst_120 {dimension_numbers = #tpu.dot_dimension_numbers<[1], [0], [0], [1], [0, 0, 1, 1], [], []>} : vector<56x22xf32>, vector<22x16xf32>, vector<56x16xf32> -> vector<56x16xf32>
      %c0_121 = arith.constant 0 : index
      %c0_122 = arith.constant 0 : index
      %274 = vector.load %arg5[%c0_121, %c0_122] : memref<1x16xf32, #tpu.memory_space<vmem>>, vector<1x16xf32>
      %275 = vector.broadcast %274 : vector<1x16xf32> to vector<56x16xf32>
      %276 = arith.addf %273, %275 : vector<56x16xf32>
      %cst_123 = arith.constant 0.000000e+00 : f32
      %277 = vector.broadcast %cst_123 : f32 to vector<56x16xf32>
      %278 = arith.maximumf %276, %277 : vector<56x16xf32>
      %c0_124 = arith.constant 0 : index
      %c0_125 = arith.constant 0 : index
      %279 = vector.load %arg6[%c0_124, %c0_125] : memref<16x32xf32, #tpu.memory_space<vmem>>, vector<16x32xf32>
      %cst_126 = arith.constant dense<0.000000e+00> : vector<56x32xf32>
      %280 = tpu.matmul %278, %279, %cst_126 {dimension_numbers = #tpu.dot_dimension_numbers<[1], [0], [0], [1], [0, 0, 1, 1], [], []>} : vector<56x16xf32>, vector<16x32xf32>, vector<56x32xf32> -> vector<56x32xf32>
      %c0_127 = arith.constant 0 : index
      %c0_128 = arith.constant 0 : index
      %281 = vector.load %arg7[%c0_127, %c0_128] : memref<1x32xf32, #tpu.memory_space<vmem>>, vector<1x32xf32>
      %282 = vector.broadcast %281 : vector<1x32xf32> to vector<56x32xf32>
      %283 = arith.addf %280, %282 : vector<56x32xf32>
      %c0_129 = arith.constant 0 : index
      %c0_130 = arith.constant 0 : index
      %284 = vector.load %arg2[%c0_129, %c0_130] : memref<56x32xf32, #tpu.memory_space<vmem>>, vector<56x32xf32>
      %285 = arith.addf %283, %284 : vector<56x32xf32>
      %c0_131 = arith.constant 0 : index
      %c0_132 = arith.constant 0 : index
      %286 = vector.load %arg34[%c0_131, %c0_132] : memref<56x32xf32, #tpu.memory_space<vmem>>, vector<56x32xf32>
      tpu.vector_store %arg34[%c0_131, %c0_132], %285 {strides = array<i32>} : memref<56x32xf32, #tpu.memory_space<vmem>>, vector<56x32xf32>,
    } else {
    }
    %c0 = arith.constant 0 : index
    %c0_1 = arith.constant 0 : index
    %3 = vector.load %arg34[%c0, %c0_1] : memref<56x32xf32, #tpu.memory_space<vmem>>, vector<56x32xf32>
    %c0_2 = arith.constant 0 : index
    %c0_3 = arith.constant 0 : index
    %c0_4 = arith.constant 0 : index
    %4 = vector.load %arg8[%c0_2, %c0_3, %c0_4] : memref<1x1x32xf32, #tpu.memory_space<vmem>>, vector<1x1x32xf32>
    %5 = vector.shape_cast %4 : vector<1x1x32xf32> to vector<1x32xf32>
    %c0_5 = arith.constant 0 : index
    %c0_6 = arith.constant 0 : index
    %c0_7 = arith.constant 0 : index
    %6 = vector.load %arg9[%c0_5, %c0_6, %c0_7] : memref<1x1x32xf32, #tpu.memory_space<vmem>>, vector<1x1x32xf32>
    %7 = vector.shape_cast %6 : vector<1x1x32xf32> to vector<1x32xf32>
    %cst = arith.constant dense<0.000000e+00> : vector<56xf32>
    %8 = vector.multi_reduction <add>, %3, %cst [1] : vector<56x32xf32> to vector<56xf32>
    %9 = vector.shape_cast %8 : vector<56xf32> to vector<56x1xf32>
    %cst_8 = arith.constant 3.200000e+01 : f32
    %10 = vector.broadcast %cst_8 : f32 to vector<56x1xf32>
    %11 = arith.divf %9, %10 : vector<56x1xf32>
    %12 = vector.broadcast %11 : vector<56x1xf32> to vector<56x32xf32>
    %13 = arith.subf %3, %12 : vector<56x32xf32>
    %14 = arith.mulf %13, %13 : vector<56x32xf32>
    %cst_9 = arith.constant dense<0.000000e+00> : vector<56xf32>
    %15 = vector.multi_reduction <add>, %14, %cst_9 [1] : vector<56x32xf32> to vector<56xf32>
    %16 = vector.shape_cast %15 : vector<56xf32> to vector<56x1xf32>
    %cst_10 = arith.constant 0.0322580636 : f32
    %17 = vector.broadcast %cst_10 : f32 to vector<56x1xf32>
    %18 = arith.mulf %16, %17 : vector<56x1xf32>
    %19 = math.sqrt %18 : vector<56x1xf32>
    %cst_11 = arith.constant 9.99999997E-7 : f32
    %20 = vector.broadcast %cst_11 : f32 to vector<56x1xf32>
    %21 = arith.addf %19, %20 : vector<56x1xf32>
    %22 = tpu.reciprocal %21 {approx = true} : vector<56x1xf32> -> vector<56x1xf32>
    %23 = vector.broadcast %22 : vector<56x1xf32> to vector<56x32xf32>
    %24 = arith.mulf %13, %23 : vector<56x32xf32>
    %25 = vector.broadcast %5 : vector<1x32xf32> to vector<56x32xf32>
    %26 = arith.mulf %25, %24 : vector<56x32xf32>
    %27 = vector.broadcast %7 : vector<1x32xf32> to vector<56x32xf32>
    %28 = arith.addf %26, %27 : vector<56x32xf32>
    %c0_12 = arith.constant 0 : index
    %c0_13 = arith.constant 0 : index
    %c0_14 = arith.constant 0 : index
    %29 = vector.load %arg10[%c0_12, %c0_13, %c0_14] : memref<1x32x32xf32, #tpu.memory_space<vmem>>, vector<1x32x32xf32>
    %30 = vector.shape_cast %29 : vector<1x32x32xf32> to vector<32x32xf32>
    %cst_15 = arith.constant dense<0.000000e+00> : vector<56x32xf32>
    %31 = tpu.matmul %28, %30, %cst_15 {dimension_numbers = #tpu.dot_dimension_numbers<[1], [0], [0], [1], [0, 0, 1, 1], [], []>} : vector<56x32xf32>, vector<32x32xf32>, vector<56x32xf32> -> vector<56x32xf32>
    %c0_16 = arith.constant 0 : index
    %c0_17 = arith.constant 0 : index
    %c0_18 = arith.constant 0 : index
    %32 = vector.load %arg11[%c0_16, %c0_17, %c0_18] : memref<1x1x32xf32, #tpu.memory_space<vmem>>, vector<1x1x32xf32>
    %33 = vector.shape_cast %32 : vector<1x1x32xf32> to vector<1x32xf32>
    %34 = vector.broadcast %33 : vector<1x32xf32> to vector<56x32xf32>
    %35 = arith.addf %31, %34 : vector<56x32xf32>
    %c0_19 = arith.constant 0 : index
    %c0_20 = arith.constant 0 : index
    %c0_21 = arith.constant 0 : index
    %36 = vector.load %arg12[%c0_19, %c0_20, %c0_21] : memref<1x32x32xf32, #tpu.memory_space<vmem>>, vector<1x32x32xf32>
    %37 = vector.shape_cast %36 : vector<1x32x32xf32> to vector<32x32xf32>
    %cst_22 = arith.constant dense<0.000000e+00> : vector<56x32xf32>
    %38 = tpu.matmul %28, %37, %cst_22 {dimension_numbers = #tpu.dot_dimension_numbers<[1], [0], [0], [1], [0, 0, 1, 1], [], []>} : vector<56x32xf32>, vector<32x32xf32>, vector<56x32xf32> -> vector<56x32xf32>
    %c0_23 = arith.constant 0 : index
    %c0_24 = arith.constant 0 : index
    %c0_25 = arith.constant 0 : index
    %39 = vector.load %arg13[%c0_23, %c0_24, %c0_25] : memref<1x1x32xf32, #tpu.memory_space<vmem>>, vector<1x1x32xf32>
    %40 = vector.shape_cast %39 : vector<1x1x32xf32> to vector<1x32xf32>
    %41 = vector.broadcast %40 : vector<1x32xf32> to vector<56x32xf32>
    %42 = arith.addf %38, %41 : vector<56x32xf32>
    %c0_26 = arith.constant 0 : index
    %c0_27 = arith.constant 0 : index
    %c0_28 = arith.constant 0 : index
    %43 = vector.load %arg14[%c0_26, %c0_27, %c0_28] : memref<1x32x32xf32, #tpu.memory_space<vmem>>, vector<1x32x32xf32>
    %44 = vector.shape_cast %43 : vector<1x32x32xf32> to vector<32x32xf32>
    %cst_29 = arith.constant dense<0.000000e+00> : vector<56x32xf32>
    %45 = tpu.matmul %28, %44, %cst_29 {dimension_numbers = #tpu.dot_dimension_numbers<[1], [0], [0], [1], [0, 0, 1, 1], [], []>} : vector<56x32xf32>, vector<32x32xf32>, vector<56x32xf32> -> vector<56x32xf32>
    %c0_30 = arith.constant 0 : index
    %c0_31 = arith.constant 0 : index
    %c0_32 = arith.constant 0 : index
    %46 = vector.load %arg15[%c0_30, %c0_31, %c0_32] : memref<1x1x32xf32, #tpu.memory_space<vmem>>, vector<1x1x32xf32>
    %47 = vector.shape_cast %46 : vector<1x1x32xf32> to vector<1x32xf32>
    %48 = vector.broadcast %47 : vector<1x32xf32> to vector<56x32xf32>
    %49 = arith.addf %45, %48 : vector<56x32xf32>
    %c0_33 = arith.constant 0 : index
    %c0_34 = arith.constant 0 : index
    %c0_35 = arith.constant 0 : index
    %50 = vector.load %arg16[%c0_33, %c0_34, %c0_35] : memref<1x32x32xf32, #tpu.memory_space<vmem>>, vector<1x32x32xf32>
    %51 = vector.shape_cast %50 : vector<1x32x32xf32> to vector<32x32xf32>
    %c0_36 = arith.constant 0 : index
    %c0_37 = arith.constant 0 : index
    %52 = vector.load %arg3[%c0_36, %c0_37] : memref<56x56xf32, #tpu.memory_space<vmem>>, vector<56x56xf32>
    %cst_38 = arith.constant 0.000000e+00 : f32
    %53 = vector.broadcast %cst_38 : f32 to vector<56x32xf32>
    %54 = vector.extract_strided_slice %35 {offsets = [0, 0], sizes = [56, 4], strides = [1, 1]} : vector<56x32xf32> to vector<56x4xf32>
    %55 = vector.extract_strided_slice %42 {offsets = [0, 0], sizes = [56, 4], strides = [1, 1]} : vector<56x32xf32> to vector<56x4xf32>
    %56 = vector.extract_strided_slice %49 {offsets = [0, 0], sizes = [56, 4], strides = [1, 1]} : vector<56x32xf32> to vector<56x4xf32>
    "tpu.trace_start"() <{level = 10 : i32, message = "id,jd->ij"}> : () -> ()
    %cst_39 = arith.constant dense<0.000000e+00> : vector<56x56xf32>
    %57 = tpu.matmul %54, %55, %cst_39 {dimension_numbers = #tpu.dot_dimension_numbers<[1], [1], [0], [0], [0, 0, 1, 0], [], []>} : vector<56x4xf32>, vector<56x4xf32>, vector<56x56xf32> -> vector<56x56xf32>
    "tpu.trace_stop"() : () -> ()
    %cst_40 = arith.constant 5.000000e-01 : f32
    %58 = vector.broadcast %cst_40 : f32 to vector<56x56xf32>
    %59 = arith.mulf %57, %58 : vector<56x56xf32>
    %60 = arith.addf %59, %52 : vector<56x56xf32>
    %cst_41 = arith.constant dense<0xFF800000> : vector<56xf32>
    %61 = vector.multi_reduction <maximumf>, %60, %cst_41 [1] : vector<56x56xf32> to vector<56xf32>
    %62 = vector.shape_cast %61 : vector<56xf32> to vector<56x1xf32>
    %63 = vector.broadcast %62 : vector<56x1xf32> to vector<56x56xf32>
    %64 = arith.subf %60, %63 : vector<56x56xf32>
    %65 = math.exp %64 : vector<56x56xf32>
    %cst_42 = arith.constant dense<0.000000e+00> : vector<56xf32>
    %66 = vector.multi_reduction <add>, %65, %cst_42 [1] : vector<56x56xf32> to vector<56xf32>
    %67 = vector.shape_cast %66 : vector<56xf32> to vector<56x1xf32>
    %68 = tpu.reciprocal %67 {approx = true} : vector<56x1xf32> -> vector<56x1xf32>
    %69 = vector.broadcast %68 : vector<56x1xf32> to vector<56x56xf32>
    %70 = arith.mulf %65, %69 : vector<56x56xf32>
    %cst_43 = arith.constant dense<0.000000e+00> : vector<56x4xf32>
    %71 = tpu.matmul %70, %56, %cst_43 {dimension_numbers = #tpu.dot_dimension_numbers<[1], [0], [0], [1], [0, 0, 1, 1], [], []>} : vector<56x56xf32>, vector<56x4xf32>, vector<56x4xf32> -> vector<56x4xf32>
    %72 = vector.extract_strided_slice %51 {offsets = [0, 0], sizes = [4, 32], strides = [1, 1]} : vector<32x32xf32> to vector<4x32xf32>
    %cst_44 = arith.constant dense<0.000000e+00> : vector<56x32xf32>
    %73 = tpu.matmul %71, %72, %cst_44 {dimension_numbers = #tpu.dot_dimension_numbers<[1], [0], [0], [1], [0, 0, 1, 1], [], []>} : vector<56x4xf32>, vector<4x32xf32>, vector<56x32xf32> -> vector<56x32xf32>
    %74 = arith.addf %53, %73 : vector<56x32xf32>
    %75 = vector.extract_strided_slice %35 {offsets = [0, 4], sizes = [56, 4], strides = [1, 1]} : vector<56x32xf32> to vector<56x4xf32>
    %76 = vector.extract_strided_slice %42 {offsets = [0, 4], sizes = [56, 4], strides = [1, 1]} : vector<56x32xf32> to vector<56x4xf32>
    %77 = vector.extract_strided_slice %49 {offsets = [0, 4], sizes = [56, 4], strides = [1, 1]} : vector<56x32xf32> to vector<56x4xf32>
    "tpu.trace_start"() <{level = 10 : i32, message = "id,jd->ij"}> : () -> ()
    %cst_45 = arith.constant dense<0.000000e+00> : vector<56x56xf32>
    %78 = tpu.matmul %75, %76, %cst_45 {dimension_numbers = #tpu.dot_dimension_numbers<[1], [1], [0], [0], [0, 0, 1, 0], [], []>} : vector<56x4xf32>, vector<56x4xf32>, vector<56x56xf32> -> vector<56x56xf32>
    "tpu.trace_stop"() : () -> ()
    %cst_46 = arith.constant 5.000000e-01 : f32
    %79 = vector.broadcast %cst_46 : f32 to vector<56x56xf32>
    %80 = arith.mulf %78, %79 : vector<56x56xf32>
    %81 = arith.addf %80, %52 : vector<56x56xf32>
    %cst_47 = arith.constant dense<0xFF800000> : vector<56xf32>
    %82 = vector.multi_reduction <maximumf>, %81, %cst_47 [1] : vector<56x56xf32> to vector<56xf32>
    %83 = vector.shape_cast %82 : vector<56xf32> to vector<56x1xf32>
    %84 = vector.broadcast %83 : vector<56x1xf32> to vector<56x56xf32>
    %85 = arith.subf %81, %84 : vector<56x56xf32>
    %86 = math.exp %85 : vector<56x56xf32>
    %cst_48 = arith.constant dense<0.000000e+00> : vector<56xf32>
    %87 = vector.multi_reduction <add>, %86, %cst_48 [1] : vector<56x56xf32> to vector<56xf32>
    %88 = vector.shape_cast %87 : vector<56xf32> to vector<56x1xf32>
    %89 = tpu.reciprocal %88 {approx = true} : vector<56x1xf32> -> vector<56x1xf32>
    %90 = vector.broadcast %89 : vector<56x1xf32> to vector<56x56xf32>
    %91 = arith.mulf %86, %90 : vector<56x56xf32>
    %cst_49 = arith.constant dense<0.000000e+00> : vector<56x4xf32>
    %92 = tpu.matmul %91, %77, %cst_49 {dimension_numbers = #tpu.dot_dimension_numbers<[1], [0], [0], [1], [0, 0, 1, 1], [], []>} : vector<56x56xf32>, vector<56x4xf32>, vector<56x4xf32> -> vector<56x4xf32>
    %93 = vector.extract_strided_slice %51 {offsets = [4, 0], sizes = [4, 32], strides = [1, 1]} : vector<32x32xf32> to vector<4x32xf32>
    %cst_50 = arith.constant dense<0.000000e+00> : vector<56x32xf32>
    %94 = tpu.matmul %92, %93, %cst_50 {dimension_numbers = #tpu.dot_dimension_numbers<[1], [0], [0], [1], [0, 0, 1, 1], [], []>} : vector<56x4xf32>, vector<4x32xf32>, vector<56x32xf32> -> vector<56x32xf32>
    %95 = arith.addf %74, %94 : vector<56x32xf32>
    %96 = vector.extract_strided_slice %35 {offsets = [0, 8], sizes = [56, 4], strides = [1, 1]} : vector<56x32xf32> to vector<56x4xf32>
    %97 = vector.extract_strided_slice %42 {offsets = [0, 8], sizes = [56, 4], strides = [1, 1]} : vector<56x32xf32> to vector<56x4xf32>
    %98 = vector.extract_strided_slice %49 {offsets = [0, 8], sizes = [56, 4], strides = [1, 1]} : vector<56x32xf32> to vector<56x4xf32>
    "tpu.trace_start"() <{level = 10 : i32, message = "id,jd->ij"}> : () -> ()
    %cst_51 = arith.constant dense<0.000000e+00> : vector<56x56xf32>
    %99 = tpu.matmul %96, %97, %cst_51 {dimension_numbers = #tpu.dot_dimension_numbers<[1], [1], [0], [0], [0, 0, 1, 0], [], []>} : vector<56x4xf32>, vector<56x4xf32>, vector<56x56xf32> -> vector<56x56xf32>
    "tpu.trace_stop"() : () -> ()
    %cst_52 = arith.constant 5.000000e-01 : f32
    %100 = vector.broadcast %cst_52 : f32 to vector<56x56xf32>
    %101 = arith.mulf %99, %100 : vector<56x56xf32>
    %102 = arith.addf %101, %52 : vector<56x56xf32>
    %cst_53 = arith.constant dense<0xFF800000> : vector<56xf32>
    %103 = vector.multi_reduction <maximumf>, %102, %cst_53 [1] : vector<56x56xf32> to vector<56xf32>
    %104 = vector.shape_cast %103 : vector<56xf32> to vector<56x1xf32>
    %105 = vector.broadcast %104 : vector<56x1xf32> to vector<56x56xf32>
    %106 = arith.subf %102, %105 : vector<56x56xf32>
    %107 = math.exp %106 : vector<56x56xf32>
    %cst_54 = arith.constant dense<0.000000e+00> : vector<56xf32>
    %108 = vector.multi_reduction <add>, %107, %cst_54 [1] : vector<56x56xf32> to vector<56xf32>
    %109 = vector.shape_cast %108 : vector<56xf32> to vector<56x1xf32>
    %110 = tpu.reciprocal %109 {approx = true} : vector<56x1xf32> -> vector<56x1xf32>
    %111 = vector.broadcast %110 : vector<56x1xf32> to vector<56x56xf32>
    %112 = arith.mulf %107, %111 : vector<56x56xf32>
    %cst_55 = arith.constant dense<0.000000e+00> : vector<56x4xf32>
    %113 = tpu.matmul %112, %98, %cst_55 {dimension_numbers = #tpu.dot_dimension_numbers<[1], [0], [0], [1], [0, 0, 1, 1], [], []>} : vector<56x56xf32>, vector<56x4xf32>, vector<56x4xf32> -> vector<56x4xf32>
    %114 = vector.extract_strided_slice %51 {offsets = [8, 0], sizes = [4, 32], strides = [1, 1]} : vector<32x32xf32> to vector<4x32xf32>
    %cst_56 = arith.constant dense<0.000000e+00> : vector<56x32xf32>
    %115 = tpu.matmul %113, %114, %cst_56 {dimension_numbers = #tpu.dot_dimension_numbers<[1], [0], [0], [1], [0, 0, 1, 1], [], []>} : vector<56x4xf32>, vector<4x32xf32>, vector<56x32xf32> -> vector<56x32xf32>
    %116 = arith.addf %95, %115 : vector<56x32xf32>
    %117 = vector.extract_strided_slice %35 {offsets = [0, 12], sizes = [56, 4], strides = [1, 1]} : vector<56x32xf32> to vector<56x4xf32>
    %118 = vector.extract_strided_slice %42 {offsets = [0, 12], sizes = [56, 4], strides = [1, 1]} : vector<56x32xf32> to vector<56x4xf32>
    %119 = vector.extract_strided_slice %49 {offsets = [0, 12], sizes = [56, 4], strides = [1, 1]} : vector<56x32xf32> to vector<56x4xf32>
    "tpu.trace_start"() <{level = 10 : i32, message = "id,jd->ij"}> : () -> ()
    %cst_57 = arith.constant dense<0.000000e+00> : vector<56x56xf32>
    %120 = tpu.matmul %117, %118, %cst_57 {dimension_numbers = #tpu.dot_dimension_numbers<[1], [1], [0], [0], [0, 0, 1, 0], [], []>} : vector<56x4xf32>, vector<56x4xf32>, vector<56x56xf32> -> vector<56x56xf32>
    "tpu.trace_stop"() : () -> ()
    %cst_58 = arith.constant 5.000000e-01 : f32
    %121 = vector.broadcast %cst_58 : f32 to vector<56x56xf32>
    %122 = arith.mulf %120, %121 : vector<56x56xf32>
    %123 = arith.addf %122, %52 : vector<56x56xf32>
    %cst_59 = arith.constant dense<0xFF800000> : vector<56xf32>
    %124 = vector.multi_reduction <maximumf>, %123, %cst_59 [1] : vector<56x56xf32> to vector<56xf32>
    %125 = vector.shape_cast %124 : vector<56xf32> to vector<56x1xf32>
    %126 = vector.broadcast %125 : vector<56x1xf32> to vector<56x56xf32>
    %127 = arith.subf %123, %126 : vector<56x56xf32>
    %128 = math.exp %127 : vector<56x56xf32>
    %cst_60 = arith.constant dense<0.000000e+00> : vector<56xf32>
    %129 = vector.multi_reduction <add>, %128, %cst_60 [1] : vector<56x56xf32> to vector<56xf32>
    %130 = vector.shape_cast %129 : vector<56xf32> to vector<56x1xf32>
    %131 = tpu.reciprocal %130 {approx = true} : vector<56x1xf32> -> vector<56x1xf32>
    %132 = vector.broadcast %131 : vector<56x1xf32> to vector<56x56xf32>
    %133 = arith.mulf %128, %132 : vector<56x56xf32>
    %cst_61 = arith.constant dense<0.000000e+00> : vector<56x4xf32>
    %134 = tpu.matmul %133, %119, %cst_61 {dimension_numbers = #tpu.dot_dimension_numbers<[1], [0], [0], [1], [0, 0, 1, 1], [], []>} : vector<56x56xf32>, vector<56x4xf32>, vector<56x4xf32> -> vector<56x4xf32>
    %135 = vector.extract_strided_slice %51 {offsets = [12, 0], sizes = [4, 32], strides = [1, 1]} : vector<32x32xf32> to vector<4x32xf32>
    %cst_62 = arith.constant dense<0.000000e+00> : vector<56x32xf32>
    %136 = tpu.matmul %134, %135, %cst_62 {dimension_numbers = #tpu.dot_dimension_numbers<[1], [0], [0], [1], [0, 0, 1, 1], [], []>} : vector<56x4xf32>, vector<4x32xf32>, vector<56x32xf32> -> vector<56x32xf32>
    %137 = arith.addf %116, %136 : vector<56x32xf32>
    %138 = vector.extract_strided_slice %35 {offsets = [0, 16], sizes = [56, 4], strides = [1, 1]} : vector<56x32xf32> to vector<56x4xf32>
    %139 = vector.extract_strided_slice %42 {offsets = [0, 16], sizes = [56, 4], strides = [1, 1]} : vector<56x32xf32> to vector<56x4xf32>
    %140 = vector.extract_strided_slice %49 {offsets = [0, 16], sizes = [56, 4], strides = [1, 1]} : vector<56x32xf32> to vector<56x4xf32>
    "tpu.trace_start"() <{level = 10 : i32, message = "id,jd->ij"}> : () -> ()
    %cst_63 = arith.constant dense<0.000000e+00> : vector<56x56xf32>
    %141 = tpu.matmul %138, %139, %cst_63 {dimension_numbers = #tpu.dot_dimension_numbers<[1], [1], [0], [0], [0, 0, 1, 0], [], []>} : vector<56x4xf32>, vector<56x4xf32>, vector<56x56xf32> -> vector<56x56xf32>
    "tpu.trace_stop"() : () -> ()
    %cst_64 = arith.constant 5.000000e-01 : f32
    %142 = vector.broadcast %cst_64 : f32 to vector<56x56xf32>
    %143 = arith.mulf %141, %142 : vector<56x56xf32>
    %144 = arith.addf %143, %52 : vector<56x56xf32>
    %cst_65 = arith.constant dense<0xFF800000> : vector<56xf32>
    %145 = vector.multi_reduction <maximumf>, %144, %cst_65 [1] : vector<56x56xf32> to vector<56xf32>
    %146 = vector.shape_cast %145 : vector<56xf32> to vector<56x1xf32>
    %147 = vector.broadcast %146 : vector<56x1xf32> to vector<56x56xf32>
    %148 = arith.subf %144, %147 : vector<56x56xf32>
    %149 = math.exp %148 : vector<56x56xf32>
    %cst_66 = arith.constant dense<0.000000e+00> : vector<56xf32>
    %150 = vector.multi_reduction <add>, %149, %cst_66 [1] : vector<56x56xf32> to vector<56xf32>
    %151 = vector.shape_cast %150 : vector<56xf32> to vector<56x1xf32>
    %152 = tpu.reciprocal %151 {approx = true} : vector<56x1xf32> -> vector<56x1xf32>
    %153 = vector.broadcast %152 : vector<56x1xf32> to vector<56x56xf32>
    %154 = arith.mulf %149, %153 : vector<56x56xf32>
    %cst_67 = arith.constant dense<0.000000e+00> : vector<56x4xf32>
    %155 = tpu.matmul %154, %140, %cst_67 {dimension_numbers = #tpu.dot_dimension_numbers<[1], [0], [0], [1], [0, 0, 1, 1], [], []>} : vector<56x56xf32>, vector<56x4xf32>, vector<56x4xf32> -> vector<56x4xf32>
    %156 = vector.extract_strided_slice %51 {offsets = [16, 0], sizes = [4, 32], strides = [1, 1]} : vector<32x32xf32> to vector<4x32xf32>
    %cst_68 = arith.constant dense<0.000000e+00> : vector<56x32xf32>
    %157 = tpu.matmul %155, %156, %cst_68 {dimension_numbers = #tpu.dot_dimension_numbers<[1], [0], [0], [1], [0, 0, 1, 1], [], []>} : vector<56x4xf32>, vector<4x32xf32>, vector<56x32xf32> -> vector<56x32xf32>
    %158 = arith.addf %137, %157 : vector<56x32xf32>
    %159 = vector.extract_strided_slice %35 {offsets = [0, 20], sizes = [56, 4], strides = [1, 1]} : vector<56x32xf32> to vector<56x4xf32>
    %160 = vector.extract_strided_slice %42 {offsets = [0, 20], sizes = [56, 4], strides = [1, 1]} : vector<56x32xf32> to vector<56x4xf32>
    %161 = vector.extract_strided_slice %49 {offsets = [0, 20], sizes = [56, 4], strides = [1, 1]} : vector<56x32xf32> to vector<56x4xf32>
    "tpu.trace_start"() <{level = 10 : i32, message = "id,jd->ij"}> : () -> ()
    %cst_69 = arith.constant dense<0.000000e+00> : vector<56x56xf32>
    %162 = tpu.matmul %159, %160, %cst_69 {dimension_numbers = #tpu.dot_dimension_numbers<[1], [1], [0], [0], [0, 0, 1, 0], [], []>} : vector<56x4xf32>, vector<56x4xf32>, vector<56x56xf32> -> vector<56x56xf32>
    "tpu.trace_stop"() : () -> ()
    %cst_70 = arith.constant 5.000000e-01 : f32
    %163 = vector.broadcast %cst_70 : f32 to vector<56x56xf32>
    %164 = arith.mulf %162, %163 : vector<56x56xf32>
    %165 = arith.addf %164, %52 : vector<56x56xf32>
    %cst_71 = arith.constant dense<0xFF800000> : vector<56xf32>
    %166 = vector.multi_reduction <maximumf>, %165, %cst_71 [1] : vector<56x56xf32> to vector<56xf32>
    %167 = vector.shape_cast %166 : vector<56xf32> to vector<56x1xf32>
    %168 = vector.broadcast %167 : vector<56x1xf32> to vector<56x56xf32>
    %169 = arith.subf %165, %168 : vector<56x56xf32>
    %170 = math.exp %169 : vector<56x56xf32>
    %cst_72 = arith.constant dense<0.000000e+00> : vector<56xf32>
    %171 = vector.multi_reduction <add>, %170, %cst_72 [1] : vector<56x56xf32> to vector<56xf32>
    %172 = vector.shape_cast %171 : vector<56xf32> to vector<56x1xf32>
    %173 = tpu.reciprocal %172 {approx = true} : vector<56x1xf32> -> vector<56x1xf32>
    %174 = vector.broadcast %173 : vector<56x1xf32> to vector<56x56xf32>
    %175 = arith.mulf %170, %174 : vector<56x56xf32>
    %cst_73 = arith.constant dense<0.000000e+00> : vector<56x4xf32>
    %176 = tpu.matmul %175, %161, %cst_73 {dimension_numbers = #tpu.dot_dimension_numbers<[1], [0], [0], [1], [0, 0, 1, 1], [], []>} : vector<56x56xf32>, vector<56x4xf32>, vector<56x4xf32> -> vector<56x4xf32>
    %177 = vector.extract_strided_slice %51 {offsets = [20, 0], sizes = [4, 32], strides = [1, 1]} : vector<32x32xf32> to vector<4x32xf32>
    %cst_74 = arith.constant dense<0.000000e+00> : vector<56x32xf32>
    %178 = tpu.matmul %176, %177, %cst_74 {dimension_numbers = #tpu.dot_dimension_numbers<[1], [0], [0], [1], [0, 0, 1, 1], [], []>} : vector<56x4xf32>, vector<4x32xf32>, vector<56x32xf32> -> vector<56x32xf32>
    %179 = arith.addf %158, %178 : vector<56x32xf32>
    %180 = vector.extract_strided_slice %35 {offsets = [0, 24], sizes = [56, 4], strides = [1, 1]} : vector<56x32xf32> to vector<56x4xf32>
    %181 = vector.extract_strided_slice %42 {offsets = [0, 24], sizes = [56, 4], strides = [1, 1]} : vector<56x32xf32> to vector<56x4xf32>
    %182 = vector.extract_strided_slice %49 {offsets = [0, 24], sizes = [56, 4], strides = [1, 1]} : vector<56x32xf32> to vector<56x4xf32>
    "tpu.trace_start"() <{level = 10 : i32, message = "id,jd->ij"}> : () -> ()
    %cst_75 = arith.constant dense<0.000000e+00> : vector<56x56xf32>
    %183 = tpu.matmul %180, %181, %cst_75 {dimension_numbers = #tpu.dot_dimension_numbers<[1], [1], [0], [0], [0, 0, 1, 0], [], []>} : vector<56x4xf32>, vector<56x4xf32>, vector<56x56xf32> -> vector<56x56xf32>
    "tpu.trace_stop"() : () -> ()
    %cst_76 = arith.constant 5.000000e-01 : f32
    %184 = vector.broadcast %cst_76 : f32 to vector<56x56xf32>
    %185 = arith.mulf %183, %184 : vector<56x56xf32>
    %186 = arith.addf %185, %52 : vector<56x56xf32>
    %cst_77 = arith.constant dense<0xFF800000> : vector<56xf32>
    %187 = vector.multi_reduction <maximumf>, %186, %cst_77 [1] : vector<56x56xf32> to vector<56xf32>
    %188 = vector.shape_cast %187 : vector<56xf32> to vector<56x1xf32>
    %189 = vector.broadcast %188 : vector<56x1xf32> to vector<56x56xf32>
    %190 = arith.subf %186, %189 : vector<56x56xf32>
    %191 = math.exp %190 : vector<56x56xf32>
    %cst_78 = arith.constant dense<0.000000e+00> : vector<56xf32>
    %192 = vector.multi_reduction <add>, %191, %cst_78 [1] : vector<56x56xf32> to vector<56xf32>
    %193 = vector.shape_cast %192 : vector<56xf32> to vector<56x1xf32>
    %194 = tpu.reciprocal %193 {approx = true} : vector<56x1xf32> -> vector<56x1xf32>
    %195 = vector.broadcast %194 : vector<56x1xf32> to vector<56x56xf32>
    %196 = arith.mulf %191, %195 : vector<56x56xf32>
    %cst_79 = arith.constant dense<0.000000e+00> : vector<56x4xf32>
    %197 = tpu.matmul %196, %182, %cst_79 {dimension_numbers = #tpu.dot_dimension_numbers<[1], [0], [0], [1], [0, 0, 1, 1], [], []>} : vector<56x56xf32>, vector<56x4xf32>, vector<56x4xf32> -> vector<56x4xf32>
    %198 = vector.extract_strided_slice %51 {offsets = [24, 0], sizes = [4, 32], strides = [1, 1]} : vector<32x32xf32> to vector<4x32xf32>
    %cst_80 = arith.constant dense<0.000000e+00> : vector<56x32xf32>
    %199 = tpu.matmul %197, %198, %cst_80 {dimension_numbers = #tpu.dot_dimension_numbers<[1], [0], [0], [1], [0, 0, 1, 1], [], []>} : vector<56x4xf32>, vector<4x32xf32>, vector<56x32xf32> -> vector<56x32xf32>
    %200 = arith.addf %179, %199 : vector<56x32xf32>
    %201 = vector.extract_strided_slice %35 {offsets = [0, 28], sizes = [56, 4], strides = [1, 1]} : vector<56x32xf32> to vector<56x4xf32>
    %202 = vector.extract_strided_slice %42 {offsets = [0, 28], sizes = [56, 4], strides = [1, 1]} : vector<56x32xf32> to vector<56x4xf32>
    %203 = vector.extract_strided_slice %49 {offsets = [0, 28], sizes = [56, 4], strides = [1, 1]} : vector<56x32xf32> to vector<56x4xf32>
    "tpu.trace_start"() <{level = 10 : i32, message = "id,jd->ij"}> : () -> ()
    %cst_81 = arith.constant dense<0.000000e+00> : vector<56x56xf32>
    %204 = tpu.matmul %201, %202, %cst_81 {dimension_numbers = #tpu.dot_dimension_numbers<[1], [1], [0], [0], [0, 0, 1, 0], [], []>} : vector<56x4xf32>, vector<56x4xf32>, vector<56x56xf32> -> vector<56x56xf32>
    "tpu.trace_stop"() : () -> ()
    %cst_82 = arith.constant 5.000000e-01 : f32
    %205 = vector.broadcast %cst_82 : f32 to vector<56x56xf32>
    %206 = arith.mulf %204, %205 : vector<56x56xf32>
    %207 = arith.addf %206, %52 : vector<56x56xf32>
    %cst_83 = arith.constant dense<0xFF800000> : vector<56xf32>
    %208 = vector.multi_reduction <maximumf>, %207, %cst_83 [1] : vector<56x56xf32> to vector<56xf32>
    %209 = vector.shape_cast %208 : vector<56xf32> to vector<56x1xf32>
    %210 = vector.broadcast %209 : vector<56x1xf32> to vector<56x56xf32>
    %211 = arith.subf %207, %210 : vector<56x56xf32>
    %212 = math.exp %211 : vector<56x56xf32>
    %cst_84 = arith.constant dense<0.000000e+00> : vector<56xf32>
    %213 = vector.multi_reduction <add>, %212, %cst_84 [1] : vector<56x56xf32> to vector<56xf32>
    %214 = vector.shape_cast %213 : vector<56xf32> to vector<56x1xf32>
    %215 = tpu.reciprocal %214 {approx = true} : vector<56x1xf32> -> vector<56x1xf32>
    %216 = vector.broadcast %215 : vector<56x1xf32> to vector<56x56xf32>
    %217 = arith.mulf %212, %216 : vector<56x56xf32>
    %cst_85 = arith.constant dense<0.000000e+00> : vector<56x4xf32>
    %218 = tpu.matmul %217, %203, %cst_85 {dimension_numbers = #tpu.dot_dimension_numbers<[1], [0], [0], [1], [0, 0, 1, 1], [], []>} : vector<56x56xf32>, vector<56x4xf32>, vector<56x4xf32> -> vector<56x4xf32>
    %219 = vector.extract_strided_slice %51 {offsets = [28, 0], sizes = [4, 32], strides = [1, 1]} : vector<32x32xf32> to vector<4x32xf32>
    %cst_86 = arith.constant dense<0.000000e+00> : vector<56x32xf32>
    %220 = tpu.matmul %218, %219, %cst_86 {dimension_numbers = #tpu.dot_dimension_numbers<[1], [0], [0], [1], [0, 0, 1, 1], [], []>} : vector<56x4xf32>, vector<4x32xf32>, vector<56x32xf32> -> vector<56x32xf32>
    %221 = arith.addf %200, %220 : vector<56x32xf32>
    %222 = arith.addf %3, %221 : vector<56x32xf32>
    %c0_87 = arith.constant 0 : index
    %c0_88 = arith.constant 0 : index
    %c0_89 = arith.constant 0 : index
    %223 = vector.load %arg17[%c0_87, %c0_88, %c0_89] : memref<1x1x32xf32, #tpu.memory_space<vmem>>, vector<1x1x32xf32>
    %224 = vector.shape_cast %223 : vector<1x1x32xf32> to vector<1x32xf32>
    %c0_90 = arith.constant 0 : index
    %c0_91 = arith.constant 0 : index
    %c0_92 = arith.constant 0 : index
    %225 = vector.load %arg18[%c0_90, %c0_91, %c0_92] : memref<1x1x32xf32, #tpu.memory_space<vmem>>, vector<1x1x32xf32>
    %226 = vector.shape_cast %225 : vector<1x1x32xf32> to vector<1x32xf32>
    %cst_93 = arith.constant dense<0.000000e+00> : vector<56xf32>
    %227 = vector.multi_reduction <add>, %222, %cst_93 [1] : vector<56x32xf32> to vector<56xf32>
    %228 = vector.shape_cast %227 : vector<56xf32> to vector<56x1xf32>
    %cst_94 = arith.constant 3.200000e+01 : f32
    %229 = vector.broadcast %cst_94 : f32 to vector<56x1xf32>
    %230 = arith.divf %228, %229 : vector<56x1xf32>
    %231 = vector.broadcast %230 : vector<56x1xf32> to vector<56x32xf32>
    %232 = arith.subf %222, %231 : vector<56x32xf32>
    %233 = arith.mulf %232, %232 : vector<56x32xf32>
    %cst_95 = arith.constant dense<0.000000e+00> : vector<56xf32>
    %234 = vector.multi_reduction <add>, %233, %cst_95 [1] : vector<56x32xf32> to vector<56xf32>
    %235 = vector.shape_cast %234 : vector<56xf32> to vector<56x1xf32>
    %cst_96 = arith.constant 0.0322580636 : f32
    %236 = vector.broadcast %cst_96 : f32 to vector<56x1xf32>
    %237 = arith.mulf %235, %236 : vector<56x1xf32>
    %238 = math.sqrt %237 : vector<56x1xf32>
    %cst_97 = arith.constant 9.99999997E-7 : f32
    %239 = vector.broadcast %cst_97 : f32 to vector<56x1xf32>
    %240 = arith.addf %238, %239 : vector<56x1xf32>
    %241 = tpu.reciprocal %240 {approx = true} : vector<56x1xf32> -> vector<56x1xf32>
    %242 = vector.broadcast %241 : vector<56x1xf32> to vector<56x32xf32>
    %243 = arith.mulf %232, %242 : vector<56x32xf32>
    %244 = vector.broadcast %224 : vector<1x32xf32> to vector<56x32xf32>
    %245 = arith.mulf %244, %243 : vector<56x32xf32>
    %246 = vector.broadcast %226 : vector<1x32xf32> to vector<56x32xf32>
    %247 = arith.addf %245, %246 : vector<56x32xf32>
    %248 = arith.truncf %247 : vector<56x32xf32> to vector<56x32xbf16>
    %c0_98 = arith.constant 0 : index
    %c0_99 = arith.constant 0 : index
    %c0_100 = arith.constant 0 : index
    %249 = vector.load %arg19[%c0_98, %c0_99, %c0_100] : memref<1x32x2048xbf16, #tpu.memory_space<vmem>>, vector<1x32x2048xbf16>
    %250 = vector.shape_cast %249 : vector<1x32x2048xbf16> to vector<32x2048xbf16>
    %cst_101 = arith.constant dense<0.000000e+00> : vector<56x2048xf32>
    %251 = tpu.matmul %248, %250, %cst_101 {dimension_numbers = #tpu.dot_dimension_numbers<[1], [0], [0], [1], [0, 0, 1, 1], [], []>} : vector<56x32xbf16>, vector<32x2048xbf16>, vector<56x2048xf32> -> vector<56x2048xf32>
    %c0_102 = arith.constant 0 : index
    %c0_103 = arith.constant 0 : index
    %c0_104 = arith.constant 0 : index
    %252 = vector.load %arg20[%c0_102, %c0_103, %c0_104] : memref<1x1x2048xf32, #tpu.memory_space<vmem>>, vector<1x1x2048xf32>
    %253 = vector.shape_cast %252 : vector<1x1x2048xf32> to vector<1x2048xf32>
    %254 = vector.broadcast %253 : vector<1x2048xf32> to vector<56x2048xf32>
    %255 = arith.addf %251, %254 : vector<56x2048xf32>
    %cst_105 = arith.constant 0.000000e+00 : f32
    %256 = vector.broadcast %cst_105 : f32 to vector<56x2048xf32>
    %257 = arith.maximumf %255, %256 : vector<56x2048xf32>
    %258 = arith.truncf %257 : vector<56x2048xf32> to vector<56x2048xbf16>
    %c0_106 = arith.constant 0 : index
    %c0_107 = arith.constant 0 : index
    %c0_108 = arith.constant 0 : index
    %259 = vector.load %arg21[%c0_106, %c0_107, %c0_108] : memref<1x2048x32xbf16, #tpu.memory_space<vmem>>, vector<1x2048x32xbf16>
    %260 = vector.shape_cast %259 : vector<1x2048x32xbf16> to vector<2048x32xbf16>
    %cst_109 = arith.constant dense<0.000000e+00> : vector<56x32xf32>
    %261 = tpu.matmul %258, %260, %cst_109 {dimension_numbers = #tpu.dot_dimension_numbers<[1], [0], [0], [1], [0, 0, 1, 1], [], []>} : vector<56x2048xbf16>, vector<2048x32xbf16>, vector<56x32xf32> -> vector<56x32xf32>
    %c0_110 = arith.constant 0 : index
    %c0_111 = arith.constant 0 : index
    %c0_112 = arith.constant 0 : index
    %262 = vector.load %arg22[%c0_110, %c0_111, %c0_112] : memref<1x1x32xf32, #tpu.memory_space<vmem>>, vector<1x1x32xf32>
    %263 = vector.shape_cast %262 : vector<1x1x32xf32> to vector<1x32xf32>
    %264 = vector.broadcast %263 : vector<1x32xf32> to vector<56x32xf32>
    %265 = arith.addf %261, %264 : vector<56x32xf32>
    %266 = arith.addf %222, %265 : vector<56x32xf32>
    %c0_113 = arith.constant 0 : index
    %c0_114 = arith.constant 0 : index
    %267 = vector.load %arg34[%c0_113, %c0_114] : memref<56x32xf32, #tpu.memory_space<vmem>>, vector<56x32xf32>
    tpu.vector_store %arg34[%c0_113, %c0_114], %266 {strides = array<i32>} : memref<56x32xf32, #tpu.memory_space<vmem>>, vector<56x32xf32>,
    %c5_i32 = arith.constant 5 : i32
    %268 = arith.cmpi eq, %arg0, %c5_i32 : i32
    %269 = arith.extui %268 : i1 to i32
    %c0_i32_115 = arith.constant 0 : i32
    %270 = arith.cmpi ne, %269, %c0_i32_115 : i32
    scf.if %270 {
      %c0_116 = arith.constant 0 : index
      %c0_117 = arith.constant 0 : index
      %271 = vector.load %arg23[%c0_116, %c0_117] : memref<1x32xf32, #tpu.memory_space<vmem>>, vector<1x32xf32>
      %c0_118 = arith.constant 0 : index
      %c0_119 = arith.constant 0 : index
      %272 = vector.load %arg24[%c0_118, %c0_119] : memref<1x32xf32, #tpu.memory_space<vmem>>, vector<1x32xf32>
      %cst_120 = arith.constant dense<0.000000e+00> : vector<56xf32>
      %273 = vector.multi_reduction <add>, %266, %cst_120 [1] : vector<56x32xf32> to vector<56xf32>
      %274 = vector.shape_cast %273 : vector<56xf32> to vector<56x1xf32>
      %cst_121 = arith.constant 3.200000e+01 : f32
      %275 = vector.broadcast %cst_121 : f32 to vector<56x1xf32>
      %276 = arith.divf %274, %275 : vector<56x1xf32>
      %277 = vector.broadcast %276 : vector<56x1xf32> to vector<56x32xf32>
      %278 = arith.subf %266, %277 : vector<56x32xf32>
      %279 = arith.mulf %278, %278 : vector<56x32xf32>
      %cst_122 = arith.constant dense<0.000000e+00> : vector<56xf32>
      %280 = vector.multi_reduction <add>, %279, %cst_122 [1] : vector<56x32xf32> to vector<56xf32>
      %281 = vector.shape_cast %280 : vector<56xf32> to vector<56x1xf32>
      %cst_123 = arith.constant 0.0322580636 : f32
      %282 = vector.broadcast %cst_123 : f32 to vector<56x1xf32>
      %283 = arith.mulf %281, %282 : vector<56x1xf32>
      %284 = math.sqrt %283 : vector<56x1xf32>
      %cst_124 = arith.constant 9.99999997E-7 : f32
      %285 = vector.broadcast %cst_124 : f32 to vector<56x1xf32>
      %286 = arith.addf %284, %285 : vector<56x1xf32>
      %287 = tpu.reciprocal %286 {approx = true} : vector<56x1xf32> -> vector<56x1xf32>
      %288 = vector.broadcast %287 : vector<56x1xf32> to vector<56x32xf32>
      %289 = arith.mulf %278, %288 : vector<56x32xf32>
      %290 = vector.broadcast %271 : vector<1x32xf32> to vector<56x32xf32>
      %291 = arith.mulf %290, %289 : vector<56x32xf32>
      %292 = vector.broadcast %272 : vector<1x32xf32> to vector<56x32xf32>
      %293 = arith.addf %291, %292 : vector<56x32xf32>
      %c0_125 = arith.constant 0 : index
      %c0_126 = arith.constant 0 : index
      %294 = vector.load %arg25[%c0_125, %c0_126] : memref<32x16xf32, #tpu.memory_space<vmem>>, vector<32x16xf32>
      %cst_127 = arith.constant dense<0.000000e+00> : vector<56x16xf32>
      %295 = tpu.matmul %293, %294, %cst_127 {dimension_numbers = #tpu.dot_dimension_numbers<[1], [0], [0], [1], [0, 0, 1, 1], [], []>} : vector<56x32xf32>, vector<32x16xf32>, vector<56x16xf32> -> vector<56x16xf32>
      %c0_128 = arith.constant 0 : index
      %c0_129 = arith.constant 0 : index
      %296 = vector.load %arg26[%c0_128, %c0_129] : memref<1x16xf32, #tpu.memory_space<vmem>>, vector<1x16xf32>
      %297 = vector.broadcast %296 : vector<1x16xf32> to vector<56x16xf32>
      %298 = arith.addf %295, %297 : vector<56x16xf32>
      %cst_130 = arith.constant 0.000000e+00 : f32
      %299 = vector.broadcast %cst_130 : f32 to vector<56x16xf32>
      %300 = arith.maximumf %298, %299 : vector<56x16xf32>
      %c0_131 = arith.constant 0 : index
      %c0_132 = arith.constant 0 : index
      %301 = vector.load %arg27[%c0_131, %c0_132] : memref<16x22xf32, #tpu.memory_space<vmem>>, vector<16x22xf32>
      %cst_133 = arith.constant dense<0.000000e+00> : vector<56x22xf32>
      %302 = tpu.matmul %300, %301, %cst_133 {dimension_numbers = #tpu.dot_dimension_numbers<[1], [0], [0], [1], [0, 0, 1, 1], [], []>} : vector<56x16xf32>, vector<16x22xf32>, vector<56x22xf32> -> vector<56x22xf32>
      %c0_134 = arith.constant 0 : index
      %c0_135 = arith.constant 0 : index
      %303 = vector.load %arg28[%c0_134, %c0_135] : memref<1x22xf32, #tpu.memory_space<vmem>>, vector<1x22xf32>
      %304 = vector.broadcast %303 : vector<1x22xf32> to vector<56x22xf32>
      %305 = arith.addf %302, %304 : vector<56x22xf32>
      %306 = vector.extract_strided_slice %305 {offsets = [0, 0], sizes = [28, 22], strides = [1, 1]} : vector<56x22xf32> to vector<28x22xf32>
      %c0_136 = arith.constant 0 : index
      %c0_137 = arith.constant 0 : index
      %307 = vector.load %arg29[%c0_136, %c0_137] : memref<21x28xf32, #tpu.memory_space<vmem>>, vector<21x28xf32>
      %cst_138 = arith.constant dense<0.000000e+00> : vector<21x22xf32>
      %308 = tpu.matmul %307, %306, %cst_138 {dimension_numbers = #tpu.dot_dimension_numbers<[1], [0], [0], [1], [0, 0, 1, 1], [], []>} : vector<21x28xf32>, vector<28x22xf32>, vector<21x22xf32> -> vector<21x22xf32>
      %c0_139 = arith.constant 0 : index
      %c0_140 = arith.constant 0 : index
      %309 = vector.load %arg30[%c0_139, %c0_140] : memref<21x1xf32, #tpu.memory_space<vmem>>, vector<21x1xf32>
      %310 = vector.broadcast %309 : vector<21x1xf32> to vector<21x22xf32>
      %311 = arith.addf %308, %310 : vector<21x22xf32>
      %cst_141 = arith.constant 0.000000e+00 : f32
      %312 = vector.broadcast %cst_141 : f32 to vector<21x22xf32>
      %313 = arith.maximumf %311, %312 : vector<21x22xf32>
      %c0_142 = arith.constant 0 : index
      %c0_143 = arith.constant 0 : index
      %314 = vector.load %arg31[%c0_142, %c0_143] : memref<14x21xf32, #tpu.memory_space<vmem>>, vector<14x21xf32>
      %cst_144 = arith.constant dense<0.000000e+00> : vector<14x22xf32>
      %315 = tpu.matmul %314, %313, %cst_144 {dimension_numbers = #tpu.dot_dimension_numbers<[1], [0], [0], [1], [0, 0, 1, 1], [], []>} : vector<14x21xf32>, vector<21x22xf32>, vector<14x22xf32> -> vector<14x22xf32>
      %c0_145 = arith.constant 0 : index
      %c0_146 = arith.constant 0 : index
      %316 = vector.load %arg32[%c0_145, %c0_146] : memref<14x1xf32, #tpu.memory_space<vmem>>, vector<14x1xf32>
      %317 = vector.broadcast %316 : vector<14x1xf32> to vector<14x22xf32>
      %318 = arith.addf %315, %317 : vector<14x22xf32>
      %c0_147 = arith.constant 0 : index
      %c0_148 = arith.constant 0 : index
      %c0_149 = arith.constant 0 : index
      %319 = vector.load %arg33[%c0_147, %c0_148, %c0_149] : memref<2x14x22xf32, #tpu.memory_space<vmem>>, vector<1x14x22xf32>
      %320 = vector.shape_cast %319 : vector<1x14x22xf32> to vector<14x22xf32>
      %321 = vector.shape_cast %318 : vector<14x22xf32> to vector<1x14x22xf32>
      tpu.vector_store %arg33[%c0_147, %c0_148, %c0_149], %321 {strides = array<i32>} : memref<2x14x22xf32, #tpu.memory_space<vmem>>, vector<1x14x22xf32>,
      %322 = vector.extract_strided_slice %305 {offsets = [28, 0], sizes = [28, 22], strides = [1, 1]} : vector<56x22xf32> to vector<28x22xf32>
      %c0_150 = arith.constant 0 : index
      %c0_151 = arith.constant 0 : index
      %323 = vector.load %arg29[%c0_150, %c0_151] : memref<21x28xf32, #tpu.memory_space<vmem>>, vector<21x28xf32>
      %cst_152 = arith.constant dense<0.000000e+00> : vector<21x22xf32>
      %324 = tpu.matmul %323, %322, %cst_152 {dimension_numbers = #tpu.dot_dimension_numbers<[1], [0], [0], [1], [0, 0, 1, 1], [], []>} : vector<21x28xf32>, vector<28x22xf32>, vector<21x22xf32> -> vector<21x22xf32>
      %c0_153 = arith.constant 0 : index
      %c0_154 = arith.constant 0 : index
      %325 = vector.load %arg30[%c0_153, %c0_154] : memref<21x1xf32, #tpu.memory_space<vmem>>, vector<21x1xf32>
      %326 = vector.broadcast %325 : vector<21x1xf32> to vector<21x22xf32>
      %327 = arith.addf %324, %326 : vector<21x22xf32>
      %cst_155 = arith.constant 0.000000e+00 : f32
      %328 = vector.broadcast %cst_155 : f32 to vector<21x22xf32>
      %329 = arith.maximumf %327, %328 : vector<21x22xf32>
      %c0_156 = arith.constant 0 : index
      %c0_157 = arith.constant 0 : index
      %330 = vector.load %arg31[%c0_156, %c0_157] : memref<14x21xf32, #tpu.memory_space<vmem>>, vector<14x21xf32>
      %cst_158 = arith.constant dense<0.000000e+00> : vector<14x22xf32>
      %331 = tpu.matmul %330, %329, %cst_158 {dimension_numbers = #tpu.dot_dimension_numbers<[1], [0], [0], [1], [0, 0, 1, 1], [], []>} : vector<14x21xf32>, vector<21x22xf32>, vector<14x22xf32> -> vector<14x22xf32>
      %c0_159 = arith.constant 0 : index
      %c0_160 = arith.constant 0 : index
      %332 = vector.load %arg32[%c0_159, %c0_160] : memref<14x1xf32, #tpu.memory_space<vmem>>, vector<14x1xf32>
      %333 = vector.broadcast %332 : vector<14x1xf32> to vector<14x22xf32>
      %334 = arith.addf %331, %333 : vector<14x22xf32>
      %c1 = arith.constant 1 : index
      %c0_161 = arith.constant 0 : index
      %c0_162 = arith.constant 0 : index
      %335 = vector.load %arg33[%c1, %c0_161, %c0_162] : memref<2x14x22xf32, #tpu.memory_space<vmem>>, vector<1x14x22xf32>
      %336 = vector.shape_cast %335 : vector<1x14x22xf32> to vector<14x22xf32>
      %337 = vector.shape_cast %334 : vector<14x22xf32> to vector<1x14x22xf32>
      tpu.vector_store %arg33[%c1, %c0_161, %c0_162], %337 {strides = array<i32>} : memref<2x14x22xf32, #tpu.memory_space<vmem>>, vector<1x14x22xf32>,
    } else {
    }
    return
  }
  func.func @transform_0(%arg0: i32) -> (i32, i32) {
    %c0_i32 = arith.constant 0 : i32
    %c0_i32_0 = arith.constant 0 : i32
    %c0_i32_1 = arith.constant 0 : i32
    return %c0_i32, %c0_i32_0 : i32, i32
  }
  func.func @transform_1(%arg0: i32) -> (i32, i32) {
    %c0_i32 = arith.constant 0 : i32
    %c0_i32_0 = arith.constant 0 : i32
    %c0_i32_1 = arith.constant 0 : i32
    return %c0_i32, %c0_i32_0 : i32, i32
  }
  func.func @transform_2(%arg0: i32) -> (i32, i32) {
    %c0_i32 = arith.constant 0 : i32
    %c0_i32_0 = arith.constant 0 : i32
    %c0_i32_1 = arith.constant 0 : i32
    return %c0_i32, %c0_i32_0 : i32, i32
  }
  func.func @transform_3(%arg0: i32) -> (i32, i32) {
    %c0_i32 = arith.constant 0 : i32
    %c0_i32_0 = arith.constant 0 : i32
    %c0_i32_1 = arith.constant 0 : i32
    return %c0_i32, %c0_i32_0 : i32, i32
  }
  func.func @transform_4(%arg0: i32) -> (i32, i32) {
    %c0_i32 = arith.constant 0 : i32
    %c0_i32_0 = arith.constant 0 : i32
    %c0_i32_1 = arith.constant 0 : i32
    return %c0_i32, %c0_i32_0 : i32, i32
  }
  func.func @transform_5(%arg0: i32) -> (i32, i32) {
    %c0_i32 = arith.constant 0 : i32
    %c0_i32_0 = arith.constant 0 : i32
    %c0_i32_1 = arith.constant 0 : i32
    return %c0_i32, %c0_i32_0 : i32, i32
  }
  func.func @transform_6(%arg0: i32) -> (i32, i32) {
    %c0_i32 = arith.constant 0 : i32
    %c0_i32_0 = arith.constant 0 : i32
    %c0_i32_1 = arith.constant 0 : i32
    return %c0_i32, %c0_i32_0 : i32, i32
  }
  func.func @transform_7(%arg0: i32) -> (i32, i32, i32) {
    %c0_i32 = arith.constant 0 : i32
    %c0_i32_0 = arith.constant 0 : i32
    %c0_i32_1 = arith.constant 0 : i32
    return %arg0, %c0_i32, %c0_i32_0 : i32, i32, i32
  }
  func.func @transform_8(%arg0: i32) -> (i32, i32, i32) {
    %c0_i32 = arith.constant 0 : i32
    %c0_i32_0 = arith.constant 0 : i32
    %c0_i32_1 = arith.constant 0 : i32
    return %arg0, %c0_i32, %c0_i32_0 : i32, i32, i32
  }
  func.func @transform_9(%arg0: i32) -> (i32, i32, i32) {
    %c0_i32 = arith.constant 0 : i32
    %c0_i32_0 = arith.constant 0 : i32
    %c0_i32_1 = arith.constant 0 : i32
    return %arg0, %c0_i32, %c0_i32_0 : i32, i32, i32
  }
  func.func @transform_10(%arg0: i32) -> (i32, i32, i32) {
    %c0_i32 = arith.constant 0 : i32
    %c0_i32_0 = arith.constant 0 : i32
    %c0_i32_1 = arith.constant 0 : i32
    return %arg0, %c0_i32, %c0_i32_0 : i32, i32, i32
  }
  func.func @transform_11(%arg0: i32) -> (i32, i32, i32) {
    %c0_i32 = arith.constant 0 : i32
    %c0_i32_0 = arith.constant 0 : i32
    %c0_i32_1 = arith.constant 0 : i32
    return %arg0, %c0_i32, %c0_i32_0 : i32, i32, i32
  }
  func.func @transform_12(%arg0: i32) -> (i32, i32, i32) {
    %c0_i32 = arith.constant 0 : i32
    %c0_i32_0 = arith.constant 0 : i32
    %c0_i32_1 = arith.constant 0 : i32
    return %arg0, %c0_i32, %c0_i32_0 : i32, i32, i32
  }
  func.func @transform_13(%arg0: i32) -> (i32, i32, i32) {
    %c0_i32 = arith.constant 0 : i32
    %c0_i32_0 = arith.constant 0 : i32
    %c0_i32_1 = arith.constant 0 : i32
    return %arg0, %c0_i32, %c0_i32_0 : i32, i32, i32
  }
  func.func @transform_14(%arg0: i32) -> (i32, i32, i32) {
    %c0_i32 = arith.constant 0 : i32
    %c0_i32_0 = arith.constant 0 : i32
    %c0_i32_1 = arith.constant 0 : i32
    return %arg0, %c0_i32, %c0_i32_0 : i32, i32, i32
  }
  func.func @transform_15(%arg0: i32) -> (i32, i32, i32) {
    %c0_i32 = arith.constant 0 : i32
    %c0_i32_0 = arith.constant 0 : i32
    %c0_i32_1 = arith.constant 0 : i32
    return %arg0, %c0_i32, %c0_i32_0 : i32, i32, i32
  }
  func.func @transform_16(%arg0: i32) -> (i32, i32, i32) {
    %c0_i32 = arith.constant 0 : i32
    %c0_i32_0 = arith.constant 0 : i32
    %c0_i32_1 = arith.constant 0 : i32
    return %arg0, %c0_i32, %c0_i32_0 : i32, i32, i32
  }
  func.func @transform_17(%arg0: i32) -> (i32, i32, i32) {
    %c0_i32 = arith.constant 0 : i32
    %c0_i32_0 = arith.constant 0 : i32
    %c0_i32_1 = arith.constant 0 : i32
    return %arg0, %c0_i32, %c0_i32_0 : i32, i32, i32
  }
  func.func @transform_18(%arg0: i32) -> (i32, i32, i32) {
    %c0_i32 = arith.constant 0 : i32
    %c0_i32_0 = arith.constant 0 : i32
    %c0_i32_1 = arith.constant 0 : i32
    return %arg0, %c0_i32, %c0_i32_0 : i32, i32, i32
  }
  func.func @transform_19(%arg0: i32) -> (i32, i32, i32) {
    %c0_i32 = arith.constant 0 : i32
    %c0_i32_0 = arith.constant 0 : i32
    %c0_i32_1 = arith.constant 0 : i32
    return %arg0, %c0_i32, %c0_i32_0 : i32, i32, i32
  }
  func.func @transform_20(%arg0: i32) -> (i32, i32, i32) {
    %c0_i32 = arith.constant 0 : i32
    %c0_i32_0 = arith.constant 0 : i32
    %c0_i32_1 = arith.constant 0 : i32
    return %arg0, %c0_i32, %c0_i32_0 : i32, i32, i32
  }
  func.func @transform_21(%arg0: i32) -> (i32, i32, i32) {
    %c0_i32 = arith.constant 0 : i32
    %c0_i32_0 = arith.constant 0 : i32
    %c0_i32_1 = arith.constant 0 : i32
    return %arg0, %c0_i32, %c0_i32_0 : i32, i32, i32
  }
  func.func @transform_22(%arg0: i32) -> (i32, i32) {
    %c0_i32 = arith.constant 0 : i32
    %c0_i32_0 = arith.constant 0 : i32
    %c0_i32_1 = arith.constant 0 : i32
    return %c0_i32, %c0_i32_0 : i32, i32
  }
  func.func @transform_23(%arg0: i32) -> (i32, i32) {
    %c0_i32 = arith.constant 0 : i32
    %c0_i32_0 = arith.constant 0 : i32
    %c0_i32_1 = arith.constant 0 : i32
    return %c0_i32, %c0_i32_0 : i32, i32
  }
  func.func @transform_24(%arg0: i32) -> (i32, i32) {
    %c0_i32 = arith.constant 0 : i32
    %c0_i32_0 = arith.constant 0 : i32
    %c0_i32_1 = arith.constant 0 : i32
    return %c0_i32, %c0_i32_0 : i32, i32
  }
  func.func @transform_25(%arg0: i32) -> (i32, i32) {
    %c0_i32 = arith.constant 0 : i32
    %c0_i32_0 = arith.constant 0 : i32
    %c0_i32_1 = arith.constant 0 : i32
    return %c0_i32, %c0_i32_0 : i32, i32
  }
  func.func @transform_26(%arg0: i32) -> (i32, i32) {
    %c0_i32 = arith.constant 0 : i32
    %c0_i32_0 = arith.constant 0 : i32
    %c0_i32_1 = arith.constant 0 : i32
    return %c0_i32, %c0_i32_0 : i32, i32
  }
  func.func @transform_27(%arg0: i32) -> (i32, i32) {
    %c0_i32 = arith.constant 0 : i32
    %c0_i32_0 = arith.constant 0 : i32
    %c0_i32_1 = arith.constant 0 : i32
    return %c0_i32, %c0_i32_0 : i32, i32
  }
  func.func @transform_28(%arg0: i32) -> (i32, i32) {
    %c0_i32 = arith.constant 0 : i32
    %c0_i32_0 = arith.constant 0 : i32
    %c0_i32_1 = arith.constant 0 : i32
    return %c0_i32, %c0_i32_0 : i32, i32
  }
  func.func @transform_29(%arg0: i32) -> (i32, i32) {
    %c0_i32 = arith.constant 0 : i32
    %c0_i32_0 = arith.constant 0 : i32
    %c0_i32_1 = arith.constant 0 : i32
    return %c0_i32, %c0_i32_0 : i32, i32
  }
  func.func @transform_30(%arg0: i32) -> (i32, i32) {
    %c0_i32 = arith.constant 0 : i32
    %c0_i32_0 = arith.constant 0 : i32
    %c0_i32_1 = arith.constant 0 : i32
    return %c0_i32, %c0_i32_0 : i32, i32
  }
  func.func @transform_31(%arg0: i32) -> (i32, i32) {
    %c0_i32 = arith.constant 0 : i32
    %c0_i32_0 = arith.constant 0 : i32
    %c0_i32_1 = arith.constant 0 : i32
    return %c0_i32, %c0_i32_0 : i32, i32
  }
  func.func @transform_32(%arg0: i32) -> (i32, i32, i32) {
    %c0_i32 = arith.constant 0 : i32
    %c0_i32_0 = arith.constant 0 : i32
    %c0_i32_1 = arith.constant 0 : i32
    %c0_i32_2 = arith.constant 0 : i32
    return %c0_i32, %c0_i32_0, %c0_i32_1 : i32, i32, i32
  }
}

</mosaic_0001>

<llo_original>
// kernel: eq.8
$region0: #{eq.8}
  %s0 = inlined_call_operand.vmem [shape: s32[2,28], index: 0, kind: input, shape index: {}]
  %s1 = inlined_call_operand.vmem [shape: s32[56], index: 1, kind: output, shape index: {}]
  $region1: #{eq.8} parent=0
    #allocation0 [shape = 'u8[4096]{0}', space=vmem, size = 0x1000, scoped, tag = 'scoped mem for output reshape']
    #allocation1 [shape = 'u8[4096]{0}', space=vmem, size = 0x1000, scoped, tag = 'scoped mem for input reshape']
    %s3 = sshllo.u32 0, 2
    %v4 = vld [vmem:[%s0] sm:%s3]
    %5 = vst [vmem:[#allocation1] sm:%s3] %v4
    %v6 = vld [vmem:[#allocation1] sm:$0x1]
    %vm7 = vcmask 228352
    %8 = vst.msk [vmem:[#allocation0] sm:$0x1] %vm7, %v6
    %s9 = scalar_lea.vmem [#allocation1], 1
    %v10 = vld [vmem:[%s9] sm:$0x1]
    %11 = vrot.lane.b32.xlu0 %v10, 28
    %v12 = vpop.permute.xlu0 %11
    %vm13 = vcmask 457952
    %14 = vst.msk [vmem:[#allocation0] sm:$0x1] %vm13, %v12
    %s16 = sshllo.u32 0, 1
    %v18 = vld [vmem:[#allocation0] sm:%s16]
    %s19 = sshllo.u32 0, 1
    %20 = vst [vmem:[%s1] sm:%s19] %v18

// kernel: tile.9
$region0: #{tile.9}
  %s0 = inlined_call_operand.vmem [shape: f32[2,28,32], index: 0, kind: input, shape index: {}]
  %s1 = inlined_call_operand.vmem [shape: f32[56,32], index: 1, kind: output, shape index: {}]
  $region1: #{tile.9} parent=0
    #allocation0 [shape = 'u8[131072]{0}', space=vmem, size = 0x20000, scoped, tag = 'scoped mem for input reshape']
    %s3 = sshllo.u32 0, 2
    %s4 = smul.addr 2, 31
    %s5 = scalar_lea.vmem %s0, %s4
    %v6 = vld [vmem:[%s5] sm:%s3]
    %s7 = scalar_lea.vmem [#allocation0], 248
    %8 = vst [vmem:[%s7] sm:%s3] %v6
    %s9 = smul.addr 2, 30
    %s10 = scalar_lea.vmem %s0, %s9
    %v11 = vld [vmem:[%s10] sm:%s3]
    %s12 = scalar_lea.vmem [#allocation0], 240
    %13 = vst [vmem:[%s12] sm:%s3] %v11
    %s14 = smul.addr 2, 29
    %s15 = scalar_lea.vmem %s0, %s14
    %v16 = vld [vmem:[%s15] sm:%s3]
    %s17 = scalar_lea.vmem [#allocation0], 232
    %18 = vst [vmem:[%s17] sm:%s3] %v16
    %s19 = smul.addr 2, 28
    %s20 = scalar_lea.vmem %s0, %s19
    %v21 = vld [vmem:[%s20] sm:%s3]
    %s22 = scalar_lea.vmem [#allocation0], 224
    %23 = vst [vmem:[%s22] sm:%s3] %v21
    %s24 = smul.addr 2, 27
    %s25 = scalar_lea.vmem %s0, %s24
    %v26 = vld [vmem:[%s25] sm:%s3]
    %s27 = scalar_lea.vmem [#allocation0], 216
    %28 = vst [vmem:[%s27] sm:%s3] %v26
    %s29 = smul.addr 2, 26
    %s30 = scalar_lea.vmem %s0, %s29
    %v31 = vld [vmem:[%s30] sm:%s3]
    %s32 = scalar_lea.vmem [#allocation0], 208
    %33 = vst [vmem:[%s32] sm:%s3] %v31
    %s34 = smul.addr 2, 25
    %s35 = scalar_lea.vmem %s0, %s34
    %v36 = vld [vmem:[%s35] sm:%s3]
    %s37 = scalar_lea.vmem [#allocation0], 200
    %38 = vst [vmem:[%s37] sm:%s3] %v36
    %s39 = smul.addr 2, 24
    %s40 = scalar_lea.vmem %s0, %s39
    %v41 = vld [vmem:[%s40] sm:%s3]
    %s42 = scalar_lea.vmem [#allocation0], 192
    %43 = vst [vmem:[%s42] sm:%s3] %v41
    %s44 = smul.addr 2, 23
    %s45 = scalar_lea.vmem %s0, %s44
    %v46 = vld [vmem:[%s45] sm:%s3]
    %s47 = scalar_lea.vmem [#allocation0], 184
    %48 = vst [vmem:[%s47] sm:%s3] %v46
    %s49 = smul.addr 2, 22
    %s50 = scalar_lea.vmem %s0, %s49
    %v51 = vld [vmem:[%s50] sm:%s3]
    %s52 = scalar_lea.vmem [#allocation0], 176
    %53 = vst [vmem:[%s52] sm:%s3] %v51
    %s54 = smul.addr 2, 21
    %s55 = scalar_lea.vmem %s0, %s54
    %v56 = vld [vmem:[%s55] sm:%s3]
    %s57 = scalar_lea.vmem [#allocation0], 168
    %58 = vst [vmem:[%s57] sm:%s3] %v56
    %s59 = smul.addr 2, 20
    %s60 = scalar_lea.vmem %s0, %s59
    %v61 = vld [vmem:[%s60] sm:%s3]
    %s62 = scalar_lea.vmem [#allocation0], 160
    %63 = vst [vmem:[%s62] sm:%s3] %v61
    %s64 = smul.addr 2, 19
    %s65 = scalar_lea.vmem %s0, %s64
    %v66 = vld [vmem:[%s65] sm:%s3]
    %s67 = scalar_lea.vmem [#allocation0], 152
    %68 = vst [vmem:[%s67] sm:%s3] %v66
    %s69 = smul.addr 2, 18
    %s70 = scalar_lea.vmem %s0, %s69
    %v71 = vld [vmem:[%s70] sm:%s3]
    %s72 = scalar_lea.vmem [#allocation0], 144
    %73 = vst [vmem:[%s72] sm:%s3] %v71
    %s74 = smul.addr 2, 17
    %s75 = scalar_lea.vmem %s0, %s74
    %v76 = vld [vmem:[%s75] sm:%s3]
    %s77 = scalar_lea.vmem [#allocation0], 136
    %78 = vst [vmem:[%s77] sm:%s3] %v76
    %s79 = smul.addr 2, 16
    %s80 = scalar_lea.vmem %s0, %s79
    %v81 = vld [vmem:[%s80] sm:%s3]
    %s82 = scalar_lea.vmem [#allocation0], 128
    %83 = vst [vmem:[%s82] sm:%s3] %v81
    %s84 = smul.addr 2, 15
    %s85 = scalar_lea.vmem %s0, %s84
    %v86 = vld [vmem:[%s85] sm:%s3]
    %s87 = scalar_lea.vmem [#allocation0], 120
    %88 = vst [vmem:[%s87] sm:%s3] %v86
    %s89 = smul.addr 2, 14
    %s90 = scalar_lea.vmem %s0, %s89
    %v91 = vld [vmem:[%s90] sm:%s3]
    %s92 = scalar_lea.vmem [#allocation0], 112
    %93 = vst [vmem:[%s92] sm:%s3] %v91
    %s94 = smul.addr 2, 13
    %s95 = scalar_lea.vmem %s0, %s94
    %v96 = vld [vmem:[%s95] sm:%s3]
    %s97 = scalar_lea.vmem [#allocation0], 104
    %98 = vst [vmem:[%s97] sm:%s3] %v96
    %s99 = smul.addr 2, 12
    %s100 = scalar_lea.vmem %s0, %s99
    %v101 = vld [vmem:[%s100] sm:%s3]
    %s102 = scalar_lea.vmem [#allocation0], 96
    %103 = vst [vmem:[%s102] sm:%s3] %v101
    %s104 = smul.addr 2, 11
    %s105 = scalar_lea.vmem %s0, %s104
    %v106 = vld [vmem:[%s105] sm:%s3]
    %s107 = scalar_lea.vmem [#allocation0], 88
    %108 = vst [vmem:[%s107] sm:%s3] %v106
    %s109 = smul.addr 2, 10
    %s110 = scalar_lea.vmem %s0, %s109
    %v111 = vld [vmem:[%s110] sm:%s3]
    %s112 = scalar_lea.vmem [#allocation0], 80
    %113 = vst [vmem:[%s112] sm:%s3] %v111
    %s114 = smul.addr 2, 9
    %s115 = scalar_lea.vmem %s0, %s114
    %v116 = vld [vmem:[%s115] sm:%s3]
    %s117 = scalar_lea.vmem [#allocation0], 72
    %118 = vst [vmem:[%s117] sm:%s3] %v116
    %s119 = smul.addr 2, 8
    %s120 = scalar_lea.vmem %s0, %s119
    %v121 = vld [vmem:[%s120] sm:%s3]
    %s122 = scalar_lea.vmem [#allocation0], 64
    %123 = vst [vmem:[%s122] sm:%s3] %v121
    %s124 = smul.addr 2, 7
    %s125 = scalar_lea.vmem %s0, %s124
    %v126 = vld [vmem:[%s125] sm:%s3]
    %s127 = scalar_lea.vmem [#allocation0], 56
    %128 = vst [vmem:[%s127] sm:%s3] %v126
    %s129 = smul.addr 2, 6
    %s130 = scalar_lea.vmem %s0, %s129
    %v131 = vld [vmem:[%s130] sm:%s3]
    %s132 = scalar_lea.vmem [#allocation0], 48
    %133 = vst [vmem:[%s132] sm:%s3] %v131
    %s134 = smul.addr 2, 5
    %s135 = scalar_lea.vmem %s0, %s134
    %v136 = vld [vmem:[%s135] sm:%s3]
    %s137 = scalar_lea.vmem [#allocation0], 40
    %138 = vst [vmem:[%s137] sm:%s3] %v136
    %s139 = smul.addr 2, 4
    %s140 = scalar_lea.vmem %s0, %s139
    %v141 = vld [vmem:[%s140] sm:%s3]
    %s142 = scalar_lea.vmem [#allocation0], 32
    %143 = vst [vmem:[%s142] sm:%s3] %v141
    %s144 = smul.addr 2, 3
    %s145 = scalar_lea.vmem %s0, %s144
    %v146 = vld [vmem:[%s145] sm:%s3]
    %s147 = scalar_lea.vmem [#allocation0], 24
    %148 = vst [vmem:[%s147] sm:%s3] %v146
    %s149 = smul.addr 2, 2
    %s150 = scalar_lea.vmem %s0, %s149
    %v151 = vld [vmem:[%s150] sm:%s3]
    %s152 = scalar_lea.vmem [#allocation0], 16
    %153 = vst [vmem:[%s152] sm:%s3] %v151
    %s154 = scalar_lea.vmem %s0, 2
    %v155 = vld [vmem:[%s154] sm:%s3]
    %s156 = scalar_lea.vmem [#allocation0], 8
    %157 = vst [vmem:[%s156] sm:%s3] %v155
    %v158 = vld [vmem:[%s0] sm:%s3]
    %159 = vst [vmem:[#allocation0] sm:%s3] %v158
    %v160 = vld [vmem:[#allocation0] ss:$8 sm:$0xf]
    %v161 = vld [vmem:[#allocation0] ss:$8 sm:$0xf0]
    %vm162 = vcmask 1047556
    %v163 = vsel %vm162, %v161, %v160
    %vm164 = vcmask 228352
    %165 = vst.msk [vmem:[%s1] sm:$0xff] %vm164, %v163
    %s166 = scalar_lea.vmem [#allocation0], 64
    %v167 = vld [vmem:[%s166] ss:$8 sm:$0xf]
    %s168 = scalar_lea.vmem [#allocation0], 64
    %v169 = vld [vmem:[%s168] ss:$8 sm:$0xf0]
    %vm170 = vcmask 1047556
    %v171 = vsel %vm170, %v169, %v167
    %vm172 = vcmask 228352
    %s173 = scalar_lea.vmem %s1, 8
    %174 = vst.msk [vmem:[%s173] sm:$0xff] %vm172, %v171
    %s175 = scalar_lea.vmem [#allocation0], 128
    %v176 = vld [vmem:[%s175] ss:$8 sm:$0xf]
    %s177 = scalar_lea.vmem [#allocation0], 128
    %v178 = vld [vmem:[%s177] ss:$8 sm:$0xf0]
    %vm179 = vcmask 1047556
    %v180 = vsel %vm179, %v178, %v176
    %vm181 = vcmask 228352
    %s182 = scalar_lea.vmem %s1, 16
    %183 = vst.msk [vmem:[%s182] sm:$0xff] %vm181, %v180
    %s184 = scalar_lea.vmem [#allocation0], 192
    %v185 = vld [vmem:[%s184] ss:$8 sm:$0xf]
    %s186 = scalar_lea.vmem [#allocation0], 192
    %v187 = vld [vmem:[%s186] ss:$8 sm:$0xf0]
    %vm188 = vcmask 1047556
    %v189 = vsel %vm188, %v187, %v185
    %vm190 = vcmask 228352
    %s191 = scalar_lea.vmem %s1, 24
    %192 = vst.msk [vmem:[%s191] sm:$0xff] %vm190, %v189
    %s193 = scalar_lea.vmem [#allocation0], 1
    %v194 = vld [vmem:[%s193] ss:$8 sm:$0xf]
    %s195 = scalar_lea.vmem [#allocation0], 1
    %v196 = vld [vmem:[%s195] ss:$8 sm:$0xf0]
    %vm197 = vcmask 1047556
    %v198 = vsel %vm197, %v196, %v194
    %199 = vrot.lane.b32.xlu0 %v198, 28
    %v200 = vpop.permute.xlu0 %199
    %vm201 = vcmask 457952
    %202 = vst.msk [vmem:[%s1] sm:$0xff] %vm201, %v200
    %s203 = scalar_lea.vmem [#allocation0], 65
    %v204 = vld [vmem:[%s203] ss:$8 sm:$0xf]
    %s205 = scalar_lea.vmem [#allocation0], 65
    %v206 = vld [vmem:[%s205] ss:$8 sm:$0xf0]
    %vm207 = vcmask 1047556
    %v208 = vsel %vm207, %v206, %v204
    %209 = vrot.lane.b32.xlu0 %v208, 28
    %v210 = vpop.permute.xlu0 %209
    %vm211 = vcmask 457952
    %s212 = scalar_lea.vmem %s1, 8
    %213 = vst.msk [vmem:[%s212] sm:$0xff] %vm211, %v210
    %s214 = scalar_lea.vmem [#allocation0], 129
    %v215 = vld [vmem:[%s214] ss:$8 sm:$0xf]
    %s216 = scalar_lea.vmem [#allocation0], 129
    %v217 = vld [vmem:[%s216] ss:$8 sm:$0xf0]
    %vm218 = vcmask 1047556
    %v219 = vsel %vm218, %v217, %v215
    %220 = vrot.lane.b32.xlu0 %v219, 28
    %v221 = vpop.permute.xlu0 %220
    %vm222 = vcmask 457952
    %s223 = scalar_lea.vmem %s1, 16
    %224 = vst.msk [vmem:[%s223] sm:$0xff] %vm222, %v221
    %s225 = scalar_lea.vmem [#allocation0], 193
    %v226 = vld [vmem:[%s225] ss:$8 sm:$0xf]
    %s227 = scalar_lea.vmem [#allocation0], 193
    %v228 = vld [vmem:[%s227] ss:$8 sm:$0xf0]
    %vm229 = vcmask 1047556
    %v230 = vsel %vm229, %v228, %v226
    %231 = vrot.lane.b32.xlu0 %v230, 28
    %v232 = vpop.permute.xlu0 %231
    %vm233 = vcmask 457952
    %s234 = scalar_lea.vmem %s1, 24
    %235 = vst.msk [vmem:[%s234] sm:$0xff] %vm233, %v232

// kernel: tf_forward.1
$region0: #{tf_forward.1}
  #allocation0 [shape = 'u32[]', space=smem, size = 0x4, offset = 0x4, fixed_abs, tag = 'smem constant byte address 0x4 - core index']
  #allocation1 [shape = 'u32[144,128]{1,0:T(1,128)}', space=vmem, size = 0x12000, scoped, tag = 'internal scratch']
  #allocation2 [shape = 'f32[56,32]{1,0:T(8,128)}', space=vmem, size = 0x7000, scoped, tag = 'scratch operand']
  %s0 = inlined_call_operand.smem [shape: u32[33], index: -1, kind: input, shape index: {}]
  %s1 = sld [smem:[%s0]]
  %s2 = scalar_lea.smem %s0, 1
  %s3 = sld [smem:[%s2]]
  %s4 = scalar_lea.smem %s0, 2
  %s5 = sld [smem:[%s4]]
  %s6 = scalar_lea.smem %s0, 3
  %s7 = sld [smem:[%s6]]
  %s8 = scalar_lea.smem %s0, 4
  %s9 = sld [smem:[%s8]]
  %s10 = scalar_lea.smem %s0, 5
  %s11 = sld [smem:[%s10]]
  %s12 = scalar_lea.smem %s0, 6
  %s13 = sld [smem:[%s12]]
  %s14 = scalar_lea.smem %s0, 7
  %s15 = sld [smem:[%s14]]
  %s16 = scalar_lea.smem %s0, 8
  %s17 = sld [smem:[%s16]]
  %s18 = scalar_lea.smem %s0, 9
  %s19 = sld [smem:[%s18]]
  %s20 = scalar_lea.smem %s0, 10
  %s21 = sld [smem:[%s20]]
  %s22 = scalar_lea.smem %s0, 11
  %s23 = sld [smem:[%s22]]
  %s24 = scalar_lea.smem %s0, 12
  %s25 = sld [smem:[%s24]]
  %s26 = scalar_lea.smem %s0, 13
  %s27 = sld [smem:[%s26]]
  %s28 = scalar_lea.smem %s0, 14
  %s29 = sld [smem:[%s28]]
  %s30 = scalar_lea.smem %s0, 15
  %s31 = sld [smem:[%s30]]
  %s32 = scalar_lea.smem %s0, 16
  %s33 = sld [smem:[%s32]]
  %s34 = scalar_lea.smem %s0, 17
  %s35 = sld [smem:[%s34]]
  %s36 = scalar_lea.smem %s0, 18
  %s37 = sld [smem:[%s36]]
  %s38 = scalar_lea.smem %s0, 19
  %s39 = sld [smem:[%s38]]
  %s40 = scalar_lea.smem %s0, 20
  %s41 = sld [smem:[%s40]]
  %s42 = scalar_lea.smem %s0, 21
  %s43 = sld [smem:[%s42]]
  %s44 = scalar_lea.smem %s0, 22
  %s45 = sld [smem:[%s44]]
  %s46 = scalar_lea.smem %s0, 23
  %s47 = sld [smem:[%s46]]
  %s48 = scalar_lea.smem %s0, 24
  %s49 = sld [smem:[%s48]]
  %s50 = scalar_lea.smem %s0, 25
  %s51 = sld [smem:[%s50]]
  %s52 = scalar_lea.smem %s0, 26
  %s53 = sld [smem:[%s52]]
  %s54 = scalar_lea.smem %s0, 27
  %s55 = sld [smem:[%s54]]
  %s56 = scalar_lea.smem %s0, 28
  %s57 = sld [smem:[%s56]]
  %s58 = scalar_lea.smem %s0, 29
  %s59 = sld [smem:[%s58]]
  %s60 = scalar_lea.smem %s0, 30
  %s61 = sld [smem:[%s60]]
  %s62 = scalar_lea.smem %s0, 31
  %s63 = sld [smem:[%s62]]
  %s64 = scalar_lea.smem %s0, 32
  %s65 = sld [smem:[%s64]]
  %s66 = sld [smem:[#allocation0]]
  $region169: #{tf_forward.1} parent=0
    _
  %s68 = ssub.s32 1, %s66
  %s69 = scalar_select 0, %s68, %s66
  loop: start=0, step=1, limit=8
  $region2: #{tf_forward.1} parent=0 // loop_pre_header
    _
  $region3: #{tf_forward.1} parent=0 // loop_header
    %s71 = sphi 0, %s75
    %p72 = scmp.ge.s32.totalorder %s71, 8
    %s79 = sphi 0, %s79
    %s81 = sphi 0, %s79
    %s82 = sphi 0, %s81
    %s96 = sphi 0, %s82
    %s100 = sphi 0, %s100
    %s102 = sphi 0, %s100
    %s103 = sphi 0, %s102
    %s117 = sphi 0, %s103
    %s121 = sphi 0, %s121
    %s123 = sphi 0, %s121
    %s124 = sphi 0, %s123
    %s138 = sphi 0, %s124
    %s142 = sphi 0, %s142
    %s144 = sphi 0, %s142
    %s145 = sphi 0, %s144
    %s159 = sphi 0, %s145
    %s163 = sphi 0, %s163
    %s165 = sphi 0, %s163
    %s166 = sphi 0, %s165
    %s180 = sphi 0, %s166
    %s184 = sphi 0, %s184
    %s186 = sphi 0, %s184
    %s187 = sphi 0, %s186
    %s201 = sphi 0, %s187
    %s205 = sphi 0, %s205
    %s207 = sphi 0, %s205
    %s208 = sphi 0, %s207
    %s222 = sphi 0, %s208
    %s228 = sphi 0, %s230
    %s231 = sphi 0, %s228
    %s232 = sphi 0, %s231
    %s248 = sphi 0, %s232
    %s254 = sphi 0, %s256
    %s257 = sphi 0, %s254
    %s258 = sphi 0, %s257
    %s274 = sphi 0, %s258
    %s280 = sphi 0, %s282
    %s283 = sphi 0, %s280
    %s284 = sphi 0, %s283
    %s300 = sphi 0, %s284
    %s306 = sphi 0, %s308
    %s309 = sphi 0, %s306
    %s310 = sphi 0, %s309
    %s326 = sphi 0, %s310
    %s332 = sphi 0, %s334
    %s335 = sphi 0, %s332
    %s336 = sphi 0, %s335
    %s352 = sphi 0, %s336
    %s358 = sphi 0, %s360
    %s361 = sphi 0, %s358
    %s362 = sphi 0, %s361
    %s378 = sphi 0, %s362
    %s384 = sphi 0, %s386
    %s387 = sphi 0, %s384
    %s388 = sphi 0, %s387
    %s404 = sphi 0, %s388
    %s410 = sphi 0, %s412
    %s413 = sphi 0, %s410
    %s414 = sphi 0, %s413
    %s430 = sphi 0, %s414
    %s436 = sphi 0, %s438
    %s439 = sphi 0, %s436
    %s440 = sphi 0, %s439
    %s456 = sphi 0, %s440
    %s462 = sphi 0, %s464
    %s465 = sphi 0, %s462
    %s466 = sphi 0, %s465
    %s482 = sphi 0, %s466
    %s488 = sphi 0, %s490
    %s491 = sphi 0, %s488
    %s492 = sphi 0, %s491
    %s508 = sphi 0, %s492
    %s514 = sphi 0, %s516
    %s517 = sphi 0, %s514
    %s518 = sphi 0, %s517
    %s534 = sphi 0, %s518
    %s540 = sphi 0, %s542
    %s543 = sphi 0, %s540
    %s544 = sphi 0, %s543
    %s560 = sphi 0, %s544
    %s566 = sphi 0, %s568
    %s569 = sphi 0, %s566
    %s570 = sphi 0, %s569
    %s586 = sphi 0, %s570
    %s592 = sphi 0, %s594
    %s595 = sphi 0, %s592
    %s596 = sphi 0, %s595
    %s612 = sphi 0, %s596
    %s616 = sphi 0, %s616
    %s618 = sphi 0, %s616
    %s619 = sphi 0, %s618
    %s633 = sphi 0, %s619
    %s637 = sphi 0, %s637
    %s639 = sphi 0, %s637
    %s640 = sphi 0, %s639
    %s654 = sphi 0, %s640
    %s658 = sphi 0, %s658
    %s660 = sphi 0, %s658
    %s661 = sphi 0, %s660
    %s675 = sphi 0, %s661
    %s679 = sphi 0, %s679
    %s681 = sphi 0, %s679
    %s682 = sphi 0, %s681
    %s696 = sphi 0, %s682
    %s700 = sphi 0, %s700
    %s702 = sphi 0, %s700
    %s703 = sphi 0, %s702
    %s717 = sphi 0, %s703
    %s721 = sphi 0, %s721
    %s723 = sphi 0, %s721
    %s724 = sphi 0, %s723
    %s738 = sphi 0, %s724
    %s742 = sphi 0, %s742
    %s744 = sphi 0, %s742
    %s745 = sphi 0, %s744
    %s759 = sphi 0, %s745
    %s763 = sphi 0, %s763
    %s765 = sphi 0, %s763
    %s766 = sphi 0, %s765
    %s780 = sphi 0, %s766
    %s784 = sphi 0, %s784
    %s786 = sphi 0, %s784
    %s787 = sphi 0, %s786
    %s801 = sphi 0, %s787
    %s805 = sphi 0, %s805
    %s807 = sphi 0, %s805
    %s808 = sphi 0, %s807
    %s822 = sphi 0, %s808
    %s826 = sphi 0, %s826
    %s828 = sphi 0, %s826
    %s829 = sphi 0, %s828
    %s843 = sphi 0, %s829
  $region4: #{tf_forward.1} parent=0 // loop_header_branch
    %74 = sbr.rel (%p72) target = $region8
  $region5: #{tf_forward.1} parent=0 // loop_body
    %s76 = ssub.s32 %s71, 1
    %s77 = ssub.s32 %s71, 2
    %s78 = sadd.s32 %s71, 1
    %s80 = sadd.s32 %s79, 1
    %p83 = scmp.eq.s32.totalorder %s71, 5
    %p84 = scmp.ne.s32.totalorder %s79, %s81
    %p85 = scmp.eq.s32.totalorder %s71, 0
    %p86 = por %p84, %p85
    %p87 = scmp.ne.s32.totalorder %s79, %s81
    %p88 = scmp.eq.s32.totalorder %s76, 5
    %p89 = por %p87, %p88
    %p90 = scmp.ne.s32.totalorder %s81, %s82
    %p91 = scmp.eq.s32.totalorder %s76, 0
    %p92 = por %p90, %p91
    %p93 = scmp.ne.s32.totalorder %s81, %s82
    %p94 = scmp.eq.s32.totalorder %s77, 5
    %p95 = por %p93, %p94
    %p97 = scmp.ne.s32.totalorder %s82, %s96
    %p98 = scmp.eq.s32.totalorder %s77, 0
    %p99 = por %p97, %p98
    %s101 = sadd.s32 %s100, 1
    %p104 = scmp.eq.s32.totalorder %s71, 5
    %p105 = scmp.ne.s32.totalorder %s100, %s102
    %p106 = scmp.eq.s32.totalorder %s71, 0
    %p107 = por %p105, %p106
    %p108 = scmp.ne.s32.totalorder %s100, %s102
    %p109 = scmp.eq.s32.totalorder %s76, 5
    %p110 = por %p108, %p109
    %p111 = scmp.ne.s32.totalorder %s102, %s103
    %p112 = scmp.eq.s32.totalorder %s76, 0
    %p113 = por %p111, %p112
    %p114 = scmp.ne.s32.totalorder %s102, %s103
    %p115 = scmp.eq.s32.totalorder %s77, 5
    %p116 = por %p114, %p115
    %p118 = scmp.ne.s32.totalorder %s103, %s117
    %p119 = scmp.eq.s32.totalorder %s77, 0
    %p120 = por %p118, %p119
    %s122 = sadd.s32 %s121, 1
    %p125 = scmp.eq.s32.totalorder %s71, 5
    %p126 = scmp.ne.s32.totalorder %s121, %s123
    %p127 = scmp.eq.s32.totalorder %s71, 0
    %p128 = por %p126, %p127
    %p129 = scmp.ne.s32.totalorder %s121, %s123
    %p130 = scmp.eq.s32.totalorder %s76, 5
    %p131 = por %p129, %p130
    %p132 = scmp.ne.s32.totalorder %s123, %s124
    %p133 = scmp.eq.s32.totalorder %s76, 0
    %p134 = por %p132, %p133
    %p135 = scmp.ne.s32.totalorder %s123, %s124
    %p136 = scmp.eq.s32.totalorder %s77, 5
    %p137 = por %p135, %p136
    %p139 = scmp.ne.s32.totalorder %s124, %s138
    %p140 = scmp.eq.s32.totalorder %s77, 0
    %p141 = por %p139, %p140
    %s143 = sadd.s32 %s142, 1
    %p146 = scmp.eq.s32.totalorder %s71, 5
    %p147 = scmp.ne.s32.totalorder %s142, %s144
    %p148 = scmp.eq.s32.totalorder %s71, 0
    %p149 = por %p147, %p148
    %p150 = scmp.ne.s32.totalorder %s142, %s144
    %p151 = scmp.eq.s32.totalorder %s76, 5
    %p152 = por %p150, %p151
    %p153 = scmp.ne.s32.totalorder %s144, %s145
    %p154 = scmp.eq.s32.totalorder %s76, 0
    %p155 = por %p153, %p154
    %p156 = scmp.ne.s32.totalorder %s144, %s145
    %p157 = scmp.eq.s32.totalorder %s77, 5
    %p158 = por %p156, %p157
    %p160 = scmp.ne.s32.totalorder %s145, %s159
    %p161 = scmp.eq.s32.totalorder %s77, 0
    %p162 = por %p160, %p161
    %s164 = sadd.s32 %s163, 1
    %p167 = scmp.eq.s32.totalorder %s71, 5
    %p168 = scmp.ne.s32.totalorder %s163, %s165
    %p169 = scmp.eq.s32.totalorder %s71, 0
    %p170 = por %p168, %p169
    %p171 = scmp.ne.s32.totalorder %s163, %s165
    %p172 = scmp.eq.s32.totalorder %s76, 5
    %p173 = por %p171, %p172
    %p174 = scmp.ne.s32.totalorder %s165, %s166
    %p175 = scmp.eq.s32.totalorder %s76, 0
    %p176 = por %p174, %p175
    %p177 = scmp.ne.s32.totalorder %s165, %s166
    %p178 = scmp.eq.s32.totalorder %s77, 5
    %p179 = por %p177, %p178
    %p181 = scmp.ne.s32.totalorder %s166, %s180
    %p182 = scmp.eq.s32.totalorder %s77, 0
    %p183 = por %p181, %p182
    %s185 = sadd.s32 %s184, 1
    %p188 = scmp.eq.s32.totalorder %s71, 5
    %p189 = scmp.ne.s32.totalorder %s184, %s186
    %p190 = scmp.eq.s32.totalorder %s71, 0
    %p191 = por %p189, %p190
    %p192 = scmp.ne.s32.totalorder %s184, %s186
    %p193 = scmp.eq.s32.totalorder %s76, 5
    %p194 = por %p192, %p193
    %p195 = scmp.ne.s32.totalorder %s186, %s187
    %p196 = scmp.eq.s32.totalorder %s76, 0
    %p197 = por %p195, %p196
    %p198 = scmp.ne.s32.totalorder %s186, %s187
    %p199 = scmp.eq.s32.totalorder %s77, 5
    %p200 = por %p198, %p199
    %p202 = scmp.ne.s32.totalorder %s187, %s201
    %p203 = scmp.eq.s32.totalorder %s77, 0
    %p204 = por %p202, %p203
    %s206 = sadd.s32 %s205, 1
    %p209 = scmp.eq.s32.totalorder %s71, 5
    %p210 = scmp.ne.s32.totalorder %s205, %s207
    %p211 = scmp.eq.s32.totalorder %s71, 0
    %p212 = por %p210, %p211
    %p213 = scmp.ne.s32.totalorder %s205, %s207
    %p214 = scmp.eq.s32.totalorder %s76, 5
    %p215 = por %p213, %p214
    %p216 = scmp.ne.s32.totalorder %s207, %s208
    %p217 = scmp.eq.s32.totalorder %s76, 0
    %p218 = por %p216, %p217
    %p219 = scmp.ne.s32.totalorder %s207, %s208
    %p220 = scmp.eq.s32.totalorder %s77, 5
    %p221 = por %p219, %p220
    %p223 = scmp.ne.s32.totalorder %s208, %s222
    %p224 = scmp.eq.s32.totalorder %s77, 0
    %p225 = por %p223, %p224
    %s226 = ssub.s32 %s71, %s78
    %p227 = scmp.eq.s32.totalorder %s226, 0
    %s229 = sadd.s32 %s228, 1
    %s230 = scalar_select %p227, %s228, %s229
    %p233 = pneg %p227
    %p234 = scmp.eq.s32.totalorder %s71, 5
    %p235 = por %p233, %p234
    %p236 = scmp.ne.s32.totalorder %s228, %s231
    %p237 = scmp.eq.s32.totalorder %s71, 0
    %p238 = por %p236, %p237
    %p239 = scmp.ne.s32.totalorder %s228, %s231
    %p240 = scmp.eq.s32.totalorder %s76, 5
    %p241 = por %p239, %p240
    %p242 = scmp.ne.s32.totalorder %s231, %s232
    %p243 = scmp.eq.s32.totalorder %s76, 0
    %p244 = por %p242, %p243
    %p245 = scmp.ne.s32.totalorder %s231, %s232
    %p246 = scmp.eq.s32.totalorder %s77, 5
    %p247 = por %p245, %p246
    %p249 = scmp.ne.s32.totalorder %s232, %s248
    %p250 = scmp.eq.s32.totalorder %s77, 0
    %p251 = por %p249, %p250
    %s252 = ssub.s32 %s71, %s78
    %p253 = scmp.eq.s32.totalorder %s252, 0
    %s255 = sadd.s32 %s254, 1
    %s256 = scalar_select %p253, %s254, %s255
    %p259 = pneg %p253
    %p260 = scmp.eq.s32.totalorder %s71, 5
    %p261 = por %p259, %p260
    %p262 = scmp.ne.s32.totalorder %s254, %s257
    %p263 = scmp.eq.s32.totalorder %s71, 0
    %p264 = por %p262, %p263
    %p265 = scmp.ne.s32.totalorder %s254, %s257
    %p266 = scmp.eq.s32.totalorder %s76, 5
    %p267 = por %p265, %p266
    %p268 = scmp.ne.s32.totalorder %s257, %s258
    %p269 = scmp.eq.s32.totalorder %s76, 0
    %p270 = por %p268, %p269
    %p271 = scmp.ne.s32.totalorder %s257, %s258
    %p272 = scmp.eq.s32.totalorder %s77, 5
    %p273 = por %p271, %p272
    %p275 = scmp.ne.s32.totalorder %s258, %s274
    %p276 = scmp.eq.s32.totalorder %s77, 0
    %p277 = por %p275, %p276
    %s278 = ssub.s32 %s71, %s78
    %p279 = scmp.eq.s32.totalorder %s278, 0
    %s281 = sadd.s32 %s280, 1
    %s282 = scalar_select %p279, %s280, %s281
    %p285 = pneg %p279
    %p286 = scmp.eq.s32.totalorder %s71, 5
    %p287 = por %p285, %p286
    %p288 = scmp.ne.s32.totalorder %s280, %s283
    %p289 = scmp.eq.s32.totalorder %s71, 0
    %p290 = por %p288, %p289
    %p291 = scmp.ne.s32.totalorder %s280, %s283
    %p292 = scmp.eq.s32.totalorder %s76, 5
    %p293 = por %p291, %p292
    %p294 = scmp.ne.s32.totalorder %s283, %s284
    %p295 = scmp.eq.s32.totalorder %s76, 0
    %p296 = por %p294, %p295
    %p297 = scmp.ne.s32.totalorder %s283, %s284
    %p298 = scmp.eq.s32.totalorder %s77, 5
    %p299 = por %p297, %p298
    %p301 = scmp.ne.s32.totalorder %s284, %s300
    %p302 = scmp.eq.s32.totalorder %s77, 0
    %p303 = por %p301, %p302
    %s304 = ssub.s32 %s71, %s78
    %p305 = scmp.eq.s32.totalorder %s304, 0
    %s307 = sadd.s32 %s306, 1
    %s308 = scalar_select %p305, %s306, %s307
    %p311 = pneg %p305
    %p312 = scmp.eq.s32.totalorder %s71, 5
    %p313 = por %p311, %p312
    %p314 = scmp.ne.s32.totalorder %s306, %s309
    %p315 = scmp.eq.s32.totalorder %s71, 0
    %p316 = por %p314, %p315
    %p317 = scmp.ne.s32.totalorder %s306, %s309
    %p318 = scmp.eq.s32.totalorder %s76, 5
    %p319 = por %p317, %p318
    %p320 = scmp.ne.s32.totalorder %s309, %s310
    %p321 = scmp.eq.s32.totalorder %s76, 0
    %p322 = por %p320, %p321
    %p323 = scmp.ne.s32.totalorder %s309, %s310
    %p324 = scmp.eq.s32.totalorder %s77, 5
    %p325 = por %p323, %p324
    %p327 = scmp.ne.s32.totalorder %s310, %s326
    %p328 = scmp.eq.s32.totalorder %s77, 0
    %p329 = por %p327, %p328
    %s330 = ssub.s32 %s71, %s78
    %p331 = scmp.eq.s32.totalorder %s330, 0
    %s333 = sadd.s32 %s332, 1
    %s334 = scalar_select %p331, %s332, %s333
    %p337 = pneg %p331
    %p338 = scmp.eq.s32.totalorder %s71, 5
    %p339 = por %p337, %p338
    %p340 = scmp.ne.s32.totalorder %s332, %s335
    %p341 = scmp.eq.s32.totalorder %s71, 0
    %p342 = por %p340, %p341
    %p343 = scmp.ne.s32.totalorder %s332, %s335
    %p344 = scmp.eq.s32.totalorder %s76, 5
    %p345 = por %p343, %p344
    %p346 = scmp.ne.s32.totalorder %s335, %s336
    %p347 = scmp.eq.s32.totalorder %s76, 0
    %p348 = por %p346, %p347
    %p349 = scmp.ne.s32.totalorder %s335, %s336
    %p350 = scmp.eq.s32.totalorder %s77, 5
    %p351 = por %p349, %p350
    %p353 = scmp.ne.s32.totalorder %s336, %s352
    %p354 = scmp.eq.s32.totalorder %s77, 0
    %p355 = por %p353, %p354
    %s356 = ssub.s32 %s71, %s78
    %p357 = scmp.eq.s32.totalorder %s356, 0
    %s359 = sadd.s32 %s358, 1
    %s360 = scalar_select %p357, %s358, %s359
    %p363 = pneg %p357
    %p364 = scmp.eq.s32.totalorder %s71, 5
    %p365 = por %p363, %p364
    %p366 = scmp.ne.s32.totalorder %s358, %s361
    %p367 = scmp.eq.s32.totalorder %s71, 0
    %p368 = por %p366, %p367
    %p369 = scmp.ne.s32.totalorder %s358, %s361
    %p370 = scmp.eq.s32.totalorder %s76, 5
    %p371 = por %p369, %p370
    %p372 = scmp.ne.s32.totalorder %s361, %s362
    %p373 = scmp.eq.s32.totalorder %s76, 0
    %p374 = por %p372, %p373
    %p375 = scmp.ne.s32.totalorder %s361, %s362
    %p376 = scmp.eq.s32.totalorder %s77, 5
    %p377 = por %p375, %p376
    %p379 = scmp.ne.s32.totalorder %s362, %s378
    %p380 = scmp.eq.s32.totalorder %s77, 0
    %p381 = por %p379, %p380
    %s382 = ssub.s32 %s71, %s78
    %p383 = scmp.eq.s32.totalorder %s382, 0
    %s385 = sadd.s32 %s384, 1
    %s386 = scalar_select %p383, %s384, %s385
    %p389 = pneg %p383
    %p390 = scmp.eq.s32.totalorder %s71, 5
    %p391 = por %p389, %p390
    %p392 = scmp.ne.s32.totalorder %s384, %s387
    %p393 = scmp.eq.s32.totalorder %s71, 0
    %p394 = por %p392, %p393
    %p395 = scmp.ne.s32.totalorder %s384, %s387
    %p396 = scmp.eq.s32.totalorder %s76, 5
    %p397 = por %p395, %p396
    %p398 = scmp.ne.s32.totalorder %s387, %s388
    %p399 = scmp.eq.s32.totalorder %s76, 0
    %p400 = por %p398, %p399
    %p401 = scmp.ne.s32.totalorder %s387, %s388
    %p402 = scmp.eq.s32.totalorder %s77, 5
    %p403 = por %p401, %p402
    %p405 = scmp.ne.s32.totalorder %s388, %s404
    %p406 = scmp.eq.s32.totalorder %s77, 0
    %p407 = por %p405, %p406
    %s408 = ssub.s32 %s71, %s78
    %p409 = scmp.eq.s32.totalorder %s408, 0
    %s411 = sadd.s32 %s410, 1
    %s412 = scalar_select %p409, %s410, %s411
    %p415 = pneg %p409
    %p416 = scmp.eq.s32.totalorder %s71, 5
    %p417 = por %p415, %p416
    %p418 = scmp.ne.s32.totalorder %s410, %s413
    %p419 = scmp.eq.s32.totalorder %s71, 0
    %p420 = por %p418, %p419
    %p421 = scmp.ne.s32.totalorder %s410, %s413
    %p422 = scmp.eq.s32.totalorder %s76, 5
    %p423 = por %p421, %p422
    %p424 = scmp.ne.s32.totalorder %s413, %s414
    %p425 = scmp.eq.s32.totalorder %s76, 0
    %p426 = por %p424, %p425
    %p427 = scmp.ne.s32.totalorder %s413, %s414
    %p428 = scmp.eq.s32.totalorder %s77, 5
    %p429 = por %p427, %p428
    %p431 = scmp.ne.s32.totalorder %s414, %s430
    %p432 = scmp.eq.s32.totalorder %s77, 0
    %p433 = por %p431, %p432
    %s434 = ssub.s32 %s71, %s78
    %p435 = scmp.eq.s32.totalorder %s434, 0
    %s437 = sadd.s32 %s436, 1
    %s438 = scalar_select %p435, %s436, %s437
    %p441 = pneg %p435
    %p442 = scmp.eq.s32.totalorder %s71, 5
    %p443 = por %p441, %p442
    %p444 = scmp.ne.s32.totalorder %s436, %s439
    %p445 = scmp.eq.s32.totalorder %s71, 0
    %p446 = por %p444, %p445
    %p447 = scmp.ne.s32.totalorder %s436, %s439
    %p448 = scmp.eq.s32.totalorder %s76, 5
    %p449 = por %p447, %p448
    %p450 = scmp.ne.s32.totalorder %s439, %s440
    %p451 = scmp.eq.s32.totalorder %s76, 0
    %p452 = por %p450, %p451
    %p453 = scmp.ne.s32.totalorder %s439, %s440
    %p454 = scmp.eq.s32.totalorder %s77, 5
    %p455 = por %p453, %p454
    %p457 = scmp.ne.s32.totalorder %s440, %s456
    %p458 = scmp.eq.s32.totalorder %s77, 0
    %p459 = por %p457, %p458
    %s460 = ssub.s32 %s71, %s78
    %p461 = scmp.eq.s32.totalorder %s460, 0
    %s463 = sadd.s32 %s462, 1
    %s464 = scalar_select %p461, %s462, %s463
    %p467 = pneg %p461
    %p468 = scmp.eq.s32.totalorder %s71, 5
    %p469 = por %p467, %p468
    %p470 = scmp.ne.s32.totalorder %s462, %s465
    %p471 = scmp.eq.s32.totalorder %s71, 0
    %p472 = por %p470, %p471
    %p473 = scmp.ne.s32.totalorder %s462, %s465
    %p474 = scmp.eq.s32.totalorder %s76, 5
    %p475 = por %p473, %p474
    %p476 = scmp.ne.s32.totalorder %s465, %s466
    %p477 = scmp.eq.s32.totalorder %s76, 0
    %p478 = por %p476, %p477
    %p479 = scmp.ne.s32.totalorder %s465, %s466
    %p480 = scmp.eq.s32.totalorder %s77, 5
    %p481 = por %p479, %p480
    %p483 = scmp.ne.s32.totalorder %s466, %s482
    %p484 = scmp.eq.s32.totalorder %s77, 0
    %p485 = por %p483, %p484
    %s486 = ssub.s32 %s71, %s78
    %p487 = scmp.eq.s32.totalorder %s486, 0
    %s489 = sadd.s32 %s488, 1
    %s490 = scalar_select %p487, %s488, %s489
    %p493 = pneg %p487
    %p494 = scmp.eq.s32.totalorder %s71, 5
    %p495 = por %p493, %p494
    %p496 = scmp.ne.s32.totalorder %s488, %s491
    %p497 = scmp.eq.s32.totalorder %s71, 0
    %p498 = por %p496, %p497
    %p499 = scmp.ne.s32.totalorder %s488, %s491
    %p500 = scmp.eq.s32.totalorder %s76, 5
    %p501 = por %p499, %p500
    %p502 = scmp.ne.s32.totalorder %s491, %s492
    %p503 = scmp.eq.s32.totalorder %s76, 0
    %p504 = por %p502, %p503
    %p505 = scmp.ne.s32.totalorder %s491, %s492
    %p506 = scmp.eq.s32.totalorder %s77, 5
    %p507 = por %p505, %p506
    %p509 = scmp.ne.s32.totalorder %s492, %s508
    %p510 = scmp.eq.s32.totalorder %s77, 0
    %p511 = por %p509, %p510
    %s512 = ssub.s32 %s71, %s78
    %p513 = scmp.eq.s32.totalorder %s512, 0
    %s515 = sadd.s32 %s514, 1
    %s516 = scalar_select %p513, %s514, %s515
    %p519 = pneg %p513
    %p520 = scmp.eq.s32.totalorder %s71, 5
    %p521 = por %p519, %p520
    %p522 = scmp.ne.s32.totalorder %s514, %s517
    %p523 = scmp.eq.s32.totalorder %s71, 0
    %p524 = por %p522, %p523
    %p525 = scmp.ne.s32.totalorder %s514, %s517
    %p526 = scmp.eq.s32.totalorder %s76, 5
    %p527 = por %p525, %p526
    %p528 = scmp.ne.s32.totalorder %s517, %s518
    %p529 = scmp.eq.s32.totalorder %s76, 0
    %p530 = por %p528, %p529
    %p531 = scmp.ne.s32.totalorder %s517, %s518
    %p532 = scmp.eq.s32.totalorder %s77, 5
    %p533 = por %p531, %p532
    %p535 = scmp.ne.s32.totalorder %s518, %s534
    %p536 = scmp.eq.s32.totalorder %s77, 0
    %p537 = por %p535, %p536
    %s538 = ssub.s32 %s71, %s78
    %p539 = scmp.eq.s32.totalorder %s538, 0
    %s541 = sadd.s32 %s540, 1
    %s542 = scalar_select %p539, %s540, %s541
    %p545 = pneg %p539
    %p546 = scmp.eq.s32.totalorder %s71, 5
    %p547 = por %p545, %p546
    %p548 = scmp.ne.s32.totalorder %s540, %s543
    %p549 = scmp.eq.s32.totalorder %s71, 0
    %p550 = por %p548, %p549
    %p551 = scmp.ne.s32.totalorder %s540, %s543
    %p552 = scmp.eq.s32.totalorder %s76, 5
    %p553 = por %p551, %p552
    %p554 = scmp.ne.s32.totalorder %s543, %s544
    %p555 = scmp.eq.s32.totalorder %s76, 0
    %p556 = por %p554, %p555
    %p557 = scmp.ne.s32.totalorder %s543, %s544
    %p558 = scmp.eq.s32.totalorder %s77, 5
    %p559 = por %p557, %p558
    %p561 = scmp.ne.s32.totalorder %s544, %s560
    %p562 = scmp.eq.s32.totalorder %s77, 0
    %p563 = por %p561, %p562
    %s564 = ssub.s32 %s71, %s78
    %p565 = scmp.eq.s32.totalorder %s564, 0
    %s567 = sadd.s32 %s566, 1
    %s568 = scalar_select %p565, %s566, %s567
    %p571 = pneg %p565
    %p572 = scmp.eq.s32.totalorder %s71, 5
    %p573 = por %p571, %p572
    %p574 = scmp.ne.s32.totalorder %s566, %s569
    %p575 = scmp.eq.s32.totalorder %s71, 0
    %p576 = por %p574, %p575
    %p577 = scmp.ne.s32.totalorder %s566, %s569
    %p578 = scmp.eq.s32.totalorder %s76, 5
    %p579 = por %p577, %p578
    %p580 = scmp.ne.s32.totalorder %s569, %s570
    %p581 = scmp.eq.s32.totalorder %s76, 0
    %p582 = por %p580, %p581
    %p583 = scmp.ne.s32.totalorder %s569, %s570
    %p584 = scmp.eq.s32.totalorder %s77, 5
    %p585 = por %p583, %p584
    %p587 = scmp.ne.s32.totalorder %s570, %s586
    %p588 = scmp.eq.s32.totalorder %s77, 0
    %p589 = por %p587, %p588
    %s590 = ssub.s32 %s71, %s78
    %p591 = scmp.eq.s32.totalorder %s590, 0
    %s593 = sadd.s32 %s592, 1
    %s594 = scalar_select %p591, %s592, %s593
    %p597 = pneg %p591
    %p598 = scmp.eq.s32.totalorder %s71, 5
    %p599 = por %p597, %p598
    %p600 = scmp.ne.s32.totalorder %s592, %s595
    %p601 = scmp.eq.s32.totalorder %s71, 0
    %p602 = por %p600, %p601
    %p603 = scmp.ne.s32.totalorder %s592, %s595
    %p604 = scmp.eq.s32.totalorder %s76, 5
    %p605 = por %p603, %p604
    %p606 = scmp.ne.s32.totalorder %s595, %s596
    %p607 = scmp.eq.s32.totalorder %s76, 0
    %p608 = por %p606, %p607
    %p609 = scmp.ne.s32.totalorder %s595, %s596
    %p610 = scmp.eq.s32.totalorder %s77, 5
    %p611 = por %p609, %p610
    %p613 = scmp.ne.s32.totalorder %s596, %s612
    %p614 = scmp.eq.s32.totalorder %s77, 0
    %p615 = por %p613, %p614
    %s617 = sadd.s32 %s616, 1
    %p620 = scmp.eq.s32.totalorder %s71, 5
    %p621 = scmp.ne.s32.totalorder %s616, %s618
    %p622 = scmp.eq.s32.totalorder %s71, 0
    %p623 = por %p621, %p622
    %p624 = scmp.ne.s32.totalorder %s616, %s618
    %p625 = scmp.eq.s32.totalorder %s76, 5
    %p626 = por %p624, %p625
    %p627 = scmp.ne.s32.totalorder %s618, %s619
    %p628 = scmp.eq.s32.totalorder %s76, 0
    %p629 = por %p627, %p628
    %p630 = scmp.ne.s32.totalorder %s618, %s619
    %p631 = scmp.eq.s32.totalorder %s77, 5
    %p632 = por %p630, %p631
    %p634 = scmp.ne.s32.totalorder %s619, %s633
    %p635 = scmp.eq.s32.totalorder %s77, 0
    %p636 = por %p634, %p635
    %s638 = sadd.s32 %s637, 1
    %p641 = scmp.eq.s32.totalorder %s71, 5
    %p642 = scmp.ne.s32.totalorder %s637, %s639
    %p643 = scmp.eq.s32.totalorder %s71, 0
    %p644 = por %p642, %p643
    %p645 = scmp.ne.s32.totalorder %s637, %s639
    %p646 = scmp.eq.s32.totalorder %s76, 5
    %p647 = por %p645, %p646
    %p648 = scmp.ne.s32.totalorder %s639, %s640
    %p649 = scmp.eq.s32.totalorder %s76, 0
    %p650 = por %p648, %p649
    %p651 = scmp.ne.s32.totalorder %s639, %s640
    %p652 = scmp.eq.s32.totalorder %s77, 5
    %p653 = por %p651, %p652
    %p655 = scmp.ne.s32.totalorder %s640, %s654
    %p656 = scmp.eq.s32.totalorder %s77, 0
    %p657 = por %p655, %p656
    %s659 = sadd.s32 %s658, 1
    %p662 = scmp.eq.s32.totalorder %s71, 5
    %p663 = scmp.ne.s32.totalorder %s658, %s660
    %p664 = scmp.eq.s32.totalorder %s71, 0
    %p665 = por %p663, %p664
    %p666 = scmp.ne.s32.totalorder %s658, %s660
    %p667 = scmp.eq.s32.totalorder %s76, 5
    %p668 = por %p666, %p667
    %p669 = scmp.ne.s32.totalorder %s660, %s661
    %p670 = scmp.eq.s32.totalorder %s76, 0
    %p671 = por %p669, %p670
    %p672 = scmp.ne.s32.totalorder %s660, %s661
    %p673 = scmp.eq.s32.totalorder %s77, 5
    %p674 = por %p672, %p673
    %p676 = scmp.ne.s32.totalorder %s661, %s675
    %p677 = scmp.eq.s32.totalorder %s77, 0
    %p678 = por %p676, %p677
    %s680 = sadd.s32 %s679, 1
    %p683 = scmp.eq.s32.totalorder %s71, 5
    %p684 = scmp.ne.s32.totalorder %s679, %s681
    %p685 = scmp.eq.s32.totalorder %s71, 0
    %p686 = por %p684, %p685
    %p687 = scmp.ne.s32.totalorder %s679, %s681
    %p688 = scmp.eq.s32.totalorder %s76, 5
    %p689 = por %p687, %p688
    %p690 = scmp.ne.s32.totalorder %s681, %s682
    %p691 = scmp.eq.s32.totalorder %s76, 0
    %p692 = por %p690, %p691
    %p693 = scmp.ne.s32.totalorder %s681, %s682
    %p694 = scmp.eq.s32.totalorder %s77, 5
    %p695 = por %p693, %p694
    %p697 = scmp.ne.s32.totalorder %s682, %s696
    %p698 = scmp.eq.s32.totalorder %s77, 0
    %p699 = por %p697, %p698
    %s701 = sadd.s32 %s700, 1
    %p704 = scmp.eq.s32.totalorder %s71, 5
    %p705 = scmp.ne.s32.totalorder %s700, %s702
    %p706 = scmp.eq.s32.totalorder %s71, 0
    %p707 = por %p705, %p706
    %p708 = scmp.ne.s32.totalorder %s700, %s702
    %p709 = scmp.eq.s32.totalorder %s76, 5
    %p710 = por %p708, %p709
    %p711 = scmp.ne.s32.totalorder %s702, %s703
    %p712 = scmp.eq.s32.totalorder %s76, 0
    %p713 = por %p711, %p712
    %p714 = scmp.ne.s32.totalorder %s702, %s703
    %p715 = scmp.eq.s32.totalorder %s77, 5
    %p716 = por %p714, %p715
    %p718 = scmp.ne.s32.totalorder %s703, %s717
    %p719 = scmp.eq.s32.totalorder %s77, 0
    %p720 = por %p718, %p719
    %s722 = sadd.s32 %s721, 1
    %p725 = scmp.eq.s32.totalorder %s71, 5
    %p726 = scmp.ne.s32.totalorder %s721, %s723
    %p727 = scmp.eq.s32.totalorder %s71, 0
    %p728 = por %p726, %p727
    %p729 = scmp.ne.s32.totalorder %s721, %s723
    %p730 = scmp.eq.s32.totalorder %s76, 5
    %p731 = por %p729, %p730
    %p732 = scmp.ne.s32.totalorder %s723, %s724
    %p733 = scmp.eq.s32.totalorder %s76, 0
    %p734 = por %p732, %p733
    %p735 = scmp.ne.s32.totalorder %s723, %s724
    %p736 = scmp.eq.s32.totalorder %s77, 5
    %p737 = por %p735, %p736
    %p739 = scmp.ne.s32.totalorder %s724, %s738
    %p740 = scmp.eq.s32.totalorder %s77, 0
    %p741 = por %p739, %p740
    %s743 = sadd.s32 %s742, 1
    %p746 = scmp.eq.s32.totalorder %s71, 5
    %p747 = scmp.ne.s32.totalorder %s742, %s744
    %p748 = scmp.eq.s32.totalorder %s71, 0
    %p749 = por %p747, %p748
    %p750 = scmp.ne.s32.totalorder %s742, %s744
    %p751 = scmp.eq.s32.totalorder %s76, 5
    %p752 = por %p750, %p751
    %p753 = scmp.ne.s32.totalorder %s744, %s745
    %p754 = scmp.eq.s32.totalorder %s76, 0
    %p755 = por %p753, %p754
    %p756 = scmp.ne.s32.totalorder %s744, %s745
    %p757 = scmp.eq.s32.totalorder %s77, 5
    %p758 = por %p756, %p757
    %p760 = scmp.ne.s32.totalorder %s745, %s759
    %p761 = scmp.eq.s32.totalorder %s77, 0
    %p762 = por %p760, %p761
    %s764 = sadd.s32 %s763, 1
    %p767 = scmp.eq.s32.totalorder %s71, 5
    %p768 = scmp.ne.s32.totalorder %s763, %s765
    %p769 = scmp.eq.s32.totalorder %s71, 0
    %p770 = por %p768, %p769
    %p771 = scmp.ne.s32.totalorder %s763, %s765
    %p772 = scmp.eq.s32.totalorder %s76, 5
    %p773 = por %p771, %p772
    %p774 = scmp.ne.s32.totalorder %s765, %s766
    %p775 = scmp.eq.s32.totalorder %s76, 0
    %p776 = por %p774, %p775
    %p777 = scmp.ne.s32.totalorder %s765, %s766
    %p778 = scmp.eq.s32.totalorder %s77, 5
    %p779 = por %p777, %p778
    %p781 = scmp.ne.s32.totalorder %s766, %s780
    %p782 = scmp.eq.s32.totalorder %s77, 0
    %p783 = por %p781, %p782
    %s785 = sadd.s32 %s784, 1
    %p788 = scmp.eq.s32.totalorder %s71, 5
    %p789 = scmp.ne.s32.totalorder %s784, %s786
    %p790 = scmp.eq.s32.totalorder %s71, 0
    %p791 = por %p789, %p790
    %p792 = scmp.ne.s32.totalorder %s784, %s786
    %p793 = scmp.eq.s32.totalorder %s76, 5
    %p794 = por %p792, %p793
    %p795 = scmp.ne.s32.totalorder %s786, %s787
    %p796 = scmp.eq.s32.totalorder %s76, 0
    %p797 = por %p795, %p796
    %p798 = scmp.ne.s32.totalorder %s786, %s787
    %p799 = scmp.eq.s32.totalorder %s77, 5
    %p800 = por %p798, %p799
    %p802 = scmp.ne.s32.totalorder %s787, %s801
    %p803 = scmp.eq.s32.totalorder %s77, 0
    %p804 = por %p802, %p803
    %s806 = sadd.s32 %s805, 1
    %p809 = scmp.eq.s32.totalorder %s71, 5
    %p810 = scmp.ne.s32.totalorder %s805, %s807
    %p811 = scmp.eq.s32.totalorder %s71, 0
    %p812 = por %p810, %p811
    %p813 = scmp.ne.s32.totalorder %s805, %s807
    %p814 = scmp.eq.s32.totalorder %s76, 5
    %p815 = por %p813, %p814
    %p816 = scmp.ne.s32.totalorder %s807, %s808
    %p817 = scmp.eq.s32.totalorder %s76, 0
    %p818 = por %p816, %p817
    %p819 = scmp.ne.s32.totalorder %s807, %s808
    %p820 = scmp.eq.s32.totalorder %s77, 5
    %p821 = por %p819, %p820
    %p823 = scmp.ne.s32.totalorder %s808, %s822
    %p824 = scmp.eq.s32.totalorder %s77, 0
    %p825 = por %p823, %p824
    %s827 = sadd.s32 %s826, 1
    %p830 = scmp.eq.s32.totalorder %s71, 5
    %p831 = scmp.ne.s32.totalorder %s826, %s828
    %p832 = scmp.eq.s32.totalorder %s71, 0
    %p833 = por %p831, %p832
    %p834 = scmp.ne.s32.totalorder %s826, %s828
    %p835 = scmp.eq.s32.totalorder %s76, 5
    %p836 = por %p834, %p835
    %p837 = scmp.ne.s32.totalorder %s828, %s829
    %p838 = scmp.eq.s32.totalorder %s76, 0
    %p839 = por %p837, %p838
    %p840 = scmp.ne.s32.totalorder %s828, %s829
    %p841 = scmp.eq.s32.totalorder %s77, 5
    %p842 = por %p840, %p841
    %p844 = scmp.ne.s32.totalorder %s829, %s843
    %p845 = scmp.eq.s32.totalorder %s77, 0
    %p846 = por %p844, %p845
    %p847 = scmp.le.s32.totalorder 1, %s71
    %p848 = scmp.lt.s32.totalorder %s71, 7
    %p849 = pnand %p847, %p848
    %p850 = pneg %p849
    // Predicated region
    $region9: #{tf_forward.1} parent=5 // pred_check
      _
    $region10: #{tf_forward.1} parent=5 // pred_check_branch
      %852 = sbr.rel (%p849) target = $region12
    $region11: #{tf_forward.1} parent=5 // pred_region
      %s853 = ssub.s32 %s71, 1
      // Predicated region
      $region13: #{tf_forward.1} parent=11 // pred_check
        %p854 = pneg %p92
      $region14: #{tf_forward.1} parent=11 // pred_check_branch
        %856 = sbr.rel (%p854) target = $region16
      $region15: #{tf_forward.1} parent=11 // pred_region
        _
      $region16: #{tf_forward.1} parent=11 // pred_fallthru
        _
      // Predicated region
      $region17: #{tf_forward.1} parent=11 // pred_check
        %p857 = pneg %p113
      $region18: #{tf_forward.1} parent=11 // pred_check_branch
        %859 = sbr.rel (%p857) target = $region20
      $region19: #{tf_forward.1} parent=11 // pred_region
        _
      $region20: #{tf_forward.1} parent=11 // pred_fallthru
        _
      // Predicated region
      $region21: #{tf_forward.1} parent=11 // pred_check
        %p860 = pneg %p134
      $region22: #{tf_forward.1} parent=11 // pred_check_branch
        %862 = sbr.rel (%p860) target = $region24
      $region23: #{tf_forward.1} parent=11 // pred_region
        _
      $region24: #{tf_forward.1} parent=11 // pred_fallthru
        _
      // Predicated region
      $region25: #{tf_forward.1} parent=11 // pred_check
        %p863 = pneg %p155
      $region26: #{tf_forward.1} parent=11 // pred_check_branch
        %865 = sbr.rel (%p863) target = $region28
      $region27: #{tf_forward.1} parent=11 // pred_region
        _
      $region28: #{tf_forward.1} parent=11 // pred_fallthru
        _
      // Predicated region
      $region29: #{tf_forward.1} parent=11 // pred_check
        %p866 = pneg %p176
      $region30: #{tf_forward.1} parent=11 // pred_check_branch
        %868 = sbr.rel (%p866) target = $region32
      $region31: #{tf_forward.1} parent=11 // pred_region
        _
      $region32: #{tf_forward.1} parent=11 // pred_fallthru
        _
      // Predicated region
      $region33: #{tf_forward.1} parent=11 // pred_check
        %p869 = pneg %p197
      $region34: #{tf_forward.1} parent=11 // pred_check_branch
        %871 = sbr.rel (%p869) target = $region36
      $region35: #{tf_forward.1} parent=11 // pred_region
        _
      $region36: #{tf_forward.1} parent=11 // pred_fallthru
        _
      // Predicated region
      $region37: #{tf_forward.1} parent=11 // pred_check
        %p872 = pneg %p218
      $region38: #{tf_forward.1} parent=11 // pred_check_branch
        %874 = sbr.rel (%p872) target = $region40
      $region39: #{tf_forward.1} parent=11 // pred_region
        _
      $region40: #{tf_forward.1} parent=11 // pred_fallthru
        _
      // Predicated region
      $region41: #{tf_forward.1} parent=11 // pred_check
        %p875 = pneg %p629
      $region42: #{tf_forward.1} parent=11 // pred_check_branch
        %877 = sbr.rel (%p875) target = $region44
      $region43: #{tf_forward.1} parent=11 // pred_region
        _
      $region44: #{tf_forward.1} parent=11 // pred_fallthru
        _
      // Predicated region
      $region45: #{tf_forward.1} parent=11 // pred_check
        %p878 = pneg %p650
      $region46: #{tf_forward.1} parent=11 // pred_check_branch
        %880 = sbr.rel (%p878) target = $region48
      $region47: #{tf_forward.1} parent=11 // pred_region
        _
      $region48: #{tf_forward.1} parent=11 // pred_fallthru
        _
      // Predicated region
      $region49: #{tf_forward.1} parent=11 // pred_check
        %p881 = pneg %p671
      $region50: #{tf_forward.1} parent=11 // pred_check_branch
        %883 = sbr.rel (%p881) target = $region52
      $region51: #{tf_forward.1} parent=11 // pred_region
        _
      $region52: #{tf_forward.1} parent=11 // pred_fallthru
        _
      // Predicated region
      $region53: #{tf_forward.1} parent=11 // pred_check
        %p884 = pneg %p692
      $region54: #{tf_forward.1} parent=11 // pred_check_branch
        %886 = sbr.rel (%p884) target = $region56
      $region55: #{tf_forward.1} parent=11 // pred_region
        _
      $region56: #{tf_forward.1} parent=11 // pred_fallthru
        _
      // Predicated region
      $region57: #{tf_forward.1} parent=11 // pred_check
        %p887 = pneg %p713
      $region58: #{tf_forward.1} parent=11 // pred_check_branch
        %889 = sbr.rel (%p887) target = $region60
      $region59: #{tf_forward.1} parent=11 // pred_region
        _
      $region60: #{tf_forward.1} parent=11 // pred_fallthru
        _
      // Predicated region
      $region61: #{tf_forward.1} parent=11 // pred_check
        %p890 = pneg %p734
      $region62: #{tf_forward.1} parent=11 // pred_check_branch
        %892 = sbr.rel (%p890) target = $region64
      $region63: #{tf_forward.1} parent=11 // pred_region
        _
      $region64: #{tf_forward.1} parent=11 // pred_fallthru
        _
      // Predicated region
      $region65: #{tf_forward.1} parent=11 // pred_check
        %p893 = pneg %p755
      $region66: #{tf_forward.1} parent=11 // pred_check_branch
        %895 = sbr.rel (%p893) target = $region68
      $region67: #{tf_forward.1} parent=11 // pred_region
        _
      $region68: #{tf_forward.1} parent=11 // pred_fallthru
        _
      // Predicated region
      $region69: #{tf_forward.1} parent=11 // pred_check
        %p896 = pneg %p776
      $region70: #{tf_forward.1} parent=11 // pred_check_branch
        %898 = sbr.rel (%p896) target = $region72
      $region71: #{tf_forward.1} parent=11 // pred_region
        _
      $region72: #{tf_forward.1} parent=11 // pred_fallthru
        _
      // Predicated region
      $region73: #{tf_forward.1} parent=11 // pred_check
        %p899 = pneg %p797
      $region74: #{tf_forward.1} parent=11 // pred_check_branch
        %901 = sbr.rel (%p899) target = $region76
      $region75: #{tf_forward.1} parent=11 // pred_region
        _
      $region76: #{tf_forward.1} parent=11 // pred_fallthru
        _
      // Predicated region
      $region77: #{tf_forward.1} parent=11 // pred_check
        %p902 = pneg %p818
      $region78: #{tf_forward.1} parent=11 // pred_check_branch
        %904 = sbr.rel (%p902) target = $region80
      $region79: #{tf_forward.1} parent=11 // pred_region
        _
      $region80: #{tf_forward.1} parent=11 // pred_fallthru
        _
    $region12: #{tf_forward.1} parent=5 // pred_fallthru
      _
    %p905 = scmp.lt.s32.totalorder %s71, 6
    // Predicated region
    $region81: #{tf_forward.1} parent=5 // pred_check
      %p906 = pneg %p905
    $region82: #{tf_forward.1} parent=5 // pred_check_branch
      %908 = sbr.rel (%p906) target = $region84
    $region83: #{tf_forward.1} parent=5 // pred_region
      // Predicated region
      $region85: #{tf_forward.1} parent=83 // pred_check
        %p909 = pneg %p238
      $region86: #{tf_forward.1} parent=83 // pred_check_branch
        %911 = sbr.rel (%p909) target = $region88
      $region87: #{tf_forward.1} parent=83 // pred_region
        %p912 = scmp.lt.s32.totalorder %s71, 5
        %s913 = scalar_select %p912, %s71, 5
        %s914 = scalar_lea.vmem %s15, %s913
      $region88: #{tf_forward.1} parent=83 // pred_fallthru
        _
      // Predicated region
      $region89: #{tf_forward.1} parent=83 // pred_check
        %p915 = pneg %p264
      $region90: #{tf_forward.1} parent=83 // pred_check_branch
        %917 = sbr.rel (%p915) target = $region92
      $region91: #{tf_forward.1} parent=83 // pred_region
        %p918 = scmp.lt.s32.totalorder %s71, 5
        %s919 = scalar_select %p918, %s71, 5
        %s920 = scalar_lea.vmem %s17, %s919
      $region92: #{tf_forward.1} parent=83 // pred_fallthru
        _
      // Predicated region
      $region93: #{tf_forward.1} parent=83 // pred_check
        %p921 = pneg %p290
      $region94: #{tf_forward.1} parent=83 // pred_check_branch
        %923 = sbr.rel (%p921) target = $region96
      $region95: #{tf_forward.1} parent=83 // pred_region
        %p924 = scmp.lt.s32.totalorder %s71, 5
        %s925 = scalar_select %p924, %s71, 5
        %s926 = smul.addr %s925, 4
        %s927 = smul.addr %s926, 8
        %s928 = scalar_lea.vmem %s19, %s927
      $region96: #{tf_forward.1} parent=83 // pred_fallthru
        _
      // Predicated region
      $region97: #{tf_forward.1} parent=83 // pred_check
        %p929 = pneg %p316
      $region98: #{tf_forward.1} parent=83 // pred_check_branch
        %931 = sbr.rel (%p929) target = $region100
      $region99: #{tf_forward.1} parent=83 // pred_region
        %p932 = scmp.lt.s32.totalorder %s71, 5
        %s933 = scalar_select %p932, %s71, 5
        %s934 = scalar_lea.vmem %s21, %s933
      $region100: #{tf_forward.1} parent=83 // pred_fallthru
        _
      // Predicated region
      $region101: #{tf_forward.1} parent=83 // pred_check
        %p935 = pneg %p342
      $region102: #{tf_forward.1} parent=83 // pred_check_branch
        %937 = sbr.rel (%p935) target = $region104
      $region103: #{tf_forward.1} parent=83 // pred_region
        %p938 = scmp.lt.s32.totalorder %s71, 5
        %s939 = scalar_select %p938, %s71, 5
        %s940 = smul.addr %s939, 4
        %s941 = smul.addr %s940, 8
        %s942 = scalar_lea.vmem %s23, %s941
      $region104: #{tf_forward.1} parent=83 // pred_fallthru
        _
      // Predicated region
      $region105: #{tf_forward.1} parent=83 // pred_check
        %p943 = pneg %p368
      $region106: #{tf_forward.1} parent=83 // pred_check_branch
        %945 = sbr.rel (%p943) target = $region108
      $region107: #{tf_forward.1} parent=83 // pred_region
        %p946 = scmp.lt.s32.totalorder %s71, 5
        %s947 = scalar_select %p946, %s71, 5
        %s948 = scalar_lea.vmem %s25, %s947
      $region108: #{tf_forward.1} parent=83 // pred_fallthru
        _
      // Predicated region
      $region109: #{tf_forward.1} parent=83 // pred_check
        %p949 = pneg %p394
      $region110: #{tf_forward.1} parent=83 // pred_check_branch
        %951 = sbr.rel (%p949) target = $region112
      $region111: #{tf_forward.1} parent=83 // pred_region
        %p952 = scmp.lt.s32.totalorder %s71, 5
        %s953 = scalar_select %p952, %s71, 5
        %s954 = smul.addr %s953, 4
        %s955 = smul.addr %s954, 8
        %s956 = scalar_lea.vmem %s27, %s955
      $region112: #{tf_forward.1} parent=83 // pred_fallthru
        _
      // Predicated region
      $region113: #{tf_forward.1} parent=83 // pred_check
        %p957 = pneg %p420
      $region114: #{tf_forward.1} parent=83 // pred_check_branch
        %959 = sbr.rel (%p957) target = $region116
      $region115: #{tf_forward.1} parent=83 // pred_region
        %p960 = scmp.lt.s32.totalorder %s71, 5
        %s961 = scalar_select %p960, %s71, 5
        %s962 = scalar_lea.vmem %s29, %s961
      $region116: #{tf_forward.1} parent=83 // pred_fallthru
        _
      // Predicated region
      $region117: #{tf_forward.1} parent=83 // pred_check
        %p963 = pneg %p446
      $region118: #{tf_forward.1} parent=83 // pred_check_branch
        %965 = sbr.rel (%p963) target = $region120
      $region119: #{tf_forward.1} parent=83 // pred_region
        %p966 = scmp.lt.s32.totalorder %s71, 5
        %s967 = scalar_select %p966, %s71, 5
        %s968 = smul.addr %s967, 4
        %s969 = smul.addr %s968, 8
        %s970 = scalar_lea.vmem %s31, %s969
      $region120: #{tf_forward.1} parent=83 // pred_fallthru
        _
      // Predicated region
      $region121: #{tf_forward.1} parent=83 // pred_check
        %p971 = pneg %p472
      $region122: #{tf_forward.1} parent=83 // pred_check_branch
        %973 = sbr.rel (%p971) target = $region124
      $region123: #{tf_forward.1} parent=83 // pred_region
        %p974 = scmp.lt.s32.totalorder %s71, 5
        %s975 = scalar_select %p974, %s71, 5
        %s976 = scalar_lea.vmem %s33, %s975
      $region124: #{tf_forward.1} parent=83 // pred_fallthru
        _
      // Predicated region
      $region125: #{tf_forward.1} parent=83 // pred_check
        %p977 = pneg %p498
      $region126: #{tf_forward.1} parent=83 // pred_check_branch
        %979 = sbr.rel (%p977) target = $region128
      $region127: #{tf_forward.1} parent=83 // pred_region
        %p980 = scmp.lt.s32.totalorder %s71, 5
        %s981 = scalar_select %p980, %s71, 5
        %s982 = scalar_lea.vmem %s35, %s981
      $region128: #{tf_forward.1} parent=83 // pred_fallthru
        _
      // Predicated region
      $region129: #{tf_forward.1} parent=83 // pred_check
        %p983 = pneg %p524
      $region130: #{tf_forward.1} parent=83 // pred_check_branch
        %985 = sbr.rel (%p983) target = $region132
      $region131: #{tf_forward.1} parent=83 // pred_region
        %p986 = scmp.lt.s32.totalorder %s71, 5
        %s987 = scalar_select %p986, %s71, 5
        %s988 = smul.addr %s987, 64
        %s989 = smul.addr %s988, 4
        %s990 = scalar_lea.vmem %s37, %s989
      $region132: #{tf_forward.1} parent=83 // pred_fallthru
        _
      // Predicated region
      $region133: #{tf_forward.1} parent=83 // pred_check
        %p991 = pneg %p550
      $region134: #{tf_forward.1} parent=83 // pred_check_branch
        %993 = sbr.rel (%p991) target = $region136
      $region135: #{tf_forward.1} parent=83 // pred_region
        %p994 = scmp.lt.s32.totalorder %s71, 5
        %s995 = scalar_select %p994, %s71, 5
        %s996 = smul.addr %s995, 16
        %s997 = scalar_lea.vmem %s39, %s996
      $region136: #{tf_forward.1} parent=83 // pred_fallthru
        _
      // Predicated region
      $region137: #{tf_forward.1} parent=83 // pred_check
        %p998 = pneg %p576
      $region138: #{tf_forward.1} parent=83 // pred_check_branch
        %1000 = sbr.rel (%p998) target = $region140
      $region139: #{tf_forward.1} parent=83 // pred_region
        %p1001 = scmp.lt.s32.totalorder %s71, 5
        %s1002 = scalar_select %p1001, %s71, 5
        %s1003 = smul.addr %s1002, 256
        %s1004 = smul.addr %s1003, 4
        %s1005 = scalar_lea.vmem %s41, %s1004
      $region140: #{tf_forward.1} parent=83 // pred_fallthru
        _
      // Predicated region
      $region141: #{tf_forward.1} parent=83 // pred_check
        %p1006 = pneg %p602
      $region142: #{tf_forward.1} parent=83 // pred_check_branch
        %1008 = sbr.rel (%p1006) target = $region144
      $region143: #{tf_forward.1} parent=83 // pred_region
        %p1009 = scmp.lt.s32.totalorder %s71, 5
        %s1010 = scalar_select %p1009, %s71, 5
        %s1011 = scalar_lea.vmem %s43, %s1010
      $region144: #{tf_forward.1} parent=83 // pred_fallthru
        _
    $region84: #{tf_forward.1} parent=5 // pred_fallthru
      _
    %p1012 = scmp.le.s32.totalorder 1, %s71
    %p1013 = scmp.lt.s32.totalorder %s71, 7
    %p1014 = pnand %p1012, %p1013
    %p1015 = pneg %p1014
    // Predicated region
    $region145: #{tf_forward.1} parent=5 // pred_check
      _
    $region146: #{tf_forward.1} parent=5 // pred_check_branch
      %1017 = sbr.rel (%p1014) target = $region148
    $region147: #{tf_forward.1} parent=5 // pred_region
      %s1018 = ssub.s32 %s71, 1
      %p1019 = pneg %p92
      %p1020 = pneg %p89
      %p1021 = pneg %p113
      %p1022 = pneg %p110
      %p1023 = pneg %p134
      %p1024 = pneg %p131
      %p1025 = pneg %p155
      %p1026 = pneg %p152
      %p1027 = pneg %p176
      %p1028 = pneg %p173
      %p1029 = pneg %p197
      %p1030 = pneg %p194
      %p1031 = pneg %p218
      %p1032 = pneg %p215
      %p1033 = scmp.lt.s32.totalorder %s76, 5
      %s1034 = scalar_select %p1033, %s76, 5
      %s1035 = scalar_lea.vmem %s15, %s1034
      %p1036 = pneg %p244
      %p1037 = pneg %p241
      %p1038 = scmp.lt.s32.totalorder %s76, 5
      %s1039 = scalar_select %p1038, %s76, 5
      %s1040 = scalar_lea.vmem %s17, %s1039
      %p1041 = pneg %p270
      %p1042 = pneg %p267
      %p1043 = scmp.lt.s32.totalorder %s76, 5
      %s1044 = scalar_select %p1043, %s76, 5
      %s1045 = smul.addr %s1044, 4
      %s1046 = smul.addr %s1045, 8
      %s1047 = scalar_lea.vmem %s19, %s1046
      %p1048 = pneg %p296
      %p1049 = pneg %p293
      %p1050 = scmp.lt.s32.totalorder %s76, 5
      %s1051 = scalar_select %p1050, %s76, 5
      %s1052 = scalar_lea.vmem %s21, %s1051
      %p1053 = pneg %p322
      %p1054 = pneg %p319
      %p1055 = scmp.lt.s32.totalorder %s76, 5
      %s1056 = scalar_select %p1055, %s76, 5
      %s1057 = smul.addr %s1056, 4
      %s1058 = smul.addr %s1057, 8
      %s1059 = scalar_lea.vmem %s23, %s1058
      %p1060 = pneg %p348
      %p1061 = pneg %p345
      %p1062 = scmp.lt.s32.totalorder %s76, 5
      %s1063 = scalar_select %p1062, %s76, 5
      %s1064 = scalar_lea.vmem %s25, %s1063
      %p1065 = pneg %p374
      %p1066 = pneg %p371
      %p1067 = scmp.lt.s32.totalorder %s76, 5
      %s1068 = scalar_select %p1067, %s76, 5
      %s1069 = smul.addr %s1068, 4
      %s1070 = smul.addr %s1069, 8
      %s1071 = scalar_lea.vmem %s27, %s1070
      %p1072 = pneg %p400
      %p1073 = pneg %p397
      %p1074 = scmp.lt.s32.totalorder %s76, 5
      %s1075 = scalar_select %p1074, %s76, 5
      %s1076 = scalar_lea.vmem %s29, %s1075
      %p1077 = pneg %p426
      %p1078 = pneg %p423
      %p1079 = scmp.lt.s32.totalorder %s76, 5
      %s1080 = scalar_select %p1079, %s76, 5
      %s1081 = smul.addr %s1080, 4
      %s1082 = smul.addr %s1081, 8
      %s1083 = scalar_lea.vmem %s31, %s1082
      %p1084 = pneg %p452
      %p1085 = pneg %p449
      %p1086 = scmp.lt.s32.totalorder %s76, 5
      %s1087 = scalar_select %p1086, %s76, 5
      %s1088 = scalar_lea.vmem %s33, %s1087
      %p1089 = pneg %p478
      %p1090 = pneg %p475
      %p1091 = scmp.lt.s32.totalorder %s76, 5
      %s1092 = scalar_select %p1091, %s76, 5
      %s1093 = scalar_lea.vmem %s35, %s1092
      %p1094 = pneg %p504
      %p1095 = pneg %p501
      %p1096 = scmp.lt.s32.totalorder %s76, 5
      %s1097 = scalar_select %p1096, %s76, 5
      %s1098 = smul.addr %s1097, 64
      %s1099 = smul.addr %s1098, 4
      %s1100 = scalar_lea.vmem %s37, %s1099
      %p1101 = pneg %p530
      %p1102 = pneg %p527
      %p1103 = scmp.lt.s32.totalorder %s76, 5
      %s1104 = scalar_select %p1103, %s76, 5
      %s1105 = smul.addr %s1104, 16
      %s1106 = scalar_lea.vmem %s39, %s1105
      %p1107 = pneg %p556
      %p1108 = pneg %p553
      %p1109 = scmp.lt.s32.totalorder %s76, 5
      %s1110 = scalar_select %p1109, %s76, 5
      %s1111 = smul.addr %s1110, 256
      %s1112 = smul.addr %s1111, 4
      %s1113 = scalar_lea.vmem %s41, %s1112
      %p1114 = pneg %p582
      %p1115 = pneg %p579
      %p1116 = scmp.lt.s32.totalorder %s76, 5
      %s1117 = scalar_select %p1116, %s76, 5
      %s1118 = scalar_lea.vmem %s43, %s1117
      %p1119 = pneg %p608
      %p1120 = pneg %p605
      %p1121 = pneg %p629
      %p1122 = pneg %p626
      %p1123 = pneg %p650
      %p1124 = pneg %p647
      %p1125 = pneg %p671
      %p1126 = pneg %p668
      %p1127 = pneg %p692
      %p1128 = pneg %p689
      %p1129 = pneg %p713
      %p1130 = pneg %p710
      %p1131 = pneg %p734
      %p1132 = pneg %p731
      %p1133 = pneg %p755
      %p1134 = pneg %p752
      %p1135 = pneg %p776
      %p1136 = pneg %p773
      %p1137 = pneg %p797
      %p1138 = pneg %p794
      %p1139 = pneg %p818
      %p1140 = pneg %p815
      %p1141 = pneg %p839
      %p1142 = pneg %p836
      %p1143 = scmp.lt.s32.totalorder %s76, 5
      %s1144 = scalar_select %p1143, %s76, 5
      %s1145 = scalar_lea.vmem %s15, %s1144
      %p1146 = scmp.lt.s32.totalorder %s76, 5
      %s1147 = scalar_select %p1146, %s76, 5
      %s1148 = scalar_lea.vmem %s17, %s1147
      %p1149 = scmp.lt.s32.totalorder %s76, 5
      %s1150 = scalar_select %p1149, %s76, 5
      %s1151 = smul.addr %s1150, 4
      %s1152 = smul.addr %s1151, 8
      %s1153 = scalar_lea.vmem %s19, %s1152
      %p1154 = scmp.lt.s32.totalorder %s76, 5
      %s1155 = scalar_select %p1154, %s76, 5
      %s1156 = scalar_lea.vmem %s21, %s1155
      %p1157 = scmp.lt.s32.totalorder %s76, 5
      %s1158 = scalar_select %p1157, %s76, 5
      %s1159 = smul.addr %s1158, 4
      %s1160 = smul.addr %s1159, 8
      %s1161 = scalar_lea.vmem %s23, %s1160
      %p1162 = scmp.lt.s32.totalorder %s76, 5
      %s1163 = scalar_select %p1162, %s76, 5
      %s1164 = scalar_lea.vmem %s25, %s1163
      %p1165 = scmp.lt.s32.totalorder %s76, 5
      %s1166 = scalar_select %p1165, %s76, 5
      %s1167 = smul.addr %s1166, 4
      %s1168 = smul.addr %s1167, 8
      %s1169 = scalar_lea.vmem %s27, %s1168
      %p1170 = scmp.lt.s32.totalorder %s76, 5
      %s1171 = scalar_select %p1170, %s76, 5
      %s1172 = scalar_lea.vmem %s29, %s1171
      %p1173 = scmp.lt.s32.totalorder %s76, 5
      %s1174 = scalar_select %p1173, %s76, 5
      %s1175 = smul.addr %s1174, 4
      %s1176 = smul.addr %s1175, 8
      %s1177 = scalar_lea.vmem %s31, %s1176
      %p1178 = scmp.lt.s32.totalorder %s76, 5
      %s1179 = scalar_select %p1178, %s76, 5
      %s1180 = scalar_lea.vmem %s33, %s1179
      %p1181 = scmp.lt.s32.totalorder %s76, 5
      %s1182 = scalar_select %p1181, %s76, 5
      %s1183 = scalar_lea.vmem %s35, %s1182
      %p1184 = scmp.lt.s32.totalorder %s76, 5
      %s1185 = scalar_select %p1184, %s76, 5
      %s1186 = smul.addr %s1185, 64
      %s1187 = smul.addr %s1186, 4
      %s1188 = scalar_lea.vmem %s37, %s1187
      %p1189 = scmp.lt.s32.totalorder %s76, 5
      %s1190 = scalar_select %p1189, %s76, 5
      %s1191 = smul.addr %s1190, 16
      %s1192 = scalar_lea.vmem %s39, %s1191
      %p1193 = scmp.lt.s32.totalorder %s76, 5
      %s1194 = scalar_select %p1193, %s76, 5
      %s1195 = smul.addr %s1194, 256
      %s1196 = smul.addr %s1195, 4
      %s1197 = scalar_lea.vmem %s41, %s1196
      %p1198 = scmp.lt.s32.totalorder %s76, 5
      %s1199 = scalar_select %p1198, %s76, 5
      %s1200 = scalar_lea.vmem %s43, %s1199
      %p1202 = scmp.eq.s32.totalorder %s76, 0
      // Predicated region
      $region149: #{tf_forward.1} parent=147 // pred_check
        %p1203 = pneg %p1202
      $region150: #{tf_forward.1} parent=147 // pred_check_branch
        %1205 = sbr.rel (%p1203) target = $region152
      $region151: #{tf_forward.1} parent=147 // pred_region
        %v1206 = vld [vmem:[%s1] sm:$0xff]
        %v1207 = vld [vmem:[%s1 + $0x8] sm:$0xff]
        %v1208 = vld [vmem:[%s1 + $0x10] sm:$0xff]
        %v1209 = vld [vmem:[%s1 + $0x18] sm:$0xff]
        %v1210 = vld [vmem:[%s1 + $0x20] sm:$0xff]
        %v1211 = vld [vmem:[%s1 + $0x28] sm:$0xff]
        %v1212 = vld [vmem:[%s1 + $0x30] sm:$0xff]
        %v1213 = vld [vmem:[%s7] sm:$0xff]
        %v1214 = vld [vmem:[%s7 + $0x8] sm:$0xff]
        %v1215 = vld [vmem:[%s7 + $0x10] sm:$0x3f]
        %v1216 = vld [vmem:[%s9] sm:$0x1]
        %v1218 = vlaneseq
        %v1219 = vshrl.u32 %v1218, 7
        %v1220 = vsub.s32 0, %v1219
        %v1221 = vrot.slane %v1216, %v1220
        %vm1223 = vcmask 179200
        %v1225 = vsel %vm1223, %v1206, 0
        %v1228 = vsel %vm1223, %v1207, 0
        %v1231 = vsel %vm1223, %v1208, 0
        %v1234 = vsel %vm1223, %v1209, 0
        %v1237 = vsel %vm1223, %v1210, 0
        %v1240 = vsel %vm1223, %v1211, 0
        %v1243 = vsel %vm1223, %v1212, 0
        %vm1245 = vcmask 1045504
        %v1247 = vsel %vm1245, %v1215, 0
        %1249 = vmatprep.subr.mxu0 0.0
        %1250 = vmatpush1.msra.mxu0 %v1213
        %1251 = vmatprep.subr.mxu0 0.0
        %1252 = vmatpush1.msra.mxu0 %v1214
        %1253 = vmatprep.subr.mxu0 0.0
        %1254 = vmatpush1.msra.mxu0 %v1247
        %1255 = vmatprep.subr.mxu0 0.0
        %1256 = vmatpush1.msra.mxu0 0.0
        %1257 = vmatprep.subr.mxu0 0.0
        %1258 = vmatpush1.msra.mxu0 0.0
        %1259 = vmatprep.subr.mxu0 0.0
        %1260 = vmatpush1.msra.mxu0 0.0
        %1261 = vmatprep.subr.mxu0 0.0
        %1262 = vmatpush1.msra.mxu0 0.0
        %1263 = vmatprep.subr.mxu0 0.0
        %1264 = vmatpush1.msra.mxu0 0.0
        %1265 = vmatprep.subr.mxu0 0.0
        %1266 = vmatpush1.msra.mxu0 0.0
        %1267 = vmatprep.subr.mxu0 0.0
        %1268 = vmatpush1.msra.mxu0 0.0
        %1269 = vmatprep.subr.mxu0 0.0
        %1270 = vmatpush1.msra.mxu0 0.0
        %1271 = vmatprep.subr.mxu0 0.0
        %1272 = vmatpush1.msra.mxu0 0.0
        %1273 = vmatprep.subr.mxu0 0.0
        %1274 = vmatpush1.msra.mxu0 0.0
        %1275 = vmatprep.subr.mxu0 0.0
        %1276 = vmatpush1.msra.mxu0 0.0
        %1277 = vmatprep.subr.mxu0 0.0
        %1278 = vmatpush1.msra.mxu0 0.0
        %1279 = vmatprep.subr.mxu0 0.0
        %1280 = vmatpush1.msra.mxu0 0.0
        %1281 = vmatprep.subr.mxu0 0.0
        %1282 = vmatpush1.msra.mxu0 0.0
        %1283 = vmatprep.subr.mxu0 0.0
        %1284 = vmatpush1.msra.mxu0 0.0
        %1285 = vmatprep.subr.mxu0 0.0
        %1286 = vmatpush1.msra.mxu0 0.0
        %1287 = vmatprep.subr.mxu0 0.0
        %1288 = vmatpush1.msra.mxu0 0.0
        %1289 = vmatprep.subr.mxu0 0.0
        %1290 = vmatpush1.msra.mxu0 0.0
        %1291 = vmatprep.subr.mxu0 0.0
        %1292 = vmatpush1.msra.mxu0 0.0
        %1293 = vmatprep.subr.mxu0 0.0
        %1294 = vmatpush1.msra.mxu0 0.0
        %1295 = vmatprep.subr.mxu0 0.0
        %1296 = vmatpush1.msra.mxu0 0.0
        %1297 = vmatprep.subr.mxu0 0.0
        %1298 = vmatpush1.msra.mxu0 0.0
        %1299 = vmatprep.subr.mxu0 0.0
        %1300 = vmatpush1.msra.mxu0 0.0
        %1301 = vmatprep.subr.mxu0 0.0
        %1302 = vmatpush1.msra.mxu0 0.0
        %1303 = vmatprep.subr.mxu0 0.0
        %1304 = vmatpush1.msra.mxu0 0.0
        %1305 = vmatprep.subr.mxu0 0.0
        %1306 = vmatpush1.msra.mxu0 0.0
        %1307 = vmatprep.subr.mxu0 0.0
        %1308 = vmatpush1.msra.mxu0 0.0
        %1309 = vmatprep.subr.mxu0 0.0
        %1310 = vmatpush1.msra.mxu0 0.0
        %1311 = vmatprep.subr.mxu0 0.0
        %1312 = vmatpush1.msra.mxu0 0.0
        %1313 = vmatprep.mubr.f32.mxu0 0.0
        %1314 = vmatmul.mubr.f32.gmra.mrb[0].mxu0 %v1225
        %v1315 = vpop.f32.mrb[0].mxu0
        %v1316 = vadd.f32 %v1221, %v1315
        %v1317 = vpop.f32.mrb[0].mxu0
        %1318 = vmatprep.mubr.f32.mxu0 0.0
        %1319 = vmatmul.mubr.f32.gmra.mrb[0].mxu0 %v1228
        %v1320 = vpop.f32.mrb[0].mxu0
        %v1321 = vadd.f32 %v1221, %v1320
        %v1322 = vpop.f32.mrb[0].mxu0
        %1323 = vmatprep.mubr.f32.mxu0 0.0
        %1324 = vmatmul.mubr.f32.gmra.mrb[0].mxu0 %v1231
        %v1325 = vpop.f32.mrb[0].mxu0
        %v1326 = vadd.f32 %v1221, %v1325
        %v1327 = vpop.f32.mrb[0].mxu0
        %1328 = vmatprep.mubr.f32.mxu0 0.0
        %1329 = vmatmul.mubr.f32.gmra.mrb[0].mxu0 %v1234
        %v1330 = vpop.f32.mrb[0].mxu0
        %v1331 = vadd.f32 %v1221, %v1330
        %v1332 = vpop.f32.mrb[0].mxu0
        %1333 = vmatprep.mubr.f32.mxu0 0.0
        %1334 = vmatmul.mubr.f32.gmra.mrb[0].mxu0 %v1237
        %v1335 = vpop.f32.mrb[0].mxu0
        %v1336 = vadd.f32 %v1221, %v1335
        %v1337 = vpop.f32.mrb[0].mxu0
        %1338 = vmatprep.mubr.f32.mxu0 0.0
        %1339 = vmatmul.mubr.f32.gmra.mrb[0].mxu0 %v1240
        %v1340 = vpop.f32.mrb[0].mxu0
        %v1341 = vadd.f32 %v1221, %v1340
        %v1342 = vpop.f32.mrb[0].mxu0
        %1343 = vmatprep.mubr.f32.mxu0 0.0
        %1344 = vmatmul.mubr.f32.gmra.mrb[0].mxu0 %v1243
        %v1345 = vpop.f32.mrb[0].mxu0
        %v1346 = vadd.f32 %v1221, %v1345
        %v1347 = vpop.f32.mrb[0].mxu0
        %1348 = vdwg.mxu0
        %v1349 = vmax.f32 %v1316, 0.0
        %v1350 = vmax.f32 %v1321, 0.0
        %v1351 = vmax.f32 %v1326, 0.0
        %v1352 = vmax.f32 %v1331, 0.0
        %v1353 = vmax.f32 %v1336, 0.0
        %v1354 = vmax.f32 %v1341, 0.0
        %v1355 = vmax.f32 %v1346, 0.0
        %v1356 = vld [vmem:[%s11] sm:$0xff]
        %v1357 = vld [vmem:[%s11 + $0x8] sm:$0xff]
        %v1358 = vld [vmem:[%s13] sm:$0x1]
        %v1360 = vlaneseq
        %v1361 = vshrl.u32 %v1360, 7
        %v1362 = vsub.s32 0, %v1361
        %v1363 = vrot.slane %v1358, %v1362
        %vm1365 = vcmask 130048
        %v1367 = vsel %vm1365, %v1349, 0
        %v1370 = vsel %vm1365, %v1350, 0
        %v1373 = vsel %vm1365, %v1351, 0
        %v1376 = vsel %vm1365, %v1352, 0
        %v1379 = vsel %vm1365, %v1353, 0
        %v1382 = vsel %vm1365, %v1354, 0
        %v1385 = vsel %vm1365, %v1355, 0
        %1387 = vmatprep.subr.mxu0 0.0
        %1388 = vmatpush1.msra.mxu0 %v1356
        %1389 = vmatprep.subr.mxu0 0.0
        %1390 = vmatpush1.msra.mxu0 %v1357
        %1391 = vmatprep.subr.mxu0 0.0
        %1392 = vmatpush1.msra.mxu0 0.0
        %1393 = vmatprep.subr.mxu0 0.0
        %1394 = vmatpush1.msra.mxu0 0.0
        %1395 = vmatprep.subr.mxu0 0.0
        %1396 = vmatpush1.msra.mxu0 0.0
        %1397 = vmatprep.subr.mxu0 0.0
        %1398 = vmatpush1.msra.mxu0 0.0
        %1399 = vmatprep.subr.mxu0 0.0
        %1400 = vmatpush1.msra.mxu0 0.0
        %1401 = vmatprep.subr.mxu0 0.0
        %1402 = vmatpush1.msra.mxu0 0.0
        %1403 = vmatprep.subr.mxu0 0.0
        %1404 = vmatpush1.msra.mxu0 0.0
        %1405 = vmatprep.subr.mxu0 0.0
        %1406 = vmatpush1.msra.mxu0 0.0
        %1407 = vmatprep.subr.mxu0 0.0
        %1408 = vmatpush1.msra.mxu0 0.0
        %1409 = vmatprep.subr.mxu0 0.0
        %1410 = vmatpush1.msra.mxu0 0.0
        %1411 = vmatprep.subr.mxu0 0.0
        %1412 = vmatpush1.msra.mxu0 0.0
        %1413 = vmatprep.subr.mxu0 0.0
        %1414 = vmatpush1.msra.mxu0 0.0
        %1415 = vmatprep.subr.mxu0 0.0
        %1416 = vmatpush1.msra.mxu0 0.0
        %1417 = vmatprep.subr.mxu0 0.0
        %1418 = vmatpush1.msra.mxu0 0.0
        %1419 = vmatprep.subr.mxu0 0.0
        %1420 = vmatpush1.msra.mxu0 0.0
        %1421 = vmatprep.subr.mxu0 0.0
        %1422 = vmatpush1.msra.mxu0 0.0
        %1423 = vmatprep.subr.mxu0 0.0
        %1424 = vmatpush1.msra.mxu0 0.0
        %1425 = vmatprep.subr.mxu0 0.0
        %1426 = vmatpush1.msra.mxu0 0.0
        %1427 = vmatprep.subr.mxu0 0.0
        %1428 = vmatpush1.msra.mxu0 0.0
        %1429 = vmatprep.subr.mxu0 0.0
        %1430 = vmatpush1.msra.mxu0 0.0
        %1431 = vmatprep.subr.mxu0 0.0
        %1432 = vmatpush1.msra.mxu0 0.0
        %1433 = vmatprep.subr.mxu0 0.0
        %1434 = vmatpush1.msra.mxu0 0.0
        %1435 = vmatprep.subr.mxu0 0.0
        %1436 = vmatpush1.msra.mxu0 0.0
        %1437 = vmatprep.subr.mxu0 0.0
        %1438 = vmatpush1.msra.mxu0 0.0
        %1439 = vmatprep.subr.mxu0 0.0
        %1440 = vmatpush1.msra.mxu0 0.0
        %1441 = vmatprep.subr.mxu0 0.0
        %1442 = vmatpush1.msra.mxu0 0.0
        %1443 = vmatprep.subr.mxu0 0.0
        %1444 = vmatpush1.msra.mxu0 0.0
        %1445 = vmatprep.subr.mxu0 0.0
        %1446 = vmatpush1.msra.mxu0 0.0
        %1447 = vmatprep.subr.mxu0 0.0
        %1448 = vmatpush1.msra.mxu0 0.0
        %1449 = vmatprep.subr.mxu0 0.0
        %1450 = vmatpush1.msra.mxu0 0.0
        %1451 = vmatprep.mubr.f32.mxu0 0.0
        %1452 = vmatmul.mubr.f32.gmra.mrb[0].mxu0 %v1367
        %v1453 = vpop.f32.mrb[0].mxu0
        %v1454 = vadd.f32 %v1363, %v1453
        %v1455 = vpop.f32.mrb[0].mxu0
        %1456 = vmatprep.mubr.f32.mxu0 0.0
        %1457 = vmatmul.mubr.f32.gmra.mrb[0].mxu0 %v1370
        %v1458 = vpop.f32.mrb[0].mxu0
        %v1459 = vadd.f32 %v1363, %v1458
        %v1460 = vpop.f32.mrb[0].mxu0
        %1461 = vmatprep.mubr.f32.mxu0 0.0
        %1462 = vmatmul.mubr.f32.gmra.mrb[0].mxu0 %v1373
        %v1463 = vpop.f32.mrb[0].mxu0
        %v1464 = vadd.f32 %v1363, %v1463
        %v1465 = vpop.f32.mrb[0].mxu0
        %1466 = vmatprep.mubr.f32.mxu0 0.0
        %1467 = vmatmul.mubr.f32.gmra.mrb[0].mxu0 %v1376
        %v1468 = vpop.f32.mrb[0].mxu0
        %v1469 = vadd.f32 %v1363, %v1468
        %v1470 = vpop.f32.mrb[0].mxu0
        %1471 = vmatprep.mubr.f32.mxu0 0.0
        %1472 = vmatmul.mubr.f32.gmra.mrb[0].mxu0 %v1379
        %v1473 = vpop.f32.mrb[0].mxu0
        %v1474 = vadd.f32 %v1363, %v1473
        %v1475 = vpop.f32.mrb[0].mxu0
        %1476 = vmatprep.mubr.f32.mxu0 0.0
        %1477 = vmatmul.mubr.f32.gmra.mrb[0].mxu0 %v1382
        %v1478 = vpop.f32.mrb[0].mxu0
        %v1479 = vadd.f32 %v1363, %v1478
        %v1480 = vpop.f32.mrb[0].mxu0
        %1481 = vmatprep.mubr.f32.mxu0 0.0
        %1482 = vmatmul.mubr.f32.gmra.mrb[0].mxu0 %v1385
        %v1483 = vpop.f32.mrb[0].mxu0
        %v1484 = vadd.f32 %v1363, %v1483
        %v1485 = vpop.f32.mrb[0].mxu0
        %1486 = vdwg.mxu0
        %v1487 = vld [vmem:[%s3] sm:$0xff]
        %v1488 = vld [vmem:[%s3 + $0x8] sm:$0xff]
        %v1489 = vld [vmem:[%s3 + $0x10] sm:$0xff]
        %v1490 = vld [vmem:[%s3 + $0x18] sm:$0xff]
        %v1491 = vld [vmem:[%s3 + $0x20] sm:$0xff]
        %v1492 = vld [vmem:[%s3 + $0x28] sm:$0xff]
        %v1493 = vld [vmem:[%s3 + $0x30] sm:$0xff]
        %v1494 = vadd.f32 %v1454, %v1487
        %v1495 = vadd.f32 %v1459, %v1488
        %v1496 = vadd.f32 %v1464, %v1489
        %v1497 = vadd.f32 %v1469, %v1490
        %v1498 = vadd.f32 %v1474, %v1491
        %v1499 = vadd.f32 %v1479, %v1492
        %v1500 = vadd.f32 %v1484, %v1493
        %vm1501 = vcmask 261120
        %1502 = vst.msk [vmem:[#allocation2] sm:$0xff] %vm1501, %v1494
        %1503 = vst.msk [vmem:[#allocation2 + $0x8] sm:$0xff] %vm1501, %v1495
        %1504 = vst.msk [vmem:[#allocation2 + $0x10] sm:$0xff] %vm1501, %v1496
        %1505 = vst.msk [vmem:[#allocation2 + $0x18] sm:$0xff] %vm1501, %v1497
        %1506 = vst.msk [vmem:[#allocation2 + $0x20] sm:$0xff] %vm1501, %v1498
        %1507 = vst.msk [vmem:[#allocation2 + $0x28] sm:$0xff] %vm1501, %v1499
        %1508 = vst.msk [vmem:[#allocation2 + $0x30] sm:$0xff] %vm1501, %v1500
      $region152: #{tf_forward.1} parent=147 // pred_fallthru
        _
      %v1509 = vld [vmem:[#allocation2] sm:$0xff]
      %v1510 = vld [vmem:[#allocation2 + $0x8] sm:$0xff]
      %v1511 = vld [vmem:[#allocation2 + $0x10] sm:$0xff]
      %v1512 = vld [vmem:[#allocation2 + $0x18] sm:$0xff]
      %v1513 = vld [vmem:[#allocation2 + $0x20] sm:$0xff]
      %v1514 = vld [vmem:[#allocation2 + $0x28] sm:$0xff]
      %v1515 = vld [vmem:[#allocation2 + $0x30] sm:$0xff]
      %v1516 = vld [vmem:[%s1145] sm:$0x1]
      %v1517 = vld [vmem:[%s1148] sm:$0x1]
      %vm1518 = vcmask 261120
      %v1519 = vsel %vm1518, %v1509, 0.0
      %1520 = vadd.xlane.f32.xlu0 %v1519
      %v1521 = vpop.xlane.xlu0 %1520
      %v1522 = vsel %vm1518, %v1510, 0.0
      %1523 = vadd.xlane.f32.xlu0 %v1522
      %v1524 = vpop.xlane.xlu0 %1523
      %v1525 = vsel %vm1518, %v1511, 0.0
      %1526 = vadd.xlane.f32.xlu0 %v1525
      %v1527 = vpop.xlane.xlu0 %1526
      %v1528 = vsel %vm1518, %v1512, 0.0
      %1529 = vadd.xlane.f32.xlu0 %v1528
      %v1530 = vpop.xlane.xlu0 %1529
      %v1531 = vsel %vm1518, %v1513, 0.0
      %1532 = vadd.xlane.f32.xlu0 %v1531
      %v1533 = vpop.xlane.xlu0 %1532
      %v1534 = vsel %vm1518, %v1514, 0.0
      %1535 = vadd.xlane.f32.xlu0 %v1534
      %v1536 = vpop.xlane.xlu0 %1535
      %v1537 = vsel %vm1518, %v1515, 0.0
      %1538 = vadd.xlane.f32.xlu0 %v1537
      %v1539 = vpop.xlane.xlu0 %1538
      %v1540 = vrcp.pop 32.0
      %v1541 = vmul.f32 %v1521, %v1540
      %v1542 = vmul.f32 %v1524, %v1540
      %v1543 = vmul.f32 %v1527, %v1540
      %v1544 = vmul.f32 %v1530, %v1540
      %v1545 = vmul.f32 %v1533, %v1540
      %v1546 = vmul.f32 %v1536, %v1540
      %v1547 = vmul.f32 %v1539, %v1540
      %v1548 = vsub.f32 %v1509, %v1541
      %v1549 = vsub.f32 %v1510, %v1542
      %v1550 = vsub.f32 %v1511, %v1543
      %v1551 = vsub.f32 %v1512, %v1544
      %v1552 = vsub.f32 %v1513, %v1545
      %v1553 = vsub.f32 %v1514, %v1546
      %v1554 = vsub.f32 %v1515, %v1547
      %v1555 = vmul.f32 %v1548, %v1548
      %v1556 = vmul.f32 %v1549, %v1549
      %v1557 = vmul.f32 %v1550, %v1550
      %v1558 = vmul.f32 %v1551, %v1551
      %v1559 = vmul.f32 %v1552, %v1552
      %v1560 = vmul.f32 %v1553, %v1553
      %v1561 = vmul.f32 %v1554, %v1554
      %v1562 = vsel %vm1518, %v1555, 0.0
      %1563 = vadd.xlane.f32.xlu0 %v1562
      %v1564 = vpop.xlane.xlu0 %1563
      %v1565 = vsel %vm1518, %v1556, 0.0
      %1566 = vadd.xlane.f32.xlu0 %v1565
      %v1567 = vpop.xlane.xlu0 %1566
      %v1568 = vsel %vm1518, %v1557, 0.0
      %1569 = vadd.xlane.f32.xlu0 %v1568
      %v1570 = vpop.xlane.xlu0 %1569
      %v1571 = vsel %vm1518, %v1558, 0.0
      %1572 = vadd.xlane.f32.xlu0 %v1571
      %v1573 = vpop.xlane.xlu0 %1572
      %v1574 = vsel %vm1518, %v1559, 0.0
      %1575 = vadd.xlane.f32.xlu0 %v1574
      %v1576 = vpop.xlane.xlu0 %1575
      %v1577 = vsel %vm1518, %v1560, 0.0
      %1578 = vadd.xlane.f32.xlu0 %v1577
      %v1579 = vpop.xlane.xlu0 %1578
      %v1580 = vsel %vm1518, %v1561, 0.0
      %1581 = vadd.xlane.f32.xlu0 %v1580
      %v1582 = vpop.xlane.xlu0 %1581
      %v1583 = vmul.f32 %v1564, 0.032258064
      %v1584 = vmul.f32 %v1567, 0.032258064
      %v1585 = vmul.f32 %v1570, 0.032258064
      %v1586 = vmul.f32 %v1573, 0.032258064
      %v1587 = vmul.f32 %v1576, 0.032258064
      %v1588 = vmul.f32 %v1579, 0.032258064
      %v1589 = vmul.f32 %v1582, 0.032258064
      %v1590 = vrsqrt.pop %v1583
      %v1591 = vmul.f32 %v1583, %v1590
      %vm1592 = vcmp.eq.f32.partialorder %v1583, inf
      %v1593 = vsel %vm1592, %v1583, %v1591
      %vm1594 = vcmp.eq.f32.partialorder %v1583, 0.0
      %v1595 = vand.u32 %v1583, 2147483648
      %v1596 = vsel %vm1594, %v1595, %v1593
      %v1597 = vrsqrt.pop %v1584
      %v1598 = vmul.f32 %v1584, %v1597
      %vm1599 = vcmp.eq.f32.partialorder %v1584, inf
      %v1600 = vsel %vm1599, %v1584, %v1598
      %vm1601 = vcmp.eq.f32.partialorder %v1584, 0.0
      %v1602 = vand.u32 %v1584, 2147483648
      %v1603 = vsel %vm1601, %v1602, %v1600
      %v1604 = vrsqrt.pop %v1585
      %v1605 = vmul.f32 %v1585, %v1604
      %vm1606 = vcmp.eq.f32.partialorder %v1585, inf
      %v1607 = vsel %vm1606, %v1585, %v1605
      %vm1608 = vcmp.eq.f32.partialorder %v1585, 0.0
      %v1609 = vand.u32 %v1585, 2147483648
      %v1610 = vsel %vm1608, %v1609, %v1607
      %v1611 = vrsqrt.pop %v1586
      %v1612 = vmul.f32 %v1586, %v1611
      %vm1613 = vcmp.eq.f32.partialorder %v1586, inf
      %v1614 = vsel %vm1613, %v1586, %v1612
      %vm1615 = vcmp.eq.f32.partialorder %v1586, 0.0
      %v1616 = vand.u32 %v1586, 2147483648
      %v1617 = vsel %vm1615, %v1616, %v1614
      %v1618 = vrsqrt.pop %v1587
      %v1619 = vmul.f32 %v1587, %v1618
      %vm1620 = vcmp.eq.f32.partialorder %v1587, inf
      %v1621 = vsel %vm1620, %v1587, %v1619
      %vm1622 = vcmp.eq.f32.partialorder %v1587, 0.0
      %v1623 = vand.u32 %v1587, 2147483648
      %v1624 = vsel %vm1622, %v1623, %v1621
      %v1625 = vrsqrt.pop %v1588
      %v1626 = vmul.f32 %v1588, %v1625
      %vm1627 = vcmp.eq.f32.partialorder %v1588, inf
      %v1628 = vsel %vm1627, %v1588, %v1626
      %vm1629 = vcmp.eq.f32.partialorder %v1588, 0.0
      %v1630 = vand.u32 %v1588, 2147483648
      %v1631 = vsel %vm1629, %v1630, %v1628
      %v1632 = vrsqrt.pop %v1589
      %v1633 = vmul.f32 %v1589, %v1632
      %vm1634 = vcmp.eq.f32.partialorder %v1589, inf
      %v1635 = vsel %vm1634, %v1589, %v1633
      %vm1636 = vcmp.eq.f32.partialorder %v1589, 0.0
      %v1637 = vand.u32 %v1589, 2147483648
      %v1638 = vsel %vm1636, %v1637, %v1635
      %v1639 = vadd.f32 %v1596, 1e-06
      %v1640 = vadd.f32 %v1603, 1e-06
      %v1641 = vadd.f32 %v1610, 1e-06
      %v1642 = vadd.f32 %v1617, 1e-06
      %v1643 = vadd.f32 %v1624, 1e-06
      %v1644 = vadd.f32 %v1631, 1e-06
      %v1645 = vadd.f32 %v1638, 1e-06
      %v1646 = vrcp.pop %v1639
      %v1647 = vrcp.pop %v1640
      %v1648 = vrcp.pop %v1641
      %v1649 = vrcp.pop %v1642
      %v1650 = vrcp.pop %v1643
      %v1651 = vrcp.pop %v1644
      %v1652 = vrcp.pop %v1645
      %v1653 = vmul.f32 %v1548, %v1646
      %v1654 = vmul.f32 %v1549, %v1647
      %v1655 = vmul.f32 %v1550, %v1648
      %v1656 = vmul.f32 %v1551, %v1649
      %v1657 = vmul.f32 %v1552, %v1650
      %v1658 = vmul.f32 %v1553, %v1651
      %v1659 = vmul.f32 %v1554, %v1652
      %v1661 = vlaneseq
      %v1662 = vshrl.u32 %v1661, 7
      %v1663 = vsub.s32 0, %v1662
      %v1664 = vrot.slane %v1516, %v1663
      %v1666 = vmul.f32 %v1664, %v1653
      %v1667 = vmul.f32 %v1664, %v1654
      %v1668 = vmul.f32 %v1664, %v1655
      %v1669 = vmul.f32 %v1664, %v1656
      %v1670 = vmul.f32 %v1664, %v1657
      %v1671 = vmul.f32 %v1664, %v1658
      %v1672 = vmul.f32 %v1664, %v1659
      %v1674 = vlaneseq
      %v1675 = vshrl.u32 %v1674, 7
      %v1676 = vsub.s32 0, %v1675
      %v1677 = vrot.slane %v1517, %v1676
      %v1679 = vadd.f32 %v1666, %v1677
      %v1680 = vadd.f32 %v1667, %v1677
      %v1681 = vadd.f32 %v1668, %v1677
      %v1682 = vadd.f32 %v1669, %v1677
      %v1683 = vadd.f32 %v1670, %v1677
      %v1684 = vadd.f32 %v1671, %v1677
      %v1685 = vadd.f32 %v1672, %v1677
      %v1686 = vld [vmem:[%s1153] sm:$0xff]
      %v1687 = vld [vmem:[%s1153 + $0x8] sm:$0xff]
      %v1688 = vld [vmem:[%s1153 + $0x10] sm:$0xff]
      %v1689 = vld [vmem:[%s1153 + $0x18] sm:$0xff]
      %v1690 = vld [vmem:[%s1156] sm:$0x1]
      %v1692 = vlaneseq
      %v1693 = vshrl.u32 %v1692, 7
      %v1694 = vsub.s32 0, %v1693
      %v1695 = vrot.slane %v1690, %v1694
      %v1698 = vsel %vm1518, %v1679, 0
      %v1701 = vsel %vm1518, %v1680, 0
      %v1704 = vsel %vm1518, %v1681, 0
      %v1707 = vsel %vm1518, %v1682, 0
      %v1710 = vsel %vm1518, %v1683, 0
      %v1713 = vsel %vm1518, %v1684, 0
      %v1716 = vsel %vm1518, %v1685, 0
      %1718 = vmatprep.subr.mxu0 0.0
      %1719 = vmatpush1.msra.mxu0 %v1686
      %1720 = vmatprep.subr.mxu0 0.0
      %1721 = vmatpush1.msra.mxu0 %v1687
      %1722 = vmatprep.subr.mxu0 0.0
      %1723 = vmatpush1.msra.mxu0 %v1688
      %1724 = vmatprep.subr.mxu0 0.0
      %1725 = vmatpush1.msra.mxu0 %v1689
      %1726 = vmatprep.subr.mxu0 0.0
      %1727 = vmatpush1.msra.mxu0 0.0
      %1728 = vmatprep.subr.mxu0 0.0
      %1729 = vmatpush1.msra.mxu0 0.0
      %1730 = vmatprep.subr.mxu0 0.0
      %1731 = vmatpush1.msra.mxu0 0.0
      %1732 = vmatprep.subr.mxu0 0.0
      %1733 = vmatpush1.msra.mxu0 0.0
      %1734 = vmatprep.subr.mxu0 0.0
      %1735 = vmatpush1.msra.mxu0 0.0
      %1736 = vmatprep.subr.mxu0 0.0
      %1737 = vmatpush1.msra.mxu0 0.0
      %1738 = vmatprep.subr.mxu0 0.0
      %1739 = vmatpush1.msra.mxu0 0.0
      %1740 = vmatprep.subr.mxu0 0.0
      %1741 = vmatpush1.msra.mxu0 0.0
      %1742 = vmatprep.subr.mxu0 0.0
      %1743 = vmatpush1.msra.mxu0 0.0
      %1744 = vmatprep.subr.mxu0 0.0
      %1745 = vmatpush1.msra.mxu0 0.0
      %1746 = vmatprep.subr.mxu0 0.0
      %1747 = vmatpush1.msra.mxu0 0.0
      %1748 = vmatprep.subr.mxu0 0.0
      %1749 = vmatpush1.msra.mxu0 0.0
      %1750 = vmatprep.subr.mxu0 0.0
      %1751 = vmatpush1.msra.mxu0 0.0
      %1752 = vmatprep.subr.mxu0 0.0
      %1753 = vmatpush1.msra.mxu0 0.0
      %1754 = vmatprep.subr.mxu0 0.0
      %1755 = vmatpush1.msra.mxu0 0.0
      %1756 = vmatprep.subr.mxu0 0.0
      %1757 = vmatpush1.msra.mxu0 0.0
      %1758 = vmatprep.subr.mxu0 0.0
      %1759 = vmatpush1.msra.mxu0 0.0
      %1760 = vmatprep.subr.mxu0 0.0
      %1761 = vmatpush1.msra.mxu0 0.0
      %1762 = vmatprep.subr.mxu0 0.0
      %1763 = vmatpush1.msra.mxu0 0.0
      %1764 = vmatprep.subr.mxu0 0.0
      %1765 = vmatpush1.msra.mxu0 0.0
      %1766 = vmatprep.subr.mxu0 0.0
      %1767 = vmatpush1.msra.mxu0 0.0
      %1768 = vmatprep.subr.mxu0 0.0
      %1769 = vmatpush1.msra.mxu0 0.0
      %1770 = vmatprep.subr.mxu0 0.0
      %1771 = vmatpush1.msra.mxu0 0.0
      %1772 = vmatprep.subr.mxu0 0.0
      %1773 = vmatpush1.msra.mxu0 0.0
      %1774 = vmatprep.subr.mxu0 0.0
      %1775 = vmatpush1.msra.mxu0 0.0
      %1776 = vmatprep.subr.mxu0 0.0
      %1777 = vmatpush1.msra.mxu0 0.0
      %1778 = vmatprep.subr.mxu0 0.0
      %1779 = vmatpush1.msra.mxu0 0.0
      %1780 = vmatprep.subr.mxu0 0.0
      %1781 = vmatpush1.msra.mxu0 0.0
      %1782 = vmatprep.mubr.f32.mxu0 0.0
      %1783 = vmatmul.mubr.f32.gmra.mrb[0].mxu0 %v1698
      %v1784 = vpop.f32.mrb[0].mxu0
      %v1785 = vadd.f32 %v1695, %v1784
      %v1786 = vpop.f32.mrb[0].mxu0
      %1787 = vmatprep.mubr.f32.mxu0 0.0
      %1788 = vmatmul.mubr.f32.gmra.mrb[0].mxu0 %v1701
      %v1789 = vpop.f32.mrb[0].mxu0
      %v1790 = vadd.f32 %v1695, %v1789
      %v1791 = vpop.f32.mrb[0].mxu0
      %1792 = vmatprep.mubr.f32.mxu0 0.0
      %1793 = vmatmul.mubr.f32.gmra.mrb[0].mxu0 %v1704
      %v1794 = vpop.f32.mrb[0].mxu0
      %v1795 = vadd.f32 %v1695, %v1794
      %v1796 = vpop.f32.mrb[0].mxu0
      %1797 = vmatprep.mubr.f32.mxu0 0.0
      %1798 = vmatmul.mubr.f32.gmra.mrb[0].mxu0 %v1707
      %v1799 = vpop.f32.mrb[0].mxu0
      %v1800 = vadd.f32 %v1695, %v1799
      %v1801 = vpop.f32.mrb[0].mxu0
      %1802 = vmatprep.mubr.f32.mxu0 0.0
      %1803 = vmatmul.mubr.f32.gmra.mrb[0].mxu0 %v1710
      %v1804 = vpop.f32.mrb[0].mxu0
      %v1805 = vadd.f32 %v1695, %v1804
      %v1806 = vpop.f32.mrb[0].mxu0
      %1807 = vmatprep.mubr.f32.mxu0 0.0
      %1808 = vmatmul.mubr.f32.gmra.mrb[0].mxu0 %v1713
      %v1809 = vpop.f32.mrb[0].mxu0
      %v1810 = vadd.f32 %v1695, %v1809
      %v1811 = vpop.f32.mrb[0].mxu0
      %1812 = vmatprep.mubr.f32.mxu0 0.0
      %1813 = vmatmul.mubr.f32.gmra.mrb[0].mxu0 %v1716
      %v1814 = vpop.f32.mrb[0].mxu0
      %v1815 = vadd.f32 %v1695, %v1814
      %v1816 = vpop.f32.mrb[0].mxu0
      %1817 = vdwg.mxu0
      %v1818 = vld [vmem:[%s1161] sm:$0xff]
      %v1819 = vld [vmem:[%s1161 + $0x8] sm:$0xff]
      %v1820 = vld [vmem:[%s1161 + $0x10] sm:$0xff]
      %v1821 = vld [vmem:[%s1161 + $0x18] sm:$0xff]
      %v1822 = vld [vmem:[%s1164] sm:$0x1]
      %v1824 = vlaneseq
      %v1825 = vshrl.u32 %v1824, 7
      %v1826 = vsub.s32 0, %v1825
      %v1827 = vrot.slane %v1822, %v1826
      %1829 = vmatprep.subr.mxu0 0.0
      %1830 = vmatpush1.msra.mxu0 %v1818
      %1831 = vmatprep.subr.mxu0 0.0
      %1832 = vmatpush1.msra.mxu0 %v1819
      %1833 = vmatprep.subr.mxu0 0.0
      %1834 = vmatpush1.msra.mxu0 %v1820
      %1835 = vmatprep.subr.mxu0 0.0
      %1836 = vmatpush1.msra.mxu0 %v1821
      %1837 = vmatprep.subr.mxu0 0.0
      %1838 = vmatpush1.msra.mxu0 0.0
      %1839 = vmatprep.subr.mxu0 0.0
      %1840 = vmatpush1.msra.mxu0 0.0
      %1841 = vmatprep.subr.mxu0 0.0
      %1842 = vmatpush1.msra.mxu0 0.0
      %1843 = vmatprep.subr.mxu0 0.0
      %1844 = vmatpush1.msra.mxu0 0.0
      %1845 = vmatprep.subr.mxu0 0.0
      %1846 = vmatpush1.msra.mxu0 0.0
      %1847 = vmatprep.subr.mxu0 0.0
      %1848 = vmatpush1.msra.mxu0 0.0
      %1849 = vmatprep.subr.mxu0 0.0
      %1850 = vmatpush1.msra.mxu0 0.0
      %1851 = vmatprep.subr.mxu0 0.0
      %1852 = vmatpush1.msra.mxu0 0.0
      %1853 = vmatprep.subr.mxu0 0.0
      %1854 = vmatpush1.msra.mxu0 0.0
      %1855 = vmatprep.subr.mxu0 0.0
      %1856 = vmatpush1.msra.mxu0 0.0
      %1857 = vmatprep.subr.mxu0 0.0
      %1858 = vmatpush1.msra.mxu0 0.0
      %1859 = vmatprep.subr.mxu0 0.0
      %1860 = vmatpush1.msra.mxu0 0.0
      %1861 = vmatprep.subr.mxu0 0.0
      %1862 = vmatpush1.msra.mxu0 0.0
      %1863 = vmatprep.subr.mxu0 0.0
      %1864 = vmatpush1.msra.mxu0 0.0
      %1865 = vmatprep.subr.mxu0 0.0
      %1866 = vmatpush1.msra.mxu0 0.0
      %1867 = vmatprep.subr.mxu0 0.0
      %1868 = vmatpush1.msra.mxu0 0.0
      %1869 = vmatprep.subr.mxu0 0.0
      %1870 = vmatpush1.msra.mxu0 0.0
      %1871 = vmatprep.subr.mxu0 0.0
      %1872 = vmatpush1.msra.mxu0 0.0
      %1873 = vmatprep.subr.mxu0 0.0
      %1874 = vmatpush1.msra.mxu0 0.0
      %1875 = vmatprep.subr.mxu0 0.0
      %1876 = vmatpush1.msra.mxu0 0.0
      %1877 = vmatprep.subr.mxu0 0.0
      %1878 = vmatpush1.msra.mxu0 0.0
      %1879 = vmatprep.subr.mxu0 0.0
      %1880 = vmatpush1.msra.mxu0 0.0
      %1881 = vmatprep.subr.mxu0 0.0
      %1882 = vmatpush1.msra.mxu0 0.0
      %1883 = vmatprep.subr.mxu0 0.0
      %1884 = vmatpush1.msra.mxu0 0.0
      %1885 = vmatprep.subr.mxu0 0.0
      %1886 = vmatpush1.msra.mxu0 0.0
      %1887 = vmatprep.subr.mxu0 0.0
      %1888 = vmatpush1.msra.mxu0 0.0
      %1889 = vmatprep.subr.mxu0 0.0
      %1890 = vmatpush1.msra.mxu0 0.0
      %1891 = vmatprep.subr.mxu0 0.0
      %1892 = vmatpush1.msra.mxu0 0.0
      %1893 = vmatprep.mubr.f32.mxu0 0.0
      %1894 = vmatmul.mubr.f32.gmra.mrb[0].mxu0 %v1698
      %v1895 = vpop.f32.mrb[0].mxu0
      %v1896 = vadd.f32 %v1827, %v1895
      %v1897 = vpop.f32.mrb[0].mxu0
      %1898 = vmatprep.mubr.f32.mxu0 0.0
      %1899 = vmatmul.mubr.f32.gmra.mrb[0].mxu0 %v1701
      %v1900 = vpop.f32.mrb[0].mxu0
      %v1901 = vadd.f32 %v1827, %v1900
      %v1902 = vpop.f32.mrb[0].mxu0
      %1903 = vmatprep.mubr.f32.mxu0 0.0
      %1904 = vmatmul.mubr.f32.gmra.mrb[0].mxu0 %v1704
      %v1905 = vpop.f32.mrb[0].mxu0
      %v1906 = vadd.f32 %v1827, %v1905
      %v1907 = vpop.f32.mrb[0].mxu0
      %1908 = vmatprep.mubr.f32.mxu0 0.0
      %1909 = vmatmul.mubr.f32.gmra.mrb[0].mxu0 %v1707
      %v1910 = vpop.f32.mrb[0].mxu0
      %v1911 = vadd.f32 %v1827, %v1910
      %v1912 = vpop.f32.mrb[0].mxu0
      %1913 = vmatprep.mubr.f32.mxu0 0.0
      %1914 = vmatmul.mubr.f32.gmra.mrb[0].mxu0 %v1710
      %v1915 = vpop.f32.mrb[0].mxu0
      %v1916 = vadd.f32 %v1827, %v1915
      %v1917 = vpop.f32.mrb[0].mxu0
      %1918 = vmatprep.mubr.f32.mxu0 0.0
      %1919 = vmatmul.mubr.f32.gmra.mrb[0].mxu0 %v1713
      %v1920 = vpop.f32.mrb[0].mxu0
      %v1921 = vadd.f32 %v1827, %v1920
      %v1922 = vpop.f32.mrb[0].mxu0
      %1923 = vmatprep.mubr.f32.mxu0 0.0
      %1924 = vmatmul.mubr.f32.gmra.mrb[0].mxu0 %v1716
      %v1925 = vpop.f32.mrb[0].mxu0
      %v1926 = vadd.f32 %v1827, %v1925
      %v1927 = vpop.f32.mrb[0].mxu0
      %1928 = vdwg.mxu0
      %v1929 = vld [vmem:[%s1169] sm:$0xff]
      %v1930 = vld [vmem:[%s1169 + $0x8] sm:$0xff]
      %v1931 = vld [vmem:[%s1169 + $0x10] sm:$0xff]
      %v1932 = vld [vmem:[%s1169 + $0x18] sm:$0xff]
      %v1933 = vld [vmem:[%s1172] sm:$0x1]
      %v1935 = vlaneseq
      %v1936 = vshrl.u32 %v1935, 7
      %v1937 = vsub.s32 0, %v1936
      %v1938 = vrot.slane %v1933, %v1937
      %1940 = vmatprep.subr.mxu0 0.0
      %1941 = vmatpush1.msra.mxu0 %v1929
      %1942 = vmatprep.subr.mxu0 0.0
      %1943 = vmatpush1.msra.mxu0 %v1930
      %1944 = vmatprep.subr.mxu0 0.0
      %1945 = vmatpush1.msra.mxu0 %v1931
      %1946 = vmatprep.subr.mxu0 0.0
      %1947 = vmatpush1.msra.mxu0 %v1932
      %1948 = vmatprep.subr.mxu0 0.0
      %1949 = vmatpush1.msra.mxu0 0.0
      %1950 = vmatprep.subr.mxu0 0.0
      %1951 = vmatpush1.msra.mxu0 0.0
      %1952 = vmatprep.subr.mxu0 0.0
      %1953 = vmatpush1.msra.mxu0 0.0
      %1954 = vmatprep.subr.mxu0 0.0
      %1955 = vmatpush1.msra.mxu0 0.0
      %1956 = vmatprep.subr.mxu0 0.0
      %1957 = vmatpush1.msra.mxu0 0.0
      %1958 = vmatprep.subr.mxu0 0.0
      %1959 = vmatpush1.msra.mxu0 0.0
      %1960 = vmatprep.subr.mxu0 0.0
      %1961 = vmatpush1.msra.mxu0 0.0
      %1962 = vmatprep.subr.mxu0 0.0
      %1963 = vmatpush1.msra.mxu0 0.0
      %1964 = vmatprep.subr.mxu0 0.0
      %1965 = vmatpush1.msra.mxu0 0.0
      %1966 = vmatprep.subr.mxu0 0.0
      %1967 = vmatpush1.msra.mxu0 0.0
      %1968 = vmatprep.subr.mxu0 0.0
      %1969 = vmatpush1.msra.mxu0 0.0
      %1970 = vmatprep.subr.mxu0 0.0
      %1971 = vmatpush1.msra.mxu0 0.0
      %1972 = vmatprep.subr.mxu0 0.0
      %1973 = vmatpush1.msra.mxu0 0.0
      %1974 = vmatprep.subr.mxu0 0.0
      %1975 = vmatpush1.msra.mxu0 0.0
      %1976 = vmatprep.subr.mxu0 0.0
      %1977 = vmatpush1.msra.mxu0 0.0
      %1978 = vmatprep.subr.mxu0 0.0
      %1979 = vmatpush1.msra.mxu0 0.0
      %1980 = vmatprep.subr.mxu0 0.0
      %1981 = vmatpush1.msra.mxu0 0.0
      %1982 = vmatprep.subr.mxu0 0.0
      %1983 = vmatpush1.msra.mxu0 0.0
      %1984 = vmatprep.subr.mxu0 0.0
      %1985 = vmatpush1.msra.mxu0 0.0
      %1986 = vmatprep.subr.mxu0 0.0
      %1987 = vmatpush1.msra.mxu0 0.0
      %1988 = vmatprep.subr.mxu0 0.0
      %1989 = vmatpush1.msra.mxu0 0.0
      %1990 = vmatprep.subr.mxu0 0.0
      %1991 = vmatpush1.msra.mxu0 0.0
      %1992 = vmatprep.subr.mxu0 0.0
      %1993 = vmatpush1.msra.mxu0 0.0
      %1994 = vmatprep.subr.mxu0 0.0
      %1995 = vmatpush1.msra.mxu0 0.0
      %1996 = vmatprep.subr.mxu0 0.0
      %1997 = vmatpush1.msra.mxu0 0.0
      %1998 = vmatprep.subr.mxu0 0.0
      %1999 = vmatpush1.msra.mxu0 0.0
      %2000 = vmatprep.subr.mxu0 0.0
      %2001 = vmatpush1.msra.mxu0 0.0
      %2002 = vmatprep.subr.mxu0 0.0
      %2003 = vmatpush1.msra.mxu0 0.0
      %2004 = vmatprep.mubr.f32.mxu0 0.0
      %2005 = vmatmul.mubr.f32.gmra.mrb[0].mxu0 %v1698
      %v2006 = vpop.f32.mrb[0].mxu0
      %v2007 = vadd.f32 %v1938, %v2006
      %v2008 = vpop.f32.mrb[0].mxu0
      %2009 = vmatprep.mubr.f32.mxu0 0.0
      %2010 = vmatmul.mubr.f32.gmra.mrb[0].mxu0 %v1701
      %v2011 = vpop.f32.mrb[0].mxu0
      %v2012 = vadd.f32 %v1938, %v2011
      %v2013 = vpop.f32.mrb[0].mxu0
      %2014 = vmatprep.mubr.f32.mxu0 0.0
      %2015 = vmatmul.mubr.f32.gmra.mrb[0].mxu0 %v1704
      %v2016 = vpop.f32.mrb[0].mxu0
      %v2017 = vadd.f32 %v1938, %v2016
      %v2018 = vpop.f32.mrb[0].mxu0
      %2019 = vmatprep.mubr.f32.mxu0 0.0
      %2020 = vmatmul.mubr.f32.gmra.mrb[0].mxu0 %v1707
      %v2021 = vpop.f32.mrb[0].mxu0
      %v2022 = vadd.f32 %v1938, %v2021
      %v2023 = vpop.f32.mrb[0].mxu0
      %2024 = vmatprep.mubr.f32.mxu0 0.0
      %2025 = vmatmul.mubr.f32.gmra.mrb[0].mxu0 %v1710
      %v2026 = vpop.f32.mrb[0].mxu0
      %v2027 = vadd.f32 %v1938, %v2026
      %v2028 = vpop.f32.mrb[0].mxu0
      %2029 = vmatprep.mubr.f32.mxu0 0.0
      %2030 = vmatmul.mubr.f32.gmra.mrb[0].mxu0 %v1713
      %v2031 = vpop.f32.mrb[0].mxu0
      %v2032 = vadd.f32 %v1938, %v2031
      %v2033 = vpop.f32.mrb[0].mxu0
      %2034 = vmatprep.mubr.f32.mxu0 0.0
      %2035 = vmatmul.mubr.f32.gmra.mrb[0].mxu0 %v1716
      %v2036 = vpop.f32.mrb[0].mxu0
      %v2037 = vadd.f32 %v1938, %v2036
      %v2038 = vpop.f32.mrb[0].mxu0
      %2039 = vdwg.mxu0
      %v2040 = vld [vmem:[%s1177] sm:$0xff]
      %v2041 = vld [vmem:[%s1177 + $0x8] sm:$0xff]
      %v2042 = vld [vmem:[%s1177 + $0x10] sm:$0xff]
      %v2043 = vld [vmem:[%s1177 + $0x18] sm:$0xff]
      %v2044 = vld [vmem:[%s5] sm:$0xff]
      %v2045 = vld [vmem:[%s5 + $0x8] sm:$0xff]
      %v2046 = vld [vmem:[%s5 + $0x10] sm:$0xff]
      %v2047 = vld [vmem:[%s5 + $0x18] sm:$0xff]
      %v2048 = vld [vmem:[%s5 + $0x20] sm:$0xff]
      %v2049 = vld [vmem:[%s5 + $0x28] sm:$0xff]
      %v2050 = vld [vmem:[%s5 + $0x30] sm:$0xff]
      %vm2051 = vcmask 31744
      %v2053 = vsel %vm2051, %v1785, 0
      %v2056 = vsel %vm2051, %v1790, 0
      %v2059 = vsel %vm2051, %v1795, 0
      %v2062 = vsel %vm2051, %v1800, 0
      %v2065 = vsel %vm2051, %v1805, 0
      %v2068 = vsel %vm2051, %v1810, 0
      %v2071 = vsel %vm2051, %v1815, 0
      %v2074 = vsel %vm2051, %v1896, 0
      %v2077 = vsel %vm2051, %v1901, 0
      %v2080 = vsel %vm2051, %v1906, 0
      %v2083 = vsel %vm2051, %v1911, 0
      %v2086 = vsel %vm2051, %v1916, 0
      %v2089 = vsel %vm2051, %v1921, 0
      %v2092 = vsel %vm2051, %v1926, 0
      %2094 = vmatprep.subr.mxu0 0.0
      %2095 = vmatpush1.xpose.msra.mxu0 %v2074
      %2096 = vmatprep.subr.mxu0 0.0
      %2097 = vmatpush1.xpose.msra.mxu0 %v2077
      %2098 = vmatprep.subr.mxu0 0.0
      %2099 = vmatpush1.xpose.msra.mxu0 %v2080
      %2100 = vmatprep.subr.mxu0 0.0
      %2101 = vmatpush1.xpose.msra.mxu0 %v2083
      %2102 = vmatprep.subr.mxu0 0.0
      %2103 = vmatpush1.xpose.msra.mxu0 %v2086
      %2104 = vmatprep.subr.mxu0 0.0
      %2105 = vmatpush1.xpose.msra.mxu0 %v2089
      %2106 = vmatprep.subr.mxu0 0.0
      %2107 = vmatpush1.xpose.msra.mxu0 %v2092
      %2108 = vmatprep.subr.mxu0 0.0
      %2109 = vmatpush1.xpose.msra.mxu0 0.0
      %2110 = vmatprep.subr.mxu0 0.0
      %2111 = vmatpush1.xpose.msra.mxu0 0.0
      %2112 = vmatprep.subr.mxu0 0.0
      %2113 = vmatpush1.xpose.msra.mxu0 0.0
      %2114 = vmatprep.subr.mxu0 0.0
      %2115 = vmatpush1.xpose.msra.mxu0 0.0
      %2116 = vmatprep.subr.mxu0 0.0
      %2117 = vmatpush1.xpose.msra.mxu0 0.0
      %2118 = vmatprep.subr.mxu0 0.0
      %2119 = vmatpush1.xpose.msra.mxu0 0.0
      %2120 = vmatprep.subr.mxu0 0.0
      %2121 = vmatpush1.xpose.msra.mxu0 0.0
      %2122 = vmatprep.subr.mxu0 0.0
      %2123 = vmatpush1.xpose.msra.mxu0 0.0
      %2124 = vmatprep.subr.mxu0 0.0
      %2125 = vmatpush1.xpose.msra.mxu0 0.0
      %2126 = vmatprep.subr.mxu0 0.0
      %2127 = vmatpush1.xpose.msra.mxu0 0.0
      %2128 = vmatprep.subr.mxu0 0.0
      %2129 = vmatpush1.xpose.msra.mxu0 0.0
      %2130 = vmatprep.subr.mxu0 0.0
      %2131 = vmatpush1.xpose.msra.mxu0 0.0
      %2132 = vmatprep.subr.mxu0 0.0
      %2133 = vmatpush1.xpose.msra.mxu0 0.0
      %2134 = vmatprep.subr.mxu0 0.0
      %2135 = vmatpush1.xpose.msra.mxu0 0.0
      %2136 = vmatprep.subr.mxu0 0.0
      %2137 = vmatpush1.xpose.msra.mxu0 0.0
      %2138 = vmatprep.subr.mxu0 0.0
      %2139 = vmatpush1.xpose.msra.mxu0 0.0
      %2140 = vmatprep.subr.mxu0 0.0
      %2141 = vmatpush1.xpose.msra.mxu0 0.0
      %2142 = vmatprep.subr.mxu0 0.0
      %2143 = vmatpush1.xpose.msra.mxu0 0.0
      %2144 = vmatprep.subr.mxu0 0.0
      %2145 = vmatpush1.xpose.msra.mxu0 0.0
      %2146 = vmatprep.subr.mxu0 0.0
      %2147 = vmatpush1.xpose.msra.mxu0 0.0
      %2148 = vmatprep.subr.mxu0 0.0
      %2149 = vmatpush1.xpose.msra.mxu0 0.0
      %2150 = vmatprep.subr.mxu0 0.0
      %2151 = vmatpush1.xpose.msra.mxu0 0.0
      %2152 = vmatprep.subr.mxu0 0.0
      %2153 = vmatpush1.xpose.msra.mxu0 0.0
      %2154 = vmatprep.subr.mxu0 0.0
      %2155 = vmatpush1.xpose.msra.mxu0 0.0
      %2156 = vmatprep.subr.mxu0 0.0
      %2157 = vmatpush1.xpose.msra.mxu0 0.0
      %2158 = vmatprep.mubr.f32.mxu0 0.0
      %2159 = vmatmul.mubr.f32.gmra.mrb[0].mxu0 %v2053
      %v2160 = vpop.f32.mrb[0].mxu0
      %v2161 = vadd.f32 0.0, %v2160
      %v2162 = vpop.f32.mrb[0].mxu0
      %2163 = vmatprep.mubr.f32.mxu0 0.0
      %2164 = vmatmul.mubr.f32.gmra.mrb[0].mxu0 %v2056
      %v2165 = vpop.f32.mrb[0].mxu0
      %v2166 = vadd.f32 0.0, %v2165
      %v2167 = vpop.f32.mrb[0].mxu0
      %2168 = vmatprep.mubr.f32.mxu0 0.0
      %2169 = vmatmul.mubr.f32.gmra.mrb[0].mxu0 %v2059
      %v2170 = vpop.f32.mrb[0].mxu0
      %v2171 = vadd.f32 0.0, %v2170
      %v2172 = vpop.f32.mrb[0].mxu0
      %2173 = vmatprep.mubr.f32.mxu0 0.0
      %2174 = vmatmul.mubr.f32.gmra.mrb[0].mxu0 %v2062
      %v2175 = vpop.f32.mrb[0].mxu0
      %v2176 = vadd.f32 0.0, %v2175
      %v2177 = vpop.f32.mrb[0].mxu0
      %2178 = vmatprep.mubr.f32.mxu0 0.0
      %2179 = vmatmul.mubr.f32.gmra.mrb[0].mxu0 %v2065
      %v2180 = vpop.f32.mrb[0].mxu0
      %v2181 = vadd.f32 0.0, %v2180
      %v2182 = vpop.f32.mrb[0].mxu0
      %2183 = vmatprep.mubr.f32.mxu0 0.0
      %2184 = vmatmul.mubr.f32.gmra.mrb[0].mxu0 %v2068
      %v2185 = vpop.f32.mrb[0].mxu0
      %v2186 = vadd.f32 0.0, %v2185
      %v2187 = vpop.f32.mrb[0].mxu0
      %2188 = vmatprep.mubr.f32.mxu0 0.0
      %2189 = vmatmul.mubr.f32.gmra.mrb[0].mxu0 %v2071
      %v2190 = vpop.f32.mrb[0].mxu0
      %v2191 = vadd.f32 0.0, %v2190
      %v2192 = vpop.f32.mrb[0].mxu0
      %2193 = vdwg.mxu0
      %v2194 = vmul.f32 %v2161, 0.5
      %v2195 = vmul.f32 %v2166, 0.5
      %v2196 = vmul.f32 %v2171, 0.5
      %v2197 = vmul.f32 %v2176, 0.5
      %v2198 = vmul.f32 %v2181, 0.5
      %v2199 = vmul.f32 %v2186, 0.5
      %v2200 = vmul.f32 %v2191, 0.5
      %v2201 = vadd.f32 %v2194, %v2044
      %v2202 = vadd.f32 %v2195, %v2045
      %v2203 = vadd.f32 %v2196, %v2046
      %v2204 = vadd.f32 %v2197, %v2047
      %v2205 = vadd.f32 %v2198, %v2048
      %v2206 = vadd.f32 %v2199, %v2049
      %v2207 = vadd.f32 %v2200, %v2050
      %vm2208 = vcmask 457728
      %v2209 = vsel %vm2208, %v2201, -inf
      %2210 = vmax.xlane.f32.xlu0 %v2209
      %v2211 = vpop.xlane.xlu0 %2210
      %v2212 = vsel %vm2208, %v2202, -inf
      %2213 = vmax.xlane.f32.xlu0 %v2212
      %v2214 = vpop.xlane.xlu0 %2213
      %v2215 = vsel %vm2208, %v2203, -inf
      %2216 = vmax.xlane.f32.xlu0 %v2215
      %v2217 = vpop.xlane.xlu0 %2216
      %v2218 = vsel %vm2208, %v2204, -inf
      %2219 = vmax.xlane.f32.xlu0 %v2218
      %v2220 = vpop.xlane.xlu0 %2219
      %v2221 = vsel %vm2208, %v2205, -inf
      %2222 = vmax.xlane.f32.xlu0 %v2221
      %v2223 = vpop.xlane.xlu0 %2222
      %v2224 = vsel %vm2208, %v2206, -inf
      %2225 = vmax.xlane.f32.xlu0 %v2224
      %v2226 = vpop.xlane.xlu0 %2225
      %v2227 = vsel %vm2208, %v2207, -inf
      %2228 = vmax.xlane.f32.xlu0 %v2227
      %v2229 = vpop.xlane.xlu0 %2228
      %v2230 = vsub.f32 %v2201, %v2211
      %v2231 = vsub.f32 %v2202, %v2214
      %v2232 = vsub.f32 %v2203, %v2217
      %v2233 = vsub.f32 %v2204, %v2220
      %v2234 = vsub.f32 %v2205, %v2223
      %v2235 = vsub.f32 %v2206, %v2226
      %v2236 = vsub.f32 %v2207, %v2229
      %v2237 = vmul.f32 %v2230, 1.442695
      %v2238 = vpow.pop %v2237
      %v2239 = vmul.f32 %v2231, 1.442695
      %v2240 = vpow.pop %v2239
      %v2241 = vmul.f32 %v2232, 1.442695
      %v2242 = vpow.pop %v2241
      %v2243 = vmul.f32 %v2233, 1.442695
      %v2244 = vpow.pop %v2243
      %v2245 = vmul.f32 %v2234, 1.442695
      %v2246 = vpow.pop %v2245
      %v2247 = vmul.f32 %v2235, 1.442695
      %v2248 = vpow.pop %v2247
      %v2249 = vmul.f32 %v2236, 1.442695
      %v2250 = vpow.pop %v2249
      %v2251 = vsel %vm2208, %v2238, 0.0
      %2252 = vadd.xlane.f32.xlu0 %v2251
      %v2253 = vpop.xlane.xlu0 %2252
      %v2254 = vsel %vm2208, %v2240, 0.0
      %2255 = vadd.xlane.f32.xlu0 %v2254
      %v2256 = vpop.xlane.xlu0 %2255
      %v2257 = vsel %vm2208, %v2242, 0.0
      %2258 = vadd.xlane.f32.xlu0 %v2257
      %v2259 = vpop.xlane.xlu0 %2258
      %v2260 = vsel %vm2208, %v2244, 0.0
      %2261 = vadd.xlane.f32.xlu0 %v2260
      %v2262 = vpop.xlane.xlu0 %2261
      %v2263 = vsel %vm2208, %v2246, 0.0
      %2264 = vadd.xlane.f32.xlu0 %v2263
      %v2265 = vpop.xlane.xlu0 %2264
      %v2266 = vsel %vm2208, %v2248, 0.0
      %2267 = vadd.xlane.f32.xlu0 %v2266
      %v2268 = vpop.xlane.xlu0 %2267
      %v2269 = vsel %vm2208, %v2250, 0.0
      %2270 = vadd.xlane.f32.xlu0 %v2269
      %v2271 = vpop.xlane.xlu0 %2270
      %v2272 = vrcp.pop %v2253
      %v2273 = vrcp.pop %v2256
      %v2274 = vrcp.pop %v2259
      %v2275 = vrcp.pop %v2262
      %v2276 = vrcp.pop %v2265
      %v2277 = vrcp.pop %v2268
      %v2278 = vrcp.pop %v2271
      %v2279 = vmul.f32 %v2238, %v2272
      %v2280 = vmul.f32 %v2240, %v2273
      %v2281 = vmul.f32 %v2242, %v2274
      %v2282 = vmul.f32 %v2244, %v2275
      %v2283 = vmul.f32 %v2246, %v2276
      %v2284 = vmul.f32 %v2248, %v2277
      %v2285 = vmul.f32 %v2250, %v2278
      %v2287 = vsel %vm2208, %v2279, 0
      %v2290 = vsel %vm2208, %v2280, 0
      %v2293 = vsel %vm2208, %v2281, 0
      %v2296 = vsel %vm2208, %v2282, 0
      %v2299 = vsel %vm2208, %v2283, 0
      %v2302 = vsel %vm2208, %v2284, 0
      %v2305 = vsel %vm2208, %v2285, 0
      %2307 = vmatprep.subr.mxu0 0.0
      %2308 = vmatpush1.msra.mxu0 %v2007
      %2309 = vmatprep.subr.mxu0 0.0
      %2310 = vmatpush1.msra.mxu0 %v2012
      %2311 = vmatprep.subr.mxu0 0.0
      %2312 = vmatpush1.msra.mxu0 %v2017
      %2313 = vmatprep.subr.mxu0 0.0
      %2314 = vmatpush1.msra.mxu0 %v2022
      %2315 = vmatprep.subr.mxu0 0.0
      %2316 = vmatpush1.msra.mxu0 %v2027
      %2317 = vmatprep.subr.mxu0 0.0
      %2318 = vmatpush1.msra.mxu0 %v2032
      %2319 = vmatprep.subr.mxu0 0.0
      %2320 = vmatpush1.msra.mxu0 %v2037
      %2321 = vmatprep.subr.mxu0 0.0
      %2322 = vmatpush1.msra.mxu0 0.0
      %2323 = vmatprep.subr.mxu0 0.0
      %2324 = vmatpush1.msra.mxu0 0.0
      %2325 = vmatprep.subr.mxu0 0.0
      %2326 = vmatpush1.msra.mxu0 0.0
      %2327 = vmatprep.subr.mxu0 0.0
      %2328 = vmatpush1.msra.mxu0 0.0
      %2329 = vmatprep.subr.mxu0 0.0
      %2330 = vmatpush1.msra.mxu0 0.0
      %2331 = vmatprep.subr.mxu0 0.0
      %2332 = vmatpush1.msra.mxu0 0.0
      %2333 = vmatprep.subr.mxu0 0.0
      %2334 = vmatpush1.msra.mxu0 0.0
      %2335 = vmatprep.subr.mxu0 0.0
      %2336 = vmatpush1.msra.mxu0 0.0
      %2337 = vmatprep.subr.mxu0 0.0
      %2338 = vmatpush1.msra.mxu0 0.0
      %2339 = vmatprep.subr.mxu0 0.0
      %2340 = vmatpush1.msra.mxu0 0.0
      %2341 = vmatprep.subr.mxu0 0.0
      %2342 = vmatpush1.msra.mxu0 0.0
      %2343 = vmatprep.subr.mxu0 0.0
      %2344 = vmatpush1.msra.mxu0 0.0
      %2345 = vmatprep.subr.mxu0 0.0
      %2346 = vmatpush1.msra.mxu0 0.0
      %2347 = vmatprep.subr.mxu0 0.0
      %2348 = vmatpush1.msra.mxu0 0.0
      %2349 = vmatprep.subr.mxu0 0.0
      %2350 = vmatpush1.msra.mxu0 0.0
      %2351 = vmatprep.subr.mxu0 0.0
      %2352 = vmatpush1.msra.mxu0 0.0
      %2353 = vmatprep.subr.mxu0 0.0
      %2354 = vmatpush1.msra.mxu0 0.0
      %2355 = vmatprep.subr.mxu0 0.0
      %2356 = vmatpush1.msra.mxu0 0.0
      %2357 = vmatprep.subr.mxu0 0.0
      %2358 = vmatpush1.msra.mxu0 0.0
      %2359 = vmatprep.subr.mxu0 0.0
      %2360 = vmatpush1.msra.mxu0 0.0
      %2361 = vmatprep.subr.mxu0 0.0
      %2362 = vmatpush1.msra.mxu0 0.0
      %2363 = vmatprep.subr.mxu0 0.0
      %2364 = vmatpush1.msra.mxu0 0.0
      %2365 = vmatprep.subr.mxu0 0.0
      %2366 = vmatpush1.msra.mxu0 0.0
      %2367 = vmatprep.subr.mxu0 0.0
      %2368 = vmatpush1.msra.mxu0 0.0
      %2369 = vmatprep.subr.mxu0 0.0
      %2370 = vmatpush1.msra.mxu0 0.0
      %2371 = vmatprep.mubr.f32.mxu0 0.0
      %2372 = vmatmul.mubr.f32.gmra.mrb[0].mxu0 %v2287
      %v2373 = vpop.f32.mrb[0].mxu0
      %v2374 = vadd.f32 0.0, %v2373
      %v2375 = vpop.f32.mrb[0].mxu0
      %2376 = vmatprep.mubr.f32.mxu0 0.0
      %2377 = vmatmul.mubr.f32.gmra.mrb[0].mxu0 %v2290
      %v2378 = vpop.f32.mrb[0].mxu0
      %v2379 = vadd.f32 0.0, %v2378
      %v2380 = vpop.f32.mrb[0].mxu0
      %2381 = vmatprep.mubr.f32.mxu0 0.0
      %2382 = vmatmul.mubr.f32.gmra.mrb[0].mxu0 %v2293
      %v2383 = vpop.f32.mrb[0].mxu0
      %v2384 = vadd.f32 0.0, %v2383
      %v2385 = vpop.f32.mrb[0].mxu0
      %2386 = vmatprep.mubr.f32.mxu0 0.0
      %2387 = vmatmul.mubr.f32.gmra.mrb[0].mxu0 %v2296
      %v2388 = vpop.f32.mrb[0].mxu0
      %v2389 = vadd.f32 0.0, %v2388
      %v2390 = vpop.f32.mrb[0].mxu0
      %2391 = vmatprep.mubr.f32.mxu0 0.0
      %2392 = vmatmul.mubr.f32.gmra.mrb[0].mxu0 %v2299
      %v2393 = vpop.f32.mrb[0].mxu0
      %v2394 = vadd.f32 0.0, %v2393
      %v2395 = vpop.f32.mrb[0].mxu0
      %2396 = vmatprep.mubr.f32.mxu0 0.0
      %2397 = vmatmul.mubr.f32.gmra.mrb[0].mxu0 %v2302
      %v2398 = vpop.f32.mrb[0].mxu0
      %v2399 = vadd.f32 0.0, %v2398
      %v2400 = vpop.f32.mrb[0].mxu0
      %2401 = vmatprep.mubr.f32.mxu0 0.0
      %2402 = vmatmul.mubr.f32.gmra.mrb[0].mxu0 %v2305
      %v2403 = vpop.f32.mrb[0].mxu0
      %v2404 = vadd.f32 0.0, %v2403
      %v2405 = vpop.f32.mrb[0].mxu0
      %2406 = vdwg.mxu0
      %2407 = vrot.lane.b32.xlu0 %v1785, 124
      %v2408 = vpop.permute.xlu0 %2407
      %2409 = vrot.lane.b32.xlu0 %v1790, 124
      %v2410 = vpop.permute.xlu0 %2409
      %2411 = vrot.lane.b32.xlu0 %v1795, 124
      %v2412 = vpop.permute.xlu0 %2411
      %2413 = vrot.lane.b32.xlu0 %v1800, 124
      %v2414 = vpop.permute.xlu0 %2413
      %2415 = vrot.lane.b32.xlu0 %v1805, 124
      %v2416 = vpop.permute.xlu0 %2415
      %2417 = vrot.lane.b32.xlu0 %v1810, 124
      %v2418 = vpop.permute.xlu0 %2417
      %2419 = vrot.lane.b32.xlu0 %v1815, 124
      %v2420 = vpop.permute.xlu0 %2419
      %2421 = vrot.lane.b32.xlu0 %v1896, 124
      %v2422 = vpop.permute.xlu0 %2421
      %2423 = vrot.lane.b32.xlu0 %v1901, 124
      %v2424 = vpop.permute.xlu0 %2423
      %2425 = vrot.lane.b32.xlu0 %v1906, 124
      %v2426 = vpop.permute.xlu0 %2425
      %2427 = vrot.lane.b32.xlu0 %v1911, 124
      %v2428 = vpop.permute.xlu0 %2427
      %2429 = vrot.lane.b32.xlu0 %v1916, 124
      %v2430 = vpop.permute.xlu0 %2429
      %2431 = vrot.lane.b32.xlu0 %v1921, 124
      %v2432 = vpop.permute.xlu0 %2431
      %2433 = vrot.lane.b32.xlu0 %v1926, 124
      %v2434 = vpop.permute.xlu0 %2433
      %v2435 = vsel %vm2051, %v2408, 0
      %v2437 = vsel %vm2051, %v2410, 0
      %v2439 = vsel %vm2051, %v2412, 0
      %v2441 = vsel %vm2051, %v2414, 0
      %v2443 = vsel %vm2051, %v2416, 0
      %v2445 = vsel %vm2051, %v2418, 0
      %v2447 = vsel %vm2051, %v2420, 0
      %v2449 = vsel %vm2051, %v2422, 0
      %v2451 = vsel %vm2051, %v2424, 0
      %v2453 = vsel %vm2051, %v2426, 0
      %v2455 = vsel %vm2051, %v2428, 0
      %v2457 = vsel %vm2051, %v2430, 0
      %v2459 = vsel %vm2051, %v2432, 0
      %v2461 = vsel %vm2051, %v2434, 0
      %2463 = vmatprep.subr.mxu0 0.0
      %2464 = vmatpush1.xpose.msra.mxu0 %v2449
      %2465 = vmatprep.subr.mxu0 0.0
      %2466 = vmatpush1.xpose.msra.mxu0 %v2451
      %2467 = vmatprep.subr.mxu0 0.0
      %2468 = vmatpush1.xpose.msra.mxu0 %v2453
      %2469 = vmatprep.subr.mxu0 0.0
      %2470 = vmatpush1.xpose.msra.mxu0 %v2455
      %2471 = vmatprep.subr.mxu0 0.0
      %2472 = vmatpush1.xpose.msra.mxu0 %v2457
      %2473 = vmatprep.subr.mxu0 0.0
      %2474 = vmatpush1.xpose.msra.mxu0 %v2459
      %2475 = vmatprep.subr.mxu0 0.0
      %2476 = vmatpush1.xpose.msra.mxu0 %v2461
      %2477 = vmatprep.subr.mxu0 0.0
      %2478 = vmatpush1.xpose.msra.mxu0 0.0
      %2479 = vmatprep.subr.mxu0 0.0
      %2480 = vmatpush1.xpose.msra.mxu0 0.0
      %2481 = vmatprep.subr.mxu0 0.0
      %2482 = vmatpush1.xpose.msra.mxu0 0.0
      %2483 = vmatprep.subr.mxu0 0.0
      %2484 = vmatpush1.xpose.msra.mxu0 0.0
      %2485 = vmatprep.subr.mxu0 0.0
      %2486 = vmatpush1.xpose.msra.mxu0 0.0
      %2487 = vmatprep.subr.mxu0 0.0
      %2488 = vmatpush1.xpose.msra.mxu0 0.0
      %2489 = vmatprep.subr.mxu0 0.0
      %2490 = vmatpush1.xpose.msra.mxu0 0.0
      %2491 = vmatprep.subr.mxu0 0.0
      %2492 = vmatpush1.xpose.msra.mxu0 0.0
      %2493 = vmatprep.subr.mxu0 0.0
      %2494 = vmatpush1.xpose.msra.mxu0 0.0
      %2495 = vmatprep.subr.mxu0 0.0
      %2496 = vmatpush1.xpose.msra.mxu0 0.0
      %2497 = vmatprep.subr.mxu0 0.0
      %2498 = vmatpush1.xpose.msra.mxu0 0.0
      %2499 = vmatprep.subr.mxu0 0.0
      %2500 = vmatpush1.xpose.msra.mxu0 0.0
      %2501 = vmatprep.subr.mxu0 0.0
      %2502 = vmatpush1.xpose.msra.mxu0 0.0
      %2503 = vmatprep.subr.mxu0 0.0
      %2504 = vmatpush1.xpose.msra.mxu0 0.0
      %2505 = vmatprep.subr.mxu0 0.0
      %2506 = vmatpush1.xpose.msra.mxu0 0.0
      %2507 = vmatprep.subr.mxu0 0.0
      %2508 = vmatpush1.xpose.msra.mxu0 0.0
      %2509 = vmatprep.subr.mxu0 0.0
      %2510 = vmatpush1.xpose.msra.mxu0 0.0
      %2511 = vmatprep.subr.mxu0 0.0
      %2512 = vmatpush1.xpose.msra.mxu0 0.0
      %2513 = vmatprep.subr.mxu0 0.0
      %2514 = vmatpush1.xpose.msra.mxu0 0.0
      %2515 = vmatprep.subr.mxu0 0.0
      %2516 = vmatpush1.xpose.msra.mxu0 0.0
      %2517 = vmatprep.subr.mxu0 0.0
      %2518 = vmatpush1.xpose.msra.mxu0 0.0
      %2519 = vmatprep.subr.mxu0 0.0
      %2520 = vmatpush1.xpose.msra.mxu0 0.0
      %2521 = vmatprep.subr.mxu0 0.0
      %2522 = vmatpush1.xpose.msra.mxu0 0.0
      %2523 = vmatprep.subr.mxu0 0.0
      %2524 = vmatpush1.xpose.msra.mxu0 0.0
      %2525 = vmatprep.subr.mxu0 0.0
      %2526 = vmatpush1.xpose.msra.mxu0 0.0
      %2527 = vmatprep.mubr.f32.mxu0 0.0
      %2528 = vmatmul.mubr.f32.gmra.mrb[0].mxu0 %v2435
      %v2529 = vpop.f32.mrb[0].mxu0
      %v2530 = vadd.f32 0.0, %v2529
      %v2531 = vpop.f32.mrb[0].mxu0
      %2532 = vmatprep.mubr.f32.mxu0 0.0
      %2533 = vmatmul.mubr.f32.gmra.mrb[0].mxu0 %v2437
      %v2534 = vpop.f32.mrb[0].mxu0
      %v2535 = vadd.f32 0.0, %v2534
      %v2536 = vpop.f32.mrb[0].mxu0
      %2537 = vmatprep.mubr.f32.mxu0 0.0
      %2538 = vmatmul.mubr.f32.gmra.mrb[0].mxu0 %v2439
      %v2539 = vpop.f32.mrb[0].mxu0
      %v2540 = vadd.f32 0.0, %v2539
      %v2541 = vpop.f32.mrb[0].mxu0
      %2542 = vmatprep.mubr.f32.mxu0 0.0
      %2543 = vmatmul.mubr.f32.gmra.mrb[0].mxu0 %v2441
      %v2544 = vpop.f32.mrb[0].mxu0
      %v2545 = vadd.f32 0.0, %v2544
      %v2546 = vpop.f32.mrb[0].mxu0
      %2547 = vmatprep.mubr.f32.mxu0 0.0
      %2548 = vmatmul.mubr.f32.gmra.mrb[0].mxu0 %v2443
      %v2549 = vpop.f32.mrb[0].mxu0
      %v2550 = vadd.f32 0.0, %v2549
      %v2551 = vpop.f32.mrb[0].mxu0
      %2552 = vmatprep.mubr.f32.mxu0 0.0
      %2553 = vmatmul.mubr.f32.gmra.mrb[0].mxu0 %v2445
      %v2554 = vpop.f32.mrb[0].mxu0
      %v2555 = vadd.f32 0.0, %v2554
      %v2556 = vpop.f32.mrb[0].mxu0
      %2557 = vmatprep.mubr.f32.mxu0 0.0
      %2558 = vmatmul.mubr.f32.gmra.mrb[0].mxu0 %v2447
      %v2559 = vpop.f32.mrb[0].mxu0
      %v2560 = vadd.f32 0.0, %v2559
      %v2561 = vpop.f32.mrb[0].mxu0
      %2562 = vdwg.mxu0
      %v2563 = vmul.f32 %v2530, 0.5
      %v2564 = vmul.f32 %v2535, 0.5
      %v2565 = vmul.f32 %v2540, 0.5
      %v2566 = vmul.f32 %v2545, 0.5
      %v2567 = vmul.f32 %v2550, 0.5
      %v2568 = vmul.f32 %v2555, 0.5
      %v2569 = vmul.f32 %v2560, 0.5
      %v2570 = vadd.f32 %v2563, %v2044
      %v2571 = vadd.f32 %v2564, %v2045
      %v2572 = vadd.f32 %v2565, %v2046
      %v2573 = vadd.f32 %v2566, %v2047
      %v2574 = vadd.f32 %v2567, %v2048
      %v2575 = vadd.f32 %v2568, %v2049
      %v2576 = vadd.f32 %v2569, %v2050
      %v2577 = vsel %vm2208, %v2570, -inf
      %2578 = vmax.xlane.f32.xlu0 %v2577
      %v2579 = vpop.xlane.xlu0 %2578
      %v2580 = vsel %vm2208, %v2571, -inf
      %2581 = vmax.xlane.f32.xlu0 %v2580
      %v2582 = vpop.xlane.xlu0 %2581
      %v2583 = vsel %vm2208, %v2572, -inf
      %2584 = vmax.xlane.f32.xlu0 %v2583
      %v2585 = vpop.xlane.xlu0 %2584
      %v2586 = vsel %vm2208, %v2573, -inf
      %2587 = vmax.xlane.f32.xlu0 %v2586
      %v2588 = vpop.xlane.xlu0 %2587
      %v2589 = vsel %vm2208, %v2574, -inf
      %2590 = vmax.xlane.f32.xlu0 %v2589
      %v2591 = vpop.xlane.xlu0 %2590
      %v2592 = vsel %vm2208, %v2575, -inf
      %2593 = vmax.xlane.f32.xlu0 %v2592
      %v2594 = vpop.xlane.xlu0 %2593
      %v2595 = vsel %vm2208, %v2576, -inf
      %2596 = vmax.xlane.f32.xlu0 %v2595
      %v2597 = vpop.xlane.xlu0 %2596
      %v2598 = vsub.f32 %v2570, %v2579
      %v2599 = vsub.f32 %v2571, %v2582
      %v2600 = vsub.f32 %v2572, %v2585
      %v2601 = vsub.f32 %v2573, %v2588
      %v2602 = vsub.f32 %v2574, %v2591
      %v2603 = vsub.f32 %v2575, %v2594
      %v2604 = vsub.f32 %v2576, %v2597
      %v2605 = vmul.f32 %v2598, 1.442695
      %v2606 = vpow.pop %v2605
      %v2607 = vmul.f32 %v2599, 1.442695
      %v2608 = vpow.pop %v2607
      %v2609 = vmul.f32 %v2600, 1.442695
      %v2610 = vpow.pop %v2609
      %v2611 = vmul.f32 %v2601, 1.442695
      %v2612 = vpow.pop %v2611
      %v2613 = vmul.f32 %v2602, 1.442695
      %v2614 = vpow.pop %v2613
      %v2615 = vmul.f32 %v2603, 1.442695
      %v2616 = vpow.pop %v2615
      %v2617 = vmul.f32 %v2604, 1.442695
      %v2618 = vpow.pop %v2617
      %v2619 = vsel %vm2208, %v2606, 0.0
      %2620 = vadd.xlane.f32.xlu0 %v2619
      %v2621 = vpop.xlane.xlu0 %2620
      %v2622 = vsel %vm2208, %v2608, 0.0
      %2623 = vadd.xlane.f32.xlu0 %v2622
      %v2624 = vpop.xlane.xlu0 %2623
      %v2625 = vsel %vm2208, %v2610, 0.0
      %2626 = vadd.xlane.f32.xlu0 %v2625
      %v2627 = vpop.xlane.xlu0 %2626
      %v2628 = vsel %vm2208, %v2612, 0.0
      %2629 = vadd.xlane.f32.xlu0 %v2628
      %v2630 = vpop.xlane.xlu0 %2629
      %v2631 = vsel %vm2208, %v2614, 0.0
      %2632 = vadd.xlane.f32.xlu0 %v2631
      %v2633 = vpop.xlane.xlu0 %2632
      %v2634 = vsel %vm2208, %v2616, 0.0
      %2635 = vadd.xlane.f32.xlu0 %v2634
      %v2636 = vpop.xlane.xlu0 %2635
      %v2637 = vsel %vm2208, %v2618, 0.0
      %2638 = vadd.xlane.f32.xlu0 %v2637
      %v2639 = vpop.xlane.xlu0 %2638
      %v2640 = vrcp.pop %v2621
      %v2641 = vrcp.pop %v2624
      %v2642 = vrcp.pop %v2627
      %v2643 = vrcp.pop %v2630
      %v2644 = vrcp.pop %v2633
      %v2645 = vrcp.pop %v2636
      %v2646 = vrcp.pop %v2639
      %v2647 = vmul.f32 %v2606, %v2640
      %v2648 = vmul.f32 %v2608, %v2641
      %v2649 = vmul.f32 %v2610, %v2642
      %v2650 = vmul.f32 %v2612, %v2643
      %v2651 = vmul.f32 %v2614, %v2644
      %v2652 = vmul.f32 %v2616, %v2645
      %v2653 = vmul.f32 %v2618, %v2646
      %2661 = vrot.lane.b32.xlu0 %v2007, 124
      %v2662 = vpop.permute.xlu0 %2661
      %2663 = vrot.lane.b32.xlu0 %v2012, 124
      %v2664 = vpop.permute.xlu0 %2663
      %2665 = vrot.lane.b32.xlu0 %v2017, 124
      %v2666 = vpop.permute.xlu0 %2665
      %2667 = vrot.lane.b32.xlu0 %v2022, 124
      %v2668 = vpop.permute.xlu0 %2667
      %2669 = vrot.lane.b32.xlu0 %v2027, 124
      %v2670 = vpop.permute.xlu0 %2669
      %2671 = vrot.lane.b32.xlu0 %v2032, 124
      %v2672 = vpop.permute.xlu0 %2671
      %2673 = vrot.lane.b32.xlu0 %v2037, 124
      %v2674 = vpop.permute.xlu0 %2673
      %v2683 = vsel %vm2208, %v2647, 0
      %v2686 = vsel %vm2208, %v2648, 0
      %v2689 = vsel %vm2208, %v2649, 0
      %v2692 = vsel %vm2208, %v2650, 0
      %v2695 = vsel %vm2208, %v2651, 0
      %v2698 = vsel %vm2208, %v2652, 0
      %v2701 = vsel %vm2208, %v2653, 0
      %2703 = vmatprep.subr.mxu0 0.0
      %2704 = vmatpush1.msra.mxu0 %v2662
      %2705 = vmatprep.subr.mxu0 0.0
      %2706 = vmatpush1.msra.mxu0 %v2664
      %2707 = vmatprep.subr.mxu0 0.0
      %2708 = vmatpush1.msra.mxu0 %v2666
      %2709 = vmatprep.subr.mxu0 0.0
      %2710 = vmatpush1.msra.mxu0 %v2668
      %2711 = vmatprep.subr.mxu0 0.0
      %2712 = vmatpush1.msra.mxu0 %v2670
      %2713 = vmatprep.subr.mxu0 0.0
      %2714 = vmatpush1.msra.mxu0 %v2672
      %2715 = vmatprep.subr.mxu0 0.0
      %2716 = vmatpush1.msra.mxu0 %v2674
      %2717 = vmatprep.subr.mxu0 0.0
      %2718 = vmatpush1.msra.mxu0 0.0
      %2719 = vmatprep.subr.mxu0 0.0
      %2720 = vmatpush1.msra.mxu0 0.0
      %2721 = vmatprep.subr.mxu0 0.0
      %2722 = vmatpush1.msra.mxu0 0.0
      %2723 = vmatprep.subr.mxu0 0.0
      %2724 = vmatpush1.msra.mxu0 0.0
      %2725 = vmatprep.subr.mxu0 0.0
      %2726 = vmatpush1.msra.mxu0 0.0
      %2727 = vmatprep.subr.mxu0 0.0
      %2728 = vmatpush1.msra.mxu0 0.0
      %2729 = vmatprep.subr.mxu0 0.0
      %2730 = vmatpush1.msra.mxu0 0.0
      %2731 = vmatprep.subr.mxu0 0.0
      %2732 = vmatpush1.msra.mxu0 0.0
      %2733 = vmatprep.subr.mxu0 0.0
      %2734 = vmatpush1.msra.mxu0 0.0
      %2735 = vmatprep.subr.mxu0 0.0
      %2736 = vmatpush1.msra.mxu0 0.0
      %2737 = vmatprep.subr.mxu0 0.0
      %2738 = vmatpush1.msra.mxu0 0.0
      %2739 = vmatprep.subr.mxu0 0.0
      %2740 = vmatpush1.msra.mxu0 0.0
      %2741 = vmatprep.subr.mxu0 0.0
      %2742 = vmatpush1.msra.mxu0 0.0
      %2743 = vmatprep.subr.mxu0 0.0
      %2744 = vmatpush1.msra.mxu0 0.0
      %2745 = vmatprep.subr.mxu0 0.0
      %2746 = vmatpush1.msra.mxu0 0.0
      %2747 = vmatprep.subr.mxu0 0.0
      %2748 = vmatpush1.msra.mxu0 0.0
      %2749 = vmatprep.subr.mxu0 0.0
      %2750 = vmatpush1.msra.mxu0 0.0
      %2751 = vmatprep.subr.mxu0 0.0
      %2752 = vmatpush1.msra.mxu0 0.0
      %2753 = vmatprep.subr.mxu0 0.0
      %2754 = vmatpush1.msra.mxu0 0.0
      %2755 = vmatprep.subr.mxu0 0.0
      %2756 = vmatpush1.msra.mxu0 0.0
      %2757 = vmatprep.subr.mxu0 0.0
      %2758 = vmatpush1.msra.mxu0 0.0
      %2759 = vmatprep.subr.mxu0 0.0
      %2760 = vmatpush1.msra.mxu0 0.0
      %2761 = vmatprep.subr.mxu0 0.0
      %2762 = vmatpush1.msra.mxu0 0.0
      %2763 = vmatprep.subr.mxu0 0.0
      %2764 = vmatpush1.msra.mxu0 0.0
      %2765 = vmatprep.subr.mxu0 0.0
      %2766 = vmatpush1.msra.mxu0 0.0
      %2767 = vmatprep.mubr.f32.mxu0 0.0
      %2768 = vmatmul.mubr.f32.gmra.mrb[0].mxu0 %v2683
      %v2769 = vpop.f32.mrb[0].mxu0
      %v2770 = vadd.f32 0.0, %v2769
      %v2771 = vpop.f32.mrb[0].mxu0
      %2772 = vmatprep.mubr.f32.mxu0 0.0
      %2773 = vmatmul.mubr.f32.gmra.mrb[0].mxu0 %v2686
      %v2774 = vpop.f32.mrb[0].mxu0
      %v2775 = vadd.f32 0.0, %v2774
      %v2776 = vpop.f32.mrb[0].mxu0
      %2777 = vmatprep.mubr.f32.mxu0 0.0
      %2778 = vmatmul.mubr.f32.gmra.mrb[0].mxu0 %v2689
      %v2779 = vpop.f32.mrb[0].mxu0
      %v2780 = vadd.f32 0.0, %v2779
      %v2781 = vpop.f32.mrb[0].mxu0
      %2782 = vmatprep.mubr.f32.mxu0 0.0
      %2783 = vmatmul.mubr.f32.gmra.mrb[0].mxu0 %v2692
      %v2784 = vpop.f32.mrb[0].mxu0
      %v2785 = vadd.f32 0.0, %v2784
      %v2786 = vpop.f32.mrb[0].mxu0
      %2787 = vmatprep.mubr.f32.mxu0 0.0
      %2788 = vmatmul.mubr.f32.gmra.mrb[0].mxu0 %v2695
      %v2789 = vpop.f32.mrb[0].mxu0
      %v2790 = vadd.f32 0.0, %v2789
      %v2791 = vpop.f32.mrb[0].mxu0
      %2792 = vmatprep.mubr.f32.mxu0 0.0
      %2793 = vmatmul.mubr.f32.gmra.mrb[0].mxu0 %v2698
      %v2794 = vpop.f32.mrb[0].mxu0
      %v2795 = vadd.f32 0.0, %v2794
      %v2796 = vpop.f32.mrb[0].mxu0
      %2797 = vmatprep.mubr.f32.mxu0 0.0
      %2798 = vmatmul.mubr.f32.gmra.mrb[0].mxu0 %v2701
      %v2799 = vpop.f32.mrb[0].mxu0
      %v2800 = vadd.f32 0.0, %v2799
      %v2801 = vpop.f32.mrb[0].mxu0
      %2802 = vdwg.mxu0
      %v2804 = vrot.slane %v2040, 4
      %v2806 = vsel %vm2051, %v2770, 0
      %v2809 = vsel %vm2051, %v2775, 0
      %v2812 = vsel %vm2051, %v2780, 0
      %v2815 = vsel %vm2051, %v2785, 0
      %v2818 = vsel %vm2051, %v2790, 0
      %v2821 = vsel %vm2051, %v2795, 0
      %v2824 = vsel %vm2051, %v2800, 0
      %vm2826 = vcmask 1043456
      %v2827 = vsel %vm2826, %v2804, 0
      %2829 = vmatprep.subr.mxu0 0.0
      %2830 = vmatpush1.msra.mxu0 %v2827
      %2831 = vmatprep.subr.mxu0 0.0
      %2832 = vmatpush1.msra.mxu0 0.0
      %2833 = vmatprep.subr.mxu0 0.0
      %2834 = vmatpush1.msra.mxu0 0.0
      %2835 = vmatprep.subr.mxu0 0.0
      %2836 = vmatpush1.msra.mxu0 0.0
      %2837 = vmatprep.subr.mxu0 0.0
      %2838 = vmatpush1.msra.mxu0 0.0
      %2839 = vmatprep.subr.mxu0 0.0
      %2840 = vmatpush1.msra.mxu0 0.0
      %2841 = vmatprep.subr.mxu0 0.0
      %2842 = vmatpush1.msra.mxu0 0.0
      %2843 = vmatprep.subr.mxu0 0.0
      %2844 = vmatpush1.msra.mxu0 0.0
      %2845 = vmatprep.subr.mxu0 0.0
      %2846 = vmatpush1.msra.mxu0 0.0
      %2847 = vmatprep.subr.mxu0 0.0
      %2848 = vmatpush1.msra.mxu0 0.0
      %2849 = vmatprep.subr.mxu0 0.0
      %2850 = vmatpush1.msra.mxu0 0.0
      %2851 = vmatprep.subr.mxu0 0.0
      %2852 = vmatpush1.msra.mxu0 0.0
      %2853 = vmatprep.subr.mxu0 0.0
      %2854 = vmatpush1.msra.mxu0 0.0
      %2855 = vmatprep.subr.mxu0 0.0
      %2856 = vmatpush1.msra.mxu0 0.0
      %2857 = vmatprep.subr.mxu0 0.0
      %2858 = vmatpush1.msra.mxu0 0.0
      %2859 = vmatprep.subr.mxu0 0.0
      %2860 = vmatpush1.msra.mxu0 0.0
      %2861 = vmatprep.subr.mxu0 0.0
      %2862 = vmatpush1.msra.mxu0 0.0
      %2863 = vmatprep.subr.mxu0 0.0
      %2864 = vmatpush1.msra.mxu0 0.0
      %2865 = vmatprep.subr.mxu0 0.0
      %2866 = vmatpush1.msra.mxu0 0.0
      %2867 = vmatprep.subr.mxu0 0.0
      %2868 = vmatpush1.msra.mxu0 0.0
      %2869 = vmatprep.subr.mxu0 0.0
      %2870 = vmatpush1.msra.mxu0 0.0
      %2871 = vmatprep.subr.mxu0 0.0
      %2872 = vmatpush1.msra.mxu0 0.0
      %2873 = vmatprep.subr.mxu0 0.0
      %2874 = vmatpush1.msra.mxu0 0.0
      %2875 = vmatprep.subr.mxu0 0.0
      %2876 = vmatpush1.msra.mxu0 0.0
      %2877 = vmatprep.subr.mxu0 0.0
      %2878 = vmatpush1.msra.mxu0 0.0
      %2879 = vmatprep.subr.mxu0 0.0
      %2880 = vmatpush1.msra.mxu0 0.0
      %2881 = vmatprep.subr.mxu0 0.0
      %2882 = vmatpush1.msra.mxu0 0.0
      %2883 = vmatprep.subr.mxu0 0.0
      %2884 = vmatpush1.msra.mxu0 0.0
      %2885 = vmatprep.subr.mxu0 0.0
      %2886 = vmatpush1.msra.mxu0 0.0
      %2887 = vmatprep.subr.mxu0 0.0
      %2888 = vmatpush1.msra.mxu0 0.0
      %2889 = vmatprep.subr.mxu0 0.0
      %2890 = vmatpush1.msra.mxu0 0.0
      %2891 = vmatprep.subr.mxu0 0.0
      %2892 = vmatpush1.msra.mxu0 0.0
      %2893 = vmatprep.mubr.f32.mxu0 0.0
      %2894 = vmatmul.mubr.f32.gmra.mrb[0].mxu0 %v2806
      %v2895 = vpop.f32.mrb[0].mxu0
      %v2896 = vadd.f32 0.0, %v2895
      %v2897 = vpop.f32.mrb[0].mxu0
      %2898 = vmatprep.mubr.f32.mxu0 0.0
      %2899 = vmatmul.mubr.f32.gmra.mrb[0].mxu0 %v2809
      %v2900 = vpop.f32.mrb[0].mxu0
      %v2901 = vadd.f32 0.0, %v2900
      %v2902 = vpop.f32.mrb[0].mxu0
      %2903 = vmatprep.mubr.f32.mxu0 0.0
      %2904 = vmatmul.mubr.f32.gmra.mrb[0].mxu0 %v2812
      %v2905 = vpop.f32.mrb[0].mxu0
      %v2906 = vadd.f32 0.0, %v2905
      %v2907 = vpop.f32.mrb[0].mxu0
      %2908 = vmatprep.mubr.f32.mxu0 0.0
      %2909 = vmatmul.mubr.f32.gmra.mrb[0].mxu0 %v2815
      %v2910 = vpop.f32.mrb[0].mxu0
      %v2911 = vadd.f32 0.0, %v2910
      %v2912 = vpop.f32.mrb[0].mxu0
      %2913 = vmatprep.mubr.f32.mxu0 0.0
      %2914 = vmatmul.mubr.f32.gmra.mrb[0].mxu0 %v2818
      %v2915 = vpop.f32.mrb[0].mxu0
      %v2916 = vadd.f32 0.0, %v2915
      %v2917 = vpop.f32.mrb[0].mxu0
      %2918 = vmatprep.mubr.f32.mxu0 0.0
      %2919 = vmatmul.mubr.f32.gmra.mrb[0].mxu0 %v2821
      %v2920 = vpop.f32.mrb[0].mxu0
      %v2921 = vadd.f32 0.0, %v2920
      %v2922 = vpop.f32.mrb[0].mxu0
      %2923 = vmatprep.mubr.f32.mxu0 0.0
      %2924 = vmatmul.mubr.f32.gmra.mrb[0].mxu0 %v2824
      %v2925 = vpop.f32.mrb[0].mxu0
      %v2926 = vadd.f32 0.0, %v2925
      %v2927 = vpop.f32.mrb[0].mxu0
      %2928 = vdwg.mxu0
      %v2930 = vsel %vm2051, %v2374, 0
      %v2933 = vsel %vm2051, %v2379, 0
      %v2936 = vsel %vm2051, %v2384, 0
      %v2939 = vsel %vm2051, %v2389, 0
      %v2942 = vsel %vm2051, %v2394, 0
      %v2945 = vsel %vm2051, %v2399, 0
      %v2948 = vsel %vm2051, %v2404, 0
      %v2950 = vsel %vm2826, %v2040, 0
      %2952 = vmatprep.subr.mxu0 0.0
      %2953 = vmatpush1.msra.mxu0 %v2950
      %2954 = vmatprep.subr.mxu0 0.0
      %2955 = vmatpush1.msra.mxu0 0.0
      %2956 = vmatprep.subr.mxu0 0.0
      %2957 = vmatpush1.msra.mxu0 0.0
      %2958 = vmatprep.subr.mxu0 0.0
      %2959 = vmatpush1.msra.mxu0 0.0
      %2960 = vmatprep.subr.mxu0 0.0
      %2961 = vmatpush1.msra.mxu0 0.0
      %2962 = vmatprep.subr.mxu0 0.0
      %2963 = vmatpush1.msra.mxu0 0.0
      %2964 = vmatprep.subr.mxu0 0.0
      %2965 = vmatpush1.msra.mxu0 0.0
      %2966 = vmatprep.subr.mxu0 0.0
      %2967 = vmatpush1.msra.mxu0 0.0
      %2968 = vmatprep.subr.mxu0 0.0
      %2969 = vmatpush1.msra.mxu0 0.0
      %2970 = vmatprep.subr.mxu0 0.0
      %2971 = vmatpush1.msra.mxu0 0.0
      %2972 = vmatprep.subr.mxu0 0.0
      %2973 = vmatpush1.msra.mxu0 0.0
      %2974 = vmatprep.subr.mxu0 0.0
      %2975 = vmatpush1.msra.mxu0 0.0
      %2976 = vmatprep.subr.mxu0 0.0
      %2977 = vmatpush1.msra.mxu0 0.0
      %2978 = vmatprep.subr.mxu0 0.0
      %2979 = vmatpush1.msra.mxu0 0.0
      %2980 = vmatprep.subr.mxu0 0.0
      %2981 = vmatpush1.msra.mxu0 0.0
      %2982 = vmatprep.subr.mxu0 0.0
      %2983 = vmatpush1.msra.mxu0 0.0
      %2984 = vmatprep.subr.mxu0 0.0
      %2985 = vmatpush1.msra.mxu0 0.0
      %2986 = vmatprep.subr.mxu0 0.0
      %2987 = vmatpush1.msra.mxu0 0.0
      %2988 = vmatprep.subr.mxu0 0.0
      %2989 = vmatpush1.msra.mxu0 0.0
      %2990 = vmatprep.subr.mxu0 0.0
      %2991 = vmatpush1.msra.mxu0 0.0
      %2992 = vmatprep.subr.mxu0 0.0
      %2993 = vmatpush1.msra.mxu0 0.0
      %2994 = vmatprep.subr.mxu0 0.0
      %2995 = vmatpush1.msra.mxu0 0.0
      %2996 = vmatprep.subr.mxu0 0.0
      %2997 = vmatpush1.msra.mxu0 0.0
      %2998 = vmatprep.subr.mxu0 0.0
      %2999 = vmatpush1.msra.mxu0 0.0
      %3000 = vmatprep.subr.mxu0 0.0
      %3001 = vmatpush1.msra.mxu0 0.0
      %3002 = vmatprep.subr.mxu0 0.0
      %3003 = vmatpush1.msra.mxu0 0.0
      %3004 = vmatprep.subr.mxu0 0.0
      %3005 = vmatpush1.msra.mxu0 0.0
      %3006 = vmatprep.subr.mxu0 0.0
      %3007 = vmatpush1.msra.mxu0 0.0
      %3008 = vmatprep.subr.mxu0 0.0
      %3009 = vmatpush1.msra.mxu0 0.0
      %3010 = vmatprep.subr.mxu0 0.0
      %3011 = vmatpush1.msra.mxu0 0.0
      %3012 = vmatprep.subr.mxu0 0.0
      %3013 = vmatpush1.msra.mxu0 0.0
      %3014 = vmatprep.subr.mxu0 0.0
      %3015 = vmatpush1.msra.mxu0 0.0
      %3016 = vmatprep.mubr.f32.mxu0 0.0
      %3017 = vmatmul.mubr.f32.gmra.mrb[0].mxu0 %v2930
      %v3018 = vpop.f32.mrb[0].mxu0
      %v3019 = vadd.f32 %v2896, %v3018
      %v3020 = vpop.f32.mrb[0].mxu0
      %3021 = vmatprep.mubr.f32.mxu0 0.0
      %3022 = vmatmul.mubr.f32.gmra.mrb[0].mxu0 %v2933
      %v3023 = vpop.f32.mrb[0].mxu0
      %v3024 = vadd.f32 %v2901, %v3023
      %v3025 = vpop.f32.mrb[0].mxu0
      %3026 = vmatprep.mubr.f32.mxu0 0.0
      %3027 = vmatmul.mubr.f32.gmra.mrb[0].mxu0 %v2936
      %v3028 = vpop.f32.mrb[0].mxu0
      %v3029 = vadd.f32 %v2906, %v3028
      %v3030 = vpop.f32.mrb[0].mxu0
      %3031 = vmatprep.mubr.f32.mxu0 0.0
      %3032 = vmatmul.mubr.f32.gmra.mrb[0].mxu0 %v2939
      %v3033 = vpop.f32.mrb[0].mxu0
      %v3034 = vadd.f32 %v2911, %v3033
      %v3035 = vpop.f32.mrb[0].mxu0
      %3036 = vmatprep.mubr.f32.mxu0 0.0
      %3037 = vmatmul.mubr.f32.gmra.mrb[0].mxu0 %v2942
      %v3038 = vpop.f32.mrb[0].mxu0
      %v3039 = vadd.f32 %v2916, %v3038
      %v3040 = vpop.f32.mrb[0].mxu0
      %3041 = vmatprep.mubr.f32.mxu0 0.0
      %3042 = vmatmul.mubr.f32.gmra.mrb[0].mxu0 %v2945
      %v3043 = vpop.f32.mrb[0].mxu0
      %v3044 = vadd.f32 %v2921, %v3043
      %v3045 = vpop.f32.mrb[0].mxu0
      %3046 = vmatprep.mubr.f32.mxu0 0.0
      %3047 = vmatmul.mubr.f32.gmra.mrb[0].mxu0 %v2948
      %v3048 = vpop.f32.mrb[0].mxu0
      %v3049 = vadd.f32 %v2926, %v3048
      %v3050 = vpop.f32.mrb[0].mxu0
      %3051 = vdwg.mxu0
      %3052 = vrot.lane.b32.xlu0 %v1785, 120
      %v3053 = vpop.permute.xlu0 %3052
      %3054 = vrot.lane.b32.xlu0 %v1790, 120
      %v3055 = vpop.permute.xlu0 %3054
      %3056 = vrot.lane.b32.xlu0 %v1795, 120
      %v3057 = vpop.permute.xlu0 %3056
      %3058 = vrot.lane.b32.xlu0 %v1800, 120
      %v3059 = vpop.permute.xlu0 %3058
      %3060 = vrot.lane.b32.xlu0 %v1805, 120
      %v3061 = vpop.permute.xlu0 %3060
      %3062 = vrot.lane.b32.xlu0 %v1810, 120
      %v3063 = vpop.permute.xlu0 %3062
      %3064 = vrot.lane.b32.xlu0 %v1815, 120
      %v3065 = vpop.permute.xlu0 %3064
      %3066 = vrot.lane.b32.xlu0 %v1896, 120
      %v3067 = vpop.permute.xlu0 %3066
      %3068 = vrot.lane.b32.xlu0 %v1901, 120
      %v3069 = vpop.permute.xlu0 %3068
      %3070 = vrot.lane.b32.xlu0 %v1906, 120
      %v3071 = vpop.permute.xlu0 %3070
      %3072 = vrot.lane.b32.xlu0 %v1911, 120
      %v3073 = vpop.permute.xlu0 %3072
      %3074 = vrot.lane.b32.xlu0 %v1916, 120
      %v3075 = vpop.permute.xlu0 %3074
      %3076 = vrot.lane.b32.xlu0 %v1921, 120
      %v3077 = vpop.permute.xlu0 %3076
      %3078 = vrot.lane.b32.xlu0 %v1926, 120
      %v3079 = vpop.permute.xlu0 %3078
      %v3080 = vsel %vm2051, %v3053, 0
      %v3082 = vsel %vm2051, %v3055, 0
      %v3084 = vsel %vm2051, %v3057, 0
      %v3086 = vsel %vm2051, %v3059, 0
      %v3088 = vsel %vm2051, %v3061, 0
      %v3090 = vsel %vm2051, %v3063, 0
      %v3092 = vsel %vm2051, %v3065, 0
      %v3094 = vsel %vm2051, %v3067, 0
      %v3096 = vsel %vm2051, %v3069, 0
      %v3098 = vsel %vm2051, %v3071, 0
      %v3100 = vsel %vm2051, %v3073, 0
      %v3102 = vsel %vm2051, %v3075, 0
      %v3104 = vsel %vm2051, %v3077, 0
      %v3106 = vsel %vm2051, %v3079, 0
      %3108 = vmatprep.subr.mxu0 0.0
      %3109 = vmatpush1.xpose.msra.mxu0 %v3094
      %3110 = vmatprep.subr.mxu0 0.0
      %3111 = vmatpush1.xpose.msra.mxu0 %v3096
      %3112 = vmatprep.subr.mxu0 0.0
      %3113 = vmatpush1.xpose.msra.mxu0 %v3098
      %3114 = vmatprep.subr.mxu0 0.0
      %3115 = vmatpush1.xpose.msra.mxu0 %v3100
      %3116 = vmatprep.subr.mxu0 0.0
      %3117 = vmatpush1.xpose.msra.mxu0 %v3102
      %3118 = vmatprep.subr.mxu0 0.0
      %3119 = vmatpush1.xpose.msra.mxu0 %v3104
      %3120 = vmatprep.subr.mxu0 0.0
      %3121 = vmatpush1.xpose.msra.mxu0 %v3106
      %3122 = vmatprep.subr.mxu0 0.0
      %3123 = vmatpush1.xpose.msra.mxu0 0.0
      %3124 = vmatprep.subr.mxu0 0.0
      %3125 = vmatpush1.xpose.msra.mxu0 0.0
      %3126 = vmatprep.subr.mxu0 0.0
      %3127 = vmatpush1.xpose.msra.mxu0 0.0
      %3128 = vmatprep.subr.mxu0 0.0
      %3129 = vmatpush1.xpose.msra.mxu0 0.0
      %3130 = vmatprep.subr.mxu0 0.0
      %3131 = vmatpush1.xpose.msra.mxu0 0.0
      %3132 = vmatprep.subr.mxu0 0.0
      %3133 = vmatpush1.xpose.msra.mxu0 0.0
      %3134 = vmatprep.subr.mxu0 0.0
      %3135 = vmatpush1.xpose.msra.mxu0 0.0
      %3136 = vmatprep.subr.mxu0 0.0
      %3137 = vmatpush1.xpose.msra.mxu0 0.0
      %3138 = vmatprep.subr.mxu0 0.0
      %3139 = vmatpush1.xpose.msra.mxu0 0.0
      %3140 = vmatprep.subr.mxu0 0.0
      %3141 = vmatpush1.xpose.msra.mxu0 0.0
      %3142 = vmatprep.subr.mxu0 0.0
      %3143 = vmatpush1.xpose.msra.mxu0 0.0
      %3144 = vmatprep.subr.mxu0 0.0
      %3145 = vmatpush1.xpose.msra.mxu0 0.0
      %3146 = vmatprep.subr.mxu0 0.0
      %3147 = vmatpush1.xpose.msra.mxu0 0.0
      %3148 = vmatprep.subr.mxu0 0.0
      %3149 = vmatpush1.xpose.msra.mxu0 0.0
      %3150 = vmatprep.subr.mxu0 0.0
      %3151 = vmatpush1.xpose.msra.mxu0 0.0
      %3152 = vmatprep.subr.mxu0 0.0
      %3153 = vmatpush1.xpose.msra.mxu0 0.0
      %3154 = vmatprep.subr.mxu0 0.0
      %3155 = vmatpush1.xpose.msra.mxu0 0.0
      %3156 = vmatprep.subr.mxu0 0.0
      %3157 = vmatpush1.xpose.msra.mxu0 0.0
      %3158 = vmatprep.subr.mxu0 0.0
      %3159 = vmatpush1.xpose.msra.mxu0 0.0
      %3160 = vmatprep.subr.mxu0 0.0
      %3161 = vmatpush1.xpose.msra.mxu0 0.0
      %3162 = vmatprep.subr.mxu0 0.0
      %3163 = vmatpush1.xpose.msra.mxu0 0.0
      %3164 = vmatprep.subr.mxu0 0.0
      %3165 = vmatpush1.xpose.msra.mxu0 0.0
      %3166 = vmatprep.subr.mxu0 0.0
      %3167 = vmatpush1.xpose.msra.mxu0 0.0
      %3168 = vmatprep.subr.mxu0 0.0
      %3169 = vmatpush1.xpose.msra.mxu0 0.0
      %3170 = vmatprep.subr.mxu0 0.0
      %3171 = vmatpush1.xpose.msra.mxu0 0.0
      %3172 = vmatprep.mubr.f32.mxu0 0.0
      %3173 = vmatmul.mubr.f32.gmra.mrb[0].mxu0 %v3080
      %v3174 = vpop.f32.mrb[0].mxu0
      %v3175 = vadd.f32 0.0, %v3174
      %v3176 = vpop.f32.mrb[0].mxu0
      %3177 = vmatprep.mubr.f32.mxu0 0.0
      %3178 = vmatmul.mubr.f32.gmra.mrb[0].mxu0 %v3082
      %v3179 = vpop.f32.mrb[0].mxu0
      %v3180 = vadd.f32 0.0, %v3179
      %v3181 = vpop.f32.mrb[0].mxu0
      %3182 = vmatprep.mubr.f32.mxu0 0.0
      %3183 = vmatmul.mubr.f32.gmra.mrb[0].mxu0 %v3084
      %v3184 = vpop.f32.mrb[0].mxu0
      %v3185 = vadd.f32 0.0, %v3184
      %v3186 = vpop.f32.mrb[0].mxu0
      %3187 = vmatprep.mubr.f32.mxu0 0.0
      %3188 = vmatmul.mubr.f32.gmra.mrb[0].mxu0 %v3086
      %v3189 = vpop.f32.mrb[0].mxu0
      %v3190 = vadd.f32 0.0, %v3189
      %v3191 = vpop.f32.mrb[0].mxu0
      %3192 = vmatprep.mubr.f32.mxu0 0.0
      %3193 = vmatmul.mubr.f32.gmra.mrb[0].mxu0 %v3088
      %v3194 = vpop.f32.mrb[0].mxu0
      %v3195 = vadd.f32 0.0, %v3194
      %v3196 = vpop.f32.mrb[0].mxu0
      %3197 = vmatprep.mubr.f32.mxu0 0.0
      %3198 = vmatmul.mubr.f32.gmra.mrb[0].mxu0 %v3090
      %v3199 = vpop.f32.mrb[0].mxu0
      %v3200 = vadd.f32 0.0, %v3199
      %v3201 = vpop.f32.mrb[0].mxu0
      %3202 = vmatprep.mubr.f32.mxu0 0.0
      %3203 = vmatmul.mubr.f32.gmra.mrb[0].mxu0 %v3092
      %v3204 = vpop.f32.mrb[0].mxu0
      %v3205 = vadd.f32 0.0, %v3204
      %v3206 = vpop.f32.mrb[0].mxu0
      %3207 = vdwg.mxu0
      %v3208 = vmul.f32 %v3175, 0.5
      %v3209 = vmul.f32 %v3180, 0.5
      %v3210 = vmul.f32 %v3185, 0.5
      %v3211 = vmul.f32 %v3190, 0.5
      %v3212 = vmul.f32 %v3195, 0.5
      %v3213 = vmul.f32 %v3200, 0.5
      %v3214 = vmul.f32 %v3205, 0.5
      %v3215 = vadd.f32 %v3208, %v2044
      %v3216 = vadd.f32 %v3209, %v2045
      %v3217 = vadd.f32 %v3210, %v2046
      %v3218 = vadd.f32 %v3211, %v2047
      %v3219 = vadd.f32 %v3212, %v2048
      %v3220 = vadd.f32 %v3213, %v2049
      %v3221 = vadd.f32 %v3214, %v2050
      %v3222 = vsel %vm2208, %v3215, -inf
      %3223 = vmax.xlane.f32.xlu0 %v3222
      %v3224 = vpop.xlane.xlu0 %3223
      %v3225 = vsel %vm2208, %v3216, -inf
      %3226 = vmax.xlane.f32.xlu0 %v3225
      %v3227 = vpop.xlane.xlu0 %3226
      %v3228 = vsel %vm2208, %v3217, -inf
      %3229 = vmax.xlane.f32.xlu0 %v3228
      %v3230 = vpop.xlane.xlu0 %3229
      %v3231 = vsel %vm2208, %v3218, -inf
      %3232 = vmax.xlane.f32.xlu0 %v3231
      %v3233 = vpop.xlane.xlu0 %3232
      %v3234 = vsel %vm2208, %v3219, -inf
      %3235 = vmax.xlane.f32.xlu0 %v3234
      %v3236 = vpop.xlane.xlu0 %3235
      %v3237 = vsel %vm2208, %v3220, -inf
      %3238 = vmax.xlane.f32.xlu0 %v3237
      %v3239 = vpop.xlane.xlu0 %3238
      %v3240 = vsel %vm2208, %v3221, -inf
      %3241 = vmax.xlane.f32.xlu0 %v3240
      %v3242 = vpop.xlane.xlu0 %3241
      %v3243 = vsub.f32 %v3215, %v3224
      %v3244 = vsub.f32 %v3216, %v3227
      %v3245 = vsub.f32 %v3217, %v3230
      %v3246 = vsub.f32 %v3218, %v3233
      %v3247 = vsub.f32 %v3219, %v3236
      %v3248 = vsub.f32 %v3220, %v3239
      %v3249 = vsub.f32 %v3221, %v3242
      %v3250 = vmul.f32 %v3243, 1.442695
      %v3251 = vpow.pop %v3250
      %v3252 = vmul.f32 %v3244, 1.442695
      %v3253 = vpow.pop %v3252
      %v3254 = vmul.f32 %v3245, 1.442695
      %v3255 = vpow.pop %v3254
      %v3256 = vmul.f32 %v3246, 1.442695
      %v3257 = vpow.pop %v3256
      %v3258 = vmul.f32 %v3247, 1.442695
      %v3259 = vpow.pop %v3258
      %v3260 = vmul.f32 %v3248, 1.442695
      %v3261 = vpow.pop %v3260
      %v3262 = vmul.f32 %v3249, 1.442695
      %v3263 = vpow.pop %v3262
      %v3264 = vsel %vm2208, %v3251, 0.0
      %3265 = vadd.xlane.f32.xlu0 %v3264
      %v3266 = vpop.xlane.xlu0 %3265
      %v3267 = vsel %vm2208, %v3253, 0.0
      %3268 = vadd.xlane.f32.xlu0 %v3267
      %v3269 = vpop.xlane.xlu0 %3268
      %v3270 = vsel %vm2208, %v3255, 0.0
      %3271 = vadd.xlane.f32.xlu0 %v3270
      %v3272 = vpop.xlane.xlu0 %3271
      %v3273 = vsel %vm2208, %v3257, 0.0
      %3274 = vadd.xlane.f32.xlu0 %v3273
      %v3275 = vpop.xlane.xlu0 %3274
      %v3276 = vsel %vm2208, %v3259, 0.0
      %3277 = vadd.xlane.f32.xlu0 %v3276
      %v3278 = vpop.xlane.xlu0 %3277
      %v3279 = vsel %vm2208, %v3261, 0.0
      %3280 = vadd.xlane.f32.xlu0 %v3279
      %v3281 = vpop.xlane.xlu0 %3280
      %v3282 = vsel %vm2208, %v3263, 0.0
      %3283 = vadd.xlane.f32.xlu0 %v3282
      %v3284 = vpop.xlane.xlu0 %3283
      %v3285 = vrcp.pop %v3266
      %v3286 = vrcp.pop %v3269
      %v3287 = vrcp.pop %v3272
      %v3288 = vrcp.pop %v3275
      %v3289 = vrcp.pop %v3278
      %v3290 = vrcp.pop %v3281
      %v3291 = vrcp.pop %v3284
      %v3292 = vmul.f32 %v3251, %v3285
      %v3293 = vmul.f32 %v3253, %v3286
      %v3294 = vmul.f32 %v3255, %v3287
      %v3295 = vmul.f32 %v3257, %v3288
      %v3296 = vmul.f32 %v3259, %v3289
      %v3297 = vmul.f32 %v3261, %v3290
      %v3298 = vmul.f32 %v3263, %v3291
      %3299 = vrot.lane.b32.xlu0 %v2007, 120
      %v3300 = vpop.permute.xlu0 %3299
      %3301 = vrot.lane.b32.xlu0 %v2012, 120
      %v3302 = vpop.permute.xlu0 %3301
      %3303 = vrot.lane.b32.xlu0 %v2017, 120
      %v3304 = vpop.permute.xlu0 %3303
      %3305 = vrot.lane.b32.xlu0 %v2022, 120
      %v3306 = vpop.permute.xlu0 %3305
      %3307 = vrot.lane.b32.xlu0 %v2027, 120
      %v3308 = vpop.permute.xlu0 %3307
      %3309 = vrot.lane.b32.xlu0 %v2032, 120
      %v3310 = vpop.permute.xlu0 %3309
      %3311 = vrot.lane.b32.xlu0 %v2037, 120
      %v3312 = vpop.permute.xlu0 %3311
      %v3321 = vsel %vm2208, %v3292, 0
      %v3324 = vsel %vm2208, %v3293, 0
      %v3327 = vsel %vm2208, %v3294, 0
      %v3330 = vsel %vm2208, %v3295, 0
      %v3333 = vsel %vm2208, %v3296, 0
      %v3336 = vsel %vm2208, %v3297, 0
      %v3339 = vsel %vm2208, %v3298, 0
      %3341 = vmatprep.subr.mxu0 0.0
      %3342 = vmatpush1.msra.mxu0 %v3300
      %3343 = vmatprep.subr.mxu0 0.0
      %3344 = vmatpush1.msra.mxu0 %v3302
      %3345 = vmatprep.subr.mxu0 0.0
      %3346 = vmatpush1.msra.mxu0 %v3304
      %3347 = vmatprep.subr.mxu0 0.0
      %3348 = vmatpush1.msra.mxu0 %v3306
      %3349 = vmatprep.subr.mxu0 0.0
      %3350 = vmatpush1.msra.mxu0 %v3308
      %3351 = vmatprep.subr.mxu0 0.0
      %3352 = vmatpush1.msra.mxu0 %v3310
      %3353 = vmatprep.subr.mxu0 0.0
      %3354 = vmatpush1.msra.mxu0 %v3312
      %3355 = vmatprep.subr.mxu0 0.0
      %3356 = vmatpush1.msra.mxu0 0.0
      %3357 = vmatprep.subr.mxu0 0.0
      %3358 = vmatpush1.msra.mxu0 0.0
      %3359 = vmatprep.subr.mxu0 0.0
      %3360 = vmatpush1.msra.mxu0 0.0
      %3361 = vmatprep.subr.mxu0 0.0
      %3362 = vmatpush1.msra.mxu0 0.0
      %3363 = vmatprep.subr.mxu0 0.0
      %3364 = vmatpush1.msra.mxu0 0.0
      %3365 = vmatprep.subr.mxu0 0.0
      %3366 = vmatpush1.msra.mxu0 0.0
      %3367 = vmatprep.subr.mxu0 0.0
      %3368 = vmatpush1.msra.mxu0 0.0
      %3369 = vmatprep.subr.mxu0 0.0
      %3370 = vmatpush1.msra.mxu0 0.0
      %3371 = vmatprep.subr.mxu0 0.0
      %3372 = vmatpush1.msra.mxu0 0.0
      %3373 = vmatprep.subr.mxu0 0.0
      %3374 = vmatpush1.msra.mxu0 0.0
      %3375 = vmatprep.subr.mxu0 0.0
      %3376 = vmatpush1.msra.mxu0 0.0
      %3377 = vmatprep.subr.mxu0 0.0
      %3378 = vmatpush1.msra.mxu0 0.0
      %3379 = vmatprep.subr.mxu0 0.0
      %3380 = vmatpush1.msra.mxu0 0.0
      %3381 = vmatprep.subr.mxu0 0.0
      %3382 = vmatpush1.msra.mxu0 0.0
      %3383 = vmatprep.subr.mxu0 0.0
      %3384 = vmatpush1.msra.mxu0 0.0
      %3385 = vmatprep.subr.mxu0 0.0
      %3386 = vmatpush1.msra.mxu0 0.0
      %3387 = vmatprep.subr.mxu0 0.0
      %3388 = vmatpush1.msra.mxu0 0.0
      %3389 = vmatprep.subr.mxu0 0.0
      %3390 = vmatpush1.msra.mxu0 0.0
      %3391 = vmatprep.subr.mxu0 0.0
      %3392 = vmatpush1.msra.mxu0 0.0
      %3393 = vmatprep.subr.mxu0 0.0
      %3394 = vmatpush1.msra.mxu0 0.0
      %3395 = vmatprep.subr.mxu0 0.0
      %3396 = vmatpush1.msra.mxu0 0.0
      %3397 = vmatprep.subr.mxu0 0.0
      %3398 = vmatpush1.msra.mxu0 0.0
      %3399 = vmatprep.subr.mxu0 0.0
      %3400 = vmatpush1.msra.mxu0 0.0
      %3401 = vmatprep.subr.mxu0 0.0
      %3402 = vmatpush1.msra.mxu0 0.0
      %3403 = vmatprep.subr.mxu0 0.0
      %3404 = vmatpush1.msra.mxu0 0.0
      %3405 = vmatprep.mubr.f32.mxu0 0.0
      %3406 = vmatmul.mubr.f32.gmra.mrb[0].mxu0 %v3321
      %v3407 = vpop.f32.mrb[0].mxu0
      %v3408 = vadd.f32 0.0, %v3407
      %v3409 = vpop.f32.mrb[0].mxu0
      %3410 = vmatprep.mubr.f32.mxu0 0.0
      %3411 = vmatmul.mubr.f32.gmra.mrb[0].mxu0 %v3324
      %v3412 = vpop.f32.mrb[0].mxu0
      %v3413 = vadd.f32 0.0, %v3412
      %v3414 = vpop.f32.mrb[0].mxu0
      %3415 = vmatprep.mubr.f32.mxu0 0.0
      %3416 = vmatmul.mubr.f32.gmra.mrb[0].mxu0 %v3327
      %v3417 = vpop.f32.mrb[0].mxu0
      %v3418 = vadd.f32 0.0, %v3417
      %v3419 = vpop.f32.mrb[0].mxu0
      %3420 = vmatprep.mubr.f32.mxu0 0.0
      %3421 = vmatmul.mubr.f32.gmra.mrb[0].mxu0 %v3330
      %v3422 = vpop.f32.mrb[0].mxu0
      %v3423 = vadd.f32 0.0, %v3422
      %v3424 = vpop.f32.mrb[0].mxu0
      %3425 = vmatprep.mubr.f32.mxu0 0.0
      %3426 = vmatmul.mubr.f32.gmra.mrb[0].mxu0 %v3333
      %v3427 = vpop.f32.mrb[0].mxu0
      %v3428 = vadd.f32 0.0, %v3427
      %v3429 = vpop.f32.mrb[0].mxu0
      %3430 = vmatprep.mubr.f32.mxu0 0.0
      %3431 = vmatmul.mubr.f32.gmra.mrb[0].mxu0 %v3336
      %v3432 = vpop.f32.mrb[0].mxu0
      %v3433 = vadd.f32 0.0, %v3432
      %v3434 = vpop.f32.mrb[0].mxu0
      %3435 = vmatprep.mubr.f32.mxu0 0.0
      %3436 = vmatmul.mubr.f32.gmra.mrb[0].mxu0 %v3339
      %v3437 = vpop.f32.mrb[0].mxu0
      %v3438 = vadd.f32 0.0, %v3437
      %v3439 = vpop.f32.mrb[0].mxu0
      %3440 = vdwg.mxu0
      %v3442 = vsel %vm2051, %v3408, 0
      %v3445 = vsel %vm2051, %v3413, 0
      %v3448 = vsel %vm2051, %v3418, 0
      %v3451 = vsel %vm2051, %v3423, 0
      %v3454 = vsel %vm2051, %v3428, 0
      %v3457 = vsel %vm2051, %v3433, 0
      %v3460 = vsel %vm2051, %v3438, 0
      %v3463 = vsel %vm2826, %v2041, 0
      %3465 = vmatprep.subr.mxu0 0.0
      %3466 = vmatpush1.msra.mxu0 %v3463
      %3467 = vmatprep.subr.mxu0 0.0
      %3468 = vmatpush1.msra.mxu0 0.0
      %3469 = vmatprep.subr.mxu0 0.0
      %3470 = vmatpush1.msra.mxu0 0.0
      %3471 = vmatprep.subr.mxu0 0.0
      %3472 = vmatpush1.msra.mxu0 0.0
      %3473 = vmatprep.subr.mxu0 0.0
      %3474 = vmatpush1.msra.mxu0 0.0
      %3475 = vmatprep.subr.mxu0 0.0
      %3476 = vmatpush1.msra.mxu0 0.0
      %3477 = vmatprep.subr.mxu0 0.0
      %3478 = vmatpush1.msra.mxu0 0.0
      %3479 = vmatprep.subr.mxu0 0.0
      %3480 = vmatpush1.msra.mxu0 0.0
      %3481 = vmatprep.subr.mxu0 0.0
      %3482 = vmatpush1.msra.mxu0 0.0
      %3483 = vmatprep.subr.mxu0 0.0
      %3484 = vmatpush1.msra.mxu0 0.0
      %3485 = vmatprep.subr.mxu0 0.0
      %3486 = vmatpush1.msra.mxu0 0.0
      %3487 = vmatprep.subr.mxu0 0.0
      %3488 = vmatpush1.msra.mxu0 0.0
      %3489 = vmatprep.subr.mxu0 0.0
      %3490 = vmatpush1.msra.mxu0 0.0
      %3491 = vmatprep.subr.mxu0 0.0
      %3492 = vmatpush1.msra.mxu0 0.0
      %3493 = vmatprep.subr.mxu0 0.0
      %3494 = vmatpush1.msra.mxu0 0.0
      %3495 = vmatprep.subr.mxu0 0.0
      %3496 = vmatpush1.msra.mxu0 0.0
      %3497 = vmatprep.subr.mxu0 0.0
      %3498 = vmatpush1.msra.mxu0 0.0
      %3499 = vmatprep.subr.mxu0 0.0
      %3500 = vmatpush1.msra.mxu0 0.0
      %3501 = vmatprep.subr.mxu0 0.0
      %3502 = vmatpush1.msra.mxu0 0.0
      %3503 = vmatprep.subr.mxu0 0.0
      %3504 = vmatpush1.msra.mxu0 0.0
      %3505 = vmatprep.subr.mxu0 0.0
      %3506 = vmatpush1.msra.mxu0 0.0
      %3507 = vmatprep.subr.mxu0 0.0
      %3508 = vmatpush1.msra.mxu0 0.0
      %3509 = vmatprep.subr.mxu0 0.0
      %3510 = vmatpush1.msra.mxu0 0.0
      %3511 = vmatprep.subr.mxu0 0.0
      %3512 = vmatpush1.msra.mxu0 0.0
      %3513 = vmatprep.subr.mxu0 0.0
      %3514 = vmatpush1.msra.mxu0 0.0
      %3515 = vmatprep.subr.mxu0 0.0
      %3516 = vmatpush1.msra.mxu0 0.0
      %3517 = vmatprep.subr.mxu0 0.0
      %3518 = vmatpush1.msra.mxu0 0.0
      %3519 = vmatprep.subr.mxu0 0.0
      %3520 = vmatpush1.msra.mxu0 0.0
      %3521 = vmatprep.subr.mxu0 0.0
      %3522 = vmatpush1.msra.mxu0 0.0
      %3523 = vmatprep.subr.mxu0 0.0
      %3524 = vmatpush1.msra.mxu0 0.0
      %3525 = vmatprep.subr.mxu0 0.0
      %3526 = vmatpush1.msra.mxu0 0.0
      %3527 = vmatprep.subr.mxu0 0.0
      %3528 = vmatpush1.msra.mxu0 0.0
      %3529 = vmatprep.mubr.f32.mxu0 0.0
      %3530 = vmatmul.mubr.f32.gmra.mrb[0].mxu0 %v3442
      %v3531 = vpop.f32.mrb[0].mxu0
      %v3532 = vadd.f32 0.0, %v3531
      %v3533 = vpop.f32.mrb[0].mxu0
      %3534 = vmatprep.mubr.f32.mxu0 0.0
      %3535 = vmatmul.mubr.f32.gmra.mrb[0].mxu0 %v3445
      %v3536 = vpop.f32.mrb[0].mxu0
      %v3537 = vadd.f32 0.0, %v3536
      %v3538 = vpop.f32.mrb[0].mxu0
      %3539 = vmatprep.mubr.f32.mxu0 0.0
      %3540 = vmatmul.mubr.f32.gmra.mrb[0].mxu0 %v3448
      %v3541 = vpop.f32.mrb[0].mxu0
      %v3542 = vadd.f32 0.0, %v3541
      %v3543 = vpop.f32.mrb[0].mxu0
      %3544 = vmatprep.mubr.f32.mxu0 0.0
      %3545 = vmatmul.mubr.f32.gmra.mrb[0].mxu0 %v3451
      %v3546 = vpop.f32.mrb[0].mxu0
      %v3547 = vadd.f32 0.0, %v3546
      %v3548 = vpop.f32.mrb[0].mxu0
      %3549 = vmatprep.mubr.f32.mxu0 0.0
      %3550 = vmatmul.mubr.f32.gmra.mrb[0].mxu0 %v3454
      %v3551 = vpop.f32.mrb[0].mxu0
      %v3552 = vadd.f32 0.0, %v3551
      %v3553 = vpop.f32.mrb[0].mxu0
      %3554 = vmatprep.mubr.f32.mxu0 0.0
      %3555 = vmatmul.mubr.f32.gmra.mrb[0].mxu0 %v3457
      %v3556 = vpop.f32.mrb[0].mxu0
      %v3557 = vadd.f32 0.0, %v3556
      %v3558 = vpop.f32.mrb[0].mxu0
      %3559 = vmatprep.mubr.f32.mxu0 0.0
      %3560 = vmatmul.mubr.f32.gmra.mrb[0].mxu0 %v3460
      %v3561 = vpop.f32.mrb[0].mxu0
      %v3562 = vadd.f32 0.0, %v3561
      %v3563 = vpop.f32.mrb[0].mxu0
      %3564 = vdwg.mxu0
      %v3565 = vadd.f32 %v3019, %v3532
      %v3566 = vadd.f32 %v3024, %v3537
      %v3567 = vadd.f32 %v3029, %v3542
      %v3568 = vadd.f32 %v3034, %v3547
      %v3569 = vadd.f32 %v3039, %v3552
      %v3570 = vadd.f32 %v3044, %v3557
      %v3571 = vadd.f32 %v3049, %v3562
      %3572 = vrot.lane.b32.xlu0 %v1785, 116
      %v3573 = vpop.permute.xlu0 %3572
      %3574 = vrot.lane.b32.xlu0 %v1790, 116
      %v3575 = vpop.permute.xlu0 %3574
      %3576 = vrot.lane.b32.xlu0 %v1795, 116
      %v3577 = vpop.permute.xlu0 %3576
      %3578 = vrot.lane.b32.xlu0 %v1800, 116
      %v3579 = vpop.permute.xlu0 %3578
      %3580 = vrot.lane.b32.xlu0 %v1805, 116
      %v3581 = vpop.permute.xlu0 %3580
      %3582 = vrot.lane.b32.xlu0 %v1810, 116
      %v3583 = vpop.permute.xlu0 %3582
      %3584 = vrot.lane.b32.xlu0 %v1815, 116
      %v3585 = vpop.permute.xlu0 %3584
      %3586 = vrot.lane.b32.xlu0 %v1896, 116
      %v3587 = vpop.permute.xlu0 %3586
      %3588 = vrot.lane.b32.xlu0 %v1901, 116
      %v3589 = vpop.permute.xlu0 %3588
      %3590 = vrot.lane.b32.xlu0 %v1906, 116
      %v3591 = vpop.permute.xlu0 %3590
      %3592 = vrot.lane.b32.xlu0 %v1911, 116
      %v3593 = vpop.permute.xlu0 %3592
      %3594 = vrot.lane.b32.xlu0 %v1916, 116
      %v3595 = vpop.permute.xlu0 %3594
      %3596 = vrot.lane.b32.xlu0 %v1921, 116
      %v3597 = vpop.permute.xlu0 %3596
      %3598 = vrot.lane.b32.xlu0 %v1926, 116
      %v3599 = vpop.permute.xlu0 %3598
      %v3600 = vsel %vm2051, %v3573, 0
      %v3602 = vsel %vm2051, %v3575, 0
      %v3604 = vsel %vm2051, %v3577, 0
      %v3606 = vsel %vm2051, %v3579, 0
      %v3608 = vsel %vm2051, %v3581, 0
      %v3610 = vsel %vm2051, %v3583, 0
      %v3612 = vsel %vm2051, %v3585, 0
      %v3614 = vsel %vm2051, %v3587, 0
      %v3616 = vsel %vm2051, %v3589, 0
      %v3618 = vsel %vm2051, %v3591, 0
      %v3620 = vsel %vm2051, %v3593, 0
      %v3622 = vsel %vm2051, %v3595, 0
      %v3624 = vsel %vm2051, %v3597, 0
      %v3626 = vsel %vm2051, %v3599, 0
      %3628 = vmatprep.subr.mxu0 0.0
      %3629 = vmatpush1.xpose.msra.mxu0 %v3614
      %3630 = vmatprep.subr.mxu0 0.0
      %3631 = vmatpush1.xpose.msra.mxu0 %v3616
      %3632 = vmatprep.subr.mxu0 0.0
      %3633 = vmatpush1.xpose.msra.mxu0 %v3618
      %3634 = vmatprep.subr.mxu0 0.0
      %3635 = vmatpush1.xpose.msra.mxu0 %v3620
      %3636 = vmatprep.subr.mxu0 0.0
      %3637 = vmatpush1.xpose.msra.mxu0 %v3622
      %3638 = vmatprep.subr.mxu0 0.0
      %3639 = vmatpush1.xpose.msra.mxu0 %v3624
      %3640 = vmatprep.subr.mxu0 0.0
      %3641 = vmatpush1.xpose.msra.mxu0 %v3626
      %3642 = vmatprep.subr.mxu0 0.0
      %3643 = vmatpush1.xpose.msra.mxu0 0.0
      %3644 = vmatprep.subr.mxu0 0.0
      %3645 = vmatpush1.xpose.msra.mxu0 0.0
      %3646 = vmatprep.subr.mxu0 0.0
      %3647 = vmatpush1.xpose.msra.mxu0 0.0
      %3648 = vmatprep.subr.mxu0 0.0
      %3649 = vmatpush1.xpose.msra.mxu0 0.0
      %3650 = vmatprep.subr.mxu0 0.0
      %3651 = vmatpush1.xpose.msra.mxu0 0.0
      %3652 = vmatprep.subr.mxu0 0.0
      %3653 = vmatpush1.xpose.msra.mxu0 0.0
      %3654 = vmatprep.subr.mxu0 0.0
      %3655 = vmatpush1.xpose.msra.mxu0 0.0
      %3656 = vmatprep.subr.mxu0 0.0
      %3657 = vmatpush1.xpose.msra.mxu0 0.0
      %3658 = vmatprep.subr.mxu0 0.0
      %3659 = vmatpush1.xpose.msra.mxu0 0.0
      %3660 = vmatprep.subr.mxu0 0.0
      %3661 = vmatpush1.xpose.msra.mxu0 0.0
      %3662 = vmatprep.subr.mxu0 0.0
      %3663 = vmatpush1.xpose.msra.mxu0 0.0
      %3664 = vmatprep.subr.mxu0 0.0
      %3665 = vmatpush1.xpose.msra.mxu0 0.0
      %3666 = vmatprep.subr.mxu0 0.0
      %3667 = vmatpush1.xpose.msra.mxu0 0.0
      %3668 = vmatprep.subr.mxu0 0.0
      %3669 = vmatpush1.xpose.msra.mxu0 0.0
      %3670 = vmatprep.subr.mxu0 0.0
      %3671 = vmatpush1.xpose.msra.mxu0 0.0
      %3672 = vmatprep.subr.mxu0 0.0
      %3673 = vmatpush1.xpose.msra.mxu0 0.0
      %3674 = vmatprep.subr.mxu0 0.0
      %3675 = vmatpush1.xpose.msra.mxu0 0.0
      %3676 = vmatprep.subr.mxu0 0.0
      %3677 = vmatpush1.xpose.msra.mxu0 0.0
      %3678 = vmatprep.subr.mxu0 0.0
      %3679 = vmatpush1.xpose.msra.mxu0 0.0
      %3680 = vmatprep.subr.mxu0 0.0
      %3681 = vmatpush1.xpose.msra.mxu0 0.0
      %3682 = vmatprep.subr.mxu0 0.0
      %3683 = vmatpush1.xpose.msra.mxu0 0.0
      %3684 = vmatprep.subr.mxu0 0.0
      %3685 = vmatpush1.xpose.msra.mxu0 0.0
      %3686 = vmatprep.subr.mxu0 0.0
      %3687 = vmatpush1.xpose.msra.mxu0 0.0
      %3688 = vmatprep.subr.mxu0 0.0
      %3689 = vmatpush1.xpose.msra.mxu0 0.0
      %3690 = vmatprep.subr.mxu0 0.0
      %3691 = vmatpush1.xpose.msra.mxu0 0.0
      %3692 = vmatprep.mubr.f32.mxu0 0.0
      %3693 = vmatmul.mubr.f32.gmra.mrb[0].mxu0 %v3600
      %v3694 = vpop.f32.mrb[0].mxu0
      %v3695 = vadd.f32 0.0, %v3694
      %v3696 = vpop.f32.mrb[0].mxu0
      %3697 = vmatprep.mubr.f32.mxu0 0.0
      %3698 = vmatmul.mubr.f32.gmra.mrb[0].mxu0 %v3602
      %v3699 = vpop.f32.mrb[0].mxu0
      %v3700 = vadd.f32 0.0, %v3699
      %v3701 = vpop.f32.mrb[0].mxu0
      %3702 = vmatprep.mubr.f32.mxu0 0.0
      %3703 = vmatmul.mubr.f32.gmra.mrb[0].mxu0 %v3604
      %v3704 = vpop.f32.mrb[0].mxu0
      %v3705 = vadd.f32 0.0, %v3704
      %v3706 = vpop.f32.mrb[0].mxu0
      %3707 = vmatprep.mubr.f32.mxu0 0.0
      %3708 = vmatmul.mubr.f32.gmra.mrb[0].mxu0 %v3606
      %v3709 = vpop.f32.mrb[0].mxu0
      %v3710 = vadd.f32 0.0, %v3709
      %v3711 = vpop.f32.mrb[0].mxu0
      %3712 = vmatprep.mubr.f32.mxu0 0.0
      %3713 = vmatmul.mubr.f32.gmra.mrb[0].mxu0 %v3608
      %v3714 = vpop.f32.mrb[0].mxu0
      %v3715 = vadd.f32 0.0, %v3714
      %v3716 = vpop.f32.mrb[0].mxu0
      %3717 = vmatprep.mubr.f32.mxu0 0.0
      %3718 = vmatmul.mubr.f32.gmra.mrb[0].mxu0 %v3610
      %v3719 = vpop.f32.mrb[0].mxu0
      %v3720 = vadd.f32 0.0, %v3719
      %v3721 = vpop.f32.mrb[0].mxu0
      %3722 = vmatprep.mubr.f32.mxu0 0.0
      %3723 = vmatmul.mubr.f32.gmra.mrb[0].mxu0 %v3612
      %v3724 = vpop.f32.mrb[0].mxu0
      %v3725 = vadd.f32 0.0, %v3724
      %v3726 = vpop.f32.mrb[0].mxu0
      %3727 = vdwg.mxu0
      %v3728 = vmul.f32 %v3695, 0.5
      %v3729 = vmul.f32 %v3700, 0.5
      %v3730 = vmul.f32 %v3705, 0.5
      %v3731 = vmul.f32 %v3710, 0.5
      %v3732 = vmul.f32 %v3715, 0.5
      %v3733 = vmul.f32 %v3720, 0.5
      %v3734 = vmul.f32 %v3725, 0.5
      %v3735 = vadd.f32 %v3728, %v2044
      %v3736 = vadd.f32 %v3729, %v2045
      %v3737 = vadd.f32 %v3730, %v2046
      %v3738 = vadd.f32 %v3731, %v2047
      %v3739 = vadd.f32 %v3732, %v2048
      %v3740 = vadd.f32 %v3733, %v2049
      %v3741 = vadd.f32 %v3734, %v2050
      %v3742 = vsel %vm2208, %v3735, -inf
      %3743 = vmax.xlane.f32.xlu0 %v3742
      %v3744 = vpop.xlane.xlu0 %3743
      %v3745 = vsel %vm2208, %v3736, -inf
      %3746 = vmax.xlane.f32.xlu0 %v3745
      %v3747 = vpop.xlane.xlu0 %3746
      %v3748 = vsel %vm2208, %v3737, -inf
      %3749 = vmax.xlane.f32.xlu0 %v3748
      %v3750 = vpop.xlane.xlu0 %3749
      %v3751 = vsel %vm2208, %v3738, -inf
      %3752 = vmax.xlane.f32.xlu0 %v3751
      %v3753 = vpop.xlane.xlu0 %3752
      %v3754 = vsel %vm2208, %v3739, -inf
      %3755 = vmax.xlane.f32.xlu0 %v3754
      %v3756 = vpop.xlane.xlu0 %3755
      %v3757 = vsel %vm2208, %v3740, -inf
      %3758 = vmax.xlane.f32.xlu0 %v3757
      %v3759 = vpop.xlane.xlu0 %3758
      %v3760 = vsel %vm2208, %v3741, -inf
      %3761 = vmax.xlane.f32.xlu0 %v3760
      %v3762 = vpop.xlane.xlu0 %3761
      %v3763 = vsub.f32 %v3735, %v3744
      %v3764 = vsub.f32 %v3736, %v3747
      %v3765 = vsub.f32 %v3737, %v3750
      %v3766 = vsub.f32 %v3738, %v3753
      %v3767 = vsub.f32 %v3739, %v3756
      %v3768 = vsub.f32 %v3740, %v3759
      %v3769 = vsub.f32 %v3741, %v3762
      %v3770 = vmul.f32 %v3763, 1.442695
      %v3771 = vpow.pop %v3770
      %v3772 = vmul.f32 %v3764, 1.442695
      %v3773 = vpow.pop %v3772
      %v3774 = vmul.f32 %v3765, 1.442695
      %v3775 = vpow.pop %v3774
      %v3776 = vmul.f32 %v3766, 1.442695
      %v3777 = vpow.pop %v3776
      %v3778 = vmul.f32 %v3767, 1.442695
      %v3779 = vpow.pop %v3778
      %v3780 = vmul.f32 %v3768, 1.442695
      %v3781 = vpow.pop %v3780
      %v3782 = vmul.f32 %v3769, 1.442695
      %v3783 = vpow.pop %v3782
      %v3784 = vsel %vm2208, %v3771, 0.0
      %3785 = vadd.xlane.f32.xlu0 %v3784
      %v3786 = vpop.xlane.xlu0 %3785
      %v3787 = vsel %vm2208, %v3773, 0.0
      %3788 = vadd.xlane.f32.xlu0 %v3787
      %v3789 = vpop.xlane.xlu0 %3788
      %v3790 = vsel %vm2208, %v3775, 0.0
      %3791 = vadd.xlane.f32.xlu0 %v3790
      %v3792 = vpop.xlane.xlu0 %3791
      %v3793 = vsel %vm2208, %v3777, 0.0
      %3794 = vadd.xlane.f32.xlu0 %v3793
      %v3795 = vpop.xlane.xlu0 %3794
      %v3796 = vsel %vm2208, %v3779, 0.0
      %3797 = vadd.xlane.f32.xlu0 %v3796
      %v3798 = vpop.xlane.xlu0 %3797
      %v3799 = vsel %vm2208, %v3781, 0.0
      %3800 = vadd.xlane.f32.xlu0 %v3799
      %v3801 = vpop.xlane.xlu0 %3800
      %v3802 = vsel %vm2208, %v3783, 0.0
      %3803 = vadd.xlane.f32.xlu0 %v3802
      %v3804 = vpop.xlane.xlu0 %3803
      %v3805 = vrcp.pop %v3786
      %v3806 = vrcp.pop %v3789
      %v3807 = vrcp.pop %v3792
      %v3808 = vrcp.pop %v3795
      %v3809 = vrcp.pop %v3798
      %v3810 = vrcp.pop %v3801
      %v3811 = vrcp.pop %v3804
      %v3812 = vmul.f32 %v3771, %v3805
      %v3813 = vmul.f32 %v3773, %v3806
      %v3814 = vmul.f32 %v3775, %v3807
      %v3815 = vmul.f32 %v3777, %v3808
      %v3816 = vmul.f32 %v3779, %v3809
      %v3817 = vmul.f32 %v3781, %v3810
      %v3818 = vmul.f32 %v3783, %v3811
      %3819 = vrot.lane.b32.xlu0 %v2007, 116
      %v3820 = vpop.permute.xlu0 %3819
      %3821 = vrot.lane.b32.xlu0 %v2012, 116
      %v3822 = vpop.permute.xlu0 %3821
      %3823 = vrot.lane.b32.xlu0 %v2017, 116
      %v3824 = vpop.permute.xlu0 %3823
      %3825 = vrot.lane.b32.xlu0 %v2022, 116
      %v3826 = vpop.permute.xlu0 %3825
      %3827 = vrot.lane.b32.xlu0 %v2027, 116
      %v3828 = vpop.permute.xlu0 %3827
      %3829 = vrot.lane.b32.xlu0 %v2032, 116
      %v3830 = vpop.permute.xlu0 %3829
      %3831 = vrot.lane.b32.xlu0 %v2037, 116
      %v3832 = vpop.permute.xlu0 %3831
      %v3841 = vsel %vm2208, %v3812, 0
      %v3844 = vsel %vm2208, %v3813, 0
      %v3847 = vsel %vm2208, %v3814, 0
      %v3850 = vsel %vm2208, %v3815, 0
      %v3853 = vsel %vm2208, %v3816, 0
      %v3856 = vsel %vm2208, %v3817, 0
      %v3859 = vsel %vm2208, %v3818, 0
      %3861 = vmatprep.subr.mxu0 0.0
      %3862 = vmatpush1.msra.mxu0 %v3820
      %3863 = vmatprep.subr.mxu0 0.0
      %3864 = vmatpush1.msra.mxu0 %v3822
      %3865 = vmatprep.subr.mxu0 0.0
      %3866 = vmatpush1.msra.mxu0 %v3824
      %3867 = vmatprep.subr.mxu0 0.0
      %3868 = vmatpush1.msra.mxu0 %v3826
      %3869 = vmatprep.subr.mxu0 0.0
      %3870 = vmatpush1.msra.mxu0 %v3828
      %3871 = vmatprep.subr.mxu0 0.0
      %3872 = vmatpush1.msra.mxu0 %v3830
      %3873 = vmatprep.subr.mxu0 0.0
      %3874 = vmatpush1.msra.mxu0 %v3832
      %3875 = vmatprep.subr.mxu0 0.0
      %3876 = vmatpush1.msra.mxu0 0.0
      %3877 = vmatprep.subr.mxu0 0.0
      %3878 = vmatpush1.msra.mxu0 0.0
      %3879 = vmatprep.subr.mxu0 0.0
      %3880 = vmatpush1.msra.mxu0 0.0
      %3881 = vmatprep.subr.mxu0 0.0
      %3882 = vmatpush1.msra.mxu0 0.0
      %3883 = vmatprep.subr.mxu0 0.0
      %3884 = vmatpush1.msra.mxu0 0.0
      %3885 = vmatprep.subr.mxu0 0.0
      %3886 = vmatpush1.msra.mxu0 0.0
      %3887 = vmatprep.subr.mxu0 0.0
      %3888 = vmatpush1.msra.mxu0 0.0
      %3889 = vmatprep.subr.mxu0 0.0
      %3890 = vmatpush1.msra.mxu0 0.0
      %3891 = vmatprep.subr.mxu0 0.0
      %3892 = vmatpush1.msra.mxu0 0.0
      %3893 = vmatprep.subr.mxu0 0.0
      %3894 = vmatpush1.msra.mxu0 0.0
      %3895 = vmatprep.subr.mxu0 0.0
      %3896 = vmatpush1.msra.mxu0 0.0
      %3897 = vmatprep.subr.mxu0 0.0
      %3898 = vmatpush1.msra.mxu0 0.0
      %3899 = vmatprep.subr.mxu0 0.0
      %3900 = vmatpush1.msra.mxu0 0.0
      %3901 = vmatprep.subr.mxu0 0.0
      %3902 = vmatpush1.msra.mxu0 0.0
      %3903 = vmatprep.subr.mxu0 0.0
      %3904 = vmatpush1.msra.mxu0 0.0
      %3905 = vmatprep.subr.mxu0 0.0
      %3906 = vmatpush1.msra.mxu0 0.0
      %3907 = vmatprep.subr.mxu0 0.0
      %3908 = vmatpush1.msra.mxu0 0.0
      %3909 = vmatprep.subr.mxu0 0.0
      %3910 = vmatpush1.msra.mxu0 0.0
      %3911 = vmatprep.subr.mxu0 0.0
      %3912 = vmatpush1.msra.mxu0 0.0
      %3913 = vmatprep.subr.mxu0 0.0
      %3914 = vmatpush1.msra.mxu0 0.0
      %3915 = vmatprep.subr.mxu0 0.0
      %3916 = vmatpush1.msra.mxu0 0.0
      %3917 = vmatprep.subr.mxu0 0.0
      %3918 = vmatpush1.msra.mxu0 0.0
      %3919 = vmatprep.subr.mxu0 0.0
      %3920 = vmatpush1.msra.mxu0 0.0
      %3921 = vmatprep.subr.mxu0 0.0
      %3922 = vmatpush1.msra.mxu0 0.0
      %3923 = vmatprep.subr.mxu0 0.0
      %3924 = vmatpush1.msra.mxu0 0.0
      %3925 = vmatprep.mubr.f32.mxu0 0.0
      %3926 = vmatmul.mubr.f32.gmra.mrb[0].mxu0 %v3841
      %v3927 = vpop.f32.mrb[0].mxu0
      %v3928 = vadd.f32 0.0, %v3927
      %v3929 = vpop.f32.mrb[0].mxu0
      %3930 = vmatprep.mubr.f32.mxu0 0.0
      %3931 = vmatmul.mubr.f32.gmra.mrb[0].mxu0 %v3844
      %v3932 = vpop.f32.mrb[0].mxu0
      %v3933 = vadd.f32 0.0, %v3932
      %v3934 = vpop.f32.mrb[0].mxu0
      %3935 = vmatprep.mubr.f32.mxu0 0.0
      %3936 = vmatmul.mubr.f32.gmra.mrb[0].mxu0 %v3847
      %v3937 = vpop.f32.mrb[0].mxu0
      %v3938 = vadd.f32 0.0, %v3937
      %v3939 = vpop.f32.mrb[0].mxu0
      %3940 = vmatprep.mubr.f32.mxu0 0.0
      %3941 = vmatmul.mubr.f32.gmra.mrb[0].mxu0 %v3850
      %v3942 = vpop.f32.mrb[0].mxu0
      %v3943 = vadd.f32 0.0, %v3942
      %v3944 = vpop.f32.mrb[0].mxu0
      %3945 = vmatprep.mubr.f32.mxu0 0.0
      %3946 = vmatmul.mubr.f32.gmra.mrb[0].mxu0 %v3853
      %v3947 = vpop.f32.mrb[0].mxu0
      %v3948 = vadd.f32 0.0, %v3947
      %v3949 = vpop.f32.mrb[0].mxu0
      %3950 = vmatprep.mubr.f32.mxu0 0.0
      %3951 = vmatmul.mubr.f32.gmra.mrb[0].mxu0 %v3856
      %v3952 = vpop.f32.mrb[0].mxu0
      %v3953 = vadd.f32 0.0, %v3952
      %v3954 = vpop.f32.mrb[0].mxu0
      %3955 = vmatprep.mubr.f32.mxu0 0.0
      %3956 = vmatmul.mubr.f32.gmra.mrb[0].mxu0 %v3859
      %v3957 = vpop.f32.mrb[0].mxu0
      %v3958 = vadd.f32 0.0, %v3957
      %v3959 = vpop.f32.mrb[0].mxu0
      %3960 = vdwg.mxu0
      %v3961 = vrot.slane %v2041, 4
      %v3963 = vsel %vm2051, %v3928, 0
      %v3966 = vsel %vm2051, %v3933, 0
      %v3969 = vsel %vm2051, %v3938, 0
      %v3972 = vsel %vm2051, %v3943, 0
      %v3975 = vsel %vm2051, %v3948, 0
      %v3978 = vsel %vm2051, %v3953, 0
      %v3981 = vsel %vm2051, %v3958, 0
      %v3983 = vsel %vm2826, %v3961, 0
      %3985 = vmatprep.subr.mxu0 0.0
      %3986 = vmatpush1.msra.mxu0 %v3983
      %3987 = vmatprep.subr.mxu0 0.0
      %3988 = vmatpush1.msra.mxu0 0.0
      %3989 = vmatprep.subr.mxu0 0.0
      %3990 = vmatpush1.msra.mxu0 0.0
      %3991 = vmatprep.subr.mxu0 0.0
      %3992 = vmatpush1.msra.mxu0 0.0
      %3993 = vmatprep.subr.mxu0 0.0
      %3994 = vmatpush1.msra.mxu0 0.0
      %3995 = vmatprep.subr.mxu0 0.0
      %3996 = vmatpush1.msra.mxu0 0.0
      %3997 = vmatprep.subr.mxu0 0.0
      %3998 = vmatpush1.msra.mxu0 0.0
      %3999 = vmatprep.subr.mxu0 0.0
      %4000 = vmatpush1.msra.mxu0 0.0
      %4001 = vmatprep.subr.mxu0 0.0
      %4002 = vmatpush1.msra.mxu0 0.0
      %4003 = vmatprep.subr.mxu0 0.0
      %4004 = vmatpush1.msra.mxu0 0.0
      %4005 = vmatprep.subr.mxu0 0.0
      %4006 = vmatpush1.msra.mxu0 0.0
      %4007 = vmatprep.subr.mxu0 0.0
      %4008 = vmatpush1.msra.mxu0 0.0
      %4009 = vmatprep.subr.mxu0 0.0
      %4010 = vmatpush1.msra.mxu0 0.0
      %4011 = vmatprep.subr.mxu0 0.0
      %4012 = vmatpush1.msra.mxu0 0.0
      %4013 = vmatprep.subr.mxu0 0.0
      %4014 = vmatpush1.msra.mxu0 0.0
      %4015 = vmatprep.subr.mxu0 0.0
      %4016 = vmatpush1.msra.mxu0 0.0
      %4017 = vmatprep.subr.mxu0 0.0
      %4018 = vmatpush1.msra.mxu0 0.0
      %4019 = vmatprep.subr.mxu0 0.0
      %4020 = vmatpush1.msra.mxu0 0.0
      %4021 = vmatprep.subr.mxu0 0.0
      %4022 = vmatpush1.msra.mxu0 0.0
      %4023 = vmatprep.subr.mxu0 0.0
      %4024 = vmatpush1.msra.mxu0 0.0
      %4025 = vmatprep.subr.mxu0 0.0
      %4026 = vmatpush1.msra.mxu0 0.0
      %4027 = vmatprep.subr.mxu0 0.0
      %4028 = vmatpush1.msra.mxu0 0.0
      %4029 = vmatprep.subr.mxu0 0.0
      %4030 = vmatpush1.msra.mxu0 0.0
      %4031 = vmatprep.subr.mxu0 0.0
      %4032 = vmatpush1.msra.mxu0 0.0
      %4033 = vmatprep.subr.mxu0 0.0
      %4034 = vmatpush1.msra.mxu0 0.0
      %4035 = vmatprep.subr.mxu0 0.0
      %4036 = vmatpush1.msra.mxu0 0.0
      %4037 = vmatprep.subr.mxu0 0.0
      %4038 = vmatpush1.msra.mxu0 0.0
      %4039 = vmatprep.subr.mxu0 0.0
      %4040 = vmatpush1.msra.mxu0 0.0
      %4041 = vmatprep.subr.mxu0 0.0
      %4042 = vmatpush1.msra.mxu0 0.0
      %4043 = vmatprep.subr.mxu0 0.0
      %4044 = vmatpush1.msra.mxu0 0.0
      %4045 = vmatprep.subr.mxu0 0.0
      %4046 = vmatpush1.msra.mxu0 0.0
      %4047 = vmatprep.subr.mxu0 0.0
      %4048 = vmatpush1.msra.mxu0 0.0
      %4049 = vmatprep.mubr.f32.mxu0 0.0
      %4050 = vmatmul.mubr.f32.gmra.mrb[0].mxu0 %v3963
      %v4051 = vpop.f32.mrb[0].mxu0
      %v4052 = vadd.f32 0.0, %v4051
      %v4053 = vpop.f32.mrb[0].mxu0
      %4054 = vmatprep.mubr.f32.mxu0 0.0
      %4055 = vmatmul.mubr.f32.gmra.mrb[0].mxu0 %v3966
      %v4056 = vpop.f32.mrb[0].mxu0
      %v4057 = vadd.f32 0.0, %v4056
      %v4058 = vpop.f32.mrb[0].mxu0
      %4059 = vmatprep.mubr.f32.mxu0 0.0
      %4060 = vmatmul.mubr.f32.gmra.mrb[0].mxu0 %v3969
      %v4061 = vpop.f32.mrb[0].mxu0
      %v4062 = vadd.f32 0.0, %v4061
      %v4063 = vpop.f32.mrb[0].mxu0
      %4064 = vmatprep.mubr.f32.mxu0 0.0
      %4065 = vmatmul.mubr.f32.gmra.mrb[0].mxu0 %v3972
      %v4066 = vpop.f32.mrb[0].mxu0
      %v4067 = vadd.f32 0.0, %v4066
      %v4068 = vpop.f32.mrb[0].mxu0
      %4069 = vmatprep.mubr.f32.mxu0 0.0
      %4070 = vmatmul.mubr.f32.gmra.mrb[0].mxu0 %v3975
      %v4071 = vpop.f32.mrb[0].mxu0
      %v4072 = vadd.f32 0.0, %v4071
      %v4073 = vpop.f32.mrb[0].mxu0
      %4074 = vmatprep.mubr.f32.mxu0 0.0
      %4075 = vmatmul.mubr.f32.gmra.mrb[0].mxu0 %v3978
      %v4076 = vpop.f32.mrb[0].mxu0
      %v4077 = vadd.f32 0.0, %v4076
      %v4078 = vpop.f32.mrb[0].mxu0
      %4079 = vmatprep.mubr.f32.mxu0 0.0
      %4080 = vmatmul.mubr.f32.gmra.mrb[0].mxu0 %v3981
      %v4081 = vpop.f32.mrb[0].mxu0
      %v4082 = vadd.f32 0.0, %v4081
      %v4083 = vpop.f32.mrb[0].mxu0
      %4084 = vdwg.mxu0
      %v4085 = vadd.f32 %v3565, %v4052
      %v4086 = vadd.f32 %v3566, %v4057
      %v4087 = vadd.f32 %v3567, %v4062
      %v4088 = vadd.f32 %v3568, %v4067
      %v4089 = vadd.f32 %v3569, %v4072
      %v4090 = vadd.f32 %v3570, %v4077
      %v4091 = vadd.f32 %v3571, %v4082
      %4092 = vrot.lane.b32.xlu0 %v1785, 112
      %v4093 = vpop.permute.xlu0 %4092
      %4094 = vrot.lane.b32.xlu0 %v1790, 112
      %v4095 = vpop.permute.xlu0 %4094
      %4096 = vrot.lane.b32.xlu0 %v1795, 112
      %v4097 = vpop.permute.xlu0 %4096
      %4098 = vrot.lane.b32.xlu0 %v1800, 112
      %v4099 = vpop.permute.xlu0 %4098
      %4100 = vrot.lane.b32.xlu0 %v1805, 112
      %v4101 = vpop.permute.xlu0 %4100
      %4102 = vrot.lane.b32.xlu0 %v1810, 112
      %v4103 = vpop.permute.xlu0 %4102
      %4104 = vrot.lane.b32.xlu0 %v1815, 112
      %v4105 = vpop.permute.xlu0 %4104
      %4106 = vrot.lane.b32.xlu0 %v1896, 112
      %v4107 = vpop.permute.xlu0 %4106
      %4108 = vrot.lane.b32.xlu0 %v1901, 112
      %v4109 = vpop.permute.xlu0 %4108
      %4110 = vrot.lane.b32.xlu0 %v1906, 112
      %v4111 = vpop.permute.xlu0 %4110
      %4112 = vrot.lane.b32.xlu0 %v1911, 112
      %v4113 = vpop.permute.xlu0 %4112
      %4114 = vrot.lane.b32.xlu0 %v1916, 112
      %v4115 = vpop.permute.xlu0 %4114
      %4116 = vrot.lane.b32.xlu0 %v1921, 112
      %v4117 = vpop.permute.xlu0 %4116
      %4118 = vrot.lane.b32.xlu0 %v1926, 112
      %v4119 = vpop.permute.xlu0 %4118
      %v4120 = vsel %vm2051, %v4093, 0
      %v4122 = vsel %vm2051, %v4095, 0
      %v4124 = vsel %vm2051, %v4097, 0
      %v4126 = vsel %vm2051, %v4099, 0
      %v4128 = vsel %vm2051, %v4101, 0
      %v4130 = vsel %vm2051, %v4103, 0
      %v4132 = vsel %vm2051, %v4105, 0
      %v4134 = vsel %vm2051, %v4107, 0
      %v4136 = vsel %vm2051, %v4109, 0
      %v4138 = vsel %vm2051, %v4111, 0
      %v4140 = vsel %vm2051, %v4113, 0
      %v4142 = vsel %vm2051, %v4115, 0
      %v4144 = vsel %vm2051, %v4117, 0
      %v4146 = vsel %vm2051, %v4119, 0
      %4148 = vmatprep.subr.mxu0 0.0
      %4149 = vmatpush1.xpose.msra.mxu0 %v4134
      %4150 = vmatprep.subr.mxu0 0.0
      %4151 = vmatpush1.xpose.msra.mxu0 %v4136
      %4152 = vmatprep.subr.mxu0 0.0
      %4153 = vmatpush1.xpose.msra.mxu0 %v4138
      %4154 = vmatprep.subr.mxu0 0.0
      %4155 = vmatpush1.xpose.msra.mxu0 %v4140
      %4156 = vmatprep.subr.mxu0 0.0
      %4157 = vmatpush1.xpose.msra.mxu0 %v4142
      %4158 = vmatprep.subr.mxu0 0.0
      %4159 = vmatpush1.xpose.msra.mxu0 %v4144
      %4160 = vmatprep.subr.mxu0 0.0
      %4161 = vmatpush1.xpose.msra.mxu0 %v4146
      %4162 = vmatprep.subr.mxu0 0.0
      %4163 = vmatpush1.xpose.msra.mxu0 0.0
      %4164 = vmatprep.subr.mxu0 0.0
      %4165 = vmatpush1.xpose.msra.mxu0 0.0
      %4166 = vmatprep.subr.mxu0 0.0
      %4167 = vmatpush1.xpose.msra.mxu0 0.0
      %4168 = vmatprep.subr.mxu0 0.0
      %4169 = vmatpush1.xpose.msra.mxu0 0.0
      %4170 = vmatprep.subr.mxu0 0.0
      %4171 = vmatpush1.xpose.msra.mxu0 0.0
      %4172 = vmatprep.subr.mxu0 0.0
      %4173 = vmatpush1.xpose.msra.mxu0 0.0
      %4174 = vmatprep.subr.mxu0 0.0
      %4175 = vmatpush1.xpose.msra.mxu0 0.0
      %4176 = vmatprep.subr.mxu0 0.0
      %4177 = vmatpush1.xpose.msra.mxu0 0.0
      %4178 = vmatprep.subr.mxu0 0.0
      %4179 = vmatpush1.xpose.msra.mxu0 0.0
      %4180 = vmatprep.subr.mxu0 0.0
      %4181 = vmatpush1.xpose.msra.mxu0 0.0
      %4182 = vmatprep.subr.mxu0 0.0
      %4183 = vmatpush1.xpose.msra.mxu0 0.0
      %4184 = vmatprep.subr.mxu0 0.0
      %4185 = vmatpush1.xpose.msra.mxu0 0.0
      %4186 = vmatprep.subr.mxu0 0.0
      %4187 = vmatpush1.xpose.msra.mxu0 0.0
      %4188 = vmatprep.subr.mxu0 0.0
      %4189 = vmatpush1.xpose.msra.mxu0 0.0
      %4190 = vmatprep.subr.mxu0 0.0
      %4191 = vmatpush1.xpose.msra.mxu0 0.0
      %4192 = vmatprep.subr.mxu0 0.0
      %4193 = vmatpush1.xpose.msra.mxu0 0.0
      %4194 = vmatprep.subr.mxu0 0.0
      %4195 = vmatpush1.xpose.msra.mxu0 0.0
      %4196 = vmatprep.subr.mxu0 0.0
      %4197 = vmatpush1.xpose.msra.mxu0 0.0
      %4198 = vmatprep.subr.mxu0 0.0
      %4199 = vmatpush1.xpose.msra.mxu0 0.0
      %4200 = vmatprep.subr.mxu0 0.0
      %4201 = vmatpush1.xpose.msra.mxu0 0.0
      %4202 = vmatprep.subr.mxu0 0.0
      %4203 = vmatpush1.xpose.msra.mxu0 0.0
      %4204 = vmatprep.subr.mxu0 0.0
      %4205 = vmatpush1.xpose.msra.mxu0 0.0
      %4206 = vmatprep.subr.mxu0 0.0
      %4207 = vmatpush1.xpose.msra.mxu0 0.0
      %4208 = vmatprep.subr.mxu0 0.0
      %4209 = vmatpush1.xpose.msra.mxu0 0.0
      %4210 = vmatprep.subr.mxu0 0.0
      %4211 = vmatpush1.xpose.msra.mxu0 0.0
      %4212 = vmatprep.mubr.f32.mxu0 0.0
      %4213 = vmatmul.mubr.f32.gmra.mrb[0].mxu0 %v4120
      %v4214 = vpop.f32.mrb[0].mxu0
      %v4215 = vadd.f32 0.0, %v4214
      %v4216 = vpop.f32.mrb[0].mxu0
      %4217 = vmatprep.mubr.f32.mxu0 0.0
      %4218 = vmatmul.mubr.f32.gmra.mrb[0].mxu0 %v4122
      %v4219 = vpop.f32.mrb[0].mxu0
      %v4220 = vadd.f32 0.0, %v4219
      %v4221 = vpop.f32.mrb[0].mxu0
      %4222 = vmatprep.mubr.f32.mxu0 0.0
      %4223 = vmatmul.mubr.f32.gmra.mrb[0].mxu0 %v4124
      %v4224 = vpop.f32.mrb[0].mxu0
      %v4225 = vadd.f32 0.0, %v4224
      %v4226 = vpop.f32.mrb[0].mxu0
      %4227 = vmatprep.mubr.f32.mxu0 0.0
      %4228 = vmatmul.mubr.f32.gmra.mrb[0].mxu0 %v4126
      %v4229 = vpop.f32.mrb[0].mxu0
      %v4230 = vadd.f32 0.0, %v4229
      %v4231 = vpop.f32.mrb[0].mxu0
      %4232 = vmatprep.mubr.f32.mxu0 0.0
      %4233 = vmatmul.mubr.f32.gmra.mrb[0].mxu0 %v4128
      %v4234 = vpop.f32.mrb[0].mxu0
      %v4235 = vadd.f32 0.0, %v4234
      %v4236 = vpop.f32.mrb[0].mxu0
      %4237 = vmatprep.mubr.f32.mxu0 0.0
      %4238 = vmatmul.mubr.f32.gmra.mrb[0].mxu0 %v4130
      %v4239 = vpop.f32.mrb[0].mxu0
      %v4240 = vadd.f32 0.0, %v4239
      %v4241 = vpop.f32.mrb[0].mxu0
      %4242 = vmatprep.mubr.f32.mxu0 0.0
      %4243 = vmatmul.mubr.f32.gmra.mrb[0].mxu0 %v4132
      %v4244 = vpop.f32.mrb[0].mxu0
      %v4245 = vadd.f32 0.0, %v4244
      %v4246 = vpop.f32.mrb[0].mxu0
      %4247 = vdwg.mxu0
      %v4248 = vmul.f32 %v4215, 0.5
      %v4249 = vmul.f32 %v4220, 0.5
      %v4250 = vmul.f32 %v4225, 0.5
      %v4251 = vmul.f32 %v4230, 0.5
      %v4252 = vmul.f32 %v4235, 0.5
      %v4253 = vmul.f32 %v4240, 0.5
      %v4254 = vmul.f32 %v4245, 0.5
      %v4255 = vadd.f32 %v4248, %v2044
      %v4256 = vadd.f32 %v4249, %v2045
      %v4257 = vadd.f32 %v4250, %v2046
      %v4258 = vadd.f32 %v4251, %v2047
      %v4259 = vadd.f32 %v4252, %v2048
      %v4260 = vadd.f32 %v4253, %v2049
      %v4261 = vadd.f32 %v4254, %v2050
      %v4262 = vsel %vm2208, %v4255, -inf
      %4263 = vmax.xlane.f32.xlu0 %v4262
      %v4264 = vpop.xlane.xlu0 %4263
      %v4265 = vsel %vm2208, %v4256, -inf
      %4266 = vmax.xlane.f32.xlu0 %v4265
      %v4267 = vpop.xlane.xlu0 %4266
      %v4268 = vsel %vm2208, %v4257, -inf
      %4269 = vmax.xlane.f32.xlu0 %v4268
      %v4270 = vpop.xlane.xlu0 %4269
      %v4271 = vsel %vm2208, %v4258, -inf
      %4272 = vmax.xlane.f32.xlu0 %v4271
      %v4273 = vpop.xlane.xlu0 %4272
      %v4274 = vsel %vm2208, %v4259, -inf
      %4275 = vmax.xlane.f32.xlu0 %v4274
      %v4276 = vpop.xlane.xlu0 %4275
      %v4277 = vsel %vm2208, %v4260, -inf
      %4278 = vmax.xlane.f32.xlu0 %v4277
      %v4279 = vpop.xlane.xlu0 %4278
      %v4280 = vsel %vm2208, %v4261, -inf
      %4281 = vmax.xlane.f32.xlu0 %v4280
      %v4282 = vpop.xlane.xlu0 %4281
      %v4283 = vsub.f32 %v4255, %v4264
      %v4284 = vsub.f32 %v4256, %v4267
      %v4285 = vsub.f32 %v4257, %v4270
      %v4286 = vsub.f32 %v4258, %v4273
      %v4287 = vsub.f32 %v4259, %v4276
      %v4288 = vsub.f32 %v4260, %v4279
      %v4289 = vsub.f32 %v4261, %v4282
      %v4290 = vmul.f32 %v4283, 1.442695
      %v4291 = vpow.pop %v4290
      %v4292 = vmul.f32 %v4284, 1.442695
      %v4293 = vpow.pop %v4292
      %v4294 = vmul.f32 %v4285, 1.442695
      %v4295 = vpow.pop %v4294
      %v4296 = vmul.f32 %v4286, 1.442695
      %v4297 = vpow.pop %v4296
      %v4298 = vmul.f32 %v4287, 1.442695
      %v4299 = vpow.pop %v4298
      %v4300 = vmul.f32 %v4288, 1.442695
      %v4301 = vpow.pop %v4300
      %v4302 = vmul.f32 %v4289, 1.442695
      %v4303 = vpow.pop %v4302
      %v4304 = vsel %vm2208, %v4291, 0.0
      %4305 = vadd.xlane.f32.xlu0 %v4304
      %v4306 = vpop.xlane.xlu0 %4305
      %v4307 = vsel %vm2208, %v4293, 0.0
      %4308 = vadd.xlane.f32.xlu0 %v4307
      %v4309 = vpop.xlane.xlu0 %4308
      %v4310 = vsel %vm2208, %v4295, 0.0
      %4311 = vadd.xlane.f32.xlu0 %v4310
      %v4312 = vpop.xlane.xlu0 %4311
      %v4313 = vsel %vm2208, %v4297, 0.0
      %4314 = vadd.xlane.f32.xlu0 %v4313
      %v4315 = vpop.xlane.xlu0 %4314
      %v4316 = vsel %vm2208, %v4299, 0.0
      %4317 = vadd.xlane.f32.xlu0 %v4316
      %v4318 = vpop.xlane.xlu0 %4317
      %v4319 = vsel %vm2208, %v4301, 0.0
      %4320 = vadd.xlane.f32.xlu0 %v4319
      %v4321 = vpop.xlane.xlu0 %4320
      %v4322 = vsel %vm2208, %v4303, 0.0
      %4323 = vadd.xlane.f32.xlu0 %v4322
      %v4324 = vpop.xlane.xlu0 %4323
      %v4325 = vrcp.pop %v4306
      %v4326 = vrcp.pop %v4309
      %v4327 = vrcp.pop %v4312
      %v4328 = vrcp.pop %v4315
      %v4329 = vrcp.pop %v4318
      %v4330 = vrcp.pop %v4321
      %v4331 = vrcp.pop %v4324
      %v4332 = vmul.f32 %v4291, %v4325
      %v4333 = vmul.f32 %v4293, %v4326
      %v4334 = vmul.f32 %v4295, %v4327
      %v4335 = vmul.f32 %v4297, %v4328
      %v4336 = vmul.f32 %v4299, %v4329
      %v4337 = vmul.f32 %v4301, %v4330
      %v4338 = vmul.f32 %v4303, %v4331
      %4339 = vrot.lane.b32.xlu0 %v2007, 112
      %v4340 = vpop.permute.xlu0 %4339
      %4341 = vrot.lane.b32.xlu0 %v2012, 112
      %v4342 = vpop.permute.xlu0 %4341
      %4343 = vrot.lane.b32.xlu0 %v2017, 112
      %v4344 = vpop.permute.xlu0 %4343
      %4345 = vrot.lane.b32.xlu0 %v2022, 112
      %v4346 = vpop.permute.xlu0 %4345
      %4347 = vrot.lane.b32.xlu0 %v2027, 112
      %v4348 = vpop.permute.xlu0 %4347
      %4349 = vrot.lane.b32.xlu0 %v2032, 112
      %v4350 = vpop.permute.xlu0 %4349
      %4351 = vrot.lane.b32.xlu0 %v2037, 112
      %v4352 = vpop.permute.xlu0 %4351
      %v4361 = vsel %vm2208, %v4332, 0
      %v4364 = vsel %vm2208, %v4333, 0
      %v4367 = vsel %vm2208, %v4334, 0
      %v4370 = vsel %vm2208, %v4335, 0
      %v4373 = vsel %vm2208, %v4336, 0
      %v4376 = vsel %vm2208, %v4337, 0
      %v4379 = vsel %vm2208, %v4338, 0
      %4381 = vmatprep.subr.mxu0 0.0
      %4382 = vmatpush1.msra.mxu0 %v4340
      %4383 = vmatprep.subr.mxu0 0.0
      %4384 = vmatpush1.msra.mxu0 %v4342
      %4385 = vmatprep.subr.mxu0 0.0
      %4386 = vmatpush1.msra.mxu0 %v4344
      %4387 = vmatprep.subr.mxu0 0.0
      %4388 = vmatpush1.msra.mxu0 %v4346
      %4389 = vmatprep.subr.mxu0 0.0
      %4390 = vmatpush1.msra.mxu0 %v4348
      %4391 = vmatprep.subr.mxu0 0.0
      %4392 = vmatpush1.msra.mxu0 %v4350
      %4393 = vmatprep.subr.mxu0 0.0
      %4394 = vmatpush1.msra.mxu0 %v4352
      %4395 = vmatprep.subr.mxu0 0.0
      %4396 = vmatpush1.msra.mxu0 0.0
      %4397 = vmatprep.subr.mxu0 0.0
      %4398 = vmatpush1.msra.mxu0 0.0
      %4399 = vmatprep.subr.mxu0 0.0
      %4400 = vmatpush1.msra.mxu0 0.0
      %4401 = vmatprep.subr.mxu0 0.0
      %4402 = vmatpush1.msra.mxu0 0.0
      %4403 = vmatprep.subr.mxu0 0.0
      %4404 = vmatpush1.msra.mxu0 0.0
      %4405 = vmatprep.subr.mxu0 0.0
      %4406 = vmatpush1.msra.mxu0 0.0
      %4407 = vmatprep.subr.mxu0 0.0
      %4408 = vmatpush1.msra.mxu0 0.0
      %4409 = vmatprep.subr.mxu0 0.0
      %4410 = vmatpush1.msra.mxu0 0.0
      %4411 = vmatprep.subr.mxu0 0.0
      %4412 = vmatpush1.msra.mxu0 0.0
      %4413 = vmatprep.subr.mxu0 0.0
      %4414 = vmatpush1.msra.mxu0 0.0
      %4415 = vmatprep.subr.mxu0 0.0
      %4416 = vmatpush1.msra.mxu0 0.0
      %4417 = vmatprep.subr.mxu0 0.0
      %4418 = vmatpush1.msra.mxu0 0.0
      %4419 = vmatprep.subr.mxu0 0.0
      %4420 = vmatpush1.msra.mxu0 0.0
      %4421 = vmatprep.subr.mxu0 0.0
      %4422 = vmatpush1.msra.mxu0 0.0
      %4423 = vmatprep.subr.mxu0 0.0
      %4424 = vmatpush1.msra.mxu0 0.0
      %4425 = vmatprep.subr.mxu0 0.0
      %4426 = vmatpush1.msra.mxu0 0.0
      %4427 = vmatprep.subr.mxu0 0.0
      %4428 = vmatpush1.msra.mxu0 0.0
      %4429 = vmatprep.subr.mxu0 0.0
      %4430 = vmatpush1.msra.mxu0 0.0
      %4431 = vmatprep.subr.mxu0 0.0
      %4432 = vmatpush1.msra.mxu0 0.0
      %4433 = vmatprep.subr.mxu0 0.0
      %4434 = vmatpush1.msra.mxu0 0.0
      %4435 = vmatprep.subr.mxu0 0.0
      %4436 = vmatpush1.msra.mxu0 0.0
      %4437 = vmatprep.subr.mxu0 0.0
      %4438 = vmatpush1.msra.mxu0 0.0
      %4439 = vmatprep.subr.mxu0 0.0
      %4440 = vmatpush1.msra.mxu0 0.0
      %4441 = vmatprep.subr.mxu0 0.0
      %4442 = vmatpush1.msra.mxu0 0.0
      %4443 = vmatprep.subr.mxu0 0.0
      %4444 = vmatpush1.msra.mxu0 0.0
      %4445 = vmatprep.mubr.f32.mxu0 0.0
      %4446 = vmatmul.mubr.f32.gmra.mrb[0].mxu0 %v4361
      %v4447 = vpop.f32.mrb[0].mxu0
      %v4448 = vadd.f32 0.0, %v4447
      %v4449 = vpop.f32.mrb[0].mxu0
      %4450 = vmatprep.mubr.f32.mxu0 0.0
      %4451 = vmatmul.mubr.f32.gmra.mrb[0].mxu0 %v4364
      %v4452 = vpop.f32.mrb[0].mxu0
      %v4453 = vadd.f32 0.0, %v4452
      %v4454 = vpop.f32.mrb[0].mxu0
      %4455 = vmatprep.mubr.f32.mxu0 0.0
      %4456 = vmatmul.mubr.f32.gmra.mrb[0].mxu0 %v4367
      %v4457 = vpop.f32.mrb[0].mxu0
      %v4458 = vadd.f32 0.0, %v4457
      %v4459 = vpop.f32.mrb[0].mxu0
      %4460 = vmatprep.mubr.f32.mxu0 0.0
      %4461 = vmatmul.mubr.f32.gmra.mrb[0].mxu0 %v4370
      %v4462 = vpop.f32.mrb[0].mxu0
      %v4463 = vadd.f32 0.0, %v4462
      %v4464 = vpop.f32.mrb[0].mxu0
      %4465 = vmatprep.mubr.f32.mxu0 0.0
      %4466 = vmatmul.mubr.f32.gmra.mrb[0].mxu0 %v4373
      %v4467 = vpop.f32.mrb[0].mxu0
      %v4468 = vadd.f32 0.0, %v4467
      %v4469 = vpop.f32.mrb[0].mxu0
      %4470 = vmatprep.mubr.f32.mxu0 0.0
      %4471 = vmatmul.mubr.f32.gmra.mrb[0].mxu0 %v4376
      %v4472 = vpop.f32.mrb[0].mxu0
      %v4473 = vadd.f32 0.0, %v4472
      %v4474 = vpop.f32.mrb[0].mxu0
      %4475 = vmatprep.mubr.f32.mxu0 0.0
      %4476 = vmatmul.mubr.f32.gmra.mrb[0].mxu0 %v4379
      %v4477 = vpop.f32.mrb[0].mxu0
      %v4478 = vadd.f32 0.0, %v4477
      %v4479 = vpop.f32.mrb[0].mxu0
      %4480 = vdwg.mxu0
      %v4482 = vsel %vm2051, %v4448, 0
      %v4485 = vsel %vm2051, %v4453, 0
      %v4488 = vsel %vm2051, %v4458, 0
      %v4491 = vsel %vm2051, %v4463, 0
      %v4494 = vsel %vm2051, %v4468, 0
      %v4497 = vsel %vm2051, %v4473, 0
      %v4500 = vsel %vm2051, %v4478, 0
      %v4503 = vsel %vm2826, %v2042, 0
      %4505 = vmatprep.subr.mxu0 0.0
      %4506 = vmatpush1.msra.mxu0 %v4503
      %4507 = vmatprep.subr.mxu0 0.0
      %4508 = vmatpush1.msra.mxu0 0.0
      %4509 = vmatprep.subr.mxu0 0.0
      %4510 = vmatpush1.msra.mxu0 0.0
      %4511 = vmatprep.subr.mxu0 0.0
      %4512 = vmatpush1.msra.mxu0 0.0
      %4513 = vmatprep.subr.mxu0 0.0
      %4514 = vmatpush1.msra.mxu0 0.0
      %4515 = vmatprep.subr.mxu0 0.0
      %4516 = vmatpush1.msra.mxu0 0.0
      %4517 = vmatprep.subr.mxu0 0.0
      %4518 = vmatpush1.msra.mxu0 0.0
      %4519 = vmatprep.subr.mxu0 0.0
      %4520 = vmatpush1.msra.mxu0 0.0
      %4521 = vmatprep.subr.mxu0 0.0
      %4522 = vmatpush1.msra.mxu0 0.0
      %4523 = vmatprep.subr.mxu0 0.0
      %4524 = vmatpush1.msra.mxu0 0.0
      %4525 = vmatprep.subr.mxu0 0.0
      %4526 = vmatpush1.msra.mxu0 0.0
      %4527 = vmatprep.subr.mxu0 0.0
      %4528 = vmatpush1.msra.mxu0 0.0
      %4529 = vmatprep.subr.mxu0 0.0
      %4530 = vmatpush1.msra.mxu0 0.0
      %4531 = vmatprep.subr.mxu0 0.0
      %4532 = vmatpush1.msra.mxu0 0.0
      %4533 = vmatprep.subr.mxu0 0.0
      %4534 = vmatpush1.msra.mxu0 0.0
      %4535 = vmatprep.subr.mxu0 0.0
      %4536 = vmatpush1.msra.mxu0 0.0
      %4537 = vmatprep.subr.mxu0 0.0
      %4538 = vmatpush1.msra.mxu0 0.0
      %4539 = vmatprep.subr.mxu0 0.0
      %4540 = vmatpush1.msra.mxu0 0.0
      %4541 = vmatprep.subr.mxu0 0.0
      %4542 = vmatpush1.msra.mxu0 0.0
      %4543 = vmatprep.subr.mxu0 0.0
      %4544 = vmatpush1.msra.mxu0 0.0
      %4545 = vmatprep.subr.mxu0 0.0
      %4546 = vmatpush1.msra.mxu0 0.0
      %4547 = vmatprep.subr.mxu0 0.0
      %4548 = vmatpush1.msra.mxu0 0.0
      %4549 = vmatprep.subr.mxu0 0.0
      %4550 = vmatpush1.msra.mxu0 0.0
      %4551 = vmatprep.subr.mxu0 0.0
      %4552 = vmatpush1.msra.mxu0 0.0
      %4553 = vmatprep.subr.mxu0 0.0
      %4554 = vmatpush1.msra.mxu0 0.0
      %4555 = vmatprep.subr.mxu0 0.0
      %4556 = vmatpush1.msra.mxu0 0.0
      %4557 = vmatprep.subr.mxu0 0.0
      %4558 = vmatpush1.msra.mxu0 0.0
      %4559 = vmatprep.subr.mxu0 0.0
      %4560 = vmatpush1.msra.mxu0 0.0
      %4561 = vmatprep.subr.mxu0 0.0
      %4562 = vmatpush1.msra.mxu0 0.0
      %4563 = vmatprep.subr.mxu0 0.0
      %4564 = vmatpush1.msra.mxu0 0.0
      %4565 = vmatprep.subr.mxu0 0.0
      %4566 = vmatpush1.msra.mxu0 0.0
      %4567 = vmatprep.subr.mxu0 0.0
      %4568 = vmatpush1.msra.mxu0 0.0
      %4569 = vmatprep.mubr.f32.mxu0 0.0
      %4570 = vmatmul.mubr.f32.gmra.mrb[0].mxu0 %v4482
      %v4571 = vpop.f32.mrb[0].mxu0
      %v4572 = vadd.f32 0.0, %v4571
      %v4573 = vpop.f32.mrb[0].mxu0
      %4574 = vmatprep.mubr.f32.mxu0 0.0
      %4575 = vmatmul.mubr.f32.gmra.mrb[0].mxu0 %v4485
      %v4576 = vpop.f32.mrb[0].mxu0
      %v4577 = vadd.f32 0.0, %v4576
      %v4578 = vpop.f32.mrb[0].mxu0
      %4579 = vmatprep.mubr.f32.mxu0 0.0
      %4580 = vmatmul.mubr.f32.gmra.mrb[0].mxu0 %v4488
      %v4581 = vpop.f32.mrb[0].mxu0
      %v4582 = vadd.f32 0.0, %v4581
      %v4583 = vpop.f32.mrb[0].mxu0
      %4584 = vmatprep.mubr.f32.mxu0 0.0
      %4585 = vmatmul.mubr.f32.gmra.mrb[0].mxu0 %v4491
      %v4586 = vpop.f32.mrb[0].mxu0
      %v4587 = vadd.f32 0.0, %v4586
      %v4588 = vpop.f32.mrb[0].mxu0
      %4589 = vmatprep.mubr.f32.mxu0 0.0
      %4590 = vmatmul.mubr.f32.gmra.mrb[0].mxu0 %v4494
      %v4591 = vpop.f32.mrb[0].mxu0
      %v4592 = vadd.f32 0.0, %v4591
      %v4593 = vpop.f32.mrb[0].mxu0
      %4594 = vmatprep.mubr.f32.mxu0 0.0
      %4595 = vmatmul.mubr.f32.gmra.mrb[0].mxu0 %v4497
      %v4596 = vpop.f32.mrb[0].mxu0
      %v4597 = vadd.f32 0.0, %v4596
      %v4598 = vpop.f32.mrb[0].mxu0
      %4599 = vmatprep.mubr.f32.mxu0 0.0
      %4600 = vmatmul.mubr.f32.gmra.mrb[0].mxu0 %v4500
      %v4601 = vpop.f32.mrb[0].mxu0
      %v4602 = vadd.f32 0.0, %v4601
      %v4603 = vpop.f32.mrb[0].mxu0
      %4604 = vdwg.mxu0
      %v4605 = vadd.f32 %v4085, %v4572
      %v4606 = vadd.f32 %v4086, %v4577
      %v4607 = vadd.f32 %v4087, %v4582
      %v4608 = vadd.f32 %v4088, %v4587
      %v4609 = vadd.f32 %v4089, %v4592
      %v4610 = vadd.f32 %v4090, %v4597
      %v4611 = vadd.f32 %v4091, %v4602
      %4612 = vrot.lane.b32.xlu0 %v1785, 108
      %v4613 = vpop.permute.xlu0 %4612
      %4614 = vrot.lane.b32.xlu0 %v1790, 108
      %v4615 = vpop.permute.xlu0 %4614
      %4616 = vrot.lane.b32.xlu0 %v1795, 108
      %v4617 = vpop.permute.xlu0 %4616
      %4618 = vrot.lane.b32.xlu0 %v1800, 108
      %v4619 = vpop.permute.xlu0 %4618
      %4620 = vrot.lane.b32.xlu0 %v1805, 108
      %v4621 = vpop.permute.xlu0 %4620
      %4622 = vrot.lane.b32.xlu0 %v1810, 108
      %v4623 = vpop.permute.xlu0 %4622
      %4624 = vrot.lane.b32.xlu0 %v1815, 108
      %v4625 = vpop.permute.xlu0 %4624
      %4626 = vrot.lane.b32.xlu0 %v1896, 108
      %v4627 = vpop.permute.xlu0 %4626
      %4628 = vrot.lane.b32.xlu0 %v1901, 108
      %v4629 = vpop.permute.xlu0 %4628
      %4630 = vrot.lane.b32.xlu0 %v1906, 108
      %v4631 = vpop.permute.xlu0 %4630
      %4632 = vrot.lane.b32.xlu0 %v1911, 108
      %v4633 = vpop.permute.xlu0 %4632
      %4634 = vrot.lane.b32.xlu0 %v1916, 108
      %v4635 = vpop.permute.xlu0 %4634
      %4636 = vrot.lane.b32.xlu0 %v1921, 108
      %v4637 = vpop.permute.xlu0 %4636
      %4638 = vrot.lane.b32.xlu0 %v1926, 108
      %v4639 = vpop.permute.xlu0 %4638
      %v4640 = vsel %vm2051, %v4613, 0
      %v4642 = vsel %vm2051, %v4615, 0
      %v4644 = vsel %vm2051, %v4617, 0
      %v4646 = vsel %vm2051, %v4619, 0
      %v4648 = vsel %vm2051, %v4621, 0
      %v4650 = vsel %vm2051, %v4623, 0
      %v4652 = vsel %vm2051, %v4625, 0
      %v4654 = vsel %vm2051, %v4627, 0
      %v4656 = vsel %vm2051, %v4629, 0
      %v4658 = vsel %vm2051, %v4631, 0
      %v4660 = vsel %vm2051, %v4633, 0
      %v4662 = vsel %vm2051, %v4635, 0
      %v4664 = vsel %vm2051, %v4637, 0
      %v4666 = vsel %vm2051, %v4639, 0
      %4668 = vmatprep.subr.mxu0 0.0
      %4669 = vmatpush1.xpose.msra.mxu0 %v4654
      %4670 = vmatprep.subr.mxu0 0.0
      %4671 = vmatpush1.xpose.msra.mxu0 %v4656
      %4672 = vmatprep.subr.mxu0 0.0
      %4673 = vmatpush1.xpose.msra.mxu0 %v4658
      %4674 = vmatprep.subr.mxu0 0.0
      %4675 = vmatpush1.xpose.msra.mxu0 %v4660
      %4676 = vmatprep.subr.mxu0 0.0
      %4677 = vmatpush1.xpose.msra.mxu0 %v4662
      %4678 = vmatprep.subr.mxu0 0.0
      %4679 = vmatpush1.xpose.msra.mxu0 %v4664
      %4680 = vmatprep.subr.mxu0 0.0
      %4681 = vmatpush1.xpose.msra.mxu0 %v4666
      %4682 = vmatprep.subr.mxu0 0.0
      %4683 = vmatpush1.xpose.msra.mxu0 0.0
      %4684 = vmatprep.subr.mxu0 0.0
      %4685 = vmatpush1.xpose.msra.mxu0 0.0
      %4686 = vmatprep.subr.mxu0 0.0
      %4687 = vmatpush1.xpose.msra.mxu0 0.0
      %4688 = vmatprep.subr.mxu0 0.0
      %4689 = vmatpush1.xpose.msra.mxu0 0.0
      %4690 = vmatprep.subr.mxu0 0.0
      %4691 = vmatpush1.xpose.msra.mxu0 0.0
      %4692 = vmatprep.subr.mxu0 0.0
      %4693 = vmatpush1.xpose.msra.mxu0 0.0
      %4694 = vmatprep.subr.mxu0 0.0
      %4695 = vmatpush1.xpose.msra.mxu0 0.0
      %4696 = vmatprep.subr.mxu0 0.0
      %4697 = vmatpush1.xpose.msra.mxu0 0.0
      %4698 = vmatprep.subr.mxu0 0.0
      %4699 = vmatpush1.xpose.msra.mxu0 0.0
      %4700 = vmatprep.subr.mxu0 0.0
      %4701 = vmatpush1.xpose.msra.mxu0 0.0
      %4702 = vmatprep.subr.mxu0 0.0
      %4703 = vmatpush1.xpose.msra.mxu0 0.0
      %4704 = vmatprep.subr.mxu0 0.0
      %4705 = vmatpush1.xpose.msra.mxu0 0.0
      %4706 = vmatprep.subr.mxu0 0.0
      %4707 = vmatpush1.xpose.msra.mxu0 0.0
      %4708 = vmatprep.subr.mxu0 0.0
      %4709 = vmatpush1.xpose.msra.mxu0 0.0
      %4710 = vmatprep.subr.mxu0 0.0
      %4711 = vmatpush1.xpose.msra.mxu0 0.0
      %4712 = vmatprep.subr.mxu0 0.0
      %4713 = vmatpush1.xpose.msra.mxu0 0.0
      %4714 = vmatprep.subr.mxu0 0.0
      %4715 = vmatpush1.xpose.msra.mxu0 0.0
      %4716 = vmatprep.subr.mxu0 0.0
      %4717 = vmatpush1.xpose.msra.mxu0 0.0
      %4718 = vmatprep.subr.mxu0 0.0
      %4719 = vmatpush1.xpose.msra.mxu0 0.0
      %4720 = vmatprep.subr.mxu0 0.0
      %4721 = vmatpush1.xpose.msra.mxu0 0.0
      %4722 = vmatprep.subr.mxu0 0.0
      %4723 = vmatpush1.xpose.msra.mxu0 0.0
      %4724 = vmatprep.subr.mxu0 0.0
      %4725 = vmatpush1.xpose.msra.mxu0 0.0
      %4726 = vmatprep.subr.mxu0 0.0
      %4727 = vmatpush1.xpose.msra.mxu0 0.0
      %4728 = vmatprep.subr.mxu0 0.0
      %4729 = vmatpush1.xpose.msra.mxu0 0.0
      %4730 = vmatprep.subr.mxu0 0.0
      %4731 = vmatpush1.xpose.msra.mxu0 0.0
      %4732 = vmatprep.mubr.f32.mxu0 0.0
      %4733 = vmatmul.mubr.f32.gmra.mrb[0].mxu0 %v4640
      %v4734 = vpop.f32.mrb[0].mxu0
      %v4735 = vadd.f32 0.0, %v4734
      %v4736 = vpop.f32.mrb[0].mxu0
      %4737 = vmatprep.mubr.f32.mxu0 0.0
      %4738 = vmatmul.mubr.f32.gmra.mrb[0].mxu0 %v4642
      %v4739 = vpop.f32.mrb[0].mxu0
      %v4740 = vadd.f32 0.0, %v4739
      %v4741 = vpop.f32.mrb[0].mxu0
      %4742 = vmatprep.mubr.f32.mxu0 0.0
      %4743 = vmatmul.mubr.f32.gmra.mrb[0].mxu0 %v4644
      %v4744 = vpop.f32.mrb[0].mxu0
      %v4745 = vadd.f32 0.0, %v4744
      %v4746 = vpop.f32.mrb[0].mxu0
      %4747 = vmatprep.mubr.f32.mxu0 0.0
      %4748 = vmatmul.mubr.f32.gmra.mrb[0].mxu0 %v4646
      %v4749 = vpop.f32.mrb[0].mxu0
      %v4750 = vadd.f32 0.0, %v4749
      %v4751 = vpop.f32.mrb[0].mxu0
      %4752 = vmatprep.mubr.f32.mxu0 0.0
      %4753 = vmatmul.mubr.f32.gmra.mrb[0].mxu0 %v4648
      %v4754 = vpop.f32.mrb[0].mxu0
      %v4755 = vadd.f32 0.0, %v4754
      %v4756 = vpop.f32.mrb[0].mxu0
      %4757 = vmatprep.mubr.f32.mxu0 0.0
      %4758 = vmatmul.mubr.f32.gmra.mrb[0].mxu0 %v4650
      %v4759 = vpop.f32.mrb[0].mxu0
      %v4760 = vadd.f32 0.0, %v4759
      %v4761 = vpop.f32.mrb[0].mxu0
      %4762 = vmatprep.mubr.f32.mxu0 0.0
      %4763 = vmatmul.mubr.f32.gmra.mrb[0].mxu0 %v4652
      %v4764 = vpop.f32.mrb[0].mxu0
      %v4765 = vadd.f32 0.0, %v4764
      %v4766 = vpop.f32.mrb[0].mxu0
      %4767 = vdwg.mxu0
      %v4768 = vmul.f32 %v4735, 0.5
      %v4769 = vmul.f32 %v4740, 0.5
      %v4770 = vmul.f32 %v4745, 0.5
      %v4771 = vmul.f32 %v4750, 0.5
      %v4772 = vmul.f32 %v4755, 0.5
      %v4773 = vmul.f32 %v4760, 0.5
      %v4774 = vmul.f32 %v4765, 0.5
      %v4775 = vadd.f32 %v4768, %v2044
      %v4776 = vadd.f32 %v4769, %v2045
      %v4777 = vadd.f32 %v4770, %v2046
      %v4778 = vadd.f32 %v4771, %v2047
      %v4779 = vadd.f32 %v4772, %v2048
      %v4780 = vadd.f32 %v4773, %v2049
      %v4781 = vadd.f32 %v4774, %v2050
      %v4782 = vsel %vm2208, %v4775, -inf
      %4783 = vmax.xlane.f32.xlu0 %v4782
      %v4784 = vpop.xlane.xlu0 %4783
      %v4785 = vsel %vm2208, %v4776, -inf
      %4786 = vmax.xlane.f32.xlu0 %v4785
      %v4787 = vpop.xlane.xlu0 %4786
      %v4788 = vsel %vm2208, %v4777, -inf
      %4789 = vmax.xlane.f32.xlu0 %v4788
      %v4790 = vpop.xlane.xlu0 %4789
      %v4791 = vsel %vm2208, %v4778, -inf
      %4792 = vmax.xlane.f32.xlu0 %v4791
      %v4793 = vpop.xlane.xlu0 %4792
      %v4794 = vsel %vm2208, %v4779, -inf
      %4795 = vmax.xlane.f32.xlu0 %v4794
      %v4796 = vpop.xlane.xlu0 %4795
      %v4797 = vsel %vm2208, %v4780, -inf
      %4798 = vmax.xlane.f32.xlu0 %v4797
      %v4799 = vpop.xlane.xlu0 %4798
      %v4800 = vsel %vm2208, %v4781, -inf
      %4801 = vmax.xlane.f32.xlu0 %v4800
      %v4802 = vpop.xlane.xlu0 %4801
      %v4803 = vsub.f32 %v4775, %v4784
      %v4804 = vsub.f32 %v4776, %v4787
      %v4805 = vsub.f32 %v4777, %v4790
      %v4806 = vsub.f32 %v4778, %v4793
      %v4807 = vsub.f32 %v4779, %v4796
      %v4808 = vsub.f32 %v4780, %v4799
      %v4809 = vsub.f32 %v4781, %v4802
      %v4810 = vmul.f32 %v4803, 1.442695
      %v4811 = vpow.pop %v4810
      %v4812 = vmul.f32 %v4804, 1.442695
      %v4813 = vpow.pop %v4812
      %v4814 = vmul.f32 %v4805, 1.442695
      %v4815 = vpow.pop %v4814
      %v4816 = vmul.f32 %v4806, 1.442695
      %v4817 = vpow.pop %v4816
      %v4818 = vmul.f32 %v4807, 1.442695
      %v4819 = vpow.pop %v4818
      %v4820 = vmul.f32 %v4808, 1.442695
      %v4821 = vpow.pop %v4820
      %v4822 = vmul.f32 %v4809, 1.442695
      %v4823 = vpow.pop %v4822
      %v4824 = vsel %vm2208, %v4811, 0.0
      %4825 = vadd.xlane.f32.xlu0 %v4824
      %v4826 = vpop.xlane.xlu0 %4825
      %v4827 = vsel %vm2208, %v4813, 0.0
      %4828 = vadd.xlane.f32.xlu0 %v4827
      %v4829 = vpop.xlane.xlu0 %4828
      %v4830 = vsel %vm2208, %v4815, 0.0
      %4831 = vadd.xlane.f32.xlu0 %v4830
      %v4832 = vpop.xlane.xlu0 %4831
      %v4833 = vsel %vm2208, %v4817, 0.0
      %4834 = vadd.xlane.f32.xlu0 %v4833
      %v4835 = vpop.xlane.xlu0 %4834
      %v4836 = vsel %vm2208, %v4819, 0.0
      %4837 = vadd.xlane.f32.xlu0 %v4836
      %v4838 = vpop.xlane.xlu0 %4837
      %v4839 = vsel %vm2208, %v4821, 0.0
      %4840 = vadd.xlane.f32.xlu0 %v4839
      %v4841 = vpop.xlane.xlu0 %4840
      %v4842 = vsel %vm2208, %v4823, 0.0
      %4843 = vadd.xlane.f32.xlu0 %v4842
      %v4844 = vpop.xlane.xlu0 %4843
      %v4845 = vrcp.pop %v4826
      %v4846 = vrcp.pop %v4829
      %v4847 = vrcp.pop %v4832
      %v4848 = vrcp.pop %v4835
      %v4849 = vrcp.pop %v4838
      %v4850 = vrcp.pop %v4841
      %v4851 = vrcp.pop %v4844
      %v4852 = vmul.f32 %v4811, %v4845
      %v4853 = vmul.f32 %v4813, %v4846
      %v4854 = vmul.f32 %v4815, %v4847
      %v4855 = vmul.f32 %v4817, %v4848
      %v4856 = vmul.f32 %v4819, %v4849
      %v4857 = vmul.f32 %v4821, %v4850
      %v4858 = vmul.f32 %v4823, %v4851
      %4859 = vrot.lane.b32.xlu0 %v2007, 108
      %v4860 = vpop.permute.xlu0 %4859
      %4861 = vrot.lane.b32.xlu0 %v2012, 108
      %v4862 = vpop.permute.xlu0 %4861
      %4863 = vrot.lane.b32.xlu0 %v2017, 108
      %v4864 = vpop.permute.xlu0 %4863
      %4865 = vrot.lane.b32.xlu0 %v2022, 108
      %v4866 = vpop.permute.xlu0 %4865
      %4867 = vrot.lane.b32.xlu0 %v2027, 108
      %v4868 = vpop.permute.xlu0 %4867
      %4869 = vrot.lane.b32.xlu0 %v2032, 108
      %v4870 = vpop.permute.xlu0 %4869
      %4871 = vrot.lane.b32.xlu0 %v2037, 108
      %v4872 = vpop.permute.xlu0 %4871
      %v4881 = vsel %vm2208, %v4852, 0
      %v4884 = vsel %vm2208, %v4853, 0
      %v4887 = vsel %vm2208, %v4854, 0
      %v4890 = vsel %vm2208, %v4855, 0
      %v4893 = vsel %vm2208, %v4856, 0
      %v4896 = vsel %vm2208, %v4857, 0
      %v4899 = vsel %vm2208, %v4858, 0
      %4901 = vmatprep.subr.mxu0 0.0
      %4902 = vmatpush1.msra.mxu0 %v4860
      %4903 = vmatprep.subr.mxu0 0.0
      %4904 = vmatpush1.msra.mxu0 %v4862
      %4905 = vmatprep.subr.mxu0 0.0
      %4906 = vmatpush1.msra.mxu0 %v4864
      %4907 = vmatprep.subr.mxu0 0.0
      %4908 = vmatpush1.msra.mxu0 %v4866
      %4909 = vmatprep.subr.mxu0 0.0
      %4910 = vmatpush1.msra.mxu0 %v4868
      %4911 = vmatprep.subr.mxu0 0.0
      %4912 = vmatpush1.msra.mxu0 %v4870
      %4913 = vmatprep.subr.mxu0 0.0
      %4914 = vmatpush1.msra.mxu0 %v4872
      %4915 = vmatprep.subr.mxu0 0.0
      %4916 = vmatpush1.msra.mxu0 0.0
      %4917 = vmatprep.subr.mxu0 0.0
      %4918 = vmatpush1.msra.mxu0 0.0
      %4919 = vmatprep.subr.mxu0 0.0
      %4920 = vmatpush1.msra.mxu0 0.0
      %4921 = vmatprep.subr.mxu0 0.0
      %4922 = vmatpush1.msra.mxu0 0.0
      %4923 = vmatprep.subr.mxu0 0.0
      %4924 = vmatpush1.msra.mxu0 0.0
      %4925 = vmatprep.subr.mxu0 0.0
      %4926 = vmatpush1.msra.mxu0 0.0
      %4927 = vmatprep.subr.mxu0 0.0
      %4928 = vmatpush1.msra.mxu0 0.0
      %4929 = vmatprep.subr.mxu0 0.0
      %4930 = vmatpush1.msra.mxu0 0.0
      %4931 = vmatprep.subr.mxu0 0.0
      %4932 = vmatpush1.msra.mxu0 0.0
      %4933 = vmatprep.subr.mxu0 0.0
      %4934 = vmatpush1.msra.mxu0 0.0
      %4935 = vmatprep.subr.mxu0 0.0
      %4936 = vmatpush1.msra.mxu0 0.0
      %4937 = vmatprep.subr.mxu0 0.0
      %4938 = vmatpush1.msra.mxu0 0.0
      %4939 = vmatprep.subr.mxu0 0.0
      %4940 = vmatpush1.msra.mxu0 0.0
      %4941 = vmatprep.subr.mxu0 0.0
      %4942 = vmatpush1.msra.mxu0 0.0
      %4943 = vmatprep.subr.mxu0 0.0
      %4944 = vmatpush1.msra.mxu0 0.0
      %4945 = vmatprep.subr.mxu0 0.0
      %4946 = vmatpush1.msra.mxu0 0.0
      %4947 = vmatprep.subr.mxu0 0.0
      %4948 = vmatpush1.msra.mxu0 0.0
      %4949 = vmatprep.subr.mxu0 0.0
      %4950 = vmatpush1.msra.mxu0 0.0
      %4951 = vmatprep.subr.mxu0 0.0
      %4952 = vmatpush1.msra.mxu0 0.0
      %4953 = vmatprep.subr.mxu0 0.0
      %4954 = vmatpush1.msra.mxu0 0.0
      %4955 = vmatprep.subr.mxu0 0.0
      %4956 = vmatpush1.msra.mxu0 0.0
      %4957 = vmatprep.subr.mxu0 0.0
      %4958 = vmatpush1.msra.mxu0 0.0
      %4959 = vmatprep.subr.mxu0 0.0
      %4960 = vmatpush1.msra.mxu0 0.0
      %4961 = vmatprep.subr.mxu0 0.0
      %4962 = vmatpush1.msra.mxu0 0.0
      %4963 = vmatprep.subr.mxu0 0.0
      %4964 = vmatpush1.msra.mxu0 0.0
      %4965 = vmatprep.mubr.f32.mxu0 0.0
      %4966 = vmatmul.mubr.f32.gmra.mrb[0].mxu0 %v4881
      %v4967 = vpop.f32.mrb[0].mxu0
      %v4968 = vadd.f32 0.0, %v4967
      %v4969 = vpop.f32.mrb[0].mxu0
      %4970 = vmatprep.mubr.f32.mxu0 0.0
      %4971 = vmatmul.mubr.f32.gmra.mrb[0].mxu0 %v4884
      %v4972 = vpop.f32.mrb[0].mxu0
      %v4973 = vadd.f32 0.0, %v4972
      %v4974 = vpop.f32.mrb[0].mxu0
      %4975 = vmatprep.mubr.f32.mxu0 0.0
      %4976 = vmatmul.mubr.f32.gmra.mrb[0].mxu0 %v4887
      %v4977 = vpop.f32.mrb[0].mxu0
      %v4978 = vadd.f32 0.0, %v4977
      %v4979 = vpop.f32.mrb[0].mxu0
      %4980 = vmatprep.mubr.f32.mxu0 0.0
      %4981 = vmatmul.mubr.f32.gmra.mrb[0].mxu0 %v4890
      %v4982 = vpop.f32.mrb[0].mxu0
      %v4983 = vadd.f32 0.0, %v4982
      %v4984 = vpop.f32.mrb[0].mxu0
      %4985 = vmatprep.mubr.f32.mxu0 0.0
      %4986 = vmatmul.mubr.f32.gmra.mrb[0].mxu0 %v4893
      %v4987 = vpop.f32.mrb[0].mxu0
      %v4988 = vadd.f32 0.0, %v4987
      %v4989 = vpop.f32.mrb[0].mxu0
      %4990 = vmatprep.mubr.f32.mxu0 0.0
      %4991 = vmatmul.mubr.f32.gmra.mrb[0].mxu0 %v4896
      %v4992 = vpop.f32.mrb[0].mxu0
      %v4993 = vadd.f32 0.0, %v4992
      %v4994 = vpop.f32.mrb[0].mxu0
      %4995 = vmatprep.mubr.f32.mxu0 0.0
      %4996 = vmatmul.mubr.f32.gmra.mrb[0].mxu0 %v4899
      %v4997 = vpop.f32.mrb[0].mxu0
      %v4998 = vadd.f32 0.0, %v4997
      %v4999 = vpop.f32.mrb[0].mxu0
      %5000 = vdwg.mxu0
      %v5001 = vrot.slane %v2042, 4
      %v5003 = vsel %vm2051, %v4968, 0
      %v5006 = vsel %vm2051, %v4973, 0
      %v5009 = vsel %vm2051, %v4978, 0
      %v5012 = vsel %vm2051, %v4983, 0
      %v5015 = vsel %vm2051, %v4988, 0
      %v5018 = vsel %vm2051, %v4993, 0
      %v5021 = vsel %vm2051, %v4998, 0
      %v5023 = vsel %vm2826, %v5001, 0
      %5025 = vmatprep.subr.mxu0 0.0
      %5026 = vmatpush1.msra.mxu0 %v5023
      %5027 = vmatprep.subr.mxu0 0.0
      %5028 = vmatpush1.msra.mxu0 0.0
      %5029 = vmatprep.subr.mxu0 0.0
      %5030 = vmatpush1.msra.mxu0 0.0
      %5031 = vmatprep.subr.mxu0 0.0
      %5032 = vmatpush1.msra.mxu0 0.0
      %5033 = vmatprep.subr.mxu0 0.0
      %5034 = vmatpush1.msra.mxu0 0.0
      %5035 = vmatprep.subr.mxu0 0.0
      %5036 = vmatpush1.msra.mxu0 0.0
      %5037 = vmatprep.subr.mxu0 0.0
      %5038 = vmatpush1.msra.mxu0 0.0
      %5039 = vmatprep.subr.mxu0 0.0
      %5040 = vmatpush1.msra.mxu0 0.0
      %5041 = vmatprep.subr.mxu0 0.0
      %5042 = vmatpush1.msra.mxu0 0.0
      %5043 = vmatprep.subr.mxu0 0.0
      %5044 = vmatpush1.msra.mxu0 0.0
      %5045 = vmatprep.subr.mxu0 0.0
      %5046 = vmatpush1.msra.mxu0 0.0
      %5047 = vmatprep.subr.mxu0 0.0
      %5048 = vmatpush1.msra.mxu0 0.0
      %5049 = vmatprep.subr.mxu0 0.0
      %5050 = vmatpush1.msra.mxu0 0.0
      %5051 = vmatprep.subr.mxu0 0.0
      %5052 = vmatpush1.msra.mxu0 0.0
      %5053 = vmatprep.subr.mxu0 0.0
      %5054 = vmatpush1.msra.mxu0 0.0
      %5055 = vmatprep.subr.mxu0 0.0
      %5056 = vmatpush1.msra.mxu0 0.0
      %5057 = vmatprep.subr.mxu0 0.0
      %5058 = vmatpush1.msra.mxu0 0.0
      %5059 = vmatprep.subr.mxu0 0.0
      %5060 = vmatpush1.msra.mxu0 0.0
      %5061 = vmatprep.subr.mxu0 0.0
      %5062 = vmatpush1.msra.mxu0 0.0
      %5063 = vmatprep.subr.mxu0 0.0
      %5064 = vmatpush1.msra.mxu0 0.0
      %5065 = vmatprep.subr.mxu0 0.0
      %5066 = vmatpush1.msra.mxu0 0.0
      %5067 = vmatprep.subr.mxu0 0.0
      %5068 = vmatpush1.msra.mxu0 0.0
      %5069 = vmatprep.subr.mxu0 0.0
      %5070 = vmatpush1.msra.mxu0 0.0
      %5071 = vmatprep.subr.mxu0 0.0
      %5072 = vmatpush1.msra.mxu0 0.0
      %5073 = vmatprep.subr.mxu0 0.0
      %5074 = vmatpush1.msra.mxu0 0.0
      %5075 = vmatprep.subr.mxu0 0.0
      %5076 = vmatpush1.msra.mxu0 0.0
      %5077 = vmatprep.subr.mxu0 0.0
      %5078 = vmatpush1.msra.mxu0 0.0
      %5079 = vmatprep.subr.mxu0 0.0
      %5080 = vmatpush1.msra.mxu0 0.0
      %5081 = vmatprep.subr.mxu0 0.0
      %5082 = vmatpush1.msra.mxu0 0.0
      %5083 = vmatprep.subr.mxu0 0.0
      %5084 = vmatpush1.msra.mxu0 0.0
      %5085 = vmatprep.subr.mxu0 0.0
      %5086 = vmatpush1.msra.mxu0 0.0
      %5087 = vmatprep.subr.mxu0 0.0
      %5088 = vmatpush1.msra.mxu0 0.0
      %5089 = vmatprep.mubr.f32.mxu0 0.0
      %5090 = vmatmul.mubr.f32.gmra.mrb[0].mxu0 %v5003
      %v5091 = vpop.f32.mrb[0].mxu0
      %v5092 = vadd.f32 0.0, %v5091
      %v5093 = vpop.f32.mrb[0].mxu0
      %5094 = vmatprep.mubr.f32.mxu0 0.0
      %5095 = vmatmul.mubr.f32.gmra.mrb[0].mxu0 %v5006
      %v5096 = vpop.f32.mrb[0].mxu0
      %v5097 = vadd.f32 0.0, %v5096
      %v5098 = vpop.f32.mrb[0].mxu0
      %5099 = vmatprep.mubr.f32.mxu0 0.0
      %5100 = vmatmul.mubr.f32.gmra.mrb[0].mxu0 %v5009
      %v5101 = vpop.f32.mrb[0].mxu0
      %v5102 = vadd.f32 0.0, %v5101
      %v5103 = vpop.f32.mrb[0].mxu0
      %5104 = vmatprep.mubr.f32.mxu0 0.0
      %5105 = vmatmul.mubr.f32.gmra.mrb[0].mxu0 %v5012
      %v5106 = vpop.f32.mrb[0].mxu0
      %v5107 = vadd.f32 0.0, %v5106
      %v5108 = vpop.f32.mrb[0].mxu0
      %5109 = vmatprep.mubr.f32.mxu0 0.0
      %5110 = vmatmul.mubr.f32.gmra.mrb[0].mxu0 %v5015
      %v5111 = vpop.f32.mrb[0].mxu0
      %v5112 = vadd.f32 0.0, %v5111
      %v5113 = vpop.f32.mrb[0].mxu0
      %5114 = vmatprep.mubr.f32.mxu0 0.0
      %5115 = vmatmul.mubr.f32.gmra.mrb[0].mxu0 %v5018
      %v5116 = vpop.f32.mrb[0].mxu0
      %v5117 = vadd.f32 0.0, %v5116
      %v5118 = vpop.f32.mrb[0].mxu0
      %5119 = vmatprep.mubr.f32.mxu0 0.0
      %5120 = vmatmul.mubr.f32.gmra.mrb[0].mxu0 %v5021
      %v5121 = vpop.f32.mrb[0].mxu0
      %v5122 = vadd.f32 0.0, %v5121
      %v5123 = vpop.f32.mrb[0].mxu0
      %5124 = vdwg.mxu0
      %v5125 = vadd.f32 %v4605, %v5092
      %v5126 = vadd.f32 %v4606, %v5097
      %v5127 = vadd.f32 %v4607, %v5102
      %v5128 = vadd.f32 %v4608, %v5107
      %v5129 = vadd.f32 %v4609, %v5112
      %v5130 = vadd.f32 %v4610, %v5117
      %v5131 = vadd.f32 %v4611, %v5122
      %5132 = vrot.lane.b32.xlu0 %v1785, 104
      %v5133 = vpop.permute.xlu0 %5132
      %5134 = vrot.lane.b32.xlu0 %v1790, 104
      %v5135 = vpop.permute.xlu0 %5134
      %5136 = vrot.lane.b32.xlu0 %v1795, 104
      %v5137 = vpop.permute.xlu0 %5136
      %5138 = vrot.lane.b32.xlu0 %v1800, 104
      %v5139 = vpop.permute.xlu0 %5138
      %5140 = vrot.lane.b32.xlu0 %v1805, 104
      %v5141 = vpop.permute.xlu0 %5140
      %5142 = vrot.lane.b32.xlu0 %v1810, 104
      %v5143 = vpop.permute.xlu0 %5142
      %5144 = vrot.lane.b32.xlu0 %v1815, 104
      %v5145 = vpop.permute.xlu0 %5144
      %5146 = vrot.lane.b32.xlu0 %v1896, 104
      %v5147 = vpop.permute.xlu0 %5146
      %5148 = vrot.lane.b32.xlu0 %v1901, 104
      %v5149 = vpop.permute.xlu0 %5148
      %5150 = vrot.lane.b32.xlu0 %v1906, 104
      %v5151 = vpop.permute.xlu0 %5150
      %5152 = vrot.lane.b32.xlu0 %v1911, 104
      %v5153 = vpop.permute.xlu0 %5152
      %5154 = vrot.lane.b32.xlu0 %v1916, 104
      %v5155 = vpop.permute.xlu0 %5154
      %5156 = vrot.lane.b32.xlu0 %v1921, 104
      %v5157 = vpop.permute.xlu0 %5156
      %5158 = vrot.lane.b32.xlu0 %v1926, 104
      %v5159 = vpop.permute.xlu0 %5158
      %v5160 = vsel %vm2051, %v5133, 0
      %v5162 = vsel %vm2051, %v5135, 0
      %v5164 = vsel %vm2051, %v5137, 0
      %v5166 = vsel %vm2051, %v5139, 0
      %v5168 = vsel %vm2051, %v5141, 0
      %v5170 = vsel %vm2051, %v5143, 0
      %v5172 = vsel %vm2051, %v5145, 0
      %v5174 = vsel %vm2051, %v5147, 0
      %v5176 = vsel %vm2051, %v5149, 0
      %v5178 = vsel %vm2051, %v5151, 0
      %v5180 = vsel %vm2051, %v5153, 0
      %v5182 = vsel %vm2051, %v5155, 0
      %v5184 = vsel %vm2051, %v5157, 0
      %v5186 = vsel %vm2051, %v5159, 0
      %5188 = vmatprep.subr.mxu0 0.0
      %5189 = vmatpush1.xpose.msra.mxu0 %v5174
      %5190 = vmatprep.subr.mxu0 0.0
      %5191 = vmatpush1.xpose.msra.mxu0 %v5176
      %5192 = vmatprep.subr.mxu0 0.0
      %5193 = vmatpush1.xpose.msra.mxu0 %v5178
      %5194 = vmatprep.subr.mxu0 0.0
      %5195 = vmatpush1.xpose.msra.mxu0 %v5180
      %5196 = vmatprep.subr.mxu0 0.0
      %5197 = vmatpush1.xpose.msra.mxu0 %v5182
      %5198 = vmatprep.subr.mxu0 0.0
      %5199 = vmatpush1.xpose.msra.mxu0 %v5184
      %5200 = vmatprep.subr.mxu0 0.0
      %5201 = vmatpush1.xpose.msra.mxu0 %v5186
      %5202 = vmatprep.subr.mxu0 0.0
      %5203 = vmatpush1.xpose.msra.mxu0 0.0
      %5204 = vmatprep.subr.mxu0 0.0
      %5205 = vmatpush1.xpose.msra.mxu0 0.0
      %5206 = vmatprep.subr.mxu0 0.0
      %5207 = vmatpush1.xpose.msra.mxu0 0.0
      %5208 = vmatprep.subr.mxu0 0.0
      %5209 = vmatpush1.xpose.msra.mxu0 0.0
      %5210 = vmatprep.subr.mxu0 0.0
      %5211 = vmatpush1.xpose.msra.mxu0 0.0
      %5212 = vmatprep.subr.mxu0 0.0
      %5213 = vmatpush1.xpose.msra.mxu0 0.0
      %5214 = vmatprep.subr.mxu0 0.0
      %5215 = vmatpush1.xpose.msra.mxu0 0.0
      %5216 = vmatprep.subr.mxu0 0.0
      %5217 = vmatpush1.xpose.msra.mxu0 0.0
      %5218 = vmatprep.subr.mxu0 0.0
      %5219 = vmatpush1.xpose.msra.mxu0 0.0
      %5220 = vmatprep.subr.mxu0 0.0
      %5221 = vmatpush1.xpose.msra.mxu0 0.0
      %5222 = vmatprep.subr.mxu0 0.0
      %5223 = vmatpush1.xpose.msra.mxu0 0.0
      %5224 = vmatprep.subr.mxu0 0.0
      %5225 = vmatpush1.xpose.msra.mxu0 0.0
      %5226 = vmatprep.subr.mxu0 0.0
      %5227 = vmatpush1.xpose.msra.mxu0 0.0
      %5228 = vmatprep.subr.mxu0 0.0
      %5229 = vmatpush1.xpose.msra.mxu0 0.0
      %5230 = vmatprep.subr.mxu0 0.0
      %5231 = vmatpush1.xpose.msra.mxu0 0.0
      %5232 = vmatprep.subr.mxu0 0.0
      %5233 = vmatpush1.xpose.msra.mxu0 0.0
      %5234 = vmatprep.subr.mxu0 0.0
      %5235 = vmatpush1.xpose.msra.mxu0 0.0
      %5236 = vmatprep.subr.mxu0 0.0
      %5237 = vmatpush1.xpose.msra.mxu0 0.0
      %5238 = vmatprep.subr.mxu0 0.0
      %5239 = vmatpush1.xpose.msra.mxu0 0.0
      %5240 = vmatprep.subr.mxu0 0.0
      %5241 = vmatpush1.xpose.msra.mxu0 0.0
      %5242 = vmatprep.subr.mxu0 0.0
      %5243 = vmatpush1.xpose.msra.mxu0 0.0
      %5244 = vmatprep.subr.mxu0 0.0
      %5245 = vmatpush1.xpose.msra.mxu0 0.0
      %5246 = vmatprep.subr.mxu0 0.0
      %5247 = vmatpush1.xpose.msra.mxu0 0.0
      %5248 = vmatprep.subr.mxu0 0.0
      %5249 = vmatpush1.xpose.msra.mxu0 0.0
      %5250 = vmatprep.subr.mxu0 0.0
      %5251 = vmatpush1.xpose.msra.mxu0 0.0
      %5252 = vmatprep.mubr.f32.mxu0 0.0
      %5253 = vmatmul.mubr.f32.gmra.mrb[0].mxu0 %v5160
      %v5254 = vpop.f32.mrb[0].mxu0
      %v5255 = vadd.f32 0.0, %v5254
      %v5256 = vpop.f32.mrb[0].mxu0
      %5257 = vmatprep.mubr.f32.mxu0 0.0
      %5258 = vmatmul.mubr.f32.gmra.mrb[0].mxu0 %v5162
      %v5259 = vpop.f32.mrb[0].mxu0
      %v5260 = vadd.f32 0.0, %v5259
      %v5261 = vpop.f32.mrb[0].mxu0
      %5262 = vmatprep.mubr.f32.mxu0 0.0
      %5263 = vmatmul.mubr.f32.gmra.mrb[0].mxu0 %v5164
      %v5264 = vpop.f32.mrb[0].mxu0
      %v5265 = vadd.f32 0.0, %v5264
      %v5266 = vpop.f32.mrb[0].mxu0
      %5267 = vmatprep.mubr.f32.mxu0 0.0
      %5268 = vmatmul.mubr.f32.gmra.mrb[0].mxu0 %v5166
      %v5269 = vpop.f32.mrb[0].mxu0
      %v5270 = vadd.f32 0.0, %v5269
      %v5271 = vpop.f32.mrb[0].mxu0
      %5272 = vmatprep.mubr.f32.mxu0 0.0
      %5273 = vmatmul.mubr.f32.gmra.mrb[0].mxu0 %v5168
      %v5274 = vpop.f32.mrb[0].mxu0
      %v5275 = vadd.f32 0.0, %v5274
      %v5276 = vpop.f32.mrb[0].mxu0
      %5277 = vmatprep.mubr.f32.mxu0 0.0
      %5278 = vmatmul.mubr.f32.gmra.mrb[0].mxu0 %v5170
      %v5279 = vpop.f32.mrb[0].mxu0
      %v5280 = vadd.f32 0.0, %v5279
      %v5281 = vpop.f32.mrb[0].mxu0
      %5282 = vmatprep.mubr.f32.mxu0 0.0
      %5283 = vmatmul.mubr.f32.gmra.mrb[0].mxu0 %v5172
      %v5284 = vpop.f32.mrb[0].mxu0
      %v5285 = vadd.f32 0.0, %v5284
      %v5286 = vpop.f32.mrb[0].mxu0
      %5287 = vdwg.mxu0
      %v5288 = vmul.f32 %v5255, 0.5
      %v5289 = vmul.f32 %v5260, 0.5
      %v5290 = vmul.f32 %v5265, 0.5
      %v5291 = vmul.f32 %v5270, 0.5
      %v5292 = vmul.f32 %v5275, 0.5
      %v5293 = vmul.f32 %v5280, 0.5
      %v5294 = vmul.f32 %v5285, 0.5
      %v5295 = vadd.f32 %v5288, %v2044
      %v5296 = vadd.f32 %v5289, %v2045
      %v5297 = vadd.f32 %v5290, %v2046
      %v5298 = vadd.f32 %v5291, %v2047
      %v5299 = vadd.f32 %v5292, %v2048
      %v5300 = vadd.f32 %v5293, %v2049
      %v5301 = vadd.f32 %v5294, %v2050
      %v5302 = vsel %vm2208, %v5295, -inf
      %5303 = vmax.xlane.f32.xlu0 %v5302
      %v5304 = vpop.xlane.xlu0 %5303
      %v5305 = vsel %vm2208, %v5296, -inf
      %5306 = vmax.xlane.f32.xlu0 %v5305
      %v5307 = vpop.xlane.xlu0 %5306
      %v5308 = vsel %vm2208, %v5297, -inf
      %5309 = vmax.xlane.f32.xlu0 %v5308
      %v5310 = vpop.xlane.xlu0 %5309
      %v5311 = vsel %vm2208, %v5298, -inf
      %5312 = vmax.xlane.f32.xlu0 %v5311
      %v5313 = vpop.xlane.xlu0 %5312
      %v5314 = vsel %vm2208, %v5299, -inf
      %5315 = vmax.xlane.f32.xlu0 %v5314
      %v5316 = vpop.xlane.xlu0 %5315
      %v5317 = vsel %vm2208, %v5300, -inf
      %5318 = vmax.xlane.f32.xlu0 %v5317
      %v5319 = vpop.xlane.xlu0 %5318
      %v5320 = vsel %vm2208, %v5301, -inf
      %5321 = vmax.xlane.f32.xlu0 %v5320
      %v5322 = vpop.xlane.xlu0 %5321
      %v5323 = vsub.f32 %v5295, %v5304
      %v5324 = vsub.f32 %v5296, %v5307
      %v5325 = vsub.f32 %v5297, %v5310
      %v5326 = vsub.f32 %v5298, %v5313
      %v5327 = vsub.f32 %v5299, %v5316
      %v5328 = vsub.f32 %v5300, %v5319
      %v5329 = vsub.f32 %v5301, %v5322
      %v5330 = vmul.f32 %v5323, 1.442695
      %v5331 = vpow.pop %v5330
      %v5332 = vmul.f32 %v5324, 1.442695
      %v5333 = vpow.pop %v5332
      %v5334 = vmul.f32 %v5325, 1.442695
      %v5335 = vpow.pop %v5334
      %v5336 = vmul.f32 %v5326, 1.442695
      %v5337 = vpow.pop %v5336
      %v5338 = vmul.f32 %v5327, 1.442695
      %v5339 = vpow.pop %v5338
      %v5340 = vmul.f32 %v5328, 1.442695
      %v5341 = vpow.pop %v5340
      %v5342 = vmul.f32 %v5329, 1.442695
      %v5343 = vpow.pop %v5342
      %v5344 = vsel %vm2208, %v5331, 0.0
      %5345 = vadd.xlane.f32.xlu0 %v5344
      %v5346 = vpop.xlane.xlu0 %5345
      %v5347 = vsel %vm2208, %v5333, 0.0
      %5348 = vadd.xlane.f32.xlu0 %v5347
      %v5349 = vpop.xlane.xlu0 %5348
      %v5350 = vsel %vm2208, %v5335, 0.0
      %5351 = vadd.xlane.f32.xlu0 %v5350
      %v5352 = vpop.xlane.xlu0 %5351
      %v5353 = vsel %vm2208, %v5337, 0.0
      %5354 = vadd.xlane.f32.xlu0 %v5353
      %v5355 = vpop.xlane.xlu0 %5354
      %v5356 = vsel %vm2208, %v5339, 0.0
      %5357 = vadd.xlane.f32.xlu0 %v5356
      %v5358 = vpop.xlane.xlu0 %5357
      %v5359 = vsel %vm2208, %v5341, 0.0
      %5360 = vadd.xlane.f32.xlu0 %v5359
      %v5361 = vpop.xlane.xlu0 %5360
      %v5362 = vsel %vm2208, %v5343, 0.0
      %5363 = vadd.xlane.f32.xlu0 %v5362
      %v5364 = vpop.xlane.xlu0 %5363
      %v5365 = vrcp.pop %v5346
      %v5366 = vrcp.pop %v5349
      %v5367 = vrcp.pop %v5352
      %v5368 = vrcp.pop %v5355
      %v5369 = vrcp.pop %v5358
      %v5370 = vrcp.pop %v5361
      %v5371 = vrcp.pop %v5364
      %v5372 = vmul.f32 %v5331, %v5365
      %v5373 = vmul.f32 %v5333, %v5366
      %v5374 = vmul.f32 %v5335, %v5367
      %v5375 = vmul.f32 %v5337, %v5368
      %v5376 = vmul.f32 %v5339, %v5369
      %v5377 = vmul.f32 %v5341, %v5370
      %v5378 = vmul.f32 %v5343, %v5371
      %5379 = vrot.lane.b32.xlu0 %v2007, 104
      %v5380 = vpop.permute.xlu0 %5379
      %5381 = vrot.lane.b32.xlu0 %v2012, 104
      %v5382 = vpop.permute.xlu0 %5381
      %5383 = vrot.lane.b32.xlu0 %v2017, 104
      %v5384 = vpop.permute.xlu0 %5383
      %5385 = vrot.lane.b32.xlu0 %v2022, 104
      %v5386 = vpop.permute.xlu0 %5385
      %5387 = vrot.lane.b32.xlu0 %v2027, 104
      %v5388 = vpop.permute.xlu0 %5387
      %5389 = vrot.lane.b32.xlu0 %v2032, 104
      %v5390 = vpop.permute.xlu0 %5389
      %5391 = vrot.lane.b32.xlu0 %v2037, 104
      %v5392 = vpop.permute.xlu0 %5391
      %v5401 = vsel %vm2208, %v5372, 0
      %v5404 = vsel %vm2208, %v5373, 0
      %v5407 = vsel %vm2208, %v5374, 0
      %v5410 = vsel %vm2208, %v5375, 0
      %v5413 = vsel %vm2208, %v5376, 0
      %v5416 = vsel %vm2208, %v5377, 0
      %v5419 = vsel %vm2208, %v5378, 0
      %5421 = vmatprep.subr.mxu0 0.0
      %5422 = vmatpush1.msra.mxu0 %v5380
      %5423 = vmatprep.subr.mxu0 0.0
      %5424 = vmatpush1.msra.mxu0 %v5382
      %5425 = vmatprep.subr.mxu0 0.0
      %5426 = vmatpush1.msra.mxu0 %v5384
      %5427 = vmatprep.subr.mxu0 0.0
      %5428 = vmatpush1.msra.mxu0 %v5386
      %5429 = vmatprep.subr.mxu0 0.0
      %5430 = vmatpush1.msra.mxu0 %v5388
      %5431 = vmatprep.subr.mxu0 0.0
      %5432 = vmatpush1.msra.mxu0 %v5390
      %5433 = vmatprep.subr.mxu0 0.0
      %5434 = vmatpush1.msra.mxu0 %v5392
      %5435 = vmatprep.subr.mxu0 0.0
      %5436 = vmatpush1.msra.mxu0 0.0
      %5437 = vmatprep.subr.mxu0 0.0
      %5438 = vmatpush1.msra.mxu0 0.0
      %5439 = vmatprep.subr.mxu0 0.0
      %5440 = vmatpush1.msra.mxu0 0.0
      %5441 = vmatprep.subr.mxu0 0.0
      %5442 = vmatpush1.msra.mxu0 0.0
      %5443 = vmatprep.subr.mxu0 0.0
      %5444 = vmatpush1.msra.mxu0 0.0
      %5445 = vmatprep.subr.mxu0 0.0
      %5446 = vmatpush1.msra.mxu0 0.0
      %5447 = vmatprep.subr.mxu0 0.0
      %5448 = vmatpush1.msra.mxu0 0.0
      %5449 = vmatprep.subr.mxu0 0.0
      %5450 = vmatpush1.msra.mxu0 0.0
      %5451 = vmatprep.subr.mxu0 0.0
      %5452 = vmatpush1.msra.mxu0 0.0
      %5453 = vmatprep.subr.mxu0 0.0
      %5454 = vmatpush1.msra.mxu0 0.0
      %5455 = vmatprep.subr.mxu0 0.0
      %5456 = vmatpush1.msra.mxu0 0.0
      %5457 = vmatprep.subr.mxu0 0.0
      %5458 = vmatpush1.msra.mxu0 0.0
      %5459 = vmatprep.subr.mxu0 0.0
      %5460 = vmatpush1.msra.mxu0 0.0
      %5461 = vmatprep.subr.mxu0 0.0
      %5462 = vmatpush1.msra.mxu0 0.0
      %5463 = vmatprep.subr.mxu0 0.0
      %5464 = vmatpush1.msra.mxu0 0.0
      %5465 = vmatprep.subr.mxu0 0.0
      %5466 = vmatpush1.msra.mxu0 0.0
      %5467 = vmatprep.subr.mxu0 0.0
      %5468 = vmatpush1.msra.mxu0 0.0
      %5469 = vmatprep.subr.mxu0 0.0
      %5470 = vmatpush1.msra.mxu0 0.0
      %5471 = vmatprep.subr.mxu0 0.0
      %5472 = vmatpush1.msra.mxu0 0.0
      %5473 = vmatprep.subr.mxu0 0.0
      %5474 = vmatpush1.msra.mxu0 0.0
      %5475 = vmatprep.subr.mxu0 0.0
      %5476 = vmatpush1.msra.mxu0 0.0
      %5477 = vmatprep.subr.mxu0 0.0
      %5478 = vmatpush1.msra.mxu0 0.0
      %5479 = vmatprep.subr.mxu0 0.0
      %5480 = vmatpush1.msra.mxu0 0.0
      %5481 = vmatprep.subr.mxu0 0.0
      %5482 = vmatpush1.msra.mxu0 0.0
      %5483 = vmatprep.subr.mxu0 0.0
      %5484 = vmatpush1.msra.mxu0 0.0
      %5485 = vmatprep.mubr.f32.mxu0 0.0
      %5486 = vmatmul.mubr.f32.gmra.mrb[0].mxu0 %v5401
      %v5487 = vpop.f32.mrb[0].mxu0
      %v5488 = vadd.f32 0.0, %v5487
      %v5489 = vpop.f32.mrb[0].mxu0
      %5490 = vmatprep.mubr.f32.mxu0 0.0
      %5491 = vmatmul.mubr.f32.gmra.mrb[0].mxu0 %v5404
      %v5492 = vpop.f32.mrb[0].mxu0
      %v5493 = vadd.f32 0.0, %v5492
      %v5494 = vpop.f32.mrb[0].mxu0
      %5495 = vmatprep.mubr.f32.mxu0 0.0
      %5496 = vmatmul.mubr.f32.gmra.mrb[0].mxu0 %v5407
      %v5497 = vpop.f32.mrb[0].mxu0
      %v5498 = vadd.f32 0.0, %v5497
      %v5499 = vpop.f32.mrb[0].mxu0
      %5500 = vmatprep.mubr.f32.mxu0 0.0
      %5501 = vmatmul.mubr.f32.gmra.mrb[0].mxu0 %v5410
      %v5502 = vpop.f32.mrb[0].mxu0
      %v5503 = vadd.f32 0.0, %v5502
      %v5504 = vpop.f32.mrb[0].mxu0
      %5505 = vmatprep.mubr.f32.mxu0 0.0
      %5506 = vmatmul.mubr.f32.gmra.mrb[0].mxu0 %v5413
      %v5507 = vpop.f32.mrb[0].mxu0
      %v5508 = vadd.f32 0.0, %v5507
      %v5509 = vpop.f32.mrb[0].mxu0
      %5510 = vmatprep.mubr.f32.mxu0 0.0
      %5511 = vmatmul.mubr.f32.gmra.mrb[0].mxu0 %v5416
      %v5512 = vpop.f32.mrb[0].mxu0
      %v5513 = vadd.f32 0.0, %v5512
      %v5514 = vpop.f32.mrb[0].mxu0
      %5515 = vmatprep.mubr.f32.mxu0 0.0
      %5516 = vmatmul.mubr.f32.gmra.mrb[0].mxu0 %v5419
      %v5517 = vpop.f32.mrb[0].mxu0
      %v5518 = vadd.f32 0.0, %v5517
      %v5519 = vpop.f32.mrb[0].mxu0
      %5520 = vdwg.mxu0
      %v5522 = vsel %vm2051, %v5488, 0
      %v5525 = vsel %vm2051, %v5493, 0
      %v5528 = vsel %vm2051, %v5498, 0
      %v5531 = vsel %vm2051, %v5503, 0
      %v5534 = vsel %vm2051, %v5508, 0
      %v5537 = vsel %vm2051, %v5513, 0
      %v5540 = vsel %vm2051, %v5518, 0
      %v5543 = vsel %vm2826, %v2043, 0
      %5545 = vmatprep.subr.mxu0 0.0
      %5546 = vmatpush1.msra.mxu0 %v5543
      %5547 = vmatprep.subr.mxu0 0.0
      %5548 = vmatpush1.msra.mxu0 0.0
      %5549 = vmatprep.subr.mxu0 0.0
      %5550 = vmatpush1.msra.mxu0 0.0
      %5551 = vmatprep.subr.mxu0 0.0
      %5552 = vmatpush1.msra.mxu0 0.0
      %5553 = vmatprep.subr.mxu0 0.0
      %5554 = vmatpush1.msra.mxu0 0.0
      %5555 = vmatprep.subr.mxu0 0.0
      %5556 = vmatpush1.msra.mxu0 0.0
      %5557 = vmatprep.subr.mxu0 0.0
      %5558 = vmatpush1.msra.mxu0 0.0
      %5559 = vmatprep.subr.mxu0 0.0
      %5560 = vmatpush1.msra.mxu0 0.0
      %5561 = vmatprep.subr.mxu0 0.0
      %5562 = vmatpush1.msra.mxu0 0.0
      %5563 = vmatprep.subr.mxu0 0.0
      %5564 = vmatpush1.msra.mxu0 0.0
      %5565 = vmatprep.subr.mxu0 0.0
      %5566 = vmatpush1.msra.mxu0 0.0
      %5567 = vmatprep.subr.mxu0 0.0
      %5568 = vmatpush1.msra.mxu0 0.0
      %5569 = vmatprep.subr.mxu0 0.0
      %5570 = vmatpush1.msra.mxu0 0.0
      %5571 = vmatprep.subr.mxu0 0.0
      %5572 = vmatpush1.msra.mxu0 0.0
      %5573 = vmatprep.subr.mxu0 0.0
      %5574 = vmatpush1.msra.mxu0 0.0
      %5575 = vmatprep.subr.mxu0 0.0
      %5576 = vmatpush1.msra.mxu0 0.0
      %5577 = vmatprep.subr.mxu0 0.0
      %5578 = vmatpush1.msra.mxu0 0.0
      %5579 = vmatprep.subr.mxu0 0.0
      %5580 = vmatpush1.msra.mxu0 0.0
      %5581 = vmatprep.subr.mxu0 0.0
      %5582 = vmatpush1.msra.mxu0 0.0
      %5583 = vmatprep.subr.mxu0 0.0
      %5584 = vmatpush1.msra.mxu0 0.0
      %5585 = vmatprep.subr.mxu0 0.0
      %5586 = vmatpush1.msra.mxu0 0.0
      %5587 = vmatprep.subr.mxu0 0.0
      %5588 = vmatpush1.msra.mxu0 0.0
      %5589 = vmatprep.subr.mxu0 0.0
      %5590 = vmatpush1.msra.mxu0 0.0
      %5591 = vmatprep.subr.mxu0 0.0
      %5592 = vmatpush1.msra.mxu0 0.0
      %5593 = vmatprep.subr.mxu0 0.0
      %5594 = vmatpush1.msra.mxu0 0.0
      %5595 = vmatprep.subr.mxu0 0.0
      %5596 = vmatpush1.msra.mxu0 0.0
      %5597 = vmatprep.subr.mxu0 0.0
      %5598 = vmatpush1.msra.mxu0 0.0
      %5599 = vmatprep.subr.mxu0 0.0
      %5600 = vmatpush1.msra.mxu0 0.0
      %5601 = vmatprep.subr.mxu0 0.0
      %5602 = vmatpush1.msra.mxu0 0.0
      %5603 = vmatprep.subr.mxu0 0.0
      %5604 = vmatpush1.msra.mxu0 0.0
      %5605 = vmatprep.subr.mxu0 0.0
      %5606 = vmatpush1.msra.mxu0 0.0
      %5607 = vmatprep.subr.mxu0 0.0
      %5608 = vmatpush1.msra.mxu0 0.0
      %5609 = vmatprep.mubr.f32.mxu0 0.0
      %5610 = vmatmul.mubr.f32.gmra.mrb[0].mxu0 %v5522
      %v5611 = vpop.f32.mrb[0].mxu0
      %v5612 = vadd.f32 0.0, %v5611
      %v5613 = vpop.f32.mrb[0].mxu0
      %5614 = vmatprep.mubr.f32.mxu0 0.0
      %5615 = vmatmul.mubr.f32.gmra.mrb[0].mxu0 %v5525
      %v5616 = vpop.f32.mrb[0].mxu0
      %v5617 = vadd.f32 0.0, %v5616
      %v5618 = vpop.f32.mrb[0].mxu0
      %5619 = vmatprep.mubr.f32.mxu0 0.0
      %5620 = vmatmul.mubr.f32.gmra.mrb[0].mxu0 %v5528
      %v5621 = vpop.f32.mrb[0].mxu0
      %v5622 = vadd.f32 0.0, %v5621
      %v5623 = vpop.f32.mrb[0].mxu0
      %5624 = vmatprep.mubr.f32.mxu0 0.0
      %5625 = vmatmul.mubr.f32.gmra.mrb[0].mxu0 %v5531
      %v5626 = vpop.f32.mrb[0].mxu0
      %v5627 = vadd.f32 0.0, %v5626
      %v5628 = vpop.f32.mrb[0].mxu0
      %5629 = vmatprep.mubr.f32.mxu0 0.0
      %5630 = vmatmul.mubr.f32.gmra.mrb[0].mxu0 %v5534
      %v5631 = vpop.f32.mrb[0].mxu0
      %v5632 = vadd.f32 0.0, %v5631
      %v5633 = vpop.f32.mrb[0].mxu0
      %5634 = vmatprep.mubr.f32.mxu0 0.0
      %5635 = vmatmul.mubr.f32.gmra.mrb[0].mxu0 %v5537
      %v5636 = vpop.f32.mrb[0].mxu0
      %v5637 = vadd.f32 0.0, %v5636
      %v5638 = vpop.f32.mrb[0].mxu0
      %5639 = vmatprep.mubr.f32.mxu0 0.0
      %5640 = vmatmul.mubr.f32.gmra.mrb[0].mxu0 %v5540
      %v5641 = vpop.f32.mrb[0].mxu0
      %v5642 = vadd.f32 0.0, %v5641
      %v5643 = vpop.f32.mrb[0].mxu0
      %5644 = vdwg.mxu0
      %v5645 = vadd.f32 %v5125, %v5612
      %v5646 = vadd.f32 %v5126, %v5617
      %v5647 = vadd.f32 %v5127, %v5622
      %v5648 = vadd.f32 %v5128, %v5627
      %v5649 = vadd.f32 %v5129, %v5632
      %v5650 = vadd.f32 %v5130, %v5637
      %v5651 = vadd.f32 %v5131, %v5642
      %5652 = vrot.lane.b32.xlu0 %v1785, 100
      %v5653 = vpop.permute.xlu0 %5652
      %5654 = vrot.lane.b32.xlu0 %v1790, 100
      %v5655 = vpop.permute.xlu0 %5654
      %5656 = vrot.lane.b32.xlu0 %v1795, 100
      %v5657 = vpop.permute.xlu0 %5656
      %5658 = vrot.lane.b32.xlu0 %v1800, 100
      %v5659 = vpop.permute.xlu0 %5658
      %5660 = vrot.lane.b32.xlu0 %v1805, 100
      %v5661 = vpop.permute.xlu0 %5660
      %5662 = vrot.lane.b32.xlu0 %v1810, 100
      %v5663 = vpop.permute.xlu0 %5662
      %5664 = vrot.lane.b32.xlu0 %v1815, 100
      %v5665 = vpop.permute.xlu0 %5664
      %5666 = vrot.lane.b32.xlu0 %v1896, 100
      %v5667 = vpop.permute.xlu0 %5666
      %5668 = vrot.lane.b32.xlu0 %v1901, 100
      %v5669 = vpop.permute.xlu0 %5668
      %5670 = vrot.lane.b32.xlu0 %v1906, 100
      %v5671 = vpop.permute.xlu0 %5670
      %5672 = vrot.lane.b32.xlu0 %v1911, 100
      %v5673 = vpop.permute.xlu0 %5672
      %5674 = vrot.lane.b32.xlu0 %v1916, 100
      %v5675 = vpop.permute.xlu0 %5674
      %5676 = vrot.lane.b32.xlu0 %v1921, 100
      %v5677 = vpop.permute.xlu0 %5676
      %5678 = vrot.lane.b32.xlu0 %v1926, 100
      %v5679 = vpop.permute.xlu0 %5678
      %v5680 = vsel %vm2051, %v5653, 0
      %v5682 = vsel %vm2051, %v5655, 0
      %v5684 = vsel %vm2051, %v5657, 0
      %v5686 = vsel %vm2051, %v5659, 0
      %v5688 = vsel %vm2051, %v5661, 0
      %v5690 = vsel %vm2051, %v5663, 0
      %v5692 = vsel %vm2051, %v5665, 0
      %v5694 = vsel %vm2051, %v5667, 0
      %v5696 = vsel %vm2051, %v5669, 0
      %v5698 = vsel %vm2051, %v5671, 0
      %v5700 = vsel %vm2051, %v5673, 0
      %v5702 = vsel %vm2051, %v5675, 0
      %v5704 = vsel %vm2051, %v5677, 0
      %v5706 = vsel %vm2051, %v5679, 0
      %5708 = vmatprep.subr.mxu0 0.0
      %5709 = vmatpush1.xpose.msra.mxu0 %v5694
      %5710 = vmatprep.subr.mxu0 0.0
      %5711 = vmatpush1.xpose.msra.mxu0 %v5696
      %5712 = vmatprep.subr.mxu0 0.0
      %5713 = vmatpush1.xpose.msra.mxu0 %v5698
      %5714 = vmatprep.subr.mxu0 0.0
      %5715 = vmatpush1.xpose.msra.mxu0 %v5700
      %5716 = vmatprep.subr.mxu0 0.0
      %5717 = vmatpush1.xpose.msra.mxu0 %v5702
      %5718 = vmatprep.subr.mxu0 0.0
      %5719 = vmatpush1.xpose.msra.mxu0 %v5704
      %5720 = vmatprep.subr.mxu0 0.0
      %5721 = vmatpush1.xpose.msra.mxu0 %v5706
      %5722 = vmatprep.subr.mxu0 0.0
      %5723 = vmatpush1.xpose.msra.mxu0 0.0
      %5724 = vmatprep.subr.mxu0 0.0
      %5725 = vmatpush1.xpose.msra.mxu0 0.0
      %5726 = vmatprep.subr.mxu0 0.0
      %5727 = vmatpush1.xpose.msra.mxu0 0.0
      %5728 = vmatprep.subr.mxu0 0.0
      %5729 = vmatpush1.xpose.msra.mxu0 0.0
      %5730 = vmatprep.subr.mxu0 0.0
      %5731 = vmatpush1.xpose.msra.mxu0 0.0
      %5732 = vmatprep.subr.mxu0 0.0
      %5733 = vmatpush1.xpose.msra.mxu0 0.0
      %5734 = vmatprep.subr.mxu0 0.0
      %5735 = vmatpush1.xpose.msra.mxu0 0.0
      %5736 = vmatprep.subr.mxu0 0.0
      %5737 = vmatpush1.xpose.msra.mxu0 0.0
      %5738 = vmatprep.subr.mxu0 0.0
      %5739 = vmatpush1.xpose.msra.mxu0 0.0
      %5740 = vmatprep.subr.mxu0 0.0
      %5741 = vmatpush1.xpose.msra.mxu0 0.0
      %5742 = vmatprep.subr.mxu0 0.0
      %5743 = vmatpush1.xpose.msra.mxu0 0.0
      %5744 = vmatprep.subr.mxu0 0.0
      %5745 = vmatpush1.xpose.msra.mxu0 0.0
      %5746 = vmatprep.subr.mxu0 0.0
      %5747 = vmatpush1.xpose.msra.mxu0 0.0
      %5748 = vmatprep.subr.mxu0 0.0
      %5749 = vmatpush1.xpose.msra.mxu0 0.0
      %5750 = vmatprep.subr.mxu0 0.0
      %5751 = vmatpush1.xpose.msra.mxu0 0.0
      %5752 = vmatprep.subr.mxu0 0.0
      %5753 = vmatpush1.xpose.msra.mxu0 0.0
      %5754 = vmatprep.subr.mxu0 0.0
      %5755 = vmatpush1.xpose.msra.mxu0 0.0
      %5756 = vmatprep.subr.mxu0 0.0
      %5757 = vmatpush1.xpose.msra.mxu0 0.0
      %5758 = vmatprep.subr.mxu0 0.0
      %5759 = vmatpush1.xpose.msra.mxu0 0.0
      %5760 = vmatprep.subr.mxu0 0.0
      %5761 = vmatpush1.xpose.msra.mxu0 0.0
      %5762 = vmatprep.subr.mxu0 0.0
      %5763 = vmatpush1.xpose.msra.mxu0 0.0
      %5764 = vmatprep.subr.mxu0 0.0
      %5765 = vmatpush1.xpose.msra.mxu0 0.0
      %5766 = vmatprep.subr.mxu0 0.0
      %5767 = vmatpush1.xpose.msra.mxu0 0.0
      %5768 = vmatprep.subr.mxu0 0.0
      %5769 = vmatpush1.xpose.msra.mxu0 0.0
      %5770 = vmatprep.subr.mxu0 0.0
      %5771 = vmatpush1.xpose.msra.mxu0 0.0
      %5772 = vmatprep.mubr.f32.mxu0 0.0
      %5773 = vmatmul.mubr.f32.gmra.mrb[0].mxu0 %v5680
      %v5774 = vpop.f32.mrb[0].mxu0
      %v5775 = vadd.f32 0.0, %v5774
      %v5776 = vpop.f32.mrb[0].mxu0
      %5777 = vmatprep.mubr.f32.mxu0 0.0
      %5778 = vmatmul.mubr.f32.gmra.mrb[0].mxu0 %v5682
      %v5779 = vpop.f32.mrb[0].mxu0
      %v5780 = vadd.f32 0.0, %v5779
      %v5781 = vpop.f32.mrb[0].mxu0
      %5782 = vmatprep.mubr.f32.mxu0 0.0
      %5783 = vmatmul.mubr.f32.gmra.mrb[0].mxu0 %v5684
      %v5784 = vpop.f32.mrb[0].mxu0
      %v5785 = vadd.f32 0.0, %v5784
      %v5786 = vpop.f32.mrb[0].mxu0
      %5787 = vmatprep.mubr.f32.mxu0 0.0
      %5788 = vmatmul.mubr.f32.gmra.mrb[0].mxu0 %v5686
      %v5789 = vpop.f32.mrb[0].mxu0
      %v5790 = vadd.f32 0.0, %v5789
      %v5791 = vpop.f32.mrb[0].mxu0
      %5792 = vmatprep.mubr.f32.mxu0 0.0
      %5793 = vmatmul.mubr.f32.gmra.mrb[0].mxu0 %v5688
      %v5794 = vpop.f32.mrb[0].mxu0
      %v5795 = vadd.f32 0.0, %v5794
      %v5796 = vpop.f32.mrb[0].mxu0
      %5797 = vmatprep.mubr.f32.mxu0 0.0
      %5798 = vmatmul.mubr.f32.gmra.mrb[0].mxu0 %v5690
      %v5799 = vpop.f32.mrb[0].mxu0
      %v5800 = vadd.f32 0.0, %v5799
      %v5801 = vpop.f32.mrb[0].mxu0
      %5802 = vmatprep.mubr.f32.mxu0 0.0
      %5803 = vmatmul.mubr.f32.gmra.mrb[0].mxu0 %v5692
      %v5804 = vpop.f32.mrb[0].mxu0
      %v5805 = vadd.f32 0.0, %v5804
      %v5806 = vpop.f32.mrb[0].mxu0
      %5807 = vdwg.mxu0
      %v5808 = vmul.f32 %v5775, 0.5
      %v5809 = vmul.f32 %v5780, 0.5
      %v5810 = vmul.f32 %v5785, 0.5
      %v5811 = vmul.f32 %v5790, 0.5
      %v5812 = vmul.f32 %v5795, 0.5
      %v5813 = vmul.f32 %v5800, 0.5
      %v5814 = vmul.f32 %v5805, 0.5
      %v5815 = vadd.f32 %v5808, %v2044
      %v5816 = vadd.f32 %v5809, %v2045
      %v5817 = vadd.f32 %v5810, %v2046
      %v5818 = vadd.f32 %v5811, %v2047
      %v5819 = vadd.f32 %v5812, %v2048
      %v5820 = vadd.f32 %v5813, %v2049
      %v5821 = vadd.f32 %v5814, %v2050
      %v5822 = vsel %vm2208, %v5815, -inf
      %5823 = vmax.xlane.f32.xlu0 %v5822
      %v5824 = vpop.xlane.xlu0 %5823
      %v5825 = vsel %vm2208, %v5816, -inf
      %5826 = vmax.xlane.f32.xlu0 %v5825
      %v5827 = vpop.xlane.xlu0 %5826
      %v5828 = vsel %vm2208, %v5817, -inf
      %5829 = vmax.xlane.f32.xlu0 %v5828
      %v5830 = vpop.xlane.xlu0 %5829
      %v5831 = vsel %vm2208, %v5818, -inf
      %5832 = vmax.xlane.f32.xlu0 %v5831
      %v5833 = vpop.xlane.xlu0 %5832
      %v5834 = vsel %vm2208, %v5819, -inf
      %5835 = vmax.xlane.f32.xlu0 %v5834
      %v5836 = vpop.xlane.xlu0 %5835
      %v5837 = vsel %vm2208, %v5820, -inf
      %5838 = vmax.xlane.f32.xlu0 %v5837
      %v5839 = vpop.xlane.xlu0 %5838
      %v5840 = vsel %vm2208, %v5821, -inf
      %5841 = vmax.xlane.f32.xlu0 %v5840
      %v5842 = vpop.xlane.xlu0 %5841
      %v5843 = vsub.f32 %v5815, %v5824
      %v5844 = vsub.f32 %v5816, %v5827
      %v5845 = vsub.f32 %v5817, %v5830
      %v5846 = vsub.f32 %v5818, %v5833
      %v5847 = vsub.f32 %v5819, %v5836
      %v5848 = vsub.f32 %v5820, %v5839
      %v5849 = vsub.f32 %v5821, %v5842
      %v5850 = vmul.f32 %v5843, 1.442695
      %v5851 = vpow.pop %v5850
      %v5852 = vmul.f32 %v5844, 1.442695
      %v5853 = vpow.pop %v5852
      %v5854 = vmul.f32 %v5845, 1.442695
      %v5855 = vpow.pop %v5854
      %v5856 = vmul.f32 %v5846, 1.442695
      %v5857 = vpow.pop %v5856
      %v5858 = vmul.f32 %v5847, 1.442695
      %v5859 = vpow.pop %v5858
      %v5860 = vmul.f32 %v5848, 1.442695
      %v5861 = vpow.pop %v5860
      %v5862 = vmul.f32 %v5849, 1.442695
      %v5863 = vpow.pop %v5862
      %v5864 = vsel %vm2208, %v5851, 0.0
      %5865 = vadd.xlane.f32.xlu0 %v5864
      %v5866 = vpop.xlane.xlu0 %5865
      %v5867 = vsel %vm2208, %v5853, 0.0
      %5868 = vadd.xlane.f32.xlu0 %v5867
      %v5869 = vpop.xlane.xlu0 %5868
      %v5870 = vsel %vm2208, %v5855, 0.0
      %5871 = vadd.xlane.f32.xlu0 %v5870
      %v5872 = vpop.xlane.xlu0 %5871
      %v5873 = vsel %vm2208, %v5857, 0.0
      %5874 = vadd.xlane.f32.xlu0 %v5873
      %v5875 = vpop.xlane.xlu0 %5874
      %v5876 = vsel %vm2208, %v5859, 0.0
      %5877 = vadd.xlane.f32.xlu0 %v5876
      %v5878 = vpop.xlane.xlu0 %5877
      %v5879 = vsel %vm2208, %v5861, 0.0
      %5880 = vadd.xlane.f32.xlu0 %v5879
      %v5881 = vpop.xlane.xlu0 %5880
      %v5882 = vsel %vm2208, %v5863, 0.0
      %5883 = vadd.xlane.f32.xlu0 %v5882
      %v5884 = vpop.xlane.xlu0 %5883
      %v5885 = vrcp.pop %v5866
      %v5886 = vrcp.pop %v5869
      %v5887 = vrcp.pop %v5872
      %v5888 = vrcp.pop %v5875
      %v5889 = vrcp.pop %v5878
      %v5890 = vrcp.pop %v5881
      %v5891 = vrcp.pop %v5884
      %v5892 = vmul.f32 %v5851, %v5885
      %v5893 = vmul.f32 %v5853, %v5886
      %v5894 = vmul.f32 %v5855, %v5887
      %v5895 = vmul.f32 %v5857, %v5888
      %v5896 = vmul.f32 %v5859, %v5889
      %v5897 = vmul.f32 %v5861, %v5890
      %v5898 = vmul.f32 %v5863, %v5891
      %5899 = vrot.lane.b32.xlu0 %v2007, 100
      %v5900 = vpop.permute.xlu0 %5899
      %5901 = vrot.lane.b32.xlu0 %v2012, 100
      %v5902 = vpop.permute.xlu0 %5901
      %5903 = vrot.lane.b32.xlu0 %v2017, 100
      %v5904 = vpop.permute.xlu0 %5903
      %5905 = vrot.lane.b32.xlu0 %v2022, 100
      %v5906 = vpop.permute.xlu0 %5905
      %5907 = vrot.lane.b32.xlu0 %v2027, 100
      %v5908 = vpop.permute.xlu0 %5907
      %5909 = vrot.lane.b32.xlu0 %v2032, 100
      %v5910 = vpop.permute.xlu0 %5909
      %5911 = vrot.lane.b32.xlu0 %v2037, 100
      %v5912 = vpop.permute.xlu0 %5911
      %v5921 = vsel %vm2208, %v5892, 0
      %v5924 = vsel %vm2208, %v5893, 0
      %v5927 = vsel %vm2208, %v5894, 0
      %v5930 = vsel %vm2208, %v5895, 0
      %v5933 = vsel %vm2208, %v5896, 0
      %v5936 = vsel %vm2208, %v5897, 0
      %v5939 = vsel %vm2208, %v5898, 0
      %5941 = vmatprep.subr.mxu0 0.0
      %5942 = vmatpush1.msra.mxu0 %v5900
      %5943 = vmatprep.subr.mxu0 0.0
      %5944 = vmatpush1.msra.mxu0 %v5902
      %5945 = vmatprep.subr.mxu0 0.0
      %5946 = vmatpush1.msra.mxu0 %v5904
      %5947 = vmatprep.subr.mxu0 0.0
      %5948 = vmatpush1.msra.mxu0 %v5906
      %5949 = vmatprep.subr.mxu0 0.0
      %5950 = vmatpush1.msra.mxu0 %v5908
      %5951 = vmatprep.subr.mxu0 0.0
      %5952 = vmatpush1.msra.mxu0 %v5910
      %5953 = vmatprep.subr.mxu0 0.0
      %5954 = vmatpush1.msra.mxu0 %v5912
      %5955 = vmatprep.subr.mxu0 0.0
      %5956 = vmatpush1.msra.mxu0 0.0
      %5957 = vmatprep.subr.mxu0 0.0
      %5958 = vmatpush1.msra.mxu0 0.0
      %5959 = vmatprep.subr.mxu0 0.0
      %5960 = vmatpush1.msra.mxu0 0.0
      %5961 = vmatprep.subr.mxu0 0.0
      %5962 = vmatpush1.msra.mxu0 0.0
      %5963 = vmatprep.subr.mxu0 0.0
      %5964 = vmatpush1.msra.mxu0 0.0
      %5965 = vmatprep.subr.mxu0 0.0
      %5966 = vmatpush1.msra.mxu0 0.0
      %5967 = vmatprep.subr.mxu0 0.0
      %5968 = vmatpush1.msra.mxu0 0.0
      %5969 = vmatprep.subr.mxu0 0.0
      %5970 = vmatpush1.msra.mxu0 0.0
      %5971 = vmatprep.subr.mxu0 0.0
      %5972 = vmatpush1.msra.mxu0 0.0
      %5973 = vmatprep.subr.mxu0 0.0
      %5974 = vmatpush1.msra.mxu0 0.0
      %5975 = vmatprep.subr.mxu0 0.0
      %5976 = vmatpush1.msra.mxu0 0.0
      %5977 = vmatprep.subr.mxu0 0.0
      %5978 = vmatpush1.msra.mxu0 0.0
      %5979 = vmatprep.subr.mxu0 0.0
      %5980 = vmatpush1.msra.mxu0 0.0
      %5981 = vmatprep.subr.mxu0 0.0
      %5982 = vmatpush1.msra.mxu0 0.0
      %5983 = vmatprep.subr.mxu0 0.0
      %5984 = vmatpush1.msra.mxu0 0.0
      %5985 = vmatprep.subr.mxu0 0.0
      %5986 = vmatpush1.msra.mxu0 0.0
      %5987 = vmatprep.subr.mxu0 0.0
      %5988 = vmatpush1.msra.mxu0 0.0
      %5989 = vmatprep.subr.mxu0 0.0
      %5990 = vmatpush1.msra.mxu0 0.0
      %5991 = vmatprep.subr.mxu0 0.0
      %5992 = vmatpush1.msra.mxu0 0.0
      %5993 = vmatprep.subr.mxu0 0.0
      %5994 = vmatpush1.msra.mxu0 0.0
      %5995 = vmatprep.subr.mxu0 0.0
      %5996 = vmatpush1.msra.mxu0 0.0
      %5997 = vmatprep.subr.mxu0 0.0
      %5998 = vmatpush1.msra.mxu0 0.0
      %5999 = vmatprep.subr.mxu0 0.0
      %6000 = vmatpush1.msra.mxu0 0.0
      %6001 = vmatprep.subr.mxu0 0.0
      %6002 = vmatpush1.msra.mxu0 0.0
      %6003 = vmatprep.subr.mxu0 0.0
      %6004 = vmatpush1.msra.mxu0 0.0
      %6005 = vmatprep.mubr.f32.mxu0 0.0
      %6006 = vmatmul.mubr.f32.gmra.mrb[0].mxu0 %v5921
      %v6007 = vpop.f32.mrb[0].mxu0
      %v6008 = vadd.f32 0.0, %v6007
      %v6009 = vpop.f32.mrb[0].mxu0
      %6010 = vmatprep.mubr.f32.mxu0 0.0
      %6011 = vmatmul.mubr.f32.gmra.mrb[0].mxu0 %v5924
      %v6012 = vpop.f32.mrb[0].mxu0
      %v6013 = vadd.f32 0.0, %v6012
      %v6014 = vpop.f32.mrb[0].mxu0
      %6015 = vmatprep.mubr.f32.mxu0 0.0
      %6016 = vmatmul.mubr.f32.gmra.mrb[0].mxu0 %v5927
      %v6017 = vpop.f32.mrb[0].mxu0
      %v6018 = vadd.f32 0.0, %v6017
      %v6019 = vpop.f32.mrb[0].mxu0
      %6020 = vmatprep.mubr.f32.mxu0 0.0
      %6021 = vmatmul.mubr.f32.gmra.mrb[0].mxu0 %v5930
      %v6022 = vpop.f32.mrb[0].mxu0
      %v6023 = vadd.f32 0.0, %v6022
      %v6024 = vpop.f32.mrb[0].mxu0
      %6025 = vmatprep.mubr.f32.mxu0 0.0
      %6026 = vmatmul.mubr.f32.gmra.mrb[0].mxu0 %v5933
      %v6027 = vpop.f32.mrb[0].mxu0
      %v6028 = vadd.f32 0.0, %v6027
      %v6029 = vpop.f32.mrb[0].mxu0
      %6030 = vmatprep.mubr.f32.mxu0 0.0
      %6031 = vmatmul.mubr.f32.gmra.mrb[0].mxu0 %v5936
      %v6032 = vpop.f32.mrb[0].mxu0
      %v6033 = vadd.f32 0.0, %v6032
      %v6034 = vpop.f32.mrb[0].mxu0
      %6035 = vmatprep.mubr.f32.mxu0 0.0
      %6036 = vmatmul.mubr.f32.gmra.mrb[0].mxu0 %v5939
      %v6037 = vpop.f32.mrb[0].mxu0
      %v6038 = vadd.f32 0.0, %v6037
      %v6039 = vpop.f32.mrb[0].mxu0
      %6040 = vdwg.mxu0
      %v6041 = vrot.slane %v2043, 4
      %v6043 = vsel %vm2051, %v6008, 0
      %v6046 = vsel %vm2051, %v6013, 0
      %v6049 = vsel %vm2051, %v6018, 0
      %v6052 = vsel %vm2051, %v6023, 0
      %v6055 = vsel %vm2051, %v6028, 0
      %v6058 = vsel %vm2051, %v6033, 0
      %v6061 = vsel %vm2051, %v6038, 0
      %v6063 = vsel %vm2826, %v6041, 0
      %6065 = vmatprep.subr.mxu0 0.0
      %6066 = vmatpush1.msra.mxu0 %v6063
      %6067 = vmatprep.subr.mxu0 0.0
      %6068 = vmatpush1.msra.mxu0 0.0
      %6069 = vmatprep.subr.mxu0 0.0
      %6070 = vmatpush1.msra.mxu0 0.0
      %6071 = vmatprep.subr.mxu0 0.0
      %6072 = vmatpush1.msra.mxu0 0.0
      %6073 = vmatprep.subr.mxu0 0.0
      %6074 = vmatpush1.msra.mxu0 0.0
      %6075 = vmatprep.subr.mxu0 0.0
      %6076 = vmatpush1.msra.mxu0 0.0
      %6077 = vmatprep.subr.mxu0 0.0
      %6078 = vmatpush1.msra.mxu0 0.0
      %6079 = vmatprep.subr.mxu0 0.0
      %6080 = vmatpush1.msra.mxu0 0.0
      %6081 = vmatprep.subr.mxu0 0.0
      %6082 = vmatpush1.msra.mxu0 0.0
      %6083 = vmatprep.subr.mxu0 0.0
      %6084 = vmatpush1.msra.mxu0 0.0
      %6085 = vmatprep.subr.mxu0 0.0
      %6086 = vmatpush1.msra.mxu0 0.0
      %6087 = vmatprep.subr.mxu0 0.0
      %6088 = vmatpush1.msra.mxu0 0.0
      %6089 = vmatprep.subr.mxu0 0.0
      %6090 = vmatpush1.msra.mxu0 0.0
      %6091 = vmatprep.subr.mxu0 0.0
      %6092 = vmatpush1.msra.mxu0 0.0
      %6093 = vmatprep.subr.mxu0 0.0
      %6094 = vmatpush1.msra.mxu0 0.0
      %6095 = vmatprep.subr.mxu0 0.0
      %6096 = vmatpush1.msra.mxu0 0.0
      %6097 = vmatprep.subr.mxu0 0.0
      %6098 = vmatpush1.msra.mxu0 0.0
      %6099 = vmatprep.subr.mxu0 0.0
      %6100 = vmatpush1.msra.mxu0 0.0
      %6101 = vmatprep.subr.mxu0 0.0
      %6102 = vmatpush1.msra.mxu0 0.0
      %6103 = vmatprep.subr.mxu0 0.0
      %6104 = vmatpush1.msra.mxu0 0.0
      %6105 = vmatprep.subr.mxu0 0.0
      %6106 = vmatpush1.msra.mxu0 0.0
      %6107 = vmatprep.subr.mxu0 0.0
      %6108 = vmatpush1.msra.mxu0 0.0
      %6109 = vmatprep.subr.mxu0 0.0
      %6110 = vmatpush1.msra.mxu0 0.0
      %6111 = vmatprep.subr.mxu0 0.0
      %6112 = vmatpush1.msra.mxu0 0.0
      %6113 = vmatprep.subr.mxu0 0.0
      %6114 = vmatpush1.msra.mxu0 0.0
      %6115 = vmatprep.subr.mxu0 0.0
      %6116 = vmatpush1.msra.mxu0 0.0
      %6117 = vmatprep.subr.mxu0 0.0
      %6118 = vmatpush1.msra.mxu0 0.0
      %6119 = vmatprep.subr.mxu0 0.0
      %6120 = vmatpush1.msra.mxu0 0.0
      %6121 = vmatprep.subr.mxu0 0.0
      %6122 = vmatpush1.msra.mxu0 0.0
      %6123 = vmatprep.subr.mxu0 0.0
      %6124 = vmatpush1.msra.mxu0 0.0
      %6125 = vmatprep.subr.mxu0 0.0
      %6126 = vmatpush1.msra.mxu0 0.0
      %6127 = vmatprep.subr.mxu0 0.0
      %6128 = vmatpush1.msra.mxu0 0.0
      %6129 = vmatprep.mubr.f32.mxu0 0.0
      %6130 = vmatmul.mubr.f32.gmra.mrb[0].mxu0 %v6043
      %v6131 = vpop.f32.mrb[0].mxu0
      %v6132 = vadd.f32 0.0, %v6131
      %v6133 = vpop.f32.mrb[0].mxu0
      %6134 = vmatprep.mubr.f32.mxu0 0.0
      %6135 = vmatmul.mubr.f32.gmra.mrb[0].mxu0 %v6046
      %v6136 = vpop.f32.mrb[0].mxu0
      %v6137 = vadd.f32 0.0, %v6136
      %v6138 = vpop.f32.mrb[0].mxu0
      %6139 = vmatprep.mubr.f32.mxu0 0.0
      %6140 = vmatmul.mubr.f32.gmra.mrb[0].mxu0 %v6049
      %v6141 = vpop.f32.mrb[0].mxu0
      %v6142 = vadd.f32 0.0, %v6141
      %v6143 = vpop.f32.mrb[0].mxu0
      %6144 = vmatprep.mubr.f32.mxu0 0.0
      %6145 = vmatmul.mubr.f32.gmra.mrb[0].mxu0 %v6052
      %v6146 = vpop.f32.mrb[0].mxu0
      %v6147 = vadd.f32 0.0, %v6146
      %v6148 = vpop.f32.mrb[0].mxu0
      %6149 = vmatprep.mubr.f32.mxu0 0.0
      %6150 = vmatmul.mubr.f32.gmra.mrb[0].mxu0 %v6055
      %v6151 = vpop.f32.mrb[0].mxu0
      %v6152 = vadd.f32 0.0, %v6151
      %v6153 = vpop.f32.mrb[0].mxu0
      %6154 = vmatprep.mubr.f32.mxu0 0.0
      %6155 = vmatmul.mubr.f32.gmra.mrb[0].mxu0 %v6058
      %v6156 = vpop.f32.mrb[0].mxu0
      %v6157 = vadd.f32 0.0, %v6156
      %v6158 = vpop.f32.mrb[0].mxu0
      %6159 = vmatprep.mubr.f32.mxu0 0.0
      %6160 = vmatmul.mubr.f32.gmra.mrb[0].mxu0 %v6061
      %v6161 = vpop.f32.mrb[0].mxu0
      %v6162 = vadd.f32 0.0, %v6161
      %v6163 = vpop.f32.mrb[0].mxu0
      %6164 = vdwg.mxu0
      %v6165 = vadd.f32 %v5645, %v6132
      %v6166 = vadd.f32 %v5646, %v6137
      %v6167 = vadd.f32 %v5647, %v6142
      %v6168 = vadd.f32 %v5648, %v6147
      %v6169 = vadd.f32 %v5649, %v6152
      %v6170 = vadd.f32 %v5650, %v6157
      %v6171 = vadd.f32 %v5651, %v6162
      %v6172 = vadd.f32 %v1509, %v6165
      %v6173 = vadd.f32 %v1510, %v6166
      %v6174 = vadd.f32 %v1511, %v6167
      %v6175 = vadd.f32 %v1512, %v6168
      %v6176 = vadd.f32 %v1513, %v6169
      %v6177 = vadd.f32 %v1514, %v6170
      %v6178 = vadd.f32 %v1515, %v6171
      %v6179 = vld [vmem:[%s1180] sm:$0x1]
      %v6180 = vld [vmem:[%s1183] sm:$0x1]
      %v6181 = vsel %vm1518, %v6172, 0.0
      %6182 = vadd.xlane.f32.xlu0 %v6181
      %v6183 = vpop.xlane.xlu0 %6182
      %v6184 = vsel %vm1518, %v6173, 0.0
      %6185 = vadd.xlane.f32.xlu0 %v6184
      %v6186 = vpop.xlane.xlu0 %6185
      %v6187 = vsel %vm1518, %v6174, 0.0
      %6188 = vadd.xlane.f32.xlu0 %v6187
      %v6189 = vpop.xlane.xlu0 %6188
      %v6190 = vsel %vm1518, %v6175, 0.0
      %6191 = vadd.xlane.f32.xlu0 %v6190
      %v6192 = vpop.xlane.xlu0 %6191
      %v6193 = vsel %vm1518, %v6176, 0.0
      %6194 = vadd.xlane.f32.xlu0 %v6193
      %v6195 = vpop.xlane.xlu0 %6194
      %v6196 = vsel %vm1518, %v6177, 0.0
      %6197 = vadd.xlane.f32.xlu0 %v6196
      %v6198 = vpop.xlane.xlu0 %6197
      %v6199 = vsel %vm1518, %v6178, 0.0
      %6200 = vadd.xlane.f32.xlu0 %v6199
      %v6201 = vpop.xlane.xlu0 %6200
      %v6202 = vmul.f32 %v6183, %v1540
      %v6203 = vmul.f32 %v6186, %v1540
      %v6204 = vmul.f32 %v6189, %v1540
      %v6205 = vmul.f32 %v6192, %v1540
      %v6206 = vmul.f32 %v6195, %v1540
      %v6207 = vmul.f32 %v6198, %v1540
      %v6208 = vmul.f32 %v6201, %v1540
      %v6209 = vsub.f32 %v6172, %v6202
      %v6210 = vsub.f32 %v6173, %v6203
      %v6211 = vsub.f32 %v6174, %v6204
      %v6212 = vsub.f32 %v6175, %v6205
      %v6213 = vsub.f32 %v6176, %v6206
      %v6214 = vsub.f32 %v6177, %v6207
      %v6215 = vsub.f32 %v6178, %v6208
      %v6216 = vmul.f32 %v6209, %v6209
      %v6217 = vmul.f32 %v6210, %v6210
      %v6218 = vmul.f32 %v6211, %v6211
      %v6219 = vmul.f32 %v6212, %v6212
      %v6220 = vmul.f32 %v6213, %v6213
      %v6221 = vmul.f32 %v6214, %v6214
      %v6222 = vmul.f32 %v6215, %v6215
      %v6223 = vsel %vm1518, %v6216, 0.0
      %6224 = vadd.xlane.f32.xlu0 %v6223
      %v6225 = vpop.xlane.xlu0 %6224
      %v6226 = vsel %vm1518, %v6217, 0.0
      %6227 = vadd.xlane.f32.xlu0 %v6226
      %v6228 = vpop.xlane.xlu0 %6227
      %v6229 = vsel %vm1518, %v6218, 0.0
      %6230 = vadd.xlane.f32.xlu0 %v6229
      %v6231 = vpop.xlane.xlu0 %6230
      %v6232 = vsel %vm1518, %v6219, 0.0
      %6233 = vadd.xlane.f32.xlu0 %v6232
      %v6234 = vpop.xlane.xlu0 %6233
      %v6235 = vsel %vm1518, %v6220, 0.0
      %6236 = vadd.xlane.f32.xlu0 %v6235
      %v6237 = vpop.xlane.xlu0 %6236
      %v6238 = vsel %vm1518, %v6221, 0.0
      %6239 = vadd.xlane.f32.xlu0 %v6238
      %v6240 = vpop.xlane.xlu0 %6239
      %v6241 = vsel %vm1518, %v6222, 0.0
      %6242 = vadd.xlane.f32.xlu0 %v6241
      %v6243 = vpop.xlane.xlu0 %6242
      %v6244 = vmul.f32 %v6225, 0.032258064
      %v6245 = vmul.f32 %v6228, 0.032258064
      %v6246 = vmul.f32 %v6231, 0.032258064
      %v6247 = vmul.f32 %v6234, 0.032258064
      %v6248 = vmul.f32 %v6237, 0.032258064
      %v6249 = vmul.f32 %v6240, 0.032258064
      %v6250 = vmul.f32 %v6243, 0.032258064
      %v6251 = vrsqrt.pop %v6244
      %v6252 = vmul.f32 %v6244, %v6251
      %vm6253 = vcmp.eq.f32.partialorder %v6244, inf
      %v6254 = vsel %vm6253, %v6244, %v6252
      %vm6255 = vcmp.eq.f32.partialorder %v6244, 0.0
      %v6256 = vand.u32 %v6244, 2147483648
      %v6257 = vsel %vm6255, %v6256, %v6254
      %v6258 = vrsqrt.pop %v6245
      %v6259 = vmul.f32 %v6245, %v6258
      %vm6260 = vcmp.eq.f32.partialorder %v6245, inf
      %v6261 = vsel %vm6260, %v6245, %v6259
      %vm6262 = vcmp.eq.f32.partialorder %v6245, 0.0
      %v6263 = vand.u32 %v6245, 2147483648
      %v6264 = vsel %vm6262, %v6263, %v6261
      %v6265 = vrsqrt.pop %v6246
      %v6266 = vmul.f32 %v6246, %v6265
      %vm6267 = vcmp.eq.f32.partialorder %v6246, inf
      %v6268 = vsel %vm6267, %v6246, %v6266
      %vm6269 = vcmp.eq.f32.partialorder %v6246, 0.0
      %v6270 = vand.u32 %v6246, 2147483648
      %v6271 = vsel %vm6269, %v6270, %v6268
      %v6272 = vrsqrt.pop %v6247
      %v6273 = vmul.f32 %v6247, %v6272
      %vm6274 = vcmp.eq.f32.partialorder %v6247, inf
      %v6275 = vsel %vm6274, %v6247, %v6273
      %vm6276 = vcmp.eq.f32.partialorder %v6247, 0.0
      %v6277 = vand.u32 %v6247, 2147483648
      %v6278 = vsel %vm6276, %v6277, %v6275
      %v6279 = vrsqrt.pop %v6248
      %v6280 = vmul.f32 %v6248, %v6279
      %vm6281 = vcmp.eq.f32.partialorder %v6248, inf
      %v6282 = vsel %vm6281, %v6248, %v6280
      %vm6283 = vcmp.eq.f32.partialorder %v6248, 0.0
      %v6284 = vand.u32 %v6248, 2147483648
      %v6285 = vsel %vm6283, %v6284, %v6282
      %v6286 = vrsqrt.pop %v6249
      %v6287 = vmul.f32 %v6249, %v6286
      %vm6288 = vcmp.eq.f32.partialorder %v6249, inf
      %v6289 = vsel %vm6288, %v6249, %v6287
      %vm6290 = vcmp.eq.f32.partialorder %v6249, 0.0
      %v6291 = vand.u32 %v6249, 2147483648
      %v6292 = vsel %vm6290, %v6291, %v6289
      %v6293 = vrsqrt.pop %v6250
      %v6294 = vmul.f32 %v6250, %v6293
      %vm6295 = vcmp.eq.f32.partialorder %v6250, inf
      %v6296 = vsel %vm6295, %v6250, %v6294
      %vm6297 = vcmp.eq.f32.partialorder %v6250, 0.0
      %v6298 = vand.u32 %v6250, 2147483648
      %v6299 = vsel %vm6297, %v6298, %v6296
      %v6300 = vadd.f32 %v6257, 1e-06
      %v6301 = vadd.f32 %v6264, 1e-06
      %v6302 = vadd.f32 %v6271, 1e-06
      %v6303 = vadd.f32 %v6278, 1e-06
      %v6304 = vadd.f32 %v6285, 1e-06
      %v6305 = vadd.f32 %v6292, 1e-06
      %v6306 = vadd.f32 %v6299, 1e-06
      %v6307 = vrcp.pop %v6300
      %v6308 = vrcp.pop %v6301
      %v6309 = vrcp.pop %v6302
      %v6310 = vrcp.pop %v6303
      %v6311 = vrcp.pop %v6304
      %v6312 = vrcp.pop %v6305
      %v6313 = vrcp.pop %v6306
      %v6314 = vmul.f32 %v6209, %v6307
      %v6315 = vmul.f32 %v6210, %v6308
      %v6316 = vmul.f32 %v6211, %v6309
      %v6317 = vmul.f32 %v6212, %v6310
      %v6318 = vmul.f32 %v6213, %v6311
      %v6319 = vmul.f32 %v6214, %v6312
      %v6320 = vmul.f32 %v6215, %v6313
      %v6322 = vlaneseq
      %v6323 = vshrl.u32 %v6322, 7
      %v6324 = vsub.s32 0, %v6323
      %v6325 = vrot.slane %v6179, %v6324
      %v6327 = vmul.f32 %v6325, %v6314
      %v6328 = vmul.f32 %v6325, %v6315
      %v6329 = vmul.f32 %v6325, %v6316
      %v6330 = vmul.f32 %v6325, %v6317
      %v6331 = vmul.f32 %v6325, %v6318
      %v6332 = vmul.f32 %v6325, %v6319
      %v6333 = vmul.f32 %v6325, %v6320
      %v6335 = vlaneseq
      %v6336 = vshrl.u32 %v6335, 7
      %v6337 = vsub.s32 0, %v6336
      %v6338 = vrot.slane %v6180, %v6337
      %v6340 = vadd.f32 %v6327, %v6338
      %v6341 = vadd.f32 %v6328, %v6338
      %v6342 = vadd.f32 %v6329, %v6338
      %v6343 = vadd.f32 %v6330, %v6338
      %v6344 = vadd.f32 %v6331, %v6338
      %v6345 = vadd.f32 %v6332, %v6338
      %v6346 = vadd.f32 %v6333, %v6338
      %v6347 = vpack.c.bf16 %v6341, %v6340
      %v6348 = vpack.c.bf16 %v6343, %v6342
      %v6349 = vpack.c.bf16 %v6345, %v6344
      %v6350 = vpack.c.bf16 %v6346, %v6346
      %v6351 = vld [vmem:[%s1188] sm:$0xff]
      %v6352 = vld [vmem:[%s1188 + $0x8] sm:$0xff]
      %v6353 = vld [vmem:[%s1188 + $0x10] sm:$0xff]
      %v6354 = vld [vmem:[%s1188 + $0x18] sm:$0xff]
      %v6355 = vld [vmem:[%s1188 + $0x20] sm:$0xff]
      %v6356 = vld [vmem:[%s1188 + $0x28] sm:$0xff]
      %v6357 = vld [vmem:[%s1188 + $0x30] sm:$0xff]
      %v6358 = vld [vmem:[%s1188 + $0x38] sm:$0xff]
      %v6359 = vld [vmem:[%s1188 + $0x40] sm:$0xff]
      %v6360 = vld [vmem:[%s1188 + $0x48] sm:$0xff]
      %v6361 = vld [vmem:[%s1188 + $0x50] sm:$0xff]
      %v6362 = vld [vmem:[%s1188 + $0x58] sm:$0xff]
      %v6363 = vld [vmem:[%s1188 + $0x60] sm:$0xff]
      %v6364 = vld [vmem:[%s1188 + $0x68] sm:$0xff]
      %v6365 = vld [vmem:[%s1188 + $0x70] sm:$0xff]
      %v6366 = vld [vmem:[%s1188 + $0x78] sm:$0xff]
      %v6367 = vld [vmem:[%s1188 + $0x80] sm:$0xff]
      %v6368 = vld [vmem:[%s1188 + $0x88] sm:$0xff]
      %v6369 = vld [vmem:[%s1188 + $0x90] sm:$0xff]
      %v6370 = vld [vmem:[%s1188 + $0x98] sm:$0xff]
      %v6371 = vld [vmem:[%s1188 + $0xa0] sm:$0xff]
      %v6372 = vld [vmem:[%s1188 + $0xa8] sm:$0xff]
      %v6373 = vld [vmem:[%s1188 + $0xb0] sm:$0xff]
      %v6374 = vld [vmem:[%s1188 + $0xb8] sm:$0xff]
      %v6375 = vld [vmem:[%s1188 + $0xc0] sm:$0xff]
      %v6376 = vld [vmem:[%s1188 + $0xc8] sm:$0xff]
      %v6377 = vld [vmem:[%s1188 + $0xd0] sm:$0xff]
      %v6378 = vld [vmem:[%s1188 + $0xd8] sm:$0xff]
      %v6379 = vld [vmem:[%s1188 + $0xe0] sm:$0xff]
      %v6380 = vld [vmem:[%s1188 + $0xe8] sm:$0xff]
      %v6381 = vld [vmem:[%s1188 + $0xf0] sm:$0xff]
      %v6382 = vld [vmem:[%s1188 + $0xf8] sm:$0xff]
      %v6383 = vld [vmem:[%s1192] sm:$0xff]
      %v6384 = vld [vmem:[%s1192 + $0x8] sm:$0xff]
      %v6387 = vlaneseq
      %v6388 = vshrl.u32 %v6387, 7
      %v6389 = vsub.s32 0, %v6388
      %v6390 = vrot.slane %v6383, %v6389
      %v6391 = vlaneseq
      %v6392 = vshrl.u32 %v6391, 7
      %v6393 = vsub.s32 1, %v6392
      %v6394 = vrot.slane %v6383, %v6393
      %v6395 = vlaneseq
      %v6396 = vshrl.u32 %v6395, 7
      %v6397 = vsub.s32 2, %v6396
      %v6398 = vrot.slane %v6383, %v6397
      %v6399 = vlaneseq
      %v6400 = vshrl.u32 %v6399, 7
      %v6401 = vsub.s32 3, %v6400
      %v6402 = vrot.slane %v6383, %v6401
      %v6403 = vlaneseq
      %v6404 = vshrl.u32 %v6403, 7
      %v6405 = vsub.s32 4, %v6404
      %v6406 = vrot.slane %v6383, %v6405
      %v6407 = vlaneseq
      %v6408 = vshrl.u32 %v6407, 7
      %v6409 = vsub.s32 5, %v6408
      %v6410 = vrot.slane %v6383, %v6409
      %v6411 = vlaneseq
      %v6412 = vshrl.u32 %v6411, 7
      %v6413 = vsub.s32 6, %v6412
      %v6414 = vrot.slane %v6383, %v6413
      %v6415 = vlaneseq
      %v6416 = vshrl.u32 %v6415, 7
      %v6417 = vsub.s32 7, %v6416
      %v6418 = vrot.slane %v6383, %v6417
      %v6419 = vlaneseq
      %v6420 = vshrl.u32 %v6419, 7
      %v6421 = vsub.s32 0, %v6420
      %v6422 = vrot.slane %v6384, %v6421
      %v6423 = vlaneseq
      %v6424 = vshrl.u32 %v6423, 7
      %v6425 = vsub.s32 1, %v6424
      %v6426 = vrot.slane %v6384, %v6425
      %v6427 = vlaneseq
      %v6428 = vshrl.u32 %v6427, 7
      %v6429 = vsub.s32 2, %v6428
      %v6430 = vrot.slane %v6384, %v6429
      %v6431 = vlaneseq
      %v6432 = vshrl.u32 %v6431, 7
      %v6433 = vsub.s32 3, %v6432
      %v6434 = vrot.slane %v6384, %v6433
      %v6435 = vlaneseq
      %v6436 = vshrl.u32 %v6435, 7
      %v6437 = vsub.s32 4, %v6436
      %v6438 = vrot.slane %v6384, %v6437
      %v6439 = vlaneseq
      %v6440 = vshrl.u32 %v6439, 7
      %v6441 = vsub.s32 5, %v6440
      %v6442 = vrot.slane %v6384, %v6441
      %v6443 = vlaneseq
      %v6444 = vshrl.u32 %v6443, 7
      %v6445 = vsub.s32 6, %v6444
      %v6446 = vrot.slane %v6384, %v6445
      %v6447 = vlaneseq
      %v6448 = vshrl.u32 %v6447, 7
      %v6449 = vsub.s32 7, %v6448
      %v6450 = vrot.slane %v6384, %v6449
      %v6499 = vunpack.c.l.b16 %v6351
      %v6500 = vunpack.c.h.b16 %v6351
      %v6501 = vunpack.c.l.b16 %v6352
      %v6502 = vunpack.c.h.b16 %v6352
      %v6503 = vunpack.c.l.b16 %v6353
      %v6504 = vunpack.c.h.b16 %v6353
      %v6505 = vunpack.c.l.b16 %v6354
      %v6506 = vunpack.c.h.b16 %v6354
      %v6507 = vunpack.c.l.b16 %v6355
      %v6508 = vunpack.c.h.b16 %v6355
      %v6509 = vunpack.c.l.b16 %v6356
      %v6510 = vunpack.c.h.b16 %v6356
      %v6511 = vunpack.c.l.b16 %v6357
      %v6512 = vunpack.c.h.b16 %v6357
      %v6513 = vunpack.c.l.b16 %v6358
      %v6514 = vunpack.c.h.b16 %v6358
      %v6515 = vunpack.c.l.b16 %v6359
      %v6516 = vunpack.c.h.b16 %v6359
      %v6517 = vunpack.c.l.b16 %v6360
      %v6518 = vunpack.c.h.b16 %v6360
      %v6519 = vunpack.c.l.b16 %v6361
      %v6520 = vunpack.c.h.b16 %v6361
      %v6521 = vunpack.c.l.b16 %v6362
      %v6522 = vunpack.c.h.b16 %v6362
      %v6523 = vunpack.c.l.b16 %v6363
      %v6524 = vunpack.c.h.b16 %v6363
      %v6525 = vunpack.c.l.b16 %v6364
      %v6526 = vunpack.c.h.b16 %v6364
      %v6527 = vunpack.c.l.b16 %v6365
      %v6528 = vunpack.c.h.b16 %v6365
      %v6529 = vunpack.c.l.b16 %v6366
      %v6530 = vunpack.c.h.b16 %v6366
      %v6531 = vunpack.c.l.b16 %v6367
      %v6532 = vunpack.c.h.b16 %v6367
      %v6533 = vunpack.c.l.b16 %v6368
      %v6534 = vunpack.c.h.b16 %v6368
      %v6535 = vunpack.c.l.b16 %v6369
      %v6536 = vunpack.c.h.b16 %v6369
      %v6537 = vunpack.c.l.b16 %v6370
      %v6538 = vunpack.c.h.b16 %v6370
      %v6539 = vunpack.c.l.b16 %v6371
      %v6540 = vunpack.c.h.b16 %v6371
      %v6541 = vunpack.c.l.b16 %v6372
      %v6542 = vunpack.c.h.b16 %v6372
      %v6543 = vunpack.c.l.b16 %v6373
      %v6544 = vunpack.c.h.b16 %v6373
      %v6545 = vunpack.c.l.b16 %v6374
      %v6546 = vunpack.c.h.b16 %v6374
      %v6547 = vunpack.c.l.b16 %v6375
      %v6548 = vunpack.c.h.b16 %v6375
      %v6549 = vunpack.c.l.b16 %v6376
      %v6550 = vunpack.c.h.b16 %v6376
      %v6551 = vunpack.c.l.b16 %v6377
      %v6552 = vunpack.c.h.b16 %v6377
      %v6553 = vunpack.c.l.b16 %v6378
      %v6554 = vunpack.c.h.b16 %v6378
      %v6555 = vunpack.c.l.b16 %v6379
      %v6556 = vunpack.c.h.b16 %v6379
      %v6557 = vunpack.c.l.b16 %v6380
      %v6558 = vunpack.c.h.b16 %v6380
      %v6559 = vunpack.c.l.b16 %v6381
      %v6560 = vunpack.c.h.b16 %v6381
      %v6561 = vunpack.c.l.b16 %v6382
      %v6562 = vunpack.c.h.b16 %v6382
      %v6563 = vpack.c.b16 %v6515, %v6499
      %v6564 = vpack.c.b16 %v6516, %v6500
      %v6565 = vpack.c.b16 %v6517, %v6501
      %v6566 = vpack.c.b16 %v6518, %v6502
      %v6567 = vpack.c.b16 %v6519, %v6503
      %v6568 = vpack.c.b16 %v6520, %v6504
      %v6569 = vpack.c.b16 %v6521, %v6505
      %v6570 = vpack.c.b16 %v6522, %v6506
      %v6571 = vpack.c.b16 %v6523, %v6507
      %v6572 = vpack.c.b16 %v6524, %v6508
      %v6573 = vpack.c.b16 %v6525, %v6509
      %v6574 = vpack.c.b16 %v6526, %v6510
      %v6575 = vpack.c.b16 %v6527, %v6511
      %v6576 = vpack.c.b16 %v6528, %v6512
      %v6577 = vpack.c.b16 %v6529, %v6513
      %v6578 = vpack.c.b16 %v6530, %v6514
      %v6579 = vpack.c.b16 %v6547, %v6531
      %v6580 = vpack.c.b16 %v6548, %v6532
      %v6581 = vpack.c.b16 %v6549, %v6533
      %v6582 = vpack.c.b16 %v6550, %v6534
      %v6583 = vpack.c.b16 %v6551, %v6535
      %v6584 = vpack.c.b16 %v6552, %v6536
      %v6585 = vpack.c.b16 %v6553, %v6537
      %v6586 = vpack.c.b16 %v6554, %v6538
      %v6587 = vpack.c.b16 %v6555, %v6539
      %v6588 = vpack.c.b16 %v6556, %v6540
      %v6589 = vpack.c.b16 %v6557, %v6541
      %v6590 = vpack.c.b16 %v6558, %v6542
      %v6591 = vpack.c.b16 %v6559, %v6543
      %v6592 = vpack.c.b16 %v6560, %v6544
      %v6593 = vpack.c.b16 %v6561, %v6545
      %v6594 = vpack.c.b16 %v6562, %v6546
      %v6628 = vsel %vm1518, %v6347, 0
      %v6631 = vsel %vm1518, %v6348, 0
      %v6634 = vsel %vm1518, %v6349, 0
      %v6637 = vsel %vm1518, %v6350, 0
      %6639 = vmatprep.subr.bf16.mxu0 %v6564
      %6640 = vmatpush1.bf16.msra.mxu0 %v6563
      %6641 = vmatprep.subr.bf16.mxu0 %v6580
      %6642 = vmatpush1.bf16.msra.mxu0 %v6579
      %6643 = vmatprep.subr.bf16.mxu0 0
      %6644 = vmatpush1.bf16.msra.mxu0 0
      %6645 = vmatprep.subr.bf16.mxu0 0
      %6646 = vmatpush1.bf16.msra.mxu0 0
      %6647 = vmatprep.subr.bf16.mxu0 0
      %6648 = vmatpush1.bf16.msra.mxu0 0
      %6649 = vmatprep.subr.bf16.mxu0 0
      %6650 = vmatpush1.bf16.msra.mxu0 0
      %6651 = vmatprep.subr.bf16.mxu0 0
      %6652 = vmatpush1.bf16.msra.mxu0 0
      %6653 = vmatprep.subr.bf16.mxu0 0
      %6654 = vmatpush1.bf16.msra.mxu0 0
      %6655 = vmatprep.subr.bf16.mxu0 0
      %6656 = vmatpush1.bf16.msra.mxu0 0
      %6657 = vmatprep.subr.bf16.mxu0 0
      %6658 = vmatpush1.bf16.msra.mxu0 0
      %6659 = vmatprep.subr.bf16.mxu0 0
      %6660 = vmatpush1.bf16.msra.mxu0 0
      %6661 = vmatprep.subr.bf16.mxu0 0
      %6662 = vmatpush1.bf16.msra.mxu0 0
      %6663 = vmatprep.subr.bf16.mxu0 0
      %6664 = vmatpush1.bf16.msra.mxu0 0
      %6665 = vmatprep.subr.bf16.mxu0 0
      %6666 = vmatpush1.bf16.msra.mxu0 0
      %6667 = vmatprep.subr.bf16.mxu0 0
      %6668 = vmatpush1.bf16.msra.mxu0 0
      %6669 = vmatprep.subr.bf16.mxu0 0
      %6670 = vmatpush1.bf16.msra.mxu0 0
      %6671 = vmatprep.mubr.bf16.mxu0 0
      %6672 = vmatmul.mubr.bf16.gmra.mrb[0].mxu0 %v6628
      %v6673 = vpop.f32.mrb[0].mxu0
      %v6674 = vadd.f32 %v6390, %v6673
      %v6675 = vpop.f32.mrb[0].mxu0
      %v6676 = vadd.f32 %v6394, %v6675
      %v6677 = vpop.f32.mrb[0].mxu0
      %v6678 = vadd.f32 %v6390, %v6677
      %v6679 = vpop.f32.mrb[0].mxu0
      %v6680 = vadd.f32 %v6394, %v6679
      %6681 = vmatprep.mubr.bf16.mxu0 0
      %6682 = vmatmul.mubr.bf16.gmra.mrb[0].mxu0 %v6631
      %v6683 = vpop.f32.mrb[0].mxu0
      %v6684 = vadd.f32 %v6390, %v6683
      %v6685 = vpop.f32.mrb[0].mxu0
      %v6686 = vadd.f32 %v6394, %v6685
      %v6687 = vpop.f32.mrb[0].mxu0
      %v6688 = vadd.f32 %v6390, %v6687
      %v6689 = vpop.f32.mrb[0].mxu0
      %v6690 = vadd.f32 %v6394, %v6689
      %6691 = vmatprep.mubr.bf16.mxu0 0
      %6692 = vmatmul.mubr.bf16.gmra.mrb[0].mxu0 %v6634
      %v6693 = vpop.f32.mrb[0].mxu0
      %v6694 = vadd.f32 %v6390, %v6693
      %v6695 = vpop.f32.mrb[0].mxu0
      %v6696 = vadd.f32 %v6394, %v6695
      %v6697 = vpop.f32.mrb[0].mxu0
      %v6698 = vadd.f32 %v6390, %v6697
      %v6699 = vpop.f32.mrb[0].mxu0
      %v6700 = vadd.f32 %v6394, %v6699
      %6701 = vmatprep.mubr.bf16.mxu0 0
      %6702 = vmatmul.mubr.bf16.gmra.mrb[0].mxu0 %v6637
      %v6703 = vpop.f32.mrb[0].mxu0
      %v6704 = vadd.f32 %v6390, %v6703
      %v6705 = vpop.f32.mrb[0].mxu0
      %v6706 = vadd.f32 %v6394, %v6705
      %v6707 = vpop.f32.mrb[0].mxu0
      %v6708 = vpop.f32.mrb[0].mxu0
      %6709 = vdwg.mxu0
      %6710 = vmatprep.subr.bf16.mxu0 %v6566
      %6711 = vmatpush1.bf16.msra.mxu0 %v6565
      %6712 = vmatprep.subr.bf16.mxu0 %v6582
      %6713 = vmatpush1.bf16.msra.mxu0 %v6581
      %6714 = vmatprep.subr.bf16.mxu0 0
      %6715 = vmatpush1.bf16.msra.mxu0 0
      %6716 = vmatprep.subr.bf16.mxu0 0
      %6717 = vmatpush1.bf16.msra.mxu0 0
      %6718 = vmatprep.subr.bf16.mxu0 0
      %6719 = vmatpush1.bf16.msra.mxu0 0
      %6720 = vmatprep.subr.bf16.mxu0 0
      %6721 = vmatpush1.bf16.msra.mxu0 0
      %6722 = vmatprep.subr.bf16.mxu0 0
      %6723 = vmatpush1.bf16.msra.mxu0 0
      %6724 = vmatprep.subr.bf16.mxu0 0
      %6725 = vmatpush1.bf16.msra.mxu0 0
      %6726 = vmatprep.subr.bf16.mxu0 0
      %6727 = vmatpush1.bf16.msra.mxu0 0
      %6728 = vmatprep.subr.bf16.mxu0 0
      %6729 = vmatpush1.bf16.msra.mxu0 0
      %6730 = vmatprep.subr.bf16.mxu0 0
      %6731 = vmatpush1.bf16.msra.mxu0 0
      %6732 = vmatprep.subr.bf16.mxu0 0
      %6733 = vmatpush1.bf16.msra.mxu0 0
      %6734 = vmatprep.subr.bf16.mxu0 0
      %6735 = vmatpush1.bf16.msra.mxu0 0
      %6736 = vmatprep.subr.bf16.mxu0 0
      %6737 = vmatpush1.bf16.msra.mxu0 0
      %6738 = vmatprep.subr.bf16.mxu0 0
      %6739 = vmatpush1.bf16.msra.mxu0 0
      %6740 = vmatprep.subr.bf16.mxu0 0
      %6741 = vmatpush1.bf16.msra.mxu0 0
      %6742 = vmatprep.mubr.bf16.mxu0 0
      %6743 = vmatmul.mubr.bf16.gmra.mrb[0].mxu0 %v6628
      %v6744 = vpop.f32.mrb[0].mxu0
      %v6745 = vadd.f32 %v6398, %v6744
      %v6746 = vpop.f32.mrb[0].mxu0
      %v6747 = vadd.f32 %v6402, %v6746
      %v6748 = vpop.f32.mrb[0].mxu0
      %v6749 = vadd.f32 %v6398, %v6748
      %v6750 = vpop.f32.mrb[0].mxu0
      %v6751 = vadd.f32 %v6402, %v6750
      %6752 = vmatprep.mubr.bf16.mxu0 0
      %6753 = vmatmul.mubr.bf16.gmra.mrb[0].mxu0 %v6631
      %v6754 = vpop.f32.mrb[0].mxu0
      %v6755 = vadd.f32 %v6398, %v6754
      %v6756 = vpop.f32.mrb[0].mxu0
      %v6757 = vadd.f32 %v6402, %v6756
      %v6758 = vpop.f32.mrb[0].mxu0
      %v6759 = vadd.f32 %v6398, %v6758
      %v6760 = vpop.f32.mrb[0].mxu0
      %v6761 = vadd.f32 %v6402, %v6760
      %6762 = vmatprep.mubr.bf16.mxu0 0
      %6763 = vmatmul.mubr.bf16.gmra.mrb[0].mxu0 %v6634
      %v6764 = vpop.f32.mrb[0].mxu0
      %v6765 = vadd.f32 %v6398, %v6764
      %v6766 = vpop.f32.mrb[0].mxu0
      %v6767 = vadd.f32 %v6402, %v6766
      %v6768 = vpop.f32.mrb[0].mxu0
      %v6769 = vadd.f32 %v6398, %v6768
      %v6770 = vpop.f32.mrb[0].mxu0
      %v6771 = vadd.f32 %v6402, %v6770
      %6772 = vmatprep.mubr.bf16.mxu0 0
      %6773 = vmatmul.mubr.bf16.gmra.mrb[0].mxu0 %v6637
      %v6774 = vpop.f32.mrb[0].mxu0
      %v6775 = vadd.f32 %v6398, %v6774
      %v6776 = vpop.f32.mrb[0].mxu0
      %v6777 = vadd.f32 %v6402, %v6776
      %v6778 = vpop.f32.mrb[0].mxu0
      %v6779 = vpop.f32.mrb[0].mxu0
      %6780 = vdwg.mxu0
      %6781 = vmatprep.subr.bf16.mxu0 %v6568
      %6782 = vmatpush1.bf16.msra.mxu0 %v6567
      %6783 = vmatprep.subr.bf16.mxu0 %v6584
      %6784 = vmatpush1.bf16.msra.mxu0 %v6583
      %6785 = vmatprep.subr.bf16.mxu0 0
      %6786 = vmatpush1.bf16.msra.mxu0 0
      %6787 = vmatprep.subr.bf16.mxu0 0
      %6788 = vmatpush1.bf16.msra.mxu0 0
      %6789 = vmatprep.subr.bf16.mxu0 0
      %6790 = vmatpush1.bf16.msra.mxu0 0
      %6791 = vmatprep.subr.bf16.mxu0 0
      %6792 = vmatpush1.bf16.msra.mxu0 0
      %6793 = vmatprep.subr.bf16.mxu0 0
      %6794 = vmatpush1.bf16.msra.mxu0 0
      %6795 = vmatprep.subr.bf16.mxu0 0
      %6796 = vmatpush1.bf16.msra.mxu0 0
      %6797 = vmatprep.subr.bf16.mxu0 0
      %6798 = vmatpush1.bf16.msra.mxu0 0
      %6799 = vmatprep.subr.bf16.mxu0 0
      %6800 = vmatpush1.bf16.msra.mxu0 0
      %6801 = vmatprep.subr.bf16.mxu0 0
      %6802 = vmatpush1.bf16.msra.mxu0 0
      %6803 = vmatprep.subr.bf16.mxu0 0
      %6804 = vmatpush1.bf16.msra.mxu0 0
      %6805 = vmatprep.subr.bf16.mxu0 0
      %6806 = vmatpush1.bf16.msra.mxu0 0
      %6807 = vmatprep.subr.bf16.mxu0 0
      %6808 = vmatpush1.bf16.msra.mxu0 0
      %6809 = vmatprep.subr.bf16.mxu0 0
      %6810 = vmatpush1.bf16.msra.mxu0 0
      %6811 = vmatprep.subr.bf16.mxu0 0
      %6812 = vmatpush1.bf16.msra.mxu0 0
      %6813 = vmatprep.mubr.bf16.mxu0 0
      %6814 = vmatmul.mubr.bf16.gmra.mrb[0].mxu0 %v6628
      %v6815 = vpop.f32.mrb[0].mxu0
      %v6816 = vadd.f32 %v6406, %v6815
      %v6817 = vpop.f32.mrb[0].mxu0
      %v6818 = vadd.f32 %v6410, %v6817
      %v6819 = vpop.f32.mrb[0].mxu0
      %v6820 = vadd.f32 %v6406, %v6819
      %v6821 = vpop.f32.mrb[0].mxu0
      %v6822 = vadd.f32 %v6410, %v6821
      %6823 = vmatprep.mubr.bf16.mxu0 0
      %6824 = vmatmul.mubr.bf16.gmra.mrb[0].mxu0 %v6631
      %v6825 = vpop.f32.mrb[0].mxu0
      %v6826 = vadd.f32 %v6406, %v6825
      %v6827 = vpop.f32.mrb[0].mxu0
      %v6828 = vadd.f32 %v6410, %v6827
      %v6829 = vpop.f32.mrb[0].mxu0
      %v6830 = vadd.f32 %v6406, %v6829
      %v6831 = vpop.f32.mrb[0].mxu0
      %v6832 = vadd.f32 %v6410, %v6831
      %6833 = vmatprep.mubr.bf16.mxu0 0
      %6834 = vmatmul.mubr.bf16.gmra.mrb[0].mxu0 %v6634
      %v6835 = vpop.f32.mrb[0].mxu0
      %v6836 = vadd.f32 %v6406, %v6835
      %v6837 = vpop.f32.mrb[0].mxu0
      %v6838 = vadd.f32 %v6410, %v6837
      %v6839 = vpop.f32.mrb[0].mxu0
      %v6840 = vadd.f32 %v6406, %v6839
      %v6841 = vpop.f32.mrb[0].mxu0
      %v6842 = vadd.f32 %v6410, %v6841
      %6843 = vmatprep.mubr.bf16.mxu0 0
      %6844 = vmatmul.mubr.bf16.gmra.mrb[0].mxu0 %v6637
      %v6845 = vpop.f32.mrb[0].mxu0
      %v6846 = vadd.f32 %v6406, %v6845
      %v6847 = vpop.f32.mrb[0].mxu0
      %v6848 = vadd.f32 %v6410, %v6847
      %v6849 = vpop.f32.mrb[0].mxu0
      %v6850 = vpop.f32.mrb[0].mxu0
      %6851 = vdwg.mxu0
      %6852 = vmatprep.subr.bf16.mxu0 %v6570
      %6853 = vmatpush1.bf16.msra.mxu0 %v6569
      %6854 = vmatprep.subr.bf16.mxu0 %v6586
      %6855 = vmatpush1.bf16.msra.mxu0 %v6585
      %6856 = vmatprep.subr.bf16.mxu0 0
      %6857 = vmatpush1.bf16.msra.mxu0 0
      %6858 = vmatprep.subr.bf16.mxu0 0
      %6859 = vmatpush1.bf16.msra.mxu0 0
      %6860 = vmatprep.subr.bf16.mxu0 0
      %6861 = vmatpush1.bf16.msra.mxu0 0
      %6862 = vmatprep.subr.bf16.mxu0 0
      %6863 = vmatpush1.bf16.msra.mxu0 0
      %6864 = vmatprep.subr.bf16.mxu0 0
      %6865 = vmatpush1.bf16.msra.mxu0 0
      %6866 = vmatprep.subr.bf16.mxu0 0
      %6867 = vmatpush1.bf16.msra.mxu0 0
      %6868 = vmatprep.subr.bf16.mxu0 0
      %6869 = vmatpush1.bf16.msra.mxu0 0
      %6870 = vmatprep.subr.bf16.mxu0 0
      %6871 = vmatpush1.bf16.msra.mxu0 0
      %6872 = vmatprep.subr.bf16.mxu0 0
      %6873 = vmatpush1.bf16.msra.mxu0 0
      %6874 = vmatprep.subr.bf16.mxu0 0
      %6875 = vmatpush1.bf16.msra.mxu0 0
      %6876 = vmatprep.subr.bf16.mxu0 0
      %6877 = vmatpush1.bf16.msra.mxu0 0
      %6878 = vmatprep.subr.bf16.mxu0 0
      %6879 = vmatpush1.bf16.msra.mxu0 0
      %6880 = vmatprep.subr.bf16.mxu0 0
      %6881 = vmatpush1.bf16.msra.mxu0 0
      %6882 = vmatprep.subr.bf16.mxu0 0
      %6883 = vmatpush1.bf16.msra.mxu0 0
      %6884 = vmatprep.mubr.bf16.mxu0 0
      %6885 = vmatmul.mubr.bf16.gmra.mrb[0].mxu0 %v6628
      %v6886 = vpop.f32.mrb[0].mxu0
      %v6887 = vadd.f32 %v6414, %v6886
      %v6888 = vpop.f32.mrb[0].mxu0
      %v6889 = vadd.f32 %v6418, %v6888
      %v6890 = vpop.f32.mrb[0].mxu0
      %v6891 = vadd.f32 %v6414, %v6890
      %v6892 = vpop.f32.mrb[0].mxu0
      %v6893 = vadd.f32 %v6418, %v6892
      %6894 = vmatprep.mubr.bf16.mxu0 0
      %6895 = vmatmul.mubr.bf16.gmra.mrb[0].mxu0 %v6631
      %v6896 = vpop.f32.mrb[0].mxu0
      %v6897 = vadd.f32 %v6414, %v6896
      %v6898 = vpop.f32.mrb[0].mxu0
      %v6899 = vadd.f32 %v6418, %v6898
      %v6900 = vpop.f32.mrb[0].mxu0
      %v6901 = vadd.f32 %v6414, %v6900
      %v6902 = vpop.f32.mrb[0].mxu0
      %v6903 = vadd.f32 %v6418, %v6902
      %6904 = vmatprep.mubr.bf16.mxu0 0
      %6905 = vmatmul.mubr.bf16.gmra.mrb[0].mxu0 %v6634
      %v6906 = vpop.f32.mrb[0].mxu0
      %v6907 = vadd.f32 %v6414, %v6906
      %v6908 = vpop.f32.mrb[0].mxu0
      %v6909 = vadd.f32 %v6418, %v6908
      %v6910 = vpop.f32.mrb[0].mxu0
      %v6911 = vadd.f32 %v6414, %v6910
      %v6912 = vpop.f32.mrb[0].mxu0
      %v6913 = vadd.f32 %v6418, %v6912
      %6914 = vmatprep.mubr.bf16.mxu0 0
      %6915 = vmatmul.mubr.bf16.gmra.mrb[0].mxu0 %v6637
      %v6916 = vpop.f32.mrb[0].mxu0
      %v6917 = vadd.f32 %v6414, %v6916
      %v6918 = vpop.f32.mrb[0].mxu0
      %v6919 = vadd.f32 %v6418, %v6918
      %v6920 = vpop.f32.mrb[0].mxu0
      %v6921 = vpop.f32.mrb[0].mxu0
      %6922 = vdwg.mxu0
      %6923 = vmatprep.subr.bf16.mxu0 %v6572
      %6924 = vmatpush1.bf16.msra.mxu0 %v6571
      %6925 = vmatprep.subr.bf16.mxu0 %v6588
      %6926 = vmatpush1.bf16.msra.mxu0 %v6587
      %6927 = vmatprep.subr.bf16.mxu0 0
      %6928 = vmatpush1.bf16.msra.mxu0 0
      %6929 = vmatprep.subr.bf16.mxu0 0
      %6930 = vmatpush1.bf16.msra.mxu0 0
      %6931 = vmatprep.subr.bf16.mxu0 0
      %6932 = vmatpush1.bf16.msra.mxu0 0
      %6933 = vmatprep.subr.bf16.mxu0 0
      %6934 = vmatpush1.bf16.msra.mxu0 0
      %6935 = vmatprep.subr.bf16.mxu0 0
      %6936 = vmatpush1.bf16.msra.mxu0 0
      %6937 = vmatprep.subr.bf16.mxu0 0
      %6938 = vmatpush1.bf16.msra.mxu0 0
      %6939 = vmatprep.subr.bf16.mxu0 0
      %6940 = vmatpush1.bf16.msra.mxu0 0
      %6941 = vmatprep.subr.bf16.mxu0 0
      %6942 = vmatpush1.bf16.msra.mxu0 0
      %6943 = vmatprep.subr.bf16.mxu0 0
      %6944 = vmatpush1.bf16.msra.mxu0 0
      %6945 = vmatprep.subr.bf16.mxu0 0
      %6946 = vmatpush1.bf16.msra.mxu0 0
      %6947 = vmatprep.subr.bf16.mxu0 0
      %6948 = vmatpush1.bf16.msra.mxu0 0
      %6949 = vmatprep.subr.bf16.mxu0 0
      %6950 = vmatpush1.bf16.msra.mxu0 0
      %6951 = vmatprep.subr.bf16.mxu0 0
      %6952 = vmatpush1.bf16.msra.mxu0 0
      %6953 = vmatprep.subr.bf16.mxu0 0
      %6954 = vmatpush1.bf16.msra.mxu0 0
      %6955 = vmatprep.mubr.bf16.mxu0 0
      %6956 = vmatmul.mubr.bf16.gmra.mrb[0].mxu0 %v6628
      %v6957 = vpop.f32.mrb[0].mxu0
      %v6958 = vadd.f32 %v6422, %v6957
      %v6959 = vpop.f32.mrb[0].mxu0
      %v6960 = vadd.f32 %v6426, %v6959
      %v6961 = vpop.f32.mrb[0].mxu0
      %v6962 = vadd.f32 %v6422, %v6961
      %v6963 = vpop.f32.mrb[0].mxu0
      %v6964 = vadd.f32 %v6426, %v6963
      %6965 = vmatprep.mubr.bf16.mxu0 0
      %6966 = vmatmul.mubr.bf16.gmra.mrb[0].mxu0 %v6631
      %v6967 = vpop.f32.mrb[0].mxu0
      %v6968 = vadd.f32 %v6422, %v6967
      %v6969 = vpop.f32.mrb[0].mxu0
      %v6970 = vadd.f32 %v6426, %v6969
      %v6971 = vpop.f32.mrb[0].mxu0
      %v6972 = vadd.f32 %v6422, %v6971
      %v6973 = vpop.f32.mrb[0].mxu0
      %v6974 = vadd.f32 %v6426, %v6973
      %6975 = vmatprep.mubr.bf16.mxu0 0
      %6976 = vmatmul.mubr.bf16.gmra.mrb[0].mxu0 %v6634
      %v6977 = vpop.f32.mrb[0].mxu0
      %v6978 = vadd.f32 %v6422, %v6977
      %v6979 = vpop.f32.mrb[0].mxu0
      %v6980 = vadd.f32 %v6426, %v6979
      %v6981 = vpop.f32.mrb[0].mxu0
      %v6982 = vadd.f32 %v6422, %v6981
      %v6983 = vpop.f32.mrb[0].mxu0
      %v6984 = vadd.f32 %v6426, %v6983
      %6985 = vmatprep.mubr.bf16.mxu0 0
      %6986 = vmatmul.mubr.bf16.gmra.mrb[0].mxu0 %v6637
      %v6987 = vpop.f32.mrb[0].mxu0
      %v6988 = vadd.f32 %v6422, %v6987
      %v6989 = vpop.f32.mrb[0].mxu0
      %v6990 = vadd.f32 %v6426, %v6989
      %v6991 = vpop.f32.mrb[0].mxu0
      %v6992 = vpop.f32.mrb[0].mxu0
      %6993 = vdwg.mxu0
      %6994 = vmatprep.subr.bf16.mxu0 %v6574
      %6995 = vmatpush1.bf16.msra.mxu0 %v6573
      %6996 = vmatprep.subr.bf16.mxu0 %v6590
      %6997 = vmatpush1.bf16.msra.mxu0 %v6589
      %6998 = vmatprep.subr.bf16.mxu0 0
      %6999 = vmatpush1.bf16.msra.mxu0 0
      %7000 = vmatprep.subr.bf16.mxu0 0
      %7001 = vmatpush1.bf16.msra.mxu0 0
      %7002 = vmatprep.subr.bf16.mxu0 0
      %7003 = vmatpush1.bf16.msra.mxu0 0
      %7004 = vmatprep.subr.bf16.mxu0 0
      %7005 = vmatpush1.bf16.msra.mxu0 0
      %7006 = vmatprep.subr.bf16.mxu0 0
      %7007 = vmatpush1.bf16.msra.mxu0 0
      %7008 = vmatprep.subr.bf16.mxu0 0
      %7009 = vmatpush1.bf16.msra.mxu0 0
      %7010 = vmatprep.subr.bf16.mxu0 0
      %7011 = vmatpush1.bf16.msra.mxu0 0
      %7012 = vmatprep.subr.bf16.mxu0 0
      %7013 = vmatpush1.bf16.msra.mxu0 0
      %7014 = vmatprep.subr.bf16.mxu0 0
      %7015 = vmatpush1.bf16.msra.mxu0 0
      %7016 = vmatprep.subr.bf16.mxu0 0
      %7017 = vmatpush1.bf16.msra.mxu0 0
      %7018 = vmatprep.subr.bf16.mxu0 0
      %7019 = vmatpush1.bf16.msra.mxu0 0
      %7020 = vmatprep.subr.bf16.mxu0 0
      %7021 = vmatpush1.bf16.msra.mxu0 0
      %7022 = vmatprep.subr.bf16.mxu0 0
      %7023 = vmatpush1.bf16.msra.mxu0 0
      %7024 = vmatprep.subr.bf16.mxu0 0
      %7025 = vmatpush1.bf16.msra.mxu0 0
      %7026 = vmatprep.mubr.bf16.mxu0 0
      %7027 = vmatmul.mubr.bf16.gmra.mrb[0].mxu0 %v6628
      %v7028 = vpop.f32.mrb[0].mxu0
      %v7029 = vadd.f32 %v6430, %v7028
      %v7030 = vpop.f32.mrb[0].mxu0
      %v7031 = vadd.f32 %v6434, %v7030
      %v7032 = vpop.f32.mrb[0].mxu0
      %v7033 = vadd.f32 %v6430, %v7032
      %v7034 = vpop.f32.mrb[0].mxu0
      %v7035 = vadd.f32 %v6434, %v7034
      %7036 = vmatprep.mubr.bf16.mxu0 0
      %7037 = vmatmul.mubr.bf16.gmra.mrb[0].mxu0 %v6631
      %v7038 = vpop.f32.mrb[0].mxu0
      %v7039 = vadd.f32 %v6430, %v7038
      %v7040 = vpop.f32.mrb[0].mxu0
      %v7041 = vadd.f32 %v6434, %v7040
      %v7042 = vpop.f32.mrb[0].mxu0
      %v7043 = vadd.f32 %v6430, %v7042
      %v7044 = vpop.f32.mrb[0].mxu0
      %v7045 = vadd.f32 %v6434, %v7044
      %7046 = vmatprep.mubr.bf16.mxu0 0
      %7047 = vmatmul.mubr.bf16.gmra.mrb[0].mxu0 %v6634
      %v7048 = vpop.f32.mrb[0].mxu0
      %v7049 = vadd.f32 %v6430, %v7048
      %v7050 = vpop.f32.mrb[0].mxu0
      %v7051 = vadd.f32 %v6434, %v7050
      %v7052 = vpop.f32.mrb[0].mxu0
      %v7053 = vadd.f32 %v6430, %v7052
      %v7054 = vpop.f32.mrb[0].mxu0
      %v7055 = vadd.f32 %v6434, %v7054
      %7056 = vmatprep.mubr.bf16.mxu0 0
      %7057 = vmatmul.mubr.bf16.gmra.mrb[0].mxu0 %v6637
      %v7058 = vpop.f32.mrb[0].mxu0
      %v7059 = vadd.f32 %v6430, %v7058
      %v7060 = vpop.f32.mrb[0].mxu0
      %v7061 = vadd.f32 %v6434, %v7060
      %v7062 = vpop.f32.mrb[0].mxu0
      %v7063 = vpop.f32.mrb[0].mxu0
      %7064 = vdwg.mxu0
      %7065 = vmatprep.subr.bf16.mxu0 %v6576
      %7066 = vmatpush1.bf16.msra.mxu0 %v6575
      %7067 = vmatprep.subr.bf16.mxu0 %v6592
      %7068 = vmatpush1.bf16.msra.mxu0 %v6591
      %7069 = vmatprep.subr.bf16.mxu0 0
      %7070 = vmatpush1.bf16.msra.mxu0 0
      %7071 = vmatprep.subr.bf16.mxu0 0
      %7072 = vmatpush1.bf16.msra.mxu0 0
      %7073 = vmatprep.subr.bf16.mxu0 0
      %7074 = vmatpush1.bf16.msra.mxu0 0
      %7075 = vmatprep.subr.bf16.mxu0 0
      %7076 = vmatpush1.bf16.msra.mxu0 0
      %7077 = vmatprep.subr.bf16.mxu0 0
      %7078 = vmatpush1.bf16.msra.mxu0 0
      %7079 = vmatprep.subr.bf16.mxu0 0
      %7080 = vmatpush1.bf16.msra.mxu0 0
      %7081 = vmatprep.subr.bf16.mxu0 0
      %7082 = vmatpush1.bf16.msra.mxu0 0
      %7083 = vmatprep.subr.bf16.mxu0 0
      %7084 = vmatpush1.bf16.msra.mxu0 0
      %7085 = vmatprep.subr.bf16.mxu0 0
      %7086 = vmatpush1.bf16.msra.mxu0 0
      %7087 = vmatprep.subr.bf16.mxu0 0
      %7088 = vmatpush1.bf16.msra.mxu0 0
      %7089 = vmatprep.subr.bf16.mxu0 0
      %7090 = vmatpush1.bf16.msra.mxu0 0
      %7091 = vmatprep.subr.bf16.mxu0 0
      %7092 = vmatpush1.bf16.msra.mxu0 0
      %7093 = vmatprep.subr.bf16.mxu0 0
      %7094 = vmatpush1.bf16.msra.mxu0 0
      %7095 = vmatprep.subr.bf16.mxu0 0
      %7096 = vmatpush1.bf16.msra.mxu0 0
      %7097 = vmatprep.mubr.bf16.mxu0 0
      %7098 = vmatmul.mubr.bf16.gmra.mrb[0].mxu0 %v6628
      %v7099 = vpop.f32.mrb[0].mxu0
      %v7100 = vadd.f32 %v6438, %v7099
      %v7101 = vpop.f32.mrb[0].mxu0
      %v7102 = vadd.f32 %v6442, %v7101
      %v7103 = vpop.f32.mrb[0].mxu0
      %v7104 = vadd.f32 %v6438, %v7103
      %v7105 = vpop.f32.mrb[0].mxu0
      %v7106 = vadd.f32 %v6442, %v7105
      %7107 = vmatprep.mubr.bf16.mxu0 0
      %7108 = vmatmul.mubr.bf16.gmra.mrb[0].mxu0 %v6631
      %v7109 = vpop.f32.mrb[0].mxu0
      %v7110 = vadd.f32 %v6438, %v7109
      %v7111 = vpop.f32.mrb[0].mxu0
      %v7112 = vadd.f32 %v6442, %v7111
      %v7113 = vpop.f32.mrb[0].mxu0
      %v7114 = vadd.f32 %v6438, %v7113
      %v7115 = vpop.f32.mrb[0].mxu0
      %v7116 = vadd.f32 %v6442, %v7115
      %7117 = vmatprep.mubr.bf16.mxu0 0
      %7118 = vmatmul.mubr.bf16.gmra.mrb[0].mxu0 %v6634
      %v7119 = vpop.f32.mrb[0].mxu0
      %v7120 = vadd.f32 %v6438, %v7119
      %v7121 = vpop.f32.mrb[0].mxu0
      %v7122 = vadd.f32 %v6442, %v7121
      %v7123 = vpop.f32.mrb[0].mxu0
      %v7124 = vadd.f32 %v6438, %v7123
      %v7125 = vpop.f32.mrb[0].mxu0
      %v7126 = vadd.f32 %v6442, %v7125
      %7127 = vmatprep.mubr.bf16.mxu0 0
      %7128 = vmatmul.mubr.bf16.gmra.mrb[0].mxu0 %v6637
      %v7129 = vpop.f32.mrb[0].mxu0
      %v7130 = vadd.f32 %v6438, %v7129
      %v7131 = vpop.f32.mrb[0].mxu0
      %v7132 = vadd.f32 %v6442, %v7131
      %v7133 = vpop.f32.mrb[0].mxu0
      %v7134 = vpop.f32.mrb[0].mxu0
      %7135 = vdwg.mxu0
      %7136 = vmatprep.subr.bf16.mxu0 %v6578
      %7137 = vmatpush1.bf16.msra.mxu0 %v6577
      %7138 = vmatprep.subr.bf16.mxu0 %v6594
      %7139 = vmatpush1.bf16.msra.mxu0 %v6593
      %7140 = vmatprep.subr.bf16.mxu0 0
      %7141 = vmatpush1.bf16.msra.mxu0 0
      %7142 = vmatprep.subr.bf16.mxu0 0
      %7143 = vmatpush1.bf16.msra.mxu0 0
      %7144 = vmatprep.subr.bf16.mxu0 0
      %7145 = vmatpush1.bf16.msra.mxu0 0
      %7146 = vmatprep.subr.bf16.mxu0 0
      %7147 = vmatpush1.bf16.msra.mxu0 0
      %7148 = vmatprep.subr.bf16.mxu0 0
      %7149 = vmatpush1.bf16.msra.mxu0 0
      %7150 = vmatprep.subr.bf16.mxu0 0
      %7151 = vmatpush1.bf16.msra.mxu0 0
      %7152 = vmatprep.subr.bf16.mxu0 0
      %7153 = vmatpush1.bf16.msra.mxu0 0
      %7154 = vmatprep.subr.bf16.mxu0 0
      %7155 = vmatpush1.bf16.msra.mxu0 0
      %7156 = vmatprep.subr.bf16.mxu0 0
      %7157 = vmatpush1.bf16.msra.mxu0 0
      %7158 = vmatprep.subr.bf16.mxu0 0
      %7159 = vmatpush1.bf16.msra.mxu0 0
      %7160 = vmatprep.subr.bf16.mxu0 0
      %7161 = vmatpush1.bf16.msra.mxu0 0
      %7162 = vmatprep.subr.bf16.mxu0 0
      %7163 = vmatpush1.bf16.msra.mxu0 0
      %7164 = vmatprep.subr.bf16.mxu0 0
      %7165 = vmatpush1.bf16.msra.mxu0 0
      %7166 = vmatprep.subr.bf16.mxu0 0
      %7167 = vmatpush1.bf16.msra.mxu0 0
      %7168 = vmatprep.mubr.bf16.mxu0 0
      %7169 = vmatmul.mubr.bf16.gmra.mrb[0].mxu0 %v6628
      %v7170 = vpop.f32.mrb[0].mxu0
      %v7171 = vadd.f32 %v6446, %v7170
      %v7172 = vpop.f32.mrb[0].mxu0
      %v7173 = vadd.f32 %v6450, %v7172
      %v7174 = vpop.f32.mrb[0].mxu0
      %v7175 = vadd.f32 %v6446, %v7174
      %v7176 = vpop.f32.mrb[0].mxu0
      %v7177 = vadd.f32 %v6450, %v7176
      %7178 = vmatprep.mubr.bf16.mxu0 0
      %7179 = vmatmul.mubr.bf16.gmra.mrb[0].mxu0 %v6631
      %v7180 = vpop.f32.mrb[0].mxu0
      %v7181 = vadd.f32 %v6446, %v7180
      %v7182 = vpop.f32.mrb[0].mxu0
      %v7183 = vadd.f32 %v6450, %v7182
      %v7184 = vpop.f32.mrb[0].mxu0
      %v7185 = vadd.f32 %v6446, %v7184
      %v7186 = vpop.f32.mrb[0].mxu0
      %v7187 = vadd.f32 %v6450, %v7186
      %7188 = vmatprep.mubr.bf16.mxu0 0
      %7189 = vmatmul.mubr.bf16.gmra.mrb[0].mxu0 %v6634
      %v7190 = vpop.f32.mrb[0].mxu0
      %v7191 = vadd.f32 %v6446, %v7190
      %v7192 = vpop.f32.mrb[0].mxu0
      %v7193 = vadd.f32 %v6450, %v7192
      %v7194 = vpop.f32.mrb[0].mxu0
      %v7195 = vadd.f32 %v6446, %v7194
      %v7196 = vpop.f32.mrb[0].mxu0
      %v7197 = vadd.f32 %v6450, %v7196
      %7198 = vmatprep.mubr.bf16.mxu0 0
      %7199 = vmatmul.mubr.bf16.gmra.mrb[0].mxu0 %v6637
      %v7200 = vpop.f32.mrb[0].mxu0
      %v7201 = vadd.f32 %v6446, %v7200
      %v7202 = vpop.f32.mrb[0].mxu0
      %v7203 = vadd.f32 %v6450, %v7202
      %v7204 = vpop.f32.mrb[0].mxu0
      %v7205 = vpop.f32.mrb[0].mxu0
      %7206 = vdwg.mxu0
      %v7207 = vmax.f32 %v6674, 0.0
      %v7208 = vmax.f32 %v6676, 0.0
      %v7209 = vmax.f32 %v6745, 0.0
      %v7210 = vmax.f32 %v6747, 0.0
      %v7211 = vmax.f32 %v6816, 0.0
      %v7212 = vmax.f32 %v6818, 0.0
      %v7213 = vmax.f32 %v6887, 0.0
      %v7214 = vmax.f32 %v6889, 0.0
      %v7215 = vmax.f32 %v6958, 0.0
      %v7216 = vmax.f32 %v6960, 0.0
      %v7217 = vmax.f32 %v7029, 0.0
      %v7218 = vmax.f32 %v7031, 0.0
      %v7219 = vmax.f32 %v7100, 0.0
      %v7220 = vmax.f32 %v7102, 0.0
      %v7221 = vmax.f32 %v7171, 0.0
      %v7222 = vmax.f32 %v7173, 0.0
      %v7223 = vmax.f32 %v6678, 0.0
      %v7224 = vmax.f32 %v6680, 0.0
      %v7225 = vmax.f32 %v6749, 0.0
      %v7226 = vmax.f32 %v6751, 0.0
      %v7227 = vmax.f32 %v6820, 0.0
      %v7228 = vmax.f32 %v6822, 0.0
      %v7229 = vmax.f32 %v6891, 0.0
      %v7230 = vmax.f32 %v6893, 0.0
      %v7231 = vmax.f32 %v6962, 0.0
      %v7232 = vmax.f32 %v6964, 0.0
      %v7233 = vmax.f32 %v7033, 0.0
      %v7234 = vmax.f32 %v7035, 0.0
      %v7235 = vmax.f32 %v7104, 0.0
      %v7236 = vmax.f32 %v7106, 0.0
      %v7237 = vmax.f32 %v7175, 0.0
      %v7238 = vmax.f32 %v7177, 0.0
      %v7239 = vmax.f32 %v6684, 0.0
      %v7240 = vmax.f32 %v6686, 0.0
      %v7241 = vmax.f32 %v6755, 0.0
      %v7242 = vmax.f32 %v6757, 0.0
      %v7243 = vmax.f32 %v6826, 0.0
      %v7244 = vmax.f32 %v6828, 0.0
      %v7245 = vmax.f32 %v6897, 0.0
      %v7246 = vmax.f32 %v6899, 0.0
      %v7247 = vmax.f32 %v6968, 0.0
      %v7248 = vmax.f32 %v6970, 0.0
      %v7249 = vmax.f32 %v7039, 0.0
      %v7250 = vmax.f32 %v7041, 0.0
      %v7251 = vmax.f32 %v7110, 0.0
      %v7252 = vmax.f32 %v7112, 0.0
      %v7253 = vmax.f32 %v7181, 0.0
      %v7254 = vmax.f32 %v7183, 0.0
      %v7255 = vmax.f32 %v6688, 0.0
      %v7256 = vmax.f32 %v6690, 0.0
      %v7257 = vmax.f32 %v6759, 0.0
      %v7258 = vmax.f32 %v6761, 0.0
      %v7259 = vmax.f32 %v6830, 0.0
      %v7260 = vmax.f32 %v6832, 0.0
      %v7261 = vmax.f32 %v6901, 0.0
      %v7262 = vmax.f32 %v6903, 0.0
      %v7263 = vmax.f32 %v6972, 0.0
      %v7264 = vmax.f32 %v6974, 0.0
      %v7265 = vmax.f32 %v7043, 0.0
      %v7266 = vmax.f32 %v7045, 0.0
      %v7267 = vmax.f32 %v7114, 0.0
      %v7268 = vmax.f32 %v7116, 0.0
      %v7269 = vmax.f32 %v7185, 0.0
      %v7270 = vmax.f32 %v7187, 0.0
      %v7271 = vmax.f32 %v6694, 0.0
      %v7272 = vmax.f32 %v6696, 0.0
      %v7273 = vmax.f32 %v6765, 0.0
      %v7274 = vmax.f32 %v6767, 0.0
      %v7275 = vmax.f32 %v6836, 0.0
      %v7276 = vmax.f32 %v6838, 0.0
      %v7277 = vmax.f32 %v6907, 0.0
      %v7278 = vmax.f32 %v6909, 0.0
      %v7279 = vmax.f32 %v6978, 0.0
      %v7280 = vmax.f32 %v6980, 0.0
      %v7281 = vmax.f32 %v7049, 0.0
      %v7282 = vmax.f32 %v7051, 0.0
      %v7283 = vmax.f32 %v7120, 0.0
      %v7284 = vmax.f32 %v7122, 0.0
      %v7285 = vmax.f32 %v7191, 0.0
      %v7286 = vmax.f32 %v7193, 0.0
      %v7287 = vmax.f32 %v6698, 0.0
      %v7288 = vmax.f32 %v6700, 0.0
      %v7289 = vmax.f32 %v6769, 0.0
      %v7290 = vmax.f32 %v6771, 0.0
      %v7291 = vmax.f32 %v6840, 0.0
      %v7292 = vmax.f32 %v6842, 0.0
      %v7293 = vmax.f32 %v6911, 0.0
      %v7294 = vmax.f32 %v6913, 0.0
      %v7295 = vmax.f32 %v6982, 0.0
      %v7296 = vmax.f32 %v6984, 0.0
      %v7297 = vmax.f32 %v7053, 0.0
      %v7298 = vmax.f32 %v7055, 0.0
      %v7299 = vmax.f32 %v7124, 0.0
      %v7300 = vmax.f32 %v7126, 0.0
      %v7301 = vmax.f32 %v7195, 0.0
      %v7302 = vmax.f32 %v7197, 0.0
      %v7303 = vmax.f32 %v6704, 0.0
      %v7304 = vmax.f32 %v6706, 0.0
      %v7305 = vmax.f32 %v6775, 0.0
      %v7306 = vmax.f32 %v6777, 0.0
      %v7307 = vmax.f32 %v6846, 0.0
      %v7308 = vmax.f32 %v6848, 0.0
      %v7309 = vmax.f32 %v6917, 0.0
      %v7310 = vmax.f32 %v6919, 0.0
      %v7311 = vmax.f32 %v6988, 0.0
      %v7312 = vmax.f32 %v6990, 0.0
      %v7313 = vmax.f32 %v7059, 0.0
      %v7314 = vmax.f32 %v7061, 0.0
      %v7315 = vmax.f32 %v7130, 0.0
      %v7316 = vmax.f32 %v7132, 0.0
      %v7317 = vmax.f32 %v7201, 0.0
      %v7318 = vmax.f32 %v7203, 0.0
      %v7319 = vpack.c.bf16 %v7223, %v7207
      %v7320 = vpack.c.bf16 %v7224, %v7208
      %v7321 = vpack.c.bf16 %v7225, %v7209
      %v7322 = vpack.c.bf16 %v7226, %v7210
      %v7323 = vpack.c.bf16 %v7227, %v7211
      %v7324 = vpack.c.bf16 %v7228, %v7212
      %v7325 = vpack.c.bf16 %v7229, %v7213
      %v7326 = vpack.c.bf16 %v7230, %v7214
      %v7327 = vpack.c.bf16 %v7231, %v7215
      %v7328 = vpack.c.bf16 %v7232, %v7216
      %v7329 = vpack.c.bf16 %v7233, %v7217
      %v7330 = vpack.c.bf16 %v7234, %v7218
      %v7331 = vpack.c.bf16 %v7235, %v7219
      %v7332 = vpack.c.bf16 %v7236, %v7220
      %v7333 = vpack.c.bf16 %v7237, %v7221
      %v7334 = vpack.c.bf16 %v7238, %v7222
      %v7335 = vpack.c.bf16 %v7255, %v7239
      %v7336 = vpack.c.bf16 %v7256, %v7240
      %v7337 = vpack.c.bf16 %v7257, %v7241
      %v7338 = vpack.c.bf16 %v7258, %v7242
      %v7339 = vpack.c.bf16 %v7259, %v7243
      %v7340 = vpack.c.bf16 %v7260, %v7244
      %v7341 = vpack.c.bf16 %v7261, %v7245
      %v7342 = vpack.c.bf16 %v7262, %v7246
      %v7343 = vpack.c.bf16 %v7263, %v7247
      %v7344 = vpack.c.bf16 %v7264, %v7248
      %v7345 = vpack.c.bf16 %v7265, %v7249
      %v7346 = vpack.c.bf16 %v7266, %v7250
      %v7347 = vpack.c.bf16 %v7267, %v7251
      %v7348 = vpack.c.bf16 %v7268, %v7252
      %v7349 = vpack.c.bf16 %v7269, %v7253
      %v7350 = vpack.c.bf16 %v7270, %v7254
      %v7351 = vpack.c.bf16 %v7287, %v7271
      %v7352 = vpack.c.bf16 %v7288, %v7272
      %v7353 = vpack.c.bf16 %v7289, %v7273
      %v7354 = vpack.c.bf16 %v7290, %v7274
      %v7355 = vpack.c.bf16 %v7291, %v7275
      %v7356 = vpack.c.bf16 %v7292, %v7276
      %v7357 = vpack.c.bf16 %v7293, %v7277
      %v7358 = vpack.c.bf16 %v7294, %v7278
      %v7359 = vpack.c.bf16 %v7295, %v7279
      %v7360 = vpack.c.bf16 %v7296, %v7280
      %v7361 = vpack.c.bf16 %v7297, %v7281
      %v7362 = vpack.c.bf16 %v7298, %v7282
      %v7363 = vpack.c.bf16 %v7299, %v7283
      %v7364 = vpack.c.bf16 %v7300, %v7284
      %v7365 = vpack.c.bf16 %v7301, %v7285
      %v7366 = vpack.c.bf16 %v7302, %v7286
      %v7367 = vpack.c.bf16 %v7303, %v7303
      %v7368 = vpack.c.bf16 %v7304, %v7304
      %v7369 = vpack.c.bf16 %v7305, %v7305
      %v7370 = vpack.c.bf16 %v7306, %v7306
      %v7371 = vpack.c.bf16 %v7307, %v7307
      %v7372 = vpack.c.bf16 %v7308, %v7308
      %v7373 = vpack.c.bf16 %v7309, %v7309
      %v7374 = vpack.c.bf16 %v7310, %v7310
      %v7375 = vpack.c.bf16 %v7311, %v7311
      %v7376 = vpack.c.bf16 %v7312, %v7312
      %v7377 = vpack.c.bf16 %v7313, %v7313
      %v7378 = vpack.c.bf16 %v7314, %v7314
      %v7379 = vpack.c.bf16 %v7315, %v7315
      %v7380 = vpack.c.bf16 %v7316, %v7316
      %v7381 = vpack.c.bf16 %v7317, %v7317
      %v7382 = vpack.c.bf16 %v7318, %v7318
      %v7383 = vld [vmem:[%s1197] sm:$0xf]
      %v7384 = vld [vmem:[%s1197 + $0x4] sm:$0xf]
      %v7385 = vld [vmem:[%s1197 + $0x8] sm:$0xf]
      %v7386 = vld [vmem:[%s1197 + $0xc] sm:$0xf]
      %v7387 = vld [vmem:[%s1197 + $0x10] sm:$0xf]
      %v7388 = vld [vmem:[%s1197 + $0x14] sm:$0xf]
      %v7389 = vld [vmem:[%s1197 + $0x18] sm:$0xf]
      %v7390 = vld [vmem:[%s1197 + $0x1c] sm:$0xf]
      %v7391 = vld [vmem:[%s1197 + $0x20] sm:$0xf]
      %v7392 = vld [vmem:[%s1197 + $0x24] sm:$0xf]
      %v7393 = vld [vmem:[%s1197 + $0x28] sm:$0xf]
      %v7394 = vld [vmem:[%s1197 + $0x2c] sm:$0xf]
      %v7395 = vld [vmem:[%s1197 + $0x30] sm:$0xf]
      %v7396 = vld [vmem:[%s1197 + $0x34] sm:$0xf]
      %v7397 = vld [vmem:[%s1197 + $0x38] sm:$0xf]
      %v7398 = vld [vmem:[%s1197 + $0x3c] sm:$0xf]
      %v7399 = vld [vmem:[%s1197 + $0x40] sm:$0xf]
      %v7400 = vld [vmem:[%s1197 + $0x44] sm:$0xf]
      %v7401 = vld [vmem:[%s1197 + $0x48] sm:$0xf]
      %v7402 = vld [vmem:[%s1197 + $0x4c] sm:$0xf]
      %v7403 = vld [vmem:[%s1197 + $0x50] sm:$0xf]
      %v7404 = vld [vmem:[%s1197 + $0x54] sm:$0xf]
      %v7405 = vld [vmem:[%s1197 + $0x58] sm:$0xf]
      %v7406 = vld [vmem:[%s1197 + $0x5c] sm:$0xf]
      %v7407 = vld [vmem:[%s1197 + $0x60] sm:$0xf]
      %v7408 = vld [vmem:[%s1197 + $0x64] sm:$0xf]
      %v7409 = vld [vmem:[%s1197 + $0x68] sm:$0xf]
      %v7410 = vld [vmem:[%s1197 + $0x6c] sm:$0xf]
      %v7411 = vld [vmem:[%s1197 + $0x70] sm:$0xf]
      %v7412 = vld [vmem:[%s1197 + $0x74] sm:$0xf]
      %v7413 = vld [vmem:[%s1197 + $0x78] sm:$0xf]
      %v7414 = vld [vmem:[%s1197 + $0x7c] sm:$0xf]
      %v7415 = vld [vmem:[%s1197 + $0x80] sm:$0xf]
      %v7416 = vld [vmem:[%s1197 + $0x84] sm:$0xf]
      %v7417 = vld [vmem:[%s1197 + $0x88] sm:$0xf]
      %v7418 = vld [vmem:[%s1197 + $0x8c] sm:$0xf]
      %v7419 = vld [vmem:[%s1197 + $0x90] sm:$0xf]
      %v7420 = vld [vmem:[%s1197 + $0x94] sm:$0xf]
      %v7421 = vld [vmem:[%s1197 + $0x98] sm:$0xf]
      %v7422 = vld [vmem:[%s1197 + $0x9c] sm:$0xf]
      %v7423 = vld [vmem:[%s1197 + $0xa0] sm:$0xf]
      %v7424 = vld [vmem:[%s1197 + $0xa4] sm:$0xf]
      %v7425 = vld [vmem:[%s1197 + $0xa8] sm:$0xf]
      %v7426 = vld [vmem:[%s1197 + $0xac] sm:$0xf]
      %v7427 = vld [vmem:[%s1197 + $0xb0] sm:$0xf]
      %v7428 = vld [vmem:[%s1197 + $0xb4] sm:$0xf]
      %v7429 = vld [vmem:[%s1197 + $0xb8] sm:$0xf]
      %v7430 = vld [vmem:[%s1197 + $0xbc] sm:$0xf]
      %v7431 = vld [vmem:[%s1197 + $0xc0] sm:$0xf]
      %v7432 = vld [vmem:[%s1197 + $0xc4] sm:$0xf]
      %v7433 = vld [vmem:[%s1197 + $0xc8] sm:$0xf]
      %v7434 = vld [vmem:[%s1197 + $0xcc] sm:$0xf]
      %v7435 = vld [vmem:[%s1197 + $0xd0] sm:$0xf]
      %v7436 = vld [vmem:[%s1197 + $0xd4] sm:$0xf]
      %v7437 = vld [vmem:[%s1197 + $0xd8] sm:$0xf]
      %v7438 = vld [vmem:[%s1197 + $0xdc] sm:$0xf]
      %v7439 = vld [vmem:[%s1197 + $0xe0] sm:$0xf]
      %v7440 = vld [vmem:[%s1197 + $0xe4] sm:$0xf]
      %v7441 = vld [vmem:[%s1197 + $0xe8] sm:$0xf]
      %v7442 = vld [vmem:[%s1197 + $0xec] sm:$0xf]
      %v7443 = vld [vmem:[%s1197 + $0xf0] sm:$0xf]
      %v7444 = vld [vmem:[%s1197 + $0xf4] sm:$0xf]
      %v7445 = vld [vmem:[%s1197 + $0xf8] sm:$0xf]
      %v7446 = vld [vmem:[%s1197 + $0xfc] sm:$0xf]
      %v7447 = vld [vmem:[%s1197 + $0x100] sm:$0xf]
      %v7448 = vld [vmem:[%s1197 + $0x104] sm:$0xf]
      %v7449 = vld [vmem:[%s1197 + $0x108] sm:$0xf]
      %v7450 = vld [vmem:[%s1197 + $0x10c] sm:$0xf]
      %v7451 = vld [vmem:[%s1197 + $0x110] sm:$0xf]
      %v7452 = vld [vmem:[%s1197 + $0x114] sm:$0xf]
      %v7453 = vld [vmem:[%s1197 + $0x118] sm:$0xf]
      %v7454 = vld [vmem:[%s1197 + $0x11c] sm:$0xf]
      %v7455 = vld [vmem:[%s1197 + $0x120] sm:$0xf]
      %v7456 = vld [vmem:[%s1197 + $0x124] sm:$0xf]
      %v7457 = vld [vmem:[%s1197 + $0x128] sm:$0xf]
      %v7458 = vld [vmem:[%s1197 + $0x12c] sm:$0xf]
      %v7459 = vld [vmem:[%s1197 + $0x130] sm:$0xf]
      %v7460 = vld [vmem:[%s1197 + $0x134] sm:$0xf]
      %v7461 = vld [vmem:[%s1197 + $0x138] sm:$0xf]
      %v7462 = vld [vmem:[%s1197 + $0x13c] sm:$0xf]
      %v7463 = vld [vmem:[%s1197 + $0x140] sm:$0xf]
      %v7464 = vld [vmem:[%s1197 + $0x144] sm:$0xf]
      %v7465 = vld [vmem:[%s1197 + $0x148] sm:$0xf]
      %v7466 = vld [vmem:[%s1197 + $0x14c] sm:$0xf]
      %v7467 = vld [vmem:[%s1197 + $0x150] sm:$0xf]
      %v7468 = vld [vmem:[%s1197 + $0x154] sm:$0xf]
      %v7469 = vld [vmem:[%s1197 + $0x158] sm:$0xf]
      %v7470 = vld [vmem:[%s1197 + $0x15c] sm:$0xf]
      %v7471 = vld [vmem:[%s1197 + $0x160] sm:$0xf]
      %v7472 = vld [vmem:[%s1197 + $0x164] sm:$0xf]
      %v7473 = vld [vmem:[%s1197 + $0x168] sm:$0xf]
      %v7474 = vld [vmem:[%s1197 + $0x16c] sm:$0xf]
      %v7475 = vld [vmem:[%s1197 + $0x170] sm:$0xf]
      %v7476 = vld [vmem:[%s1197 + $0x174] sm:$0xf]
      %v7477 = vld [vmem:[%s1197 + $0x178] sm:$0xf]
      %v7478 = vld [vmem:[%s1197 + $0x17c] sm:$0xf]
      %v7479 = vld [vmem:[%s1197 + $0x180] sm:$0xf]
      %v7480 = vld [vmem:[%s1197 + $0x184] sm:$0xf]
      %v7481 = vld [vmem:[%s1197 + $0x188] sm:$0xf]
      %v7482 = vld [vmem:[%s1197 + $0x18c] sm:$0xf]
      %v7483 = vld [vmem:[%s1197 + $0x190] sm:$0xf]
      %v7484 = vld [vmem:[%s1197 + $0x194] sm:$0xf]
      %v7485 = vld [vmem:[%s1197 + $0x198] sm:$0xf]
      %v7486 = vld [vmem:[%s1197 + $0x19c] sm:$0xf]
      %v7487 = vld [vmem:[%s1197 + $0x1a0] sm:$0xf]
      %v7488 = vld [vmem:[%s1197 + $0x1a4] sm:$0xf]
      %v7489 = vld [vmem:[%s1197 + $0x1a8] sm:$0xf]
      %v7490 = vld [vmem:[%s1197 + $0x1ac] sm:$0xf]
      %v7491 = vld [vmem:[%s1197 + $0x1b0] sm:$0xf]
      %v7492 = vld [vmem:[%s1197 + $0x1b4] sm:$0xf]
      %v7493 = vld [vmem:[%s1197 + $0x1b8] sm:$0xf]
      %v7494 = vld [vmem:[%s1197 + $0x1bc] sm:$0xf]
      %v7495 = vld [vmem:[%s1197 + $0x1c0] sm:$0xf]
      %v7496 = vld [vmem:[%s1197 + $0x1c4] sm:$0xf]
      %v7497 = vld [vmem:[%s1197 + $0x1c8] sm:$0xf]
      %v7498 = vld [vmem:[%s1197 + $0x1cc] sm:$0xf]
      %v7499 = vld [vmem:[%s1197 + $0x1d0] sm:$0xf]
      %v7500 = vld [vmem:[%s1197 + $0x1d4] sm:$0xf]
      %v7501 = vld [vmem:[%s1197 + $0x1d8] sm:$0xf]
      %v7502 = vld [vmem:[%s1197 + $0x1dc] sm:$0xf]
      %v7503 = vld [vmem:[%s1197 + $0x1e0] sm:$0xf]
      %v7504 = vld [vmem:[%s1197 + $0x1e4] sm:$0xf]
      %v7505 = vld [vmem:[%s1197 + $0x1e8] sm:$0xf]
      %v7506 = vld [vmem:[%s1197 + $0x1ec] sm:$0xf]
      %v7507 = vld [vmem:[%s1197 + $0x1f0] sm:$0xf]
      %v7508 = vld [vmem:[%s1197 + $0x1f4] sm:$0xf]
      %v7509 = vld [vmem:[%s1197 + $0x1f8] sm:$0xf]
      %v7510 = vld [vmem:[%s1197 + $0x1fc] sm:$0xf]
      %v7511 = vld [vmem:[%s1197 + $0x200] sm:$0xf]
      %v7512 = vld [vmem:[%s1197 + $0x204] sm:$0xf]
      %v7513 = vld [vmem:[%s1197 + $0x208] sm:$0xf]
      %v7514 = vld [vmem:[%s1197 + $0x20c] sm:$0xf]
      %v7515 = vld [vmem:[%s1197 + $0x210] sm:$0xf]
      %v7516 = vld [vmem:[%s1197 + $0x214] sm:$0xf]
      %v7517 = vld [vmem:[%s1197 + $0x218] sm:$0xf]
      %v7518 = vld [vmem:[%s1197 + $0x21c] sm:$0xf]
      %v7519 = vld [vmem:[%s1197 + $0x220] sm:$0xf]
      %v7520 = vld [vmem:[%s1197 + $0x224] sm:$0xf]
      %v7521 = vld [vmem:[%s1197 + $0x228] sm:$0xf]
      %v7522 = vld [vmem:[%s1197 + $0x22c] sm:$0xf]
      %v7523 = vld [vmem:[%s1197 + $0x230] sm:$0xf]
      %v7524 = vld [vmem:[%s1197 + $0x234] sm:$0xf]
      %v7525 = vld [vmem:[%s1197 + $0x238] sm:$0xf]
      %v7526 = vld [vmem:[%s1197 + $0x23c] sm:$0xf]
      %v7527 = vld [vmem:[%s1197 + $0x240] sm:$0xf]
      %v7528 = vld [vmem:[%s1197 + $0x244] sm:$0xf]
      %v7529 = vld [vmem:[%s1197 + $0x248] sm:$0xf]
      %v7530 = vld [vmem:[%s1197 + $0x24c] sm:$0xf]
      %v7531 = vld [vmem:[%s1197 + $0x250] sm:$0xf]
      %v7532 = vld [vmem:[%s1197 + $0x254] sm:$0xf]
      %v7533 = vld [vmem:[%s1197 + $0x258] sm:$0xf]
      %v7534 = vld [vmem:[%s1197 + $0x25c] sm:$0xf]
      %v7535 = vld [vmem:[%s1197 + $0x260] sm:$0xf]
      %v7536 = vld [vmem:[%s1197 + $0x264] sm:$0xf]
      %v7537 = vld [vmem:[%s1197 + $0x268] sm:$0xf]
      %v7538 = vld [vmem:[%s1197 + $0x26c] sm:$0xf]
      %v7539 = vld [vmem:[%s1197 + $0x270] sm:$0xf]
      %v7540 = vld [vmem:[%s1197 + $0x274] sm:$0xf]
      %v7541 = vld [vmem:[%s1197 + $0x278] sm:$0xf]
      %v7542 = vld [vmem:[%s1197 + $0x27c] sm:$0xf]
      %v7543 = vld [vmem:[%s1197 + $0x280] sm:$0xf]
      %v7544 = vld [vmem:[%s1197 + $0x284] sm:$0xf]
      %v7545 = vld [vmem:[%s1197 + $0x288] sm:$0xf]
      %v7546 = vld [vmem:[%s1197 + $0x28c] sm:$0xf]
      %v7547 = vld [vmem:[%s1197 + $0x290] sm:$0xf]
      %v7548 = vld [vmem:[%s1197 + $0x294] sm:$0xf]
      %v7549 = vld [vmem:[%s1197 + $0x298] sm:$0xf]
      %v7550 = vld [vmem:[%s1197 + $0x29c] sm:$0xf]
      %v7551 = vld [vmem:[%s1197 + $0x2a0] sm:$0xf]
      %v7552 = vld [vmem:[%s1197 + $0x2a4] sm:$0xf]
      %v7553 = vld [vmem:[%s1197 + $0x2a8] sm:$0xf]
      %v7554 = vld [vmem:[%s1197 + $0x2ac] sm:$0xf]
      %v7555 = vld [vmem:[%s1197 + $0x2b0] sm:$0xf]
      %v7556 = vld [vmem:[%s1197 + $0x2b4] sm:$0xf]
      %v7557 = vld [vmem:[%s1197 + $0x2b8] sm:$0xf]
      %v7558 = vld [vmem:[%s1197 + $0x2bc] sm:$0xf]
      %v7559 = vld [vmem:[%s1197 + $0x2c0] sm:$0xf]
      %v7560 = vld [vmem:[%s1197 + $0x2c4] sm:$0xf]
      %v7561 = vld [vmem:[%s1197 + $0x2c8] sm:$0xf]
      %v7562 = vld [vmem:[%s1197 + $0x2cc] sm:$0xf]
      %v7563 = vld [vmem:[%s1197 + $0x2d0] sm:$0xf]
      %v7564 = vld [vmem:[%s1197 + $0x2d4] sm:$0xf]
      %v7565 = vld [vmem:[%s1197 + $0x2d8] sm:$0xf]
      %v7566 = vld [vmem:[%s1197 + $0x2dc] sm:$0xf]
      %v7567 = vld [vmem:[%s1197 + $0x2e0] sm:$0xf]
      %v7568 = vld [vmem:[%s1197 + $0x2e4] sm:$0xf]
      %v7569 = vld [vmem:[%s1197 + $0x2e8] sm:$0xf]
      %v7570 = vld [vmem:[%s1197 + $0x2ec] sm:$0xf]
      %v7571 = vld [vmem:[%s1197 + $0x2f0] sm:$0xf]
      %v7572 = vld [vmem:[%s1197 + $0x2f4] sm:$0xf]
      %v7573 = vld [vmem:[%s1197 + $0x2f8] sm:$0xf]
      %v7574 = vld [vmem:[%s1197 + $0x2fc] sm:$0xf]
      %v7575 = vld [vmem:[%s1197 + $0x300] sm:$0xf]
      %v7576 = vld [vmem:[%s1197 + $0x304] sm:$0xf]
      %v7577 = vld [vmem:[%s1197 + $0x308] sm:$0xf]
      %v7578 = vld [vmem:[%s1197 + $0x30c] sm:$0xf]
      %v7579 = vld [vmem:[%s1197 + $0x310] sm:$0xf]
      %v7580 = vld [vmem:[%s1197 + $0x314] sm:$0xf]
      %v7581 = vld [vmem:[%s1197 + $0x318] sm:$0xf]
      %v7582 = vld [vmem:[%s1197 + $0x31c] sm:$0xf]
      %v7583 = vld [vmem:[%s1197 + $0x320] sm:$0xf]
      %v7584 = vld [vmem:[%s1197 + $0x324] sm:$0xf]
      %v7585 = vld [vmem:[%s1197 + $0x328] sm:$0xf]
      %v7586 = vld [vmem:[%s1197 + $0x32c] sm:$0xf]
      %v7587 = vld [vmem:[%s1197 + $0x330] sm:$0xf]
      %v7588 = vld [vmem:[%s1197 + $0x334] sm:$0xf]
      %v7589 = vld [vmem:[%s1197 + $0x338] sm:$0xf]
      %v7590 = vld [vmem:[%s1197 + $0x33c] sm:$0xf]
      %v7591 = vld [vmem:[%s1197 + $0x340] sm:$0xf]
      %v7592 = vld [vmem:[%s1197 + $0x344] sm:$0xf]
      %v7593 = vld [vmem:[%s1197 + $0x348] sm:$0xf]
      %v7594 = vld [vmem:[%s1197 + $0x34c] sm:$0xf]
      %v7595 = vld [vmem:[%s1197 + $0x350] sm:$0xf]
      %v7596 = vld [vmem:[%s1197 + $0x354] sm:$0xf]
      %v7597 = vld [vmem:[%s1197 + $0x358] sm:$0xf]
      %v7598 = vld [vmem:[%s1197 + $0x35c] sm:$0xf]
      %v7599 = vld [vmem:[%s1197 + $0x360] sm:$0xf]
      %v7600 = vld [vmem:[%s1197 + $0x364] sm:$0xf]
      %v7601 = vld [vmem:[%s1197 + $0x368] sm:$0xf]
      %v7602 = vld [vmem:[%s1197 + $0x36c] sm:$0xf]
      %v7603 = vld [vmem:[%s1197 + $0x370] sm:$0xf]
      %v7604 = vld [vmem:[%s1197 + $0x374] sm:$0xf]
      %v7605 = vld [vmem:[%s1197 + $0x378] sm:$0xf]
      %v7606 = vld [vmem:[%s1197 + $0x37c] sm:$0xf]
      %v7607 = vld [vmem:[%s1197 + $0x380] sm:$0xf]
      %v7608 = vld [vmem:[%s1197 + $0x384] sm:$0xf]
      %v7609 = vld [vmem:[%s1197 + $0x388] sm:$0xf]
      %v7610 = vld [vmem:[%s1197 + $0x38c] sm:$0xf]
      %v7611 = vld [vmem:[%s1197 + $0x390] sm:$0xf]
      %v7612 = vld [vmem:[%s1197 + $0x394] sm:$0xf]
      %v7613 = vld [vmem:[%s1197 + $0x398] sm:$0xf]
      %v7614 = vld [vmem:[%s1197 + $0x39c] sm:$0xf]
      %v7615 = vld [vmem:[%s1197 + $0x3a0] sm:$0xf]
      %v7616 = vld [vmem:[%s1197 + $0x3a4] sm:$0xf]
      %v7617 = vld [vmem:[%s1197 + $0x3a8] sm:$0xf]
      %v7618 = vld [vmem:[%s1197 + $0x3ac] sm:$0xf]
      %v7619 = vld [vmem:[%s1197 + $0x3b0] sm:$0xf]
      %v7620 = vld [vmem:[%s1197 + $0x3b4] sm:$0xf]
      %v7621 = vld [vmem:[%s1197 + $0x3b8] sm:$0xf]
      %v7622 = vld [vmem:[%s1197 + $0x3bc] sm:$0xf]
      %v7623 = vld [vmem:[%s1197 + $0x3c0] sm:$0xf]
      %v7624 = vld [vmem:[%s1197 + $0x3c4] sm:$0xf]
      %v7625 = vld [vmem:[%s1197 + $0x3c8] sm:$0xf]
      %v7626 = vld [vmem:[%s1197 + $0x3cc] sm:$0xf]
      %v7627 = vld [vmem:[%s1197 + $0x3d0] sm:$0xf]
      %v7628 = vld [vmem:[%s1197 + $0x3d4] sm:$0xf]
      %v7629 = vld [vmem:[%s1197 + $0x3d8] sm:$0xf]
      %v7630 = vld [vmem:[%s1197 + $0x3dc] sm:$0xf]
      %v7631 = vld [vmem:[%s1197 + $0x3e0] sm:$0xf]
      %v7632 = vld [vmem:[%s1197 + $0x3e4] sm:$0xf]
      %v7633 = vld [vmem:[%s1197 + $0x3e8] sm:$0xf]
      %v7634 = vld [vmem:[%s1197 + $0x3ec] sm:$0xf]
      %v7635 = vld [vmem:[%s1197 + $0x3f0] sm:$0xf]
      %v7636 = vld [vmem:[%s1197 + $0x3f4] sm:$0xf]
      %v7637 = vld [vmem:[%s1197 + $0x3f8] sm:$0xf]
      %v7638 = vld [vmem:[%s1197 + $0x3fc] sm:$0xf]
      %v7639 = vld [vmem:[%s1200] sm:$0x1]
      %v7641 = vlaneseq
      %v7642 = vshrl.u32 %v7641, 7
      %v7643 = vsub.s32 0, %v7642
      %v7644 = vrot.slane %v7639, %v7643
      %v7902 = vunpack.c.l.b16 %v7383
      %v7903 = vunpack.c.l.b16 %v7384
      %v7904 = vunpack.c.l.b16 %v7385
      %v7905 = vunpack.c.l.b16 %v7386
      %v7906 = vunpack.c.l.b16 %v7387
      %v7907 = vunpack.c.l.b16 %v7388
      %v7908 = vunpack.c.l.b16 %v7389
      %v7909 = vunpack.c.l.b16 %v7390
      %v7910 = vunpack.c.l.b16 %v7391
      %v7911 = vunpack.c.l.b16 %v7392
      %v7912 = vunpack.c.l.b16 %v7393
      %v7913 = vunpack.c.l.b16 %v7394
      %v7914 = vunpack.c.l.b16 %v7395
      %v7915 = vunpack.c.l.b16 %v7396
      %v7916 = vunpack.c.l.b16 %v7397
      %v7917 = vunpack.c.l.b16 %v7398
      %v7918 = vunpack.c.l.b16 %v7399
      %v7919 = vunpack.c.l.b16 %v7400
      %v7920 = vunpack.c.l.b16 %v7401
      %v7921 = vunpack.c.l.b16 %v7402
      %v7922 = vunpack.c.l.b16 %v7403
      %v7923 = vunpack.c.l.b16 %v7404
      %v7924 = vunpack.c.l.b16 %v7405
      %v7925 = vunpack.c.l.b16 %v7406
      %v7926 = vunpack.c.l.b16 %v7407
      %v7927 = vunpack.c.l.b16 %v7408
      %v7928 = vunpack.c.l.b16 %v7409
      %v7929 = vunpack.c.l.b16 %v7410
      %v7930 = vunpack.c.l.b16 %v7411
      %v7931 = vunpack.c.l.b16 %v7412
      %v7932 = vunpack.c.l.b16 %v7413
      %v7933 = vunpack.c.l.b16 %v7414
      %v7934 = vunpack.c.l.b16 %v7415
      %v7935 = vunpack.c.l.b16 %v7416
      %v7936 = vunpack.c.l.b16 %v7417
      %v7937 = vunpack.c.l.b16 %v7418
      %v7938 = vunpack.c.l.b16 %v7419
      %v7939 = vunpack.c.l.b16 %v7420
      %v7940 = vunpack.c.l.b16 %v7421
      %v7941 = vunpack.c.l.b16 %v7422
      %v7942 = vunpack.c.l.b16 %v7423
      %v7943 = vunpack.c.l.b16 %v7424
      %v7944 = vunpack.c.l.b16 %v7425
      %v7945 = vunpack.c.l.b16 %v7426
      %v7946 = vunpack.c.l.b16 %v7427
      %v7947 = vunpack.c.l.b16 %v7428
      %v7948 = vunpack.c.l.b16 %v7429
      %v7949 = vunpack.c.l.b16 %v7430
      %v7950 = vunpack.c.l.b16 %v7431
      %v7951 = vunpack.c.l.b16 %v7432
      %v7952 = vunpack.c.l.b16 %v7433
      %v7953 = vunpack.c.l.b16 %v7434
      %v7954 = vunpack.c.l.b16 %v7435
      %v7955 = vunpack.c.l.b16 %v7436
      %v7956 = vunpack.c.l.b16 %v7437
      %v7957 = vunpack.c.l.b16 %v7438
      %v7958 = vunpack.c.l.b16 %v7439
      %v7959 = vunpack.c.l.b16 %v7440
      %v7960 = vunpack.c.l.b16 %v7441
      %v7961 = vunpack.c.l.b16 %v7442
      %v7962 = vunpack.c.l.b16 %v7443
      %v7963 = vunpack.c.l.b16 %v7444
      %v7964 = vunpack.c.l.b16 %v7445
      %v7965 = vunpack.c.l.b16 %v7446
      %v7966 = vunpack.c.l.b16 %v7447
      %v7967 = vunpack.c.l.b16 %v7448
      %v7968 = vunpack.c.l.b16 %v7449
      %v7969 = vunpack.c.l.b16 %v7450
      %v7970 = vunpack.c.l.b16 %v7451
      %v7971 = vunpack.c.l.b16 %v7452
      %v7972 = vunpack.c.l.b16 %v7453
      %v7973 = vunpack.c.l.b16 %v7454
      %v7974 = vunpack.c.l.b16 %v7455
      %v7975 = vunpack.c.l.b16 %v7456
      %v7976 = vunpack.c.l.b16 %v7457
      %v7977 = vunpack.c.l.b16 %v7458
      %v7978 = vunpack.c.l.b16 %v7459
      %v7979 = vunpack.c.l.b16 %v7460
      %v7980 = vunpack.c.l.b16 %v7461
      %v7981 = vunpack.c.l.b16 %v7462
      %v7982 = vunpack.c.l.b16 %v7463
      %v7983 = vunpack.c.l.b16 %v7464
      %v7984 = vunpack.c.l.b16 %v7465
      %v7985 = vunpack.c.l.b16 %v7466
      %v7986 = vunpack.c.l.b16 %v7467
      %v7987 = vunpack.c.l.b16 %v7468
      %v7988 = vunpack.c.l.b16 %v7469
      %v7989 = vunpack.c.l.b16 %v7470
      %v7990 = vunpack.c.l.b16 %v7471
      %v7991 = vunpack.c.l.b16 %v7472
      %v7992 = vunpack.c.l.b16 %v7473
      %v7993 = vunpack.c.l.b16 %v7474
      %v7994 = vunpack.c.l.b16 %v7475
      %v7995 = vunpack.c.l.b16 %v7476
      %v7996 = vunpack.c.l.b16 %v7477
      %v7997 = vunpack.c.l.b16 %v7478
      %v7998 = vunpack.c.l.b16 %v7479
      %v7999 = vunpack.c.l.b16 %v7480
      %v8000 = vunpack.c.l.b16 %v7481
      %v8001 = vunpack.c.l.b16 %v7482
      %v8002 = vunpack.c.l.b16 %v7483
      %v8003 = vunpack.c.l.b16 %v7484
      %v8004 = vunpack.c.l.b16 %v7485
      %v8005 = vunpack.c.l.b16 %v7486
      %v8006 = vunpack.c.l.b16 %v7487
      %v8007 = vunpack.c.l.b16 %v7488
      %v8008 = vunpack.c.l.b16 %v7489
      %v8009 = vunpack.c.l.b16 %v7490
      %v8010 = vunpack.c.l.b16 %v7491
      %v8011 = vunpack.c.l.b16 %v7492
      %v8012 = vunpack.c.l.b16 %v7493
      %v8013 = vunpack.c.l.b16 %v7494
      %v8014 = vunpack.c.l.b16 %v7495
      %v8015 = vunpack.c.l.b16 %v7496
      %v8016 = vunpack.c.l.b16 %v7497
      %v8017 = vunpack.c.l.b16 %v7498
      %v8018 = vunpack.c.l.b16 %v7499
      %v8019 = vunpack.c.l.b16 %v7500
      %v8020 = vunpack.c.l.b16 %v7501
      %v8021 = vunpack.c.l.b16 %v7502
      %v8022 = vunpack.c.l.b16 %v7503
      %v8023 = vunpack.c.l.b16 %v7504
      %v8024 = vunpack.c.l.b16 %v7505
      %v8025 = vunpack.c.l.b16 %v7506
      %v8026 = vunpack.c.l.b16 %v7507
      %v8027 = vunpack.c.l.b16 %v7508
      %v8028 = vunpack.c.l.b16 %v7509
      %v8029 = vunpack.c.l.b16 %v7510
      %v8030 = vunpack.c.l.b16 %v7511
      %v8031 = vunpack.c.l.b16 %v7512
      %v8032 = vunpack.c.l.b16 %v7513
      %v8033 = vunpack.c.l.b16 %v7514
      %v8034 = vunpack.c.l.b16 %v7515
      %v8035 = vunpack.c.l.b16 %v7516
      %v8036 = vunpack.c.l.b16 %v7517
      %v8037 = vunpack.c.l.b16 %v7518
      %v8038 = vunpack.c.l.b16 %v7519
      %v8039 = vunpack.c.l.b16 %v7520
      %v8040 = vunpack.c.l.b16 %v7521
      %v8041 = vunpack.c.l.b16 %v7522
      %v8042 = vunpack.c.l.b16 %v7523
      %v8043 = vunpack.c.l.b16 %v7524
      %v8044 = vunpack.c.l.b16 %v7525
      %v8045 = vunpack.c.l.b16 %v7526
      %v8046 = vunpack.c.l.b16 %v7527
      %v8047 = vunpack.c.l.b16 %v7528
      %v8048 = vunpack.c.l.b16 %v7529
      %v8049 = vunpack.c.l.b16 %v7530
      %v8050 = vunpack.c.l.b16 %v7531
      %v8051 = vunpack.c.l.b16 %v7532
      %v8052 = vunpack.c.l.b16 %v7533
      %v8053 = vunpack.c.l.b16 %v7534
      %v8054 = vunpack.c.l.b16 %v7535
      %v8055 = vunpack.c.l.b16 %v7536
      %v8056 = vunpack.c.l.b16 %v7537
      %v8057 = vunpack.c.l.b16 %v7538
      %v8058 = vunpack.c.l.b16 %v7539
      %v8059 = vunpack.c.l.b16 %v7540
      %v8060 = vunpack.c.l.b16 %v7541
      %v8061 = vunpack.c.l.b16 %v7542
      %v8062 = vunpack.c.l.b16 %v7543
      %v8063 = vunpack.c.l.b16 %v7544
      %v8064 = vunpack.c.l.b16 %v7545
      %v8065 = vunpack.c.l.b16 %v7546
      %v8066 = vunpack.c.l.b16 %v7547
      %v8067 = vunpack.c.l.b16 %v7548
      %v8068 = vunpack.c.l.b16 %v7549
      %v8069 = vunpack.c.l.b16 %v7550
      %v8070 = vunpack.c.l.b16 %v7551
      %v8071 = vunpack.c.l.b16 %v7552
      %v8072 = vunpack.c.l.b16 %v7553
      %v8073 = vunpack.c.l.b16 %v7554
      %v8074 = vunpack.c.l.b16 %v7555
      %v8075 = vunpack.c.l.b16 %v7556
      %v8076 = vunpack.c.l.b16 %v7557
      %v8077 = vunpack.c.l.b16 %v7558
      %v8078 = vunpack.c.l.b16 %v7559
      %v8079 = vunpack.c.l.b16 %v7560
      %v8080 = vunpack.c.l.b16 %v7561
      %v8081 = vunpack.c.l.b16 %v7562
      %v8082 = vunpack.c.l.b16 %v7563
      %v8083 = vunpack.c.l.b16 %v7564
      %v8084 = vunpack.c.l.b16 %v7565
      %v8085 = vunpack.c.l.b16 %v7566
      %v8086 = vunpack.c.l.b16 %v7567
      %v8087 = vunpack.c.l.b16 %v7568
      %v8088 = vunpack.c.l.b16 %v7569
      %v8089 = vunpack.c.l.b16 %v7570
      %v8090 = vunpack.c.l.b16 %v7571
      %v8091 = vunpack.c.l.b16 %v7572
      %v8092 = vunpack.c.l.b16 %v7573
      %v8093 = vunpack.c.l.b16 %v7574
      %v8094 = vunpack.c.l.b16 %v7575
      %v8095 = vunpack.c.l.b16 %v7576
      %v8096 = vunpack.c.l.b16 %v7577
      %v8097 = vunpack.c.l.b16 %v7578
      %v8098 = vunpack.c.l.b16 %v7579
      %v8099 = vunpack.c.l.b16 %v7580
      %v8100 = vunpack.c.l.b16 %v7581
      %v8101 = vunpack.c.l.b16 %v7582
      %v8102 = vunpack.c.l.b16 %v7583
      %v8103 = vunpack.c.l.b16 %v7584
      %v8104 = vunpack.c.l.b16 %v7585
      %v8105 = vunpack.c.l.b16 %v7586
      %v8106 = vunpack.c.l.b16 %v7587
      %v8107 = vunpack.c.l.b16 %v7588
      %v8108 = vunpack.c.l.b16 %v7589
      %v8109 = vunpack.c.l.b16 %v7590
      %v8110 = vunpack.c.l.b16 %v7591
      %v8111 = vunpack.c.l.b16 %v7592
      %v8112 = vunpack.c.l.b16 %v7593
      %v8113 = vunpack.c.l.b16 %v7594
      %v8114 = vunpack.c.l.b16 %v7595
      %v8115 = vunpack.c.l.b16 %v7596
      %v8116 = vunpack.c.l.b16 %v7597
      %v8117 = vunpack.c.l.b16 %v7598
      %v8118 = vunpack.c.l.b16 %v7599
      %v8119 = vunpack.c.l.b16 %v7600
      %v8120 = vunpack.c.l.b16 %v7601
      %v8121 = vunpack.c.l.b16 %v7602
      %v8122 = vunpack.c.l.b16 %v7603
      %v8123 = vunpack.c.l.b16 %v7604
      %v8124 = vunpack.c.l.b16 %v7605
      %v8125 = vunpack.c.l.b16 %v7606
      %v8126 = vunpack.c.l.b16 %v7607
      %v8127 = vunpack.c.l.b16 %v7608
      %v8128 = vunpack.c.l.b16 %v7609
      %v8129 = vunpack.c.l.b16 %v7610
      %v8130 = vunpack.c.l.b16 %v7611
      %v8131 = vunpack.c.l.b16 %v7612
      %v8132 = vunpack.c.l.b16 %v7613
      %v8133 = vunpack.c.l.b16 %v7614
      %v8134 = vunpack.c.l.b16 %v7615
      %v8135 = vunpack.c.l.b16 %v7616
      %v8136 = vunpack.c.l.b16 %v7617
      %v8137 = vunpack.c.l.b16 %v7618
      %v8138 = vunpack.c.l.b16 %v7619
      %v8139 = vunpack.c.l.b16 %v7620
      %v8140 = vunpack.c.l.b16 %v7621
      %v8141 = vunpack.c.l.b16 %v7622
      %v8142 = vunpack.c.l.b16 %v7623
      %v8143 = vunpack.c.l.b16 %v7624
      %v8144 = vunpack.c.l.b16 %v7625
      %v8145 = vunpack.c.l.b16 %v7626
      %v8146 = vunpack.c.l.b16 %v7627
      %v8147 = vunpack.c.l.b16 %v7628
      %v8148 = vunpack.c.l.b16 %v7629
      %v8149 = vunpack.c.l.b16 %v7630
      %v8150 = vunpack.c.l.b16 %v7631
      %v8151 = vunpack.c.l.b16 %v7632
      %v8152 = vunpack.c.l.b16 %v7633
      %v8153 = vunpack.c.l.b16 %v7634
      %v8154 = vunpack.c.l.b16 %v7635
      %v8155 = vunpack.c.l.b16 %v7636
      %v8156 = vunpack.c.l.b16 %v7637
      %v8157 = vunpack.c.l.b16 %v7638
      %v8158 = vpack.c.b16 %v7903, %v7902
      %v8159 = vpack.c.b16 %v7905, %v7904
      %v8160 = vpack.c.b16 %v7907, %v7906
      %v8161 = vpack.c.b16 %v7909, %v7908
      %v8162 = vpack.c.b16 %v7911, %v7910
      %v8163 = vpack.c.b16 %v7913, %v7912
      %v8164 = vpack.c.b16 %v7915, %v7914
      %v8165 = vpack.c.b16 %v7917, %v7916
      %v8166 = vpack.c.b16 %v7919, %v7918
      %v8167 = vpack.c.b16 %v7921, %v7920
      %v8168 = vpack.c.b16 %v7923, %v7922
      %v8169 = vpack.c.b16 %v7925, %v7924
      %v8170 = vpack.c.b16 %v7927, %v7926
      %v8171 = vpack.c.b16 %v7929, %v7928
      %v8172 = vpack.c.b16 %v7931, %v7930
      %v8173 = vpack.c.b16 %v7933, %v7932
      %v8174 = vpack.c.b16 %v7935, %v7934
      %v8175 = vpack.c.b16 %v7937, %v7936
      %v8176 = vpack.c.b16 %v7939, %v7938
      %v8177 = vpack.c.b16 %v7941, %v7940
      %v8178 = vpack.c.b16 %v7943, %v7942
      %v8179 = vpack.c.b16 %v7945, %v7944
      %v8180 = vpack.c.b16 %v7947, %v7946
      %v8181 = vpack.c.b16 %v7949, %v7948
      %v8182 = vpack.c.b16 %v7951, %v7950
      %v8183 = vpack.c.b16 %v7953, %v7952
      %v8184 = vpack.c.b16 %v7955, %v7954
      %v8185 = vpack.c.b16 %v7957, %v7956
      %v8186 = vpack.c.b16 %v7959, %v7958
      %v8187 = vpack.c.b16 %v7961, %v7960
      %v8188 = vpack.c.b16 %v7963, %v7962
      %v8189 = vpack.c.b16 %v7965, %v7964
      %v8190 = vpack.c.b16 %v7967, %v7966
      %v8191 = vpack.c.b16 %v7969, %v7968
      %v8192 = vpack.c.b16 %v7971, %v7970
      %v8193 = vpack.c.b16 %v7973, %v7972
      %v8194 = vpack.c.b16 %v7975, %v7974
      %v8195 = vpack.c.b16 %v7977, %v7976
      %v8196 = vpack.c.b16 %v7979, %v7978
      %v8197 = vpack.c.b16 %v7981, %v7980
      %v8198 = vpack.c.b16 %v7983, %v7982
      %v8199 = vpack.c.b16 %v7985, %v7984
      %v8200 = vpack.c.b16 %v7987, %v7986
      %v8201 = vpack.c.b16 %v7989, %v7988
      %v8202 = vpack.c.b16 %v7991, %v7990
      %v8203 = vpack.c.b16 %v7993, %v7992
      %v8204 = vpack.c.b16 %v7995, %v7994
      %v8205 = vpack.c.b16 %v7997, %v7996
      %v8206 = vpack.c.b16 %v7999, %v7998
      %v8207 = vpack.c.b16 %v8001, %v8000
      %v8208 = vpack.c.b16 %v8003, %v8002
      %v8209 = vpack.c.b16 %v8005, %v8004
      %v8210 = vpack.c.b16 %v8007, %v8006
      %v8211 = vpack.c.b16 %v8009, %v8008
      %v8212 = vpack.c.b16 %v8011, %v8010
      %v8213 = vpack.c.b16 %v8013, %v8012
      %v8214 = vpack.c.b16 %v8015, %v8014
      %v8215 = vpack.c.b16 %v8017, %v8016
      %v8216 = vpack.c.b16 %v8019, %v8018
      %v8217 = vpack.c.b16 %v8021, %v8020
      %v8218 = vpack.c.b16 %v8023, %v8022
      %v8219 = vpack.c.b16 %v8025, %v8024
      %v8220 = vpack.c.b16 %v8027, %v8026
      %v8221 = vpack.c.b16 %v8029, %v8028
      %v8222 = vpack.c.b16 %v8031, %v8030
      %v8223 = vpack.c.b16 %v8033, %v8032
      %v8224 = vpack.c.b16 %v8035, %v8034
      %v8225 = vpack.c.b16 %v8037, %v8036
      %v8226 = vpack.c.b16 %v8039, %v8038
      %v8227 = vpack.c.b16 %v8041, %v8040
      %v8228 = vpack.c.b16 %v8043, %v8042
      %v8229 = vpack.c.b16 %v8045, %v8044
      %v8230 = vpack.c.b16 %v8047, %v8046
      %v8231 = vpack.c.b16 %v8049, %v8048
      %v8232 = vpack.c.b16 %v8051, %v8050
      %v8233 = vpack.c.b16 %v8053, %v8052
      %v8234 = vpack.c.b16 %v8055, %v8054
      %v8235 = vpack.c.b16 %v8057, %v8056
      %v8236 = vpack.c.b16 %v8059, %v8058
      %v8237 = vpack.c.b16 %v8061, %v8060
      %v8238 = vpack.c.b16 %v8063, %v8062
      %v8239 = vpack.c.b16 %v8065, %v8064
      %v8240 = vpack.c.b16 %v8067, %v8066
      %v8241 = vpack.c.b16 %v8069, %v8068
      %v8242 = vpack.c.b16 %v8071, %v8070
      %v8243 = vpack.c.b16 %v8073, %v8072
      %v8244 = vpack.c.b16 %v8075, %v8074
      %v8245 = vpack.c.b16 %v8077, %v8076
      %v8246 = vpack.c.b16 %v8079, %v8078
      %v8247 = vpack.c.b16 %v8081, %v8080
      %v8248 = vpack.c.b16 %v8083, %v8082
      %v8249 = vpack.c.b16 %v8085, %v8084
      %v8250 = vpack.c.b16 %v8087, %v8086
      %v8251 = vpack.c.b16 %v8089, %v8088
      %v8252 = vpack.c.b16 %v8091, %v8090
      %v8253 = vpack.c.b16 %v8093, %v8092
      %v8254 = vpack.c.b16 %v8095, %v8094
      %v8255 = vpack.c.b16 %v8097, %v8096
      %v8256 = vpack.c.b16 %v8099, %v8098
      %v8257 = vpack.c.b16 %v8101, %v8100
      %v8258 = vpack.c.b16 %v8103, %v8102
      %v8259 = vpack.c.b16 %v8105, %v8104
      %v8260 = vpack.c.b16 %v8107, %v8106
      %v8261 = vpack.c.b16 %v8109, %v8108
      %v8262 = vpack.c.b16 %v8111, %v8110
      %v8263 = vpack.c.b16 %v8113, %v8112
      %v8264 = vpack.c.b16 %v8115, %v8114
      %v8265 = vpack.c.b16 %v8117, %v8116
      %v8266 = vpack.c.b16 %v8119, %v8118
      %v8267 = vpack.c.b16 %v8121, %v8120
      %v8268 = vpack.c.b16 %v8123, %v8122
      %v8269 = vpack.c.b16 %v8125, %v8124
      %v8270 = vpack.c.b16 %v8127, %v8126
      %v8271 = vpack.c.b16 %v8129, %v8128
      %v8272 = vpack.c.b16 %v8131, %v8130
      %v8273 = vpack.c.b16 %v8133, %v8132
      %v8274 = vpack.c.b16 %v8135, %v8134
      %v8275 = vpack.c.b16 %v8137, %v8136
      %v8276 = vpack.c.b16 %v8139, %v8138
      %v8277 = vpack.c.b16 %v8141, %v8140
      %v8278 = vpack.c.b16 %v8143, %v8142
      %v8279 = vpack.c.b16 %v8145, %v8144
      %v8280 = vpack.c.b16 %v8147, %v8146
      %v8281 = vpack.c.b16 %v8149, %v8148
      %v8282 = vpack.c.b16 %v8151, %v8150
      %v8283 = vpack.c.b16 %v8153, %v8152
      %v8284 = vpack.c.b16 %v8155, %v8154
      %v8285 = vpack.c.b16 %v8157, %v8156
      %8414 = vmatprep.subr.bf16.mxu0 0
      %8415 = vmatpush1.bf16.msra.mxu0 %v8158
      %8416 = vmatprep.subr.bf16.mxu0 0
      %8417 = vmatpush1.bf16.msra.mxu0 %v8159
      %8418 = vmatprep.subr.bf16.mxu0 0
      %8419 = vmatpush1.bf16.msra.mxu0 %v8160
      %8420 = vmatprep.subr.bf16.mxu0 0
      %8421 = vmatpush1.bf16.msra.mxu0 %v8161
      %8422 = vmatprep.subr.bf16.mxu0 0
      %8423 = vmatpush1.bf16.msra.mxu0 %v8162
      %8424 = vmatprep.subr.bf16.mxu0 0
      %8425 = vmatpush1.bf16.msra.mxu0 %v8163
      %8426 = vmatprep.subr.bf16.mxu0 0
      %8427 = vmatpush1.bf16.msra.mxu0 %v8164
      %8428 = vmatprep.subr.bf16.mxu0 0
      %8429 = vmatpush1.bf16.msra.mxu0 %v8165
      %8430 = vmatprep.subr.bf16.mxu0 0
      %8431 = vmatpush1.bf16.msra.mxu0 %v8166
      %8432 = vmatprep.subr.bf16.mxu0 0
      %8433 = vmatpush1.bf16.msra.mxu0 %v8167
      %8434 = vmatprep.subr.bf16.mxu0 0
      %8435 = vmatpush1.bf16.msra.mxu0 %v8168
      %8436 = vmatprep.subr.bf16.mxu0 0
      %8437 = vmatpush1.bf16.msra.mxu0 %v8169
      %8438 = vmatprep.subr.bf16.mxu0 0
      %8439 = vmatpush1.bf16.msra.mxu0 %v8170
      %8440 = vmatprep.subr.bf16.mxu0 0
      %8441 = vmatpush1.bf16.msra.mxu0 %v8171
      %8442 = vmatprep.subr.bf16.mxu0 0
      %8443 = vmatpush1.bf16.msra.mxu0 %v8172
      %8444 = vmatprep.subr.bf16.mxu0 0
      %8445 = vmatpush1.bf16.msra.mxu0 %v8173
      %8446 = vmatprep.mubr.bf16.mxu0 %v7320
      %8447 = vmatmul.mubr.bf16.gmra.mrb[0].mxu0 %v7319
      %v8448 = vpop.f32.mrb[0].mxu0
      %v8449 = vadd.f32 %v7644, %v8448
      %v8450 = vpop.f32.mrb[0].mxu0
      %v8451 = vpop.f32.mrb[0].mxu0
      %v8452 = vadd.f32 %v7644, %v8451
      %v8453 = vpop.f32.mrb[0].mxu0
      %8454 = vmatprep.mubr.bf16.mxu0 %v7336
      %8455 = vmatmul.mubr.bf16.gmra.mrb[0].mxu0 %v7335
      %v8456 = vpop.f32.mrb[0].mxu0
      %v8457 = vadd.f32 %v7644, %v8456
      %v8458 = vpop.f32.mrb[0].mxu0
      %v8459 = vpop.f32.mrb[0].mxu0
      %v8460 = vadd.f32 %v7644, %v8459
      %v8461 = vpop.f32.mrb[0].mxu0
      %8462 = vmatprep.mubr.bf16.mxu0 %v7352
      %8463 = vmatmul.mubr.bf16.gmra.mrb[0].mxu0 %v7351
      %v8464 = vpop.f32.mrb[0].mxu0
      %v8465 = vadd.f32 %v7644, %v8464
      %v8466 = vpop.f32.mrb[0].mxu0
      %v8467 = vpop.f32.mrb[0].mxu0
      %v8468 = vadd.f32 %v7644, %v8467
      %v8469 = vpop.f32.mrb[0].mxu0
      %8470 = vmatprep.mubr.bf16.mxu0 %v7368
      %8471 = vmatmul.mubr.bf16.gmra.mrb[0].mxu0 %v7367
      %v8472 = vpop.f32.mrb[0].mxu0
      %v8473 = vadd.f32 %v7644, %v8472
      %v8474 = vpop.f32.mrb[0].mxu0
      %v8475 = vpop.f32.mrb[0].mxu0
      %v8476 = vpop.f32.mrb[0].mxu0
      %8477 = vdwg.mxu0
      %8478 = vmatprep.subr.bf16.mxu0 0
      %8479 = vmatpush1.bf16.msra.mxu0 %v8174
      %8480 = vmatprep.subr.bf16.mxu0 0
      %8481 = vmatpush1.bf16.msra.mxu0 %v8175
      %8482 = vmatprep.subr.bf16.mxu0 0
      %8483 = vmatpush1.bf16.msra.mxu0 %v8176
      %8484 = vmatprep.subr.bf16.mxu0 0
      %8485 = vmatpush1.bf16.msra.mxu0 %v8177
      %8486 = vmatprep.subr.bf16.mxu0 0
      %8487 = vmatpush1.bf16.msra.mxu0 %v8178
      %8488 = vmatprep.subr.bf16.mxu0 0
      %8489 = vmatpush1.bf16.msra.mxu0 %v8179
      %8490 = vmatprep.subr.bf16.mxu0 0
      %8491 = vmatpush1.bf16.msra.mxu0 %v8180
      %8492 = vmatprep.subr.bf16.mxu0 0
      %8493 = vmatpush1.bf16.msra.mxu0 %v8181
      %8494 = vmatprep.subr.bf16.mxu0 0
      %8495 = vmatpush1.bf16.msra.mxu0 %v8182
      %8496 = vmatprep.subr.bf16.mxu0 0
      %8497 = vmatpush1.bf16.msra.mxu0 %v8183
      %8498 = vmatprep.subr.bf16.mxu0 0
      %8499 = vmatpush1.bf16.msra.mxu0 %v8184
      %8500 = vmatprep.subr.bf16.mxu0 0
      %8501 = vmatpush1.bf16.msra.mxu0 %v8185
      %8502 = vmatprep.subr.bf16.mxu0 0
      %8503 = vmatpush1.bf16.msra.mxu0 %v8186
      %8504 = vmatprep.subr.bf16.mxu0 0
      %8505 = vmatpush1.bf16.msra.mxu0 %v8187
      %8506 = vmatprep.subr.bf16.mxu0 0
      %8507 = vmatpush1.bf16.msra.mxu0 %v8188
      %8508 = vmatprep.subr.bf16.mxu0 0
      %8509 = vmatpush1.bf16.msra.mxu0 %v8189
      %8510 = vmatprep.mubr.bf16.mxu0 %v7322
      %8511 = vmatmul.mubr.bf16.gmra.mrb[0].mxu0 %v7321
      %v8512 = vpop.f32.mrb[0].mxu0
      %v8513 = vadd.f32 %v8449, %v8512
      %v8514 = vpop.f32.mrb[0].mxu0
      %v8515 = vpop.f32.mrb[0].mxu0
      %v8516 = vadd.f32 %v8452, %v8515
      %v8517 = vpop.f32.mrb[0].mxu0
      %8518 = vmatprep.mubr.bf16.mxu0 %v7338
      %8519 = vmatmul.mubr.bf16.gmra.mrb[0].mxu0 %v7337
      %v8520 = vpop.f32.mrb[0].mxu0
      %v8521 = vadd.f32 %v8457, %v8520
      %v8522 = vpop.f32.mrb[0].mxu0
      %v8523 = vpop.f32.mrb[0].mxu0
      %v8524 = vadd.f32 %v8460, %v8523
      %v8525 = vpop.f32.mrb[0].mxu0
      %8526 = vmatprep.mubr.bf16.mxu0 %v7354
      %8527 = vmatmul.mubr.bf16.gmra.mrb[0].mxu0 %v7353
      %v8528 = vpop.f32.mrb[0].mxu0
      %v8529 = vadd.f32 %v8465, %v8528
      %v8530 = vpop.f32.mrb[0].mxu0
      %v8531 = vpop.f32.mrb[0].mxu0
      %v8532 = vadd.f32 %v8468, %v8531
      %v8533 = vpop.f32.mrb[0].mxu0
      %8534 = vmatprep.mubr.bf16.mxu0 %v7370
      %8535 = vmatmul.mubr.bf16.gmra.mrb[0].mxu0 %v7369
      %v8536 = vpop.f32.mrb[0].mxu0
      %v8537 = vadd.f32 %v8473, %v8536
      %v8538 = vpop.f32.mrb[0].mxu0
      %v8539 = vpop.f32.mrb[0].mxu0
      %v8540 = vpop.f32.mrb[0].mxu0
      %8541 = vdwg.mxu0
      %8542 = vmatprep.subr.bf16.mxu0 0
      %8543 = vmatpush1.bf16.msra.mxu0 %v8190
      %8544 = vmatprep.subr.bf16.mxu0 0
      %8545 = vmatpush1.bf16.msra.mxu0 %v8191
      %8546 = vmatprep.subr.bf16.mxu0 0
      %8547 = vmatpush1.bf16.msra.mxu0 %v8192
      %8548 = vmatprep.subr.bf16.mxu0 0
      %8549 = vmatpush1.bf16.msra.mxu0 %v8193
      %8550 = vmatprep.subr.bf16.mxu0 0
      %8551 = vmatpush1.bf16.msra.mxu0 %v8194
      %8552 = vmatprep.subr.bf16.mxu0 0
      %8553 = vmatpush1.bf16.msra.mxu0 %v8195
      %8554 = vmatprep.subr.bf16.mxu0 0
      %8555 = vmatpush1.bf16.msra.mxu0 %v8196
      %8556 = vmatprep.subr.bf16.mxu0 0
      %8557 = vmatpush1.bf16.msra.mxu0 %v8197
      %8558 = vmatprep.subr.bf16.mxu0 0
      %8559 = vmatpush1.bf16.msra.mxu0 %v8198
      %8560 = vmatprep.subr.bf16.mxu0 0
      %8561 = vmatpush1.bf16.msra.mxu0 %v8199
      %8562 = vmatprep.subr.bf16.mxu0 0
      %8563 = vmatpush1.bf16.msra.mxu0 %v8200
      %8564 = vmatprep.subr.bf16.mxu0 0
      %8565 = vmatpush1.bf16.msra.mxu0 %v8201
      %8566 = vmatprep.subr.bf16.mxu0 0
      %8567 = vmatpush1.bf16.msra.mxu0 %v8202
      %8568 = vmatprep.subr.bf16.mxu0 0
      %8569 = vmatpush1.bf16.msra.mxu0 %v8203
      %8570 = vmatprep.subr.bf16.mxu0 0
      %8571 = vmatpush1.bf16.msra.mxu0 %v8204
      %8572 = vmatprep.subr.bf16.mxu0 0
      %8573 = vmatpush1.bf16.msra.mxu0 %v8205
      %8574 = vmatprep.mubr.bf16.mxu0 %v7324
      %8575 = vmatmul.mubr.bf16.gmra.mrb[0].mxu0 %v7323
      %v8576 = vpop.f32.mrb[0].mxu0
      %v8577 = vadd.f32 %v8513, %v8576
      %v8578 = vpop.f32.mrb[0].mxu0
      %v8579 = vpop.f32.mrb[0].mxu0
      %v8580 = vadd.f32 %v8516, %v8579
      %v8581 = vpop.f32.mrb[0].mxu0
      %8582 = vmatprep.mubr.bf16.mxu0 %v7340
      %8583 = vmatmul.mubr.bf16.gmra.mrb[0].mxu0 %v7339
      %v8584 = vpop.f32.mrb[0].mxu0
      %v8585 = vadd.f32 %v8521, %v8584
      %v8586 = vpop.f32.mrb[0].mxu0
      %v8587 = vpop.f32.mrb[0].mxu0
      %v8588 = vadd.f32 %v8524, %v8587
      %v8589 = vpop.f32.mrb[0].mxu0
      %8590 = vmatprep.mubr.bf16.mxu0 %v7356
      %8591 = vmatmul.mubr.bf16.gmra.mrb[0].mxu0 %v7355
      %v8592 = vpop.f32.mrb[0].mxu0
      %v8593 = vadd.f32 %v8529, %v8592
      %v8594 = vpop.f32.mrb[0].mxu0
      %v8595 = vpop.f32.mrb[0].mxu0
      %v8596 = vadd.f32 %v8532, %v8595
      %v8597 = vpop.f32.mrb[0].mxu0
      %8598 = vmatprep.mubr.bf16.mxu0 %v7372
      %8599 = vmatmul.mubr.bf16.gmra.mrb[0].mxu0 %v7371
      %v8600 = vpop.f32.mrb[0].mxu0
      %v8601 = vadd.f32 %v8537, %v8600
      %v8602 = vpop.f32.mrb[0].mxu0
      %v8603 = vpop.f32.mrb[0].mxu0
      %v8604 = vpop.f32.mrb[0].mxu0
      %8605 = vdwg.mxu0
      %8606 = vmatprep.subr.bf16.mxu0 0
      %8607 = vmatpush1.bf16.msra.mxu0 %v8206
      %8608 = vmatprep.subr.bf16.mxu0 0
      %8609 = vmatpush1.bf16.msra.mxu0 %v8207
      %8610 = vmatprep.subr.bf16.mxu0 0
      %8611 = vmatpush1.bf16.msra.mxu0 %v8208
      %8612 = vmatprep.subr.bf16.mxu0 0
      %8613 = vmatpush1.bf16.msra.mxu0 %v8209
      %8614 = vmatprep.subr.bf16.mxu0 0
      %8615 = vmatpush1.bf16.msra.mxu0 %v8210
      %8616 = vmatprep.subr.bf16.mxu0 0
      %8617 = vmatpush1.bf16.msra.mxu0 %v8211
      %8618 = vmatprep.subr.bf16.mxu0 0
      %8619 = vmatpush1.bf16.msra.mxu0 %v8212
      %8620 = vmatprep.subr.bf16.mxu0 0
      %8621 = vmatpush1.bf16.msra.mxu0 %v8213
      %8622 = vmatprep.subr.bf16.mxu0 0
      %8623 = vmatpush1.bf16.msra.mxu0 %v8214
      %8624 = vmatprep.subr.bf16.mxu0 0
      %8625 = vmatpush1.bf16.msra.mxu0 %v8215
      %8626 = vmatprep.subr.bf16.mxu0 0
      %8627 = vmatpush1.bf16.msra.mxu0 %v8216
      %8628 = vmatprep.subr.bf16.mxu0 0
      %8629 = vmatpush1.bf16.msra.mxu0 %v8217
      %8630 = vmatprep.subr.bf16.mxu0 0
      %8631 = vmatpush1.bf16.msra.mxu0 %v8218
      %8632 = vmatprep.subr.bf16.mxu0 0
      %8633 = vmatpush1.bf16.msra.mxu0 %v8219
      %8634 = vmatprep.subr.bf16.mxu0 0
      %8635 = vmatpush1.bf16.msra.mxu0 %v8220
      %8636 = vmatprep.subr.bf16.mxu0 0
      %8637 = vmatpush1.bf16.msra.mxu0 %v8221
      %8638 = vmatprep.mubr.bf16.mxu0 %v7326
      %8639 = vmatmul.mubr.bf16.gmra.mrb[0].mxu0 %v7325
      %v8640 = vpop.f32.mrb[0].mxu0
      %v8641 = vadd.f32 %v8577, %v8640
      %v8642 = vpop.f32.mrb[0].mxu0
      %v8643 = vpop.f32.mrb[0].mxu0
      %v8644 = vadd.f32 %v8580, %v8643
      %v8645 = vpop.f32.mrb[0].mxu0
      %8646 = vmatprep.mubr.bf16.mxu0 %v7342
      %8647 = vmatmul.mubr.bf16.gmra.mrb[0].mxu0 %v7341
      %v8648 = vpop.f32.mrb[0].mxu0
      %v8649 = vadd.f32 %v8585, %v8648
      %v8650 = vpop.f32.mrb[0].mxu0
      %v8651 = vpop.f32.mrb[0].mxu0
      %v8652 = vadd.f32 %v8588, %v8651
      %v8653 = vpop.f32.mrb[0].mxu0
      %8654 = vmatprep.mubr.bf16.mxu0 %v7358
      %8655 = vmatmul.mubr.bf16.gmra.mrb[0].mxu0 %v7357
      %v8656 = vpop.f32.mrb[0].mxu0
      %v8657 = vadd.f32 %v8593, %v8656
      %v8658 = vpop.f32.mrb[0].mxu0
      %v8659 = vpop.f32.mrb[0].mxu0
      %v8660 = vadd.f32 %v8596, %v8659
      %v8661 = vpop.f32.mrb[0].mxu0
      %8662 = vmatprep.mubr.bf16.mxu0 %v7374
      %8663 = vmatmul.mubr.bf16.gmra.mrb[0].mxu0 %v7373
      %v8664 = vpop.f32.mrb[0].mxu0
      %v8665 = vadd.f32 %v8601, %v8664
      %v8666 = vpop.f32.mrb[0].mxu0
      %v8667 = vpop.f32.mrb[0].mxu0
      %v8668 = vpop.f32.mrb[0].mxu0
      %8669 = vdwg.mxu0
      %8670 = vmatprep.subr.bf16.mxu0 0
      %8671 = vmatpush1.bf16.msra.mxu0 %v8222
      %8672 = vmatprep.subr.bf16.mxu0 0
      %8673 = vmatpush1.bf16.msra.mxu0 %v8223
      %8674 = vmatprep.subr.bf16.mxu0 0
      %8675 = vmatpush1.bf16.msra.mxu0 %v8224
      %8676 = vmatprep.subr.bf16.mxu0 0
      %8677 = vmatpush1.bf16.msra.mxu0 %v8225
      %8678 = vmatprep.subr.bf16.mxu0 0
      %8679 = vmatpush1.bf16.msra.mxu0 %v8226
      %8680 = vmatprep.subr.bf16.mxu0 0
      %8681 = vmatpush1.bf16.msra.mxu0 %v8227
      %8682 = vmatprep.subr.bf16.mxu0 0
      %8683 = vmatpush1.bf16.msra.mxu0 %v8228
      %8684 = vmatprep.subr.bf16.mxu0 0
      %8685 = vmatpush1.bf16.msra.mxu0 %v8229
      %8686 = vmatprep.subr.bf16.mxu0 0
      %8687 = vmatpush1.bf16.msra.mxu0 %v8230
      %8688 = vmatprep.subr.bf16.mxu0 0
      %8689 = vmatpush1.bf16.msra.mxu0 %v8231
      %8690 = vmatprep.subr.bf16.mxu0 0
      %8691 = vmatpush1.bf16.msra.mxu0 %v8232
      %8692 = vmatprep.subr.bf16.mxu0 0
      %8693 = vmatpush1.bf16.msra.mxu0 %v8233
      %8694 = vmatprep.subr.bf16.mxu0 0
      %8695 = vmatpush1.bf16.msra.mxu0 %v8234
      %8696 = vmatprep.subr.bf16.mxu0 0
      %8697 = vmatpush1.bf16.msra.mxu0 %v8235
      %8698 = vmatprep.subr.bf16.mxu0 0
      %8699 = vmatpush1.bf16.msra.mxu0 %v8236
      %8700 = vmatprep.subr.bf16.mxu0 0
      %8701 = vmatpush1.bf16.msra.mxu0 %v8237
      %8702 = vmatprep.mubr.bf16.mxu0 %v7328
      %8703 = vmatmul.mubr.bf16.gmra.mrb[0].mxu0 %v7327
      %v8704 = vpop.f32.mrb[0].mxu0
      %v8705 = vadd.f32 %v8641, %v8704
      %v8706 = vpop.f32.mrb[0].mxu0
      %v8707 = vpop.f32.mrb[0].mxu0
      %v8708 = vadd.f32 %v8644, %v8707
      %v8709 = vpop.f32.mrb[0].mxu0
      %8710 = vmatprep.mubr.bf16.mxu0 %v7344
      %8711 = vmatmul.mubr.bf16.gmra.mrb[0].mxu0 %v7343
      %v8712 = vpop.f32.mrb[0].mxu0
      %v8713 = vadd.f32 %v8649, %v8712
      %v8714 = vpop.f32.mrb[0].mxu0
      %v8715 = vpop.f32.mrb[0].mxu0
      %v8716 = vadd.f32 %v8652, %v8715
      %v8717 = vpop.f32.mrb[0].mxu0
      %8718 = vmatprep.mubr.bf16.mxu0 %v7360
      %8719 = vmatmul.mubr.bf16.gmra.mrb[0].mxu0 %v7359
      %v8720 = vpop.f32.mrb[0].mxu0
      %v8721 = vadd.f32 %v8657, %v8720
      %v8722 = vpop.f32.mrb[0].mxu0
      %v8723 = vpop.f32.mrb[0].mxu0
      %v8724 = vadd.f32 %v8660, %v8723
      %v8725 = vpop.f32.mrb[0].mxu0
      %8726 = vmatprep.mubr.bf16.mxu0 %v7376
      %8727 = vmatmul.mubr.bf16.gmra.mrb[0].mxu0 %v7375
      %v8728 = vpop.f32.mrb[0].mxu0
      %v8729 = vadd.f32 %v8665, %v8728
      %v8730 = vpop.f32.mrb[0].mxu0
      %v8731 = vpop.f32.mrb[0].mxu0
      %v8732 = vpop.f32.mrb[0].mxu0
      %8733 = vdwg.mxu0
      %8734 = vmatprep.subr.bf16.mxu0 0
      %8735 = vmatpush1.bf16.msra.mxu0 %v8238
      %8736 = vmatprep.subr.bf16.mxu0 0
      %8737 = vmatpush1.bf16.msra.mxu0 %v8239
      %8738 = vmatprep.subr.bf16.mxu0 0
      %8739 = vmatpush1.bf16.msra.mxu0 %v8240
      %8740 = vmatprep.subr.bf16.mxu0 0
      %8741 = vmatpush1.bf16.msra.mxu0 %v8241
      %8742 = vmatprep.subr.bf16.mxu0 0
      %8743 = vmatpush1.bf16.msra.mxu0 %v8242
      %8744 = vmatprep.subr.bf16.mxu0 0
      %8745 = vmatpush1.bf16.msra.mxu0 %v8243
      %8746 = vmatprep.subr.bf16.mxu0 0
      %8747 = vmatpush1.bf16.msra.mxu0 %v8244
      %8748 = vmatprep.subr.bf16.mxu0 0
      %8749 = vmatpush1.bf16.msra.mxu0 %v8245
      %8750 = vmatprep.subr.bf16.mxu0 0
      %8751 = vmatpush1.bf16.msra.mxu0 %v8246
      %8752 = vmatprep.subr.bf16.mxu0 0
      %8753 = vmatpush1.bf16.msra.mxu0 %v8247
      %8754 = vmatprep.subr.bf16.mxu0 0
      %8755 = vmatpush1.bf16.msra.mxu0 %v8248
      %8756 = vmatprep.subr.bf16.mxu0 0
      %8757 = vmatpush1.bf16.msra.mxu0 %v8249
      %8758 = vmatprep.subr.bf16.mxu0 0
      %8759 = vmatpush1.bf16.msra.mxu0 %v8250
      %8760 = vmatprep.subr.bf16.mxu0 0
      %8761 = vmatpush1.bf16.msra.mxu0 %v8251
      %8762 = vmatprep.subr.bf16.mxu0 0
      %8763 = vmatpush1.bf16.msra.mxu0 %v8252
      %8764 = vmatprep.subr.bf16.mxu0 0
      %8765 = vmatpush1.bf16.msra.mxu0 %v8253
      %8766 = vmatprep.mubr.bf16.mxu0 %v7330
      %8767 = vmatmul.mubr.bf16.gmra.mrb[0].mxu0 %v7329
      %v8768 = vpop.f32.mrb[0].mxu0
      %v8769 = vadd.f32 %v8705, %v8768
      %v8770 = vpop.f32.mrb[0].mxu0
      %v8771 = vpop.f32.mrb[0].mxu0
      %v8772 = vadd.f32 %v8708, %v8771
      %v8773 = vpop.f32.mrb[0].mxu0
      %8774 = vmatprep.mubr.bf16.mxu0 %v7346
      %8775 = vmatmul.mubr.bf16.gmra.mrb[0].mxu0 %v7345
      %v8776 = vpop.f32.mrb[0].mxu0
      %v8777 = vadd.f32 %v8713, %v8776
      %v8778 = vpop.f32.mrb[0].mxu0
      %v8779 = vpop.f32.mrb[0].mxu0
      %v8780 = vadd.f32 %v8716, %v8779
      %v8781 = vpop.f32.mrb[0].mxu0
      %8782 = vmatprep.mubr.bf16.mxu0 %v7362
      %8783 = vmatmul.mubr.bf16.gmra.mrb[0].mxu0 %v7361
      %v8784 = vpop.f32.mrb[0].mxu0
      %v8785 = vadd.f32 %v8721, %v8784
      %v8786 = vpop.f32.mrb[0].mxu0
      %v8787 = vpop.f32.mrb[0].mxu0
      %v8788 = vadd.f32 %v8724, %v8787
      %v8789 = vpop.f32.mrb[0].mxu0
      %8790 = vmatprep.mubr.bf16.mxu0 %v7378
      %8791 = vmatmul.mubr.bf16.gmra.mrb[0].mxu0 %v7377
      %v8792 = vpop.f32.mrb[0].mxu0
      %v8793 = vadd.f32 %v8729, %v8792
      %v8794 = vpop.f32.mrb[0].mxu0
      %v8795 = vpop.f32.mrb[0].mxu0
      %v8796 = vpop.f32.mrb[0].mxu0
      %8797 = vdwg.mxu0
      %8798 = vmatprep.subr.bf16.mxu0 0
      %8799 = vmatpush1.bf16.msra.mxu0 %v8254
      %8800 = vmatprep.subr.bf16.mxu0 0
      %8801 = vmatpush1.bf16.msra.mxu0 %v8255
      %8802 = vmatprep.subr.bf16.mxu0 0
      %8803 = vmatpush1.bf16.msra.mxu0 %v8256
      %8804 = vmatprep.subr.bf16.mxu0 0
      %8805 = vmatpush1.bf16.msra.mxu0 %v8257
      %8806 = vmatprep.subr.bf16.mxu0 0
      %8807 = vmatpush1.bf16.msra.mxu0 %v8258
      %8808 = vmatprep.subr.bf16.mxu0 0
      %8809 = vmatpush1.bf16.msra.mxu0 %v8259
      %8810 = vmatprep.subr.bf16.mxu0 0
      %8811 = vmatpush1.bf16.msra.mxu0 %v8260
      %8812 = vmatprep.subr.bf16.mxu0 0
      %8813 = vmatpush1.bf16.msra.mxu0 %v8261
      %8814 = vmatprep.subr.bf16.mxu0 0
      %8815 = vmatpush1.bf16.msra.mxu0 %v8262
      %8816 = vmatprep.subr.bf16.mxu0 0
      %8817 = vmatpush1.bf16.msra.mxu0 %v8263
      %8818 = vmatprep.subr.bf16.mxu0 0
      %8819 = vmatpush1.bf16.msra.mxu0 %v8264
      %8820 = vmatprep.subr.bf16.mxu0 0
      %8821 = vmatpush1.bf16.msra.mxu0 %v8265
      %8822 = vmatprep.subr.bf16.mxu0 0
      %8823 = vmatpush1.bf16.msra.mxu0 %v8266
      %8824 = vmatprep.subr.bf16.mxu0 0
      %8825 = vmatpush1.bf16.msra.mxu0 %v8267
      %8826 = vmatprep.subr.bf16.mxu0 0
      %8827 = vmatpush1.bf16.msra.mxu0 %v8268
      %8828 = vmatprep.subr.bf16.mxu0 0
      %8829 = vmatpush1.bf16.msra.mxu0 %v8269
      %8830 = vmatprep.mubr.bf16.mxu0 %v7332
      %8831 = vmatmul.mubr.bf16.gmra.mrb[0].mxu0 %v7331
      %v8832 = vpop.f32.mrb[0].mxu0
      %v8833 = vadd.f32 %v8769, %v8832
      %v8834 = vpop.f32.mrb[0].mxu0
      %v8835 = vpop.f32.mrb[0].mxu0
      %v8836 = vadd.f32 %v8772, %v8835
      %v8837 = vpop.f32.mrb[0].mxu0
      %8838 = vmatprep.mubr.bf16.mxu0 %v7348
      %8839 = vmatmul.mubr.bf16.gmra.mrb[0].mxu0 %v7347
      %v8840 = vpop.f32.mrb[0].mxu0
      %v8841 = vadd.f32 %v8777, %v8840
      %v8842 = vpop.f32.mrb[0].mxu0
      %v8843 = vpop.f32.mrb[0].mxu0
      %v8844 = vadd.f32 %v8780, %v8843
      %v8845 = vpop.f32.mrb[0].mxu0
      %8846 = vmatprep.mubr.bf16.mxu0 %v7364
      %8847 = vmatmul.mubr.bf16.gmra.mrb[0].mxu0 %v7363
      %v8848 = vpop.f32.mrb[0].mxu0
      %v8849 = vadd.f32 %v8785, %v8848
      %v8850 = vpop.f32.mrb[0].mxu0
      %v8851 = vpop.f32.mrb[0].mxu0
      %v8852 = vadd.f32 %v8788, %v8851
      %v8853 = vpop.f32.mrb[0].mxu0
      %8854 = vmatprep.mubr.bf16.mxu0 %v7380
      %8855 = vmatmul.mubr.bf16.gmra.mrb[0].mxu0 %v7379
      %v8856 = vpop.f32.mrb[0].mxu0
      %v8857 = vadd.f32 %v8793, %v8856
      %v8858 = vpop.f32.mrb[0].mxu0
      %v8859 = vpop.f32.mrb[0].mxu0
      %v8860 = vpop.f32.mrb[0].mxu0
      %8861 = vdwg.mxu0
      %8862 = vmatprep.subr.bf16.mxu0 0
      %8863 = vmatpush1.bf16.msra.mxu0 %v8270
      %8864 = vmatprep.subr.bf16.mxu0 0
      %8865 = vmatpush1.bf16.msra.mxu0 %v8271
      %8866 = vmatprep.subr.bf16.mxu0 0
      %8867 = vmatpush1.bf16.msra.mxu0 %v8272
      %8868 = vmatprep.subr.bf16.mxu0 0
      %8869 = vmatpush1.bf16.msra.mxu0 %v8273
      %8870 = vmatprep.subr.bf16.mxu0 0
      %8871 = vmatpush1.bf16.msra.mxu0 %v8274
      %8872 = vmatprep.subr.bf16.mxu0 0
      %8873 = vmatpush1.bf16.msra.mxu0 %v8275
      %8874 = vmatprep.subr.bf16.mxu0 0
      %8875 = vmatpush1.bf16.msra.mxu0 %v8276
      %8876 = vmatprep.subr.bf16.mxu0 0
      %8877 = vmatpush1.bf16.msra.mxu0 %v8277
      %8878 = vmatprep.subr.bf16.mxu0 0
      %8879 = vmatpush1.bf16.msra.mxu0 %v8278
      %8880 = vmatprep.subr.bf16.mxu0 0
      %8881 = vmatpush1.bf16.msra.mxu0 %v8279
      %8882 = vmatprep.subr.bf16.mxu0 0
      %8883 = vmatpush1.bf16.msra.mxu0 %v8280
      %8884 = vmatprep.subr.bf16.mxu0 0
      %8885 = vmatpush1.bf16.msra.mxu0 %v8281
      %8886 = vmatprep.subr.bf16.mxu0 0
      %8887 = vmatpush1.bf16.msra.mxu0 %v8282
      %8888 = vmatprep.subr.bf16.mxu0 0
      %8889 = vmatpush1.bf16.msra.mxu0 %v8283
      %8890 = vmatprep.subr.bf16.mxu0 0
      %8891 = vmatpush1.bf16.msra.mxu0 %v8284
      %8892 = vmatprep.subr.bf16.mxu0 0
      %8893 = vmatpush1.bf16.msra.mxu0 %v8285
      %8894 = vmatprep.mubr.bf16.mxu0 %v7334
      %8895 = vmatmul.mubr.bf16.gmra.mrb[0].mxu0 %v7333
      %v8896 = vpop.f32.mrb[0].mxu0
      %v8897 = vadd.f32 %v8833, %v8896
      %v8898 = vpop.f32.mrb[0].mxu0
      %v8899 = vpop.f32.mrb[0].mxu0
      %v8900 = vadd.f32 %v8836, %v8899
      %v8901 = vpop.f32.mrb[0].mxu0
      %8902 = vmatprep.mubr.bf16.mxu0 %v7350
      %8903 = vmatmul.mubr.bf16.gmra.mrb[0].mxu0 %v7349
      %v8904 = vpop.f32.mrb[0].mxu0
      %v8905 = vadd.f32 %v8841, %v8904
      %v8906 = vpop.f32.mrb[0].mxu0
      %v8907 = vpop.f32.mrb[0].mxu0
      %v8908 = vadd.f32 %v8844, %v8907
      %v8909 = vpop.f32.mrb[0].mxu0
      %8910 = vmatprep.mubr.bf16.mxu0 %v7366
      %8911 = vmatmul.mubr.bf16.gmra.mrb[0].mxu0 %v7365
      %v8912 = vpop.f32.mrb[0].mxu0
      %v8913 = vadd.f32 %v8849, %v8912
      %v8914 = vpop.f32.mrb[0].mxu0
      %v8915 = vpop.f32.mrb[0].mxu0
      %v8916 = vadd.f32 %v8852, %v8915
      %v8917 = vpop.f32.mrb[0].mxu0
      %8918 = vmatprep.mubr.bf16.mxu0 %v7382
      %8919 = vmatmul.mubr.bf16.gmra.mrb[0].mxu0 %v7381
      %v8920 = vpop.f32.mrb[0].mxu0
      %v8921 = vadd.f32 %v8857, %v8920
      %v8922 = vpop.f32.mrb[0].mxu0
      %v8923 = vpop.f32.mrb[0].mxu0
      %v8924 = vpop.f32.mrb[0].mxu0
      %8925 = vdwg.mxu0
      %v8926 = vadd.f32 %v6172, %v8897
      %v8927 = vadd.f32 %v6173, %v8900
      %v8928 = vadd.f32 %v6174, %v8905
      %v8929 = vadd.f32 %v6175, %v8908
      %v8930 = vadd.f32 %v6176, %v8913
      %v8931 = vadd.f32 %v6177, %v8916
      %v8932 = vadd.f32 %v6178, %v8921
      %8933 = vst.msk [vmem:[#allocation2] sm:$0xff] %vm1518, %v8926
      %8934 = vst.msk [vmem:[#allocation2 + $0x8] sm:$0xff] %vm1518, %v8927
      %8935 = vst.msk [vmem:[#allocation2 + $0x10] sm:$0xff] %vm1518, %v8928
      %8936 = vst.msk [vmem:[#allocation2 + $0x18] sm:$0xff] %vm1518, %v8929
      %8937 = vst.msk [vmem:[#allocation2 + $0x20] sm:$0xff] %vm1518, %v8930
      %8938 = vst.msk [vmem:[#allocation2 + $0x28] sm:$0xff] %vm1518, %v8931
      %8939 = vst.msk [vmem:[#allocation2 + $0x30] sm:$0xff] %vm1518, %v8932
      %p8940 = scmp.eq.s32.totalorder %s76, 5
      // Predicated region
      $region153: #{tf_forward.1} parent=147 // pred_check
        %p8941 = pneg %p8940
      $region154: #{tf_forward.1} parent=147 // pred_check_branch
        %8943 = sbr.rel (%p8941) target = $region156
      $region155: #{tf_forward.1} parent=147 // pred_region
        %v8944 = vld [vmem:[%s45] sm:$0x1]
        %v8945 = vld [vmem:[%s47] sm:$0x1]
        %v8946 = vsel %vm1518, %v8926, 0.0
        %8947 = vadd.xlane.f32.xlu0 %v8946
        %v8948 = vpop.xlane.xlu0 %8947
        %v8949 = vsel %vm1518, %v8927, 0.0
        %8950 = vadd.xlane.f32.xlu0 %v8949
        %v8951 = vpop.xlane.xlu0 %8950
        %v8952 = vsel %vm1518, %v8928, 0.0
        %8953 = vadd.xlane.f32.xlu0 %v8952
        %v8954 = vpop.xlane.xlu0 %8953
        %v8955 = vsel %vm1518, %v8929, 0.0
        %8956 = vadd.xlane.f32.xlu0 %v8955
        %v8957 = vpop.xlane.xlu0 %8956
        %v8958 = vsel %vm1518, %v8930, 0.0
        %8959 = vadd.xlane.f32.xlu0 %v8958
        %v8960 = vpop.xlane.xlu0 %8959
        %v8961 = vsel %vm1518, %v8931, 0.0
        %8962 = vadd.xlane.f32.xlu0 %v8961
        %v8963 = vpop.xlane.xlu0 %8962
        %v8964 = vsel %vm1518, %v8932, 0.0
        %8965 = vadd.xlane.f32.xlu0 %v8964
        %v8966 = vpop.xlane.xlu0 %8965
        %v8967 = vmul.f32 %v8948, %v1540
        %v8968 = vmul.f32 %v8951, %v1540
        %v8969 = vmul.f32 %v8954, %v1540
        %v8970 = vmul.f32 %v8957, %v1540
        %v8971 = vmul.f32 %v8960, %v1540
        %v8972 = vmul.f32 %v8963, %v1540
        %v8973 = vmul.f32 %v8966, %v1540
        %v8974 = vsub.f32 %v8926, %v8967
        %v8975 = vsub.f32 %v8927, %v8968
        %v8976 = vsub.f32 %v8928, %v8969
        %v8977 = vsub.f32 %v8929, %v8970
        %v8978 = vsub.f32 %v8930, %v8971
        %v8979 = vsub.f32 %v8931, %v8972
        %v8980 = vsub.f32 %v8932, %v8973
        %v8981 = vmul.f32 %v8974, %v8974
        %v8982 = vmul.f32 %v8975, %v8975
        %v8983 = vmul.f32 %v8976, %v8976
        %v8984 = vmul.f32 %v8977, %v8977
        %v8985 = vmul.f32 %v8978, %v8978
        %v8986 = vmul.f32 %v8979, %v8979
        %v8987 = vmul.f32 %v8980, %v8980
        %v8988 = vsel %vm1518, %v8981, 0.0
        %8989 = vadd.xlane.f32.xlu0 %v8988
        %v8990 = vpop.xlane.xlu0 %8989
        %v8991 = vsel %vm1518, %v8982, 0.0
        %8992 = vadd.xlane.f32.xlu0 %v8991
        %v8993 = vpop.xlane.xlu0 %8992
        %v8994 = vsel %vm1518, %v8983, 0.0
        %8995 = vadd.xlane.f32.xlu0 %v8994
        %v8996 = vpop.xlane.xlu0 %8995
        %v8997 = vsel %vm1518, %v8984, 0.0
        %8998 = vadd.xlane.f32.xlu0 %v8997
        %v8999 = vpop.xlane.xlu0 %8998
        %v9000 = vsel %vm1518, %v8985, 0.0
        %9001 = vadd.xlane.f32.xlu0 %v9000
        %v9002 = vpop.xlane.xlu0 %9001
        %v9003 = vsel %vm1518, %v8986, 0.0
        %9004 = vadd.xlane.f32.xlu0 %v9003
        %v9005 = vpop.xlane.xlu0 %9004
        %v9006 = vsel %vm1518, %v8987, 0.0
        %9007 = vadd.xlane.f32.xlu0 %v9006
        %v9008 = vpop.xlane.xlu0 %9007
        %v9009 = vmul.f32 %v8990, 0.032258064
        %v9010 = vmul.f32 %v8993, 0.032258064
        %v9011 = vmul.f32 %v8996, 0.032258064
        %v9012 = vmul.f32 %v8999, 0.032258064
        %v9013 = vmul.f32 %v9002, 0.032258064
        %v9014 = vmul.f32 %v9005, 0.032258064
        %v9015 = vmul.f32 %v9008, 0.032258064
        %v9016 = vrsqrt.pop %v9009
        %v9017 = vmul.f32 %v9009, %v9016
        %vm9018 = vcmp.eq.f32.partialorder %v9009, inf
        %v9019 = vsel %vm9018, %v9009, %v9017
        %vm9020 = vcmp.eq.f32.partialorder %v9009, 0.0
        %v9021 = vand.u32 %v9009, 2147483648
        %v9022 = vsel %vm9020, %v9021, %v9019
        %v9023 = vrsqrt.pop %v9010
        %v9024 = vmul.f32 %v9010, %v9023
        %vm9025 = vcmp.eq.f32.partialorder %v9010, inf
        %v9026 = vsel %vm9025, %v9010, %v9024
        %vm9027 = vcmp.eq.f32.partialorder %v9010, 0.0
        %v9028 = vand.u32 %v9010, 2147483648
        %v9029 = vsel %vm9027, %v9028, %v9026
        %v9030 = vrsqrt.pop %v9011
        %v9031 = vmul.f32 %v9011, %v9030
        %vm9032 = vcmp.eq.f32.partialorder %v9011, inf
        %v9033 = vsel %vm9032, %v9011, %v9031
        %vm9034 = vcmp.eq.f32.partialorder %v9011, 0.0
        %v9035 = vand.u32 %v9011, 2147483648
        %v9036 = vsel %vm9034, %v9035, %v9033
        %v9037 = vrsqrt.pop %v9012
        %v9038 = vmul.f32 %v9012, %v9037
        %vm9039 = vcmp.eq.f32.partialorder %v9012, inf
        %v9040 = vsel %vm9039, %v9012, %v9038
        %vm9041 = vcmp.eq.f32.partialorder %v9012, 0.0
        %v9042 = vand.u32 %v9012, 2147483648
        %v9043 = vsel %vm9041, %v9042, %v9040
        %v9044 = vrsqrt.pop %v9013
        %v9045 = vmul.f32 %v9013, %v9044
        %vm9046 = vcmp.eq.f32.partialorder %v9013, inf
        %v9047 = vsel %vm9046, %v9013, %v9045
        %vm9048 = vcmp.eq.f32.partialorder %v9013, 0.0
        %v9049 = vand.u32 %v9013, 2147483648
        %v9050 = vsel %vm9048, %v9049, %v9047
        %v9051 = vrsqrt.pop %v9014
        %v9052 = vmul.f32 %v9014, %v9051
        %vm9053 = vcmp.eq.f32.partialorder %v9014, inf
        %v9054 = vsel %vm9053, %v9014, %v9052
        %vm9055 = vcmp.eq.f32.partialorder %v9014, 0.0
        %v9056 = vand.u32 %v9014, 2147483648
        %v9057 = vsel %vm9055, %v9056, %v9054
        %v9058 = vrsqrt.pop %v9015
        %v9059 = vmul.f32 %v9015, %v9058
        %vm9060 = vcmp.eq.f32.partialorder %v9015, inf
        %v9061 = vsel %vm9060, %v9015, %v9059
        %vm9062 = vcmp.eq.f32.partialorder %v9015, 0.0
        %v9063 = vand.u32 %v9015, 2147483648
        %v9064 = vsel %vm9062, %v9063, %v9061
        %v9065 = vadd.f32 %v9022, 1e-06
        %v9066 = vadd.f32 %v9029, 1e-06
        %v9067 = vadd.f32 %v9036, 1e-06
        %v9068 = vadd.f32 %v9043, 1e-06
        %v9069 = vadd.f32 %v9050, 1e-06
        %v9070 = vadd.f32 %v9057, 1e-06
        %v9071 = vadd.f32 %v9064, 1e-06
        %v9072 = vrcp.pop %v9065
        %v9073 = vrcp.pop %v9066
        %v9074 = vrcp.pop %v9067
        %v9075 = vrcp.pop %v9068
        %v9076 = vrcp.pop %v9069
        %v9077 = vrcp.pop %v9070
        %v9078 = vrcp.pop %v9071
        %v9079 = vmul.f32 %v8974, %v9072
        %v9080 = vmul.f32 %v8975, %v9073
        %v9081 = vmul.f32 %v8976, %v9074
        %v9082 = vmul.f32 %v8977, %v9075
        %v9083 = vmul.f32 %v8978, %v9076
        %v9084 = vmul.f32 %v8979, %v9077
        %v9085 = vmul.f32 %v8980, %v9078
        %v9087 = vlaneseq
        %v9088 = vshrl.u32 %v9087, 7
        %v9089 = vsub.s32 0, %v9088
        %v9090 = vrot.slane %v8944, %v9089
        %v9092 = vmul.f32 %v9090, %v9079
        %v9093 = vmul.f32 %v9090, %v9080
        %v9094 = vmul.f32 %v9090, %v9081
        %v9095 = vmul.f32 %v9090, %v9082
        %v9096 = vmul.f32 %v9090, %v9083
        %v9097 = vmul.f32 %v9090, %v9084
        %v9098 = vmul.f32 %v9090, %v9085
        %v9100 = vlaneseq
        %v9101 = vshrl.u32 %v9100, 7
        %v9102 = vsub.s32 0, %v9101
        %v9103 = vrot.slane %v8945, %v9102
        %v9105 = vadd.f32 %v9092, %v9103
        %v9106 = vadd.f32 %v9093, %v9103
        %v9107 = vadd.f32 %v9094, %v9103
        %v9108 = vadd.f32 %v9095, %v9103
        %v9109 = vadd.f32 %v9096, %v9103
        %v9110 = vadd.f32 %v9097, %v9103
        %v9111 = vadd.f32 %v9098, %v9103
        %v9112 = vld [vmem:[%s49] sm:$0xff]
        %v9113 = vld [vmem:[%s49 + $0x8] sm:$0xff]
        %v9114 = vld [vmem:[%s49 + $0x10] sm:$0xff]
        %v9115 = vld [vmem:[%s49 + $0x18] sm:$0xff]
        %v9116 = vld [vmem:[%s51] sm:$0x1]
        %v9118 = vlaneseq
        %v9119 = vshrl.u32 %v9118, 7
        %v9120 = vsub.s32 0, %v9119
        %v9121 = vrot.slane %v9116, %v9120
        %v9124 = vsel %vm1518, %v9105, 0
        %v9127 = vsel %vm1518, %v9106, 0
        %v9130 = vsel %vm1518, %v9107, 0
        %v9133 = vsel %vm1518, %v9108, 0
        %v9136 = vsel %vm1518, %v9109, 0
        %v9139 = vsel %vm1518, %v9110, 0
        %v9142 = vsel %vm1518, %v9111, 0
        %9144 = vmatprep.subr.mxu0 0.0
        %9145 = vmatpush1.msra.mxu0 %v9112
        %9146 = vmatprep.subr.mxu0 0.0
        %9147 = vmatpush1.msra.mxu0 %v9113
        %9148 = vmatprep.subr.mxu0 0.0
        %9149 = vmatpush1.msra.mxu0 %v9114
        %9150 = vmatprep.subr.mxu0 0.0
        %9151 = vmatpush1.msra.mxu0 %v9115
        %9152 = vmatprep.subr.mxu0 0.0
        %9153 = vmatpush1.msra.mxu0 0.0
        %9154 = vmatprep.subr.mxu0 0.0
        %9155 = vmatpush1.msra.mxu0 0.0
        %9156 = vmatprep.subr.mxu0 0.0
        %9157 = vmatpush1.msra.mxu0 0.0
        %9158 = vmatprep.subr.mxu0 0.0
        %9159 = vmatpush1.msra.mxu0 0.0
        %9160 = vmatprep.subr.mxu0 0.0
        %9161 = vmatpush1.msra.mxu0 0.0
        %9162 = vmatprep.subr.mxu0 0.0
        %9163 = vmatpush1.msra.mxu0 0.0
        %9164 = vmatprep.subr.mxu0 0.0
        %9165 = vmatpush1.msra.mxu0 0.0
        %9166 = vmatprep.subr.mxu0 0.0
        %9167 = vmatpush1.msra.mxu0 0.0
        %9168 = vmatprep.subr.mxu0 0.0
        %9169 = vmatpush1.msra.mxu0 0.0
        %9170 = vmatprep.subr.mxu0 0.0
        %9171 = vmatpush1.msra.mxu0 0.0
        %9172 = vmatprep.subr.mxu0 0.0
        %9173 = vmatpush1.msra.mxu0 0.0
        %9174 = vmatprep.subr.mxu0 0.0
        %9175 = vmatpush1.msra.mxu0 0.0
        %9176 = vmatprep.subr.mxu0 0.0
        %9177 = vmatpush1.msra.mxu0 0.0
        %9178 = vmatprep.subr.mxu0 0.0
        %9179 = vmatpush1.msra.mxu0 0.0
        %9180 = vmatprep.subr.mxu0 0.0
        %9181 = vmatpush1.msra.mxu0 0.0
        %9182 = vmatprep.subr.mxu0 0.0
        %9183 = vmatpush1.msra.mxu0 0.0
        %9184 = vmatprep.subr.mxu0 0.0
        %9185 = vmatpush1.msra.mxu0 0.0
        %9186 = vmatprep.subr.mxu0 0.0
        %9187 = vmatpush1.msra.mxu0 0.0
        %9188 = vmatprep.subr.mxu0 0.0
        %9189 = vmatpush1.msra.mxu0 0.0
        %9190 = vmatprep.subr.mxu0 0.0
        %9191 = vmatpush1.msra.mxu0 0.0
        %9192 = vmatprep.subr.mxu0 0.0
        %9193 = vmatpush1.msra.mxu0 0.0
        %9194 = vmatprep.subr.mxu0 0.0
        %9195 = vmatpush1.msra.mxu0 0.0
        %9196 = vmatprep.subr.mxu0 0.0
        %9197 = vmatpush1.msra.mxu0 0.0
        %9198 = vmatprep.subr.mxu0 0.0
        %9199 = vmatpush1.msra.mxu0 0.0
        %9200 = vmatprep.subr.mxu0 0.0
        %9201 = vmatpush1.msra.mxu0 0.0
        %9202 = vmatprep.subr.mxu0 0.0
        %9203 = vmatpush1.msra.mxu0 0.0
        %9204 = vmatprep.subr.mxu0 0.0
        %9205 = vmatpush1.msra.mxu0 0.0
        %9206 = vmatprep.subr.mxu0 0.0
        %9207 = vmatpush1.msra.mxu0 0.0
        %9208 = vmatprep.mubr.f32.mxu0 0.0
        %9209 = vmatmul.mubr.f32.gmra.mrb[0].mxu0 %v9124
        %v9210 = vpop.f32.mrb[0].mxu0
        %v9211 = vadd.f32 %v9121, %v9210
        %v9212 = vpop.f32.mrb[0].mxu0
        %9213 = vmatprep.mubr.f32.mxu0 0.0
        %9214 = vmatmul.mubr.f32.gmra.mrb[0].mxu0 %v9127
        %v9215 = vpop.f32.mrb[0].mxu0
        %v9216 = vadd.f32 %v9121, %v9215
        %v9217 = vpop.f32.mrb[0].mxu0
        %9218 = vmatprep.mubr.f32.mxu0 0.0
        %9219 = vmatmul.mubr.f32.gmra.mrb[0].mxu0 %v9130
        %v9220 = vpop.f32.mrb[0].mxu0
        %v9221 = vadd.f32 %v9121, %v9220
        %v9222 = vpop.f32.mrb[0].mxu0
        %9223 = vmatprep.mubr.f32.mxu0 0.0
        %9224 = vmatmul.mubr.f32.gmra.mrb[0].mxu0 %v9133
        %v9225 = vpop.f32.mrb[0].mxu0
        %v9226 = vadd.f32 %v9121, %v9225
        %v9227 = vpop.f32.mrb[0].mxu0
        %9228 = vmatprep.mubr.f32.mxu0 0.0
        %9229 = vmatmul.mubr.f32.gmra.mrb[0].mxu0 %v9136
        %v9230 = vpop.f32.mrb[0].mxu0
        %v9231 = vadd.f32 %v9121, %v9230
        %v9232 = vpop.f32.mrb[0].mxu0
        %9233 = vmatprep.mubr.f32.mxu0 0.0
        %9234 = vmatmul.mubr.f32.gmra.mrb[0].mxu0 %v9139
        %v9235 = vpop.f32.mrb[0].mxu0
        %v9236 = vadd.f32 %v9121, %v9235
        %v9237 = vpop.f32.mrb[0].mxu0
        %9238 = vmatprep.mubr.f32.mxu0 0.0
        %9239 = vmatmul.mubr.f32.gmra.mrb[0].mxu0 %v9142
        %v9240 = vpop.f32.mrb[0].mxu0
        %v9241 = vadd.f32 %v9121, %v9240
        %v9242 = vpop.f32.mrb[0].mxu0
        %9243 = vdwg.mxu0
        %v9244 = vmax.f32 %v9211, 0.0
        %v9245 = vmax.f32 %v9216, 0.0
        %v9246 = vmax.f32 %v9221, 0.0
        %v9247 = vmax.f32 %v9226, 0.0
        %v9248 = vmax.f32 %v9231, 0.0
        %v9249 = vmax.f32 %v9236, 0.0
        %v9250 = vmax.f32 %v9241, 0.0
        %v9251 = vld [vmem:[%s53] sm:$0xff]
        %v9252 = vld [vmem:[%s53 + $0x8] sm:$0xff]
        %v9253 = vld [vmem:[%s55] sm:$0x1]
        %v9255 = vlaneseq
        %v9256 = vshrl.u32 %v9255, 7
        %v9257 = vsub.s32 0, %v9256
        %v9258 = vrot.slane %v9253, %v9257
        %vm9260 = vcmask 130048
        %v9262 = vsel %vm9260, %v9244, 0
        %v9265 = vsel %vm9260, %v9245, 0
        %v9268 = vsel %vm9260, %v9246, 0
        %v9271 = vsel %vm9260, %v9247, 0
        %v9274 = vsel %vm9260, %v9248, 0
        %v9277 = vsel %vm9260, %v9249, 0
        %v9280 = vsel %vm9260, %v9250, 0
        %9282 = vmatprep.subr.mxu0 0.0
        %9283 = vmatpush1.msra.mxu0 %v9251
        %9284 = vmatprep.subr.mxu0 0.0
        %9285 = vmatpush1.msra.mxu0 %v9252
        %9286 = vmatprep.subr.mxu0 0.0
        %9287 = vmatpush1.msra.mxu0 0.0
        %9288 = vmatprep.subr.mxu0 0.0
        %9289 = vmatpush1.msra.mxu0 0.0
        %9290 = vmatprep.subr.mxu0 0.0
        %9291 = vmatpush1.msra.mxu0 0.0
        %9292 = vmatprep.subr.mxu0 0.0
        %9293 = vmatpush1.msra.mxu0 0.0
        %9294 = vmatprep.subr.mxu0 0.0
        %9295 = vmatpush1.msra.mxu0 0.0
        %9296 = vmatprep.subr.mxu0 0.0
        %9297 = vmatpush1.msra.mxu0 0.0
        %9298 = vmatprep.subr.mxu0 0.0
        %9299 = vmatpush1.msra.mxu0 0.0
        %9300 = vmatprep.subr.mxu0 0.0
        %9301 = vmatpush1.msra.mxu0 0.0
        %9302 = vmatprep.subr.mxu0 0.0
        %9303 = vmatpush1.msra.mxu0 0.0
        %9304 = vmatprep.subr.mxu0 0.0
        %9305 = vmatpush1.msra.mxu0 0.0
        %9306 = vmatprep.subr.mxu0 0.0
        %9307 = vmatpush1.msra.mxu0 0.0
        %9308 = vmatprep.subr.mxu0 0.0
        %9309 = vmatpush1.msra.mxu0 0.0
        %9310 = vmatprep.subr.mxu0 0.0
        %9311 = vmatpush1.msra.mxu0 0.0
        %9312 = vmatprep.subr.mxu0 0.0
        %9313 = vmatpush1.msra.mxu0 0.0
        %9314 = vmatprep.subr.mxu0 0.0
        %9315 = vmatpush1.msra.mxu0 0.0
        %9316 = vmatprep.subr.mxu0 0.0
        %9317 = vmatpush1.msra.mxu0 0.0
        %9318 = vmatprep.subr.mxu0 0.0
        %9319 = vmatpush1.msra.mxu0 0.0
        %9320 = vmatprep.subr.mxu0 0.0
        %9321 = vmatpush1.msra.mxu0 0.0
        %9322 = vmatprep.subr.mxu0 0.0
        %9323 = vmatpush1.msra.mxu0 0.0
        %9324 = vmatprep.subr.mxu0 0.0
        %9325 = vmatpush1.msra.mxu0 0.0
        %9326 = vmatprep.subr.mxu0 0.0
        %9327 = vmatpush1.msra.mxu0 0.0
        %9328 = vmatprep.subr.mxu0 0.0
        %9329 = vmatpush1.msra.mxu0 0.0
        %9330 = vmatprep.subr.mxu0 0.0
        %9331 = vmatpush1.msra.mxu0 0.0
        %9332 = vmatprep.subr.mxu0 0.0
        %9333 = vmatpush1.msra.mxu0 0.0
        %9334 = vmatprep.subr.mxu0 0.0
        %9335 = vmatpush1.msra.mxu0 0.0
        %9336 = vmatprep.subr.mxu0 0.0
        %9337 = vmatpush1.msra.mxu0 0.0
        %9338 = vmatprep.subr.mxu0 0.0
        %9339 = vmatpush1.msra.mxu0 0.0
        %9340 = vmatprep.subr.mxu0 0.0
        %9341 = vmatpush1.msra.mxu0 0.0
        %9342 = vmatprep.subr.mxu0 0.0
        %9343 = vmatpush1.msra.mxu0 0.0
        %9344 = vmatprep.subr.mxu0 0.0
        %9345 = vmatpush1.msra.mxu0 0.0
        %9346 = vmatprep.mubr.f32.mxu0 0.0
        %9347 = vmatmul.mubr.f32.gmra.mrb[0].mxu0 %v9262
        %v9348 = vpop.f32.mrb[0].mxu0
        %v9349 = vadd.f32 %v9258, %v9348
        %v9350 = vpop.f32.mrb[0].mxu0
        %9351 = vmatprep.mubr.f32.mxu0 0.0
        %9352 = vmatmul.mubr.f32.gmra.mrb[0].mxu0 %v9265
        %v9353 = vpop.f32.mrb[0].mxu0
        %v9354 = vadd.f32 %v9258, %v9353
        %v9355 = vpop.f32.mrb[0].mxu0
        %9356 = vmatprep.mubr.f32.mxu0 0.0
        %9357 = vmatmul.mubr.f32.gmra.mrb[0].mxu0 %v9268
        %v9358 = vpop.f32.mrb[0].mxu0
        %v9359 = vadd.f32 %v9258, %v9358
        %v9360 = vpop.f32.mrb[0].mxu0
        %9361 = vmatprep.mubr.f32.mxu0 0.0
        %9362 = vmatmul.mubr.f32.gmra.mrb[0].mxu0 %v9271
        %v9363 = vpop.f32.mrb[0].mxu0
        %v9364 = vadd.f32 %v9258, %v9363
        %v9365 = vpop.f32.mrb[0].mxu0
        %9366 = vmatprep.mubr.f32.mxu0 0.0
        %9367 = vmatmul.mubr.f32.gmra.mrb[0].mxu0 %v9274
        %v9368 = vpop.f32.mrb[0].mxu0
        %v9369 = vadd.f32 %v9258, %v9368
        %v9370 = vpop.f32.mrb[0].mxu0
        %9371 = vmatprep.mubr.f32.mxu0 0.0
        %9372 = vmatmul.mubr.f32.gmra.mrb[0].mxu0 %v9277
        %v9373 = vpop.f32.mrb[0].mxu0
        %v9374 = vadd.f32 %v9258, %v9373
        %v9375 = vpop.f32.mrb[0].mxu0
        %9376 = vmatprep.mubr.f32.mxu0 0.0
        %9377 = vmatmul.mubr.f32.gmra.mrb[0].mxu0 %v9280
        %v9378 = vpop.f32.mrb[0].mxu0
        %v9379 = vadd.f32 %v9258, %v9378
        %v9380 = vpop.f32.mrb[0].mxu0
        %9381 = vdwg.mxu0
        %v9382 = vld [vmem:[%s57] sm:$0xff]
        %v9383 = vld [vmem:[%s57 + $0x8] sm:$0xff]
        %v9384 = vld [vmem:[%s57 + $0x10] sm:$0x1f]
        %v9385 = vld [vmem:[%s59] sm:$0xff]
        %v9386 = vld [vmem:[%s59 + $0x8] sm:$0xff]
        %v9387 = vld [vmem:[%s59 + $0x10] sm:$0x1f]
        %9389 = vset.pattern.permute.xlu0 0
        %9390 = vperm.xlu0 %9389, %v9385
        %v9391 = vpop.permute.xlu0 %9390
        %9394 = vset.pattern.permute.xlu0 0
        %9395 = vperm.xlu0 %9394, %v9386
        %v9396 = vpop.permute.xlu0 %9395
        %9399 = vset.pattern.permute.xlu0 0
        %9400 = vperm.xlu0 %9399, %v9387
        %v9401 = vpop.permute.xlu0 %9400
        %vm9403 = vcmask 228352
        %v9405 = vsel %vm9403, %v9382, 0
        %v9408 = vsel %vm9403, %v9383, 0
        %v9411 = vsel %vm9403, %v9384, 0
        %v9414 = vsel %vm2826, %v9364, 0
        %9416 = vmatprep.subr.mxu0 0.0
        %9417 = vmatpush1.msra.mxu0 %v9349
        %9418 = vmatprep.subr.mxu0 0.0
        %9419 = vmatpush1.msra.mxu0 %v9354
        %9420 = vmatprep.subr.mxu0 0.0
        %9421 = vmatpush1.msra.mxu0 %v9359
        %9422 = vmatprep.subr.mxu0 0.0
        %9423 = vmatpush1.msra.mxu0 %v9414
        %9424 = vmatprep.subr.mxu0 0.0
        %9425 = vmatpush1.msra.mxu0 0.0
        %9426 = vmatprep.subr.mxu0 0.0
        %9427 = vmatpush1.msra.mxu0 0.0
        %9428 = vmatprep.subr.mxu0 0.0
        %9429 = vmatpush1.msra.mxu0 0.0
        %9430 = vmatprep.subr.mxu0 0.0
        %9431 = vmatpush1.msra.mxu0 0.0
        %9432 = vmatprep.subr.mxu0 0.0
        %9433 = vmatpush1.msra.mxu0 0.0
        %9434 = vmatprep.subr.mxu0 0.0
        %9435 = vmatpush1.msra.mxu0 0.0
        %9436 = vmatprep.subr.mxu0 0.0
        %9437 = vmatpush1.msra.mxu0 0.0
        %9438 = vmatprep.subr.mxu0 0.0
        %9439 = vmatpush1.msra.mxu0 0.0
        %9440 = vmatprep.subr.mxu0 0.0
        %9441 = vmatpush1.msra.mxu0 0.0
        %9442 = vmatprep.subr.mxu0 0.0
        %9443 = vmatpush1.msra.mxu0 0.0
        %9444 = vmatprep.subr.mxu0 0.0
        %9445 = vmatpush1.msra.mxu0 0.0
        %9446 = vmatprep.subr.mxu0 0.0
        %9447 = vmatpush1.msra.mxu0 0.0
        %9448 = vmatprep.subr.mxu0 0.0
        %9449 = vmatpush1.msra.mxu0 0.0
        %9450 = vmatprep.subr.mxu0 0.0
        %9451 = vmatpush1.msra.mxu0 0.0
        %9452 = vmatprep.subr.mxu0 0.0
        %9453 = vmatpush1.msra.mxu0 0.0
        %9454 = vmatprep.subr.mxu0 0.0
        %9455 = vmatpush1.msra.mxu0 0.0
        %9456 = vmatprep.subr.mxu0 0.0
        %9457 = vmatpush1.msra.mxu0 0.0
        %9458 = vmatprep.subr.mxu0 0.0
        %9459 = vmatpush1.msra.mxu0 0.0
        %9460 = vmatprep.subr.mxu0 0.0
        %9461 = vmatpush1.msra.mxu0 0.0
        %9462 = vmatprep.subr.mxu0 0.0
        %9463 = vmatpush1.msra.mxu0 0.0
        %9464 = vmatprep.subr.mxu0 0.0
        %9465 = vmatpush1.msra.mxu0 0.0
        %9466 = vmatprep.subr.mxu0 0.0
        %9467 = vmatpush1.msra.mxu0 0.0
        %9468 = vmatprep.subr.mxu0 0.0
        %9469 = vmatpush1.msra.mxu0 0.0
        %9470 = vmatprep.subr.mxu0 0.0
        %9471 = vmatpush1.msra.mxu0 0.0
        %9472 = vmatprep.subr.mxu0 0.0
        %9473 = vmatpush1.msra.mxu0 0.0
        %9474 = vmatprep.subr.mxu0 0.0
        %9475 = vmatpush1.msra.mxu0 0.0
        %9476 = vmatprep.subr.mxu0 0.0
        %9477 = vmatpush1.msra.mxu0 0.0
        %9478 = vmatprep.subr.mxu0 0.0
        %9479 = vmatpush1.msra.mxu0 0.0
        %9480 = vmatprep.mubr.f32.mxu0 0.0
        %9481 = vmatmul.mubr.f32.gmra.mrb[0].mxu0 %v9405
        %v9482 = vpop.f32.mrb[0].mxu0
        %v9483 = vadd.f32 %v9391, %v9482
        %v9484 = vpop.f32.mrb[0].mxu0
        %9485 = vmatprep.mubr.f32.mxu0 0.0
        %9486 = vmatmul.mubr.f32.gmra.mrb[0].mxu0 %v9408
        %v9487 = vpop.f32.mrb[0].mxu0
        %v9488 = vadd.f32 %v9396, %v9487
        %v9489 = vpop.f32.mrb[0].mxu0
        %9490 = vmatprep.mubr.f32.mxu0 0.0
        %9491 = vmatmul.mubr.f32.gmra.mrb[0].mxu0 %v9411
        %v9492 = vpop.f32.mrb[0].mxu0
        %v9493 = vadd.f32 %v9401, %v9492
        %v9494 = vpop.f32.mrb[0].mxu0
        %9495 = vdwg.mxu0
        %v9496 = vmax.f32 %v9483, 0.0
        %v9497 = vmax.f32 %v9488, 0.0
        %v9498 = vmax.f32 %v9493, 0.0
        %v9499 = vld [vmem:[%s61] sm:$0xff]
        %v9500 = vld [vmem:[%s61 + $0x8] sm:$0x3f]
        %v9501 = vld [vmem:[%s63] sm:$0xff]
        %v9502 = vld [vmem:[%s63 + $0x8] sm:$0x3f]
        %9504 = vset.pattern.permute.xlu0 0
        %9505 = vperm.xlu0 %9504, %v9501
        %v9506 = vpop.permute.xlu0 %9505
        %9509 = vset.pattern.permute.xlu0 0
        %9510 = vperm.xlu0 %9509, %v9502
        %v9511 = vpop.permute.xlu0 %9510
        %vm9513 = vcmask 171008
        %v9515 = vsel %vm9513, %v9499, 0
        %v9518 = vsel %vm9513, %v9500, 0
        %vm9520 = vcmask 1044480
        %v9522 = vsel %vm9520, %v9498, 0
        %9524 = vmatprep.subr.mxu0 0.0
        %9525 = vmatpush1.msra.mxu0 %v9496
        %9526 = vmatprep.subr.mxu0 0.0
        %9527 = vmatpush1.msra.mxu0 %v9497
        %9528 = vmatprep.subr.mxu0 0.0
        %9529 = vmatpush1.msra.mxu0 %v9522
        %9530 = vmatprep.subr.mxu0 0.0
        %9531 = vmatpush1.msra.mxu0 0.0
        %9532 = vmatprep.subr.mxu0 0.0
        %9533 = vmatpush1.msra.mxu0 0.0
        %9534 = vmatprep.subr.mxu0 0.0
        %9535 = vmatpush1.msra.mxu0 0.0
        %9536 = vmatprep.subr.mxu0 0.0
        %9537 = vmatpush1.msra.mxu0 0.0
        %9538 = vmatprep.subr.mxu0 0.0
        %9539 = vmatpush1.msra.mxu0 0.0
        %9540 = vmatprep.subr.mxu0 0.0
        %9541 = vmatpush1.msra.mxu0 0.0
        %9542 = vmatprep.subr.mxu0 0.0
        %9543 = vmatpush1.msra.mxu0 0.0
        %9544 = vmatprep.subr.mxu0 0.0
        %9545 = vmatpush1.msra.mxu0 0.0
        %9546 = vmatprep.subr.mxu0 0.0
        %9547 = vmatpush1.msra.mxu0 0.0
        %9548 = vmatprep.subr.mxu0 0.0
        %9549 = vmatpush1.msra.mxu0 0.0
        %9550 = vmatprep.subr.mxu0 0.0
        %9551 = vmatpush1.msra.mxu0 0.0
        %9552 = vmatprep.subr.mxu0 0.0
        %9553 = vmatpush1.msra.mxu0 0.0
        %9554 = vmatprep.subr.mxu0 0.0
        %9555 = vmatpush1.msra.mxu0 0.0
        %9556 = vmatprep.subr.mxu0 0.0
        %9557 = vmatpush1.msra.mxu0 0.0
        %9558 = vmatprep.subr.mxu0 0.0
        %9559 = vmatpush1.msra.mxu0 0.0
        %9560 = vmatprep.subr.mxu0 0.0
        %9561 = vmatpush1.msra.mxu0 0.0
        %9562 = vmatprep.subr.mxu0 0.0
        %9563 = vmatpush1.msra.mxu0 0.0
        %9564 = vmatprep.subr.mxu0 0.0
        %9565 = vmatpush1.msra.mxu0 0.0
        %9566 = vmatprep.subr.mxu0 0.0
        %9567 = vmatpush1.msra.mxu0 0.0
        %9568 = vmatprep.subr.mxu0 0.0
        %9569 = vmatpush1.msra.mxu0 0.0
        %9570 = vmatprep.subr.mxu0 0.0
        %9571 = vmatpush1.msra.mxu0 0.0
        %9572 = vmatprep.subr.mxu0 0.0
        %9573 = vmatpush1.msra.mxu0 0.0
        %9574 = vmatprep.subr.mxu0 0.0
        %9575 = vmatpush1.msra.mxu0 0.0
        %9576 = vmatprep.subr.mxu0 0.0
        %9577 = vmatpush1.msra.mxu0 0.0
        %9578 = vmatprep.subr.mxu0 0.0
        %9579 = vmatpush1.msra.mxu0 0.0
        %9580 = vmatprep.subr.mxu0 0.0
        %9581 = vmatpush1.msra.mxu0 0.0
        %9582 = vmatprep.subr.mxu0 0.0
        %9583 = vmatpush1.msra.mxu0 0.0
        %9584 = vmatprep.subr.mxu0 0.0
        %9585 = vmatpush1.msra.mxu0 0.0
        %9586 = vmatprep.subr.mxu0 0.0
        %9587 = vmatpush1.msra.mxu0 0.0
        %9588 = vmatprep.mubr.f32.mxu0 0.0
        %9589 = vmatmul.mubr.f32.gmra.mrb[0].mxu0 %v9515
        %v9590 = vpop.f32.mrb[0].mxu0
        %v9591 = vadd.f32 %v9506, %v9590
        %v9592 = vpop.f32.mrb[0].mxu0
        %9593 = vmatprep.mubr.f32.mxu0 0.0
        %9594 = vmatmul.mubr.f32.gmra.mrb[0].mxu0 %v9518
        %v9595 = vpop.f32.mrb[0].mxu0
        %v9596 = vadd.f32 %v9511, %v9595
        %v9597 = vpop.f32.mrb[0].mxu0
        %9598 = vdwg.mxu0
        %vm9599 = vcmask 179200
        %9600 = vst.msk [vmem:[%s65] sm:$0xff] %vm9599, %v9591
        %vm9601 = vcmask 177152
        %9602 = vst.msk [vmem:[%s65 + $0x8] sm:$0x3f] %vm9601, %v9596
        %v9603 = vld [vmem:[%s57] sm:$0xff]
        %v9604 = vld [vmem:[%s57 + $0x8] sm:$0xff]
        %v9605 = vld [vmem:[%s57 + $0x10] sm:$0x1f]
        %v9606 = vld [vmem:[%s59] sm:$0xff]
        %v9607 = vld [vmem:[%s59 + $0x8] sm:$0xff]
        %v9608 = vld [vmem:[%s59 + $0x10] sm:$0x1f]
        %9610 = vset.pattern.permute.xlu0 0
        %9611 = vperm.xlu0 %9610, %v9606
        %v9612 = vpop.permute.xlu0 %9611
        %9615 = vset.pattern.permute.xlu0 0
        %9616 = vperm.xlu0 %9615, %v9607
        %v9617 = vpop.permute.xlu0 %9616
        %9620 = vset.pattern.permute.xlu0 0
        %9621 = vperm.xlu0 %9620, %v9608
        %v9622 = vpop.permute.xlu0 %9621
        %v9627 = vrot.slane %v9364, 4
        %v9628 = vrot.slane %v9369, 4
        %v9629 = vsel %vm2826, %v9627, %v9628
        %v9630 = vrot.slane %v9374, 4
        %v9631 = vsel %vm2826, %v9628, %v9630
        %v9632 = vrot.slane %v9379, 4
        %v9633 = vsel %vm2826, %v9630, %v9632
        %v9638 = vsel %vm9403, %v9603, 0
        %v9641 = vsel %vm9403, %v9604, 0
        %v9644 = vsel %vm9403, %v9605, 0
        %v9646 = vsel %vm2826, %v9632, 0
        %9648 = vmatprep.subr.mxu0 0.0
        %9649 = vmatpush1.msra.mxu0 %v9629
        %9650 = vmatprep.subr.mxu0 0.0
        %9651 = vmatpush1.msra.mxu0 %v9631
        %9652 = vmatprep.subr.mxu0 0.0
        %9653 = vmatpush1.msra.mxu0 %v9633
        %9654 = vmatprep.subr.mxu0 0.0
        %9655 = vmatpush1.msra.mxu0 %v9646
        %9656 = vmatprep.subr.mxu0 0.0
        %9657 = vmatpush1.msra.mxu0 0.0
        %9658 = vmatprep.subr.mxu0 0.0
        %9659 = vmatpush1.msra.mxu0 0.0
        %9660 = vmatprep.subr.mxu0 0.0
        %9661 = vmatpush1.msra.mxu0 0.0
        %9662 = vmatprep.subr.mxu0 0.0
        %9663 = vmatpush1.msra.mxu0 0.0
        %9664 = vmatprep.subr.mxu0 0.0
        %9665 = vmatpush1.msra.mxu0 0.0
        %9666 = vmatprep.subr.mxu0 0.0
        %9667 = vmatpush1.msra.mxu0 0.0
        %9668 = vmatprep.subr.mxu0 0.0
        %9669 = vmatpush1.msra.mxu0 0.0
        %9670 = vmatprep.subr.mxu0 0.0
        %9671 = vmatpush1.msra.mxu0 0.0
        %9672 = vmatprep.subr.mxu0 0.0
        %9673 = vmatpush1.msra.mxu0 0.0
        %9674 = vmatprep.subr.mxu0 0.0
        %9675 = vmatpush1.msra.mxu0 0.0
        %9676 = vmatprep.subr.mxu0 0.0
        %9677 = vmatpush1.msra.mxu0 0.0
        %9678 = vmatprep.subr.mxu0 0.0
        %9679 = vmatpush1.msra.mxu0 0.0
        %9680 = vmatprep.subr.mxu0 0.0
        %9681 = vmatpush1.msra.mxu0 0.0
        %9682 = vmatprep.subr.mxu0 0.0
        %9683 = vmatpush1.msra.mxu0 0.0
        %9684 = vmatprep.subr.mxu0 0.0
        %9685 = vmatpush1.msra.mxu0 0.0
        %9686 = vmatprep.subr.mxu0 0.0
        %9687 = vmatpush1.msra.mxu0 0.0
        %9688 = vmatprep.subr.mxu0 0.0
        %9689 = vmatpush1.msra.mxu0 0.0
        %9690 = vmatprep.subr.mxu0 0.0
        %9691 = vmatpush1.msra.mxu0 0.0
        %9692 = vmatprep.subr.mxu0 0.0
        %9693 = vmatpush1.msra.mxu0 0.0
        %9694 = vmatprep.subr.mxu0 0.0
        %9695 = vmatpush1.msra.mxu0 0.0
        %9696 = vmatprep.subr.mxu0 0.0
        %9697 = vmatpush1.msra.mxu0 0.0
        %9698 = vmatprep.subr.mxu0 0.0
        %9699 = vmatpush1.msra.mxu0 0.0
        %9700 = vmatprep.subr.mxu0 0.0
        %9701 = vmatpush1.msra.mxu0 0.0
        %9702 = vmatprep.subr.mxu0 0.0
        %9703 = vmatpush1.msra.mxu0 0.0
        %9704 = vmatprep.subr.mxu0 0.0
        %9705 = vmatpush1.msra.mxu0 0.0
        %9706 = vmatprep.subr.mxu0 0.0
        %9707 = vmatpush1.msra.mxu0 0.0
        %9708 = vmatprep.subr.mxu0 0.0
        %9709 = vmatpush1.msra.mxu0 0.0
        %9710 = vmatprep.subr.mxu0 0.0
        %9711 = vmatpush1.msra.mxu0 0.0
        %9712 = vmatprep.mubr.f32.mxu0 0.0
        %9713 = vmatmul.mubr.f32.gmra.mrb[0].mxu0 %v9638
        %v9714 = vpop.f32.mrb[0].mxu0
        %v9715 = vadd.f32 %v9612, %v9714
        %v9716 = vpop.f32.mrb[0].mxu0
        %9717 = vmatprep.mubr.f32.mxu0 0.0
        %9718 = vmatmul.mubr.f32.gmra.mrb[0].mxu0 %v9641
        %v9719 = vpop.f32.mrb[0].mxu0
        %v9720 = vadd.f32 %v9617, %v9719
        %v9721 = vpop.f32.mrb[0].mxu0
        %9722 = vmatprep.mubr.f32.mxu0 0.0
        %9723 = vmatmul.mubr.f32.gmra.mrb[0].mxu0 %v9644
        %v9724 = vpop.f32.mrb[0].mxu0
        %v9725 = vadd.f32 %v9622, %v9724
        %v9726 = vpop.f32.mrb[0].mxu0
        %9727 = vdwg.mxu0
        %v9728 = vmax.f32 %v9715, 0.0
        %v9729 = vmax.f32 %v9720, 0.0
        %v9730 = vmax.f32 %v9725, 0.0
        %v9731 = vld [vmem:[%s61] sm:$0xff]
        %v9732 = vld [vmem:[%s61 + $0x8] sm:$0x3f]
        %v9733 = vld [vmem:[%s63] sm:$0xff]
        %v9734 = vld [vmem:[%s63 + $0x8] sm:$0x3f]
        %9736 = vset.pattern.permute.xlu0 0
        %9737 = vperm.xlu0 %9736, %v9733
        %v9738 = vpop.permute.xlu0 %9737
        %9741 = vset.pattern.permute.xlu0 0
        %9742 = vperm.xlu0 %9741, %v9734
        %v9743 = vpop.permute.xlu0 %9742
        %v9746 = vsel %vm9513, %v9731, 0
        %v9749 = vsel %vm9513, %v9732, 0
        %v9752 = vsel %vm9520, %v9730, 0
        %9754 = vmatprep.subr.mxu0 0.0
        %9755 = vmatpush1.msra.mxu0 %v9728
        %9756 = vmatprep.subr.mxu0 0.0
        %9757 = vmatpush1.msra.mxu0 %v9729
        %9758 = vmatprep.subr.mxu0 0.0
        %9759 = vmatpush1.msra.mxu0 %v9752
        %9760 = vmatprep.subr.mxu0 0.0
        %9761 = vmatpush1.msra.mxu0 0.0
        %9762 = vmatprep.subr.mxu0 0.0
        %9763 = vmatpush1.msra.mxu0 0.0
        %9764 = vmatprep.subr.mxu0 0.0
        %9765 = vmatpush1.msra.mxu0 0.0
        %9766 = vmatprep.subr.mxu0 0.0
        %9767 = vmatpush1.msra.mxu0 0.0
        %9768 = vmatprep.subr.mxu0 0.0
        %9769 = vmatpush1.msra.mxu0 0.0
        %9770 = vmatprep.subr.mxu0 0.0
        %9771 = vmatpush1.msra.mxu0 0.0
        %9772 = vmatprep.subr.mxu0 0.0
        %9773 = vmatpush1.msra.mxu0 0.0
        %9774 = vmatprep.subr.mxu0 0.0
        %9775 = vmatpush1.msra.mxu0 0.0
        %9776 = vmatprep.subr.mxu0 0.0
        %9777 = vmatpush1.msra.mxu0 0.0
        %9778 = vmatprep.subr.mxu0 0.0
        %9779 = vmatpush1.msra.mxu0 0.0
        %9780 = vmatprep.subr.mxu0 0.0
        %9781 = vmatpush1.msra.mxu0 0.0
        %9782 = vmatprep.subr.mxu0 0.0
        %9783 = vmatpush1.msra.mxu0 0.0
        %9784 = vmatprep.subr.mxu0 0.0
        %9785 = vmatpush1.msra.mxu0 0.0
        %9786 = vmatprep.subr.mxu0 0.0
        %9787 = vmatpush1.msra.mxu0 0.0
        %9788 = vmatprep.subr.mxu0 0.0
        %9789 = vmatpush1.msra.mxu0 0.0
        %9790 = vmatprep.subr.mxu0 0.0
        %9791 = vmatpush1.msra.mxu0 0.0
        %9792 = vmatprep.subr.mxu0 0.0
        %9793 = vmatpush1.msra.mxu0 0.0
        %9794 = vmatprep.subr.mxu0 0.0
        %9795 = vmatpush1.msra.mxu0 0.0
        %9796 = vmatprep.subr.mxu0 0.0
        %9797 = vmatpush1.msra.mxu0 0.0
        %9798 = vmatprep.subr.mxu0 0.0
        %9799 = vmatpush1.msra.mxu0 0.0
        %9800 = vmatprep.subr.mxu0 0.0
        %9801 = vmatpush1.msra.mxu0 0.0
        %9802 = vmatprep.subr.mxu0 0.0
        %9803 = vmatpush1.msra.mxu0 0.0
        %9804 = vmatprep.subr.mxu0 0.0
        %9805 = vmatpush1.msra.mxu0 0.0
        %9806 = vmatprep.subr.mxu0 0.0
        %9807 = vmatpush1.msra.mxu0 0.0
        %9808 = vmatprep.subr.mxu0 0.0
        %9809 = vmatpush1.msra.mxu0 0.0
        %9810 = vmatprep.subr.mxu0 0.0
        %9811 = vmatpush1.msra.mxu0 0.0
        %9812 = vmatprep.subr.mxu0 0.0
        %9813 = vmatpush1.msra.mxu0 0.0
        %9814 = vmatprep.subr.mxu0 0.0
        %9815 = vmatpush1.msra.mxu0 0.0
        %9816 = vmatprep.subr.mxu0 0.0
        %9817 = vmatpush1.msra.mxu0 0.0
        %9818 = vmatprep.mubr.f32.mxu0 0.0
        %9819 = vmatmul.mubr.f32.gmra.mrb[0].mxu0 %v9746
        %v9820 = vpop.f32.mrb[0].mxu0
        %v9821 = vadd.f32 %v9738, %v9820
        %v9822 = vpop.f32.mrb[0].mxu0
        %9823 = vmatprep.mubr.f32.mxu0 0.0
        %9824 = vmatmul.mubr.f32.gmra.mrb[0].mxu0 %v9749
        %v9825 = vpop.f32.mrb[0].mxu0
        %v9826 = vadd.f32 %v9743, %v9825
        %v9827 = vpop.f32.mrb[0].mxu0
        %9828 = vdwg.mxu0
        %s9829 = scalar_lea.vmem %s65, 16
        %9830 = vst.msk [vmem:[%s9829] sm:$0xff] %vm9599, %v9821
        %9831 = vst.msk [vmem:[%s9829 + $0x8] sm:$0x3f] %vm9601, %v9826
      $region156: #{tf_forward.1} parent=147 // pred_fallthru
        _
      // Predicated region
      $region157: #{tf_forward.1} parent=147 // pred_check
        %p9832 = pneg %p836
      $region158: #{tf_forward.1} parent=147 // pred_check_branch
        %9834 = sbr.rel (%p9832) target = $region160
      $region159: #{tf_forward.1} parent=147 // pred_region
        _
      $region160: #{tf_forward.1} parent=147 // pred_fallthru
        _
      // Predicated region
      $region161: #{tf_forward.1} parent=147 // pred_check
        %p9835 = pneg %p836
      $region162: #{tf_forward.1} parent=147 // pred_check_branch
        %9837 = sbr.rel (%p9835) target = $region164
      $region163: #{tf_forward.1} parent=147 // pred_region
        _
      $region164: #{tf_forward.1} parent=147 // pred_fallthru
        _
    $region148: #{tf_forward.1} parent=5 // pred_fallthru
      _
    %p9838 = scmp.le.s32.totalorder 2, %s71
    // Predicated region
    $region165: #{tf_forward.1} parent=5 // pred_check
      %p9839 = pneg %p9838
    $region166: #{tf_forward.1} parent=5 // pred_check_branch
      %9841 = sbr.rel (%p9839) target = $region168
    $region167: #{tf_forward.1} parent=5 // pred_region
      %s9842 = ssub.s32 %s71, 2
    $region168: #{tf_forward.1} parent=5 // pred_fallthru
      _
  $region6: #{tf_forward.1} parent=0 // loop_footer
    %s75 = sadd.s32 1, %s71
  $region7: #{tf_forward.1} parent=0 // loop_footer_branch
    %70 = sbr.rel target = $region3
  $region8: #{tf_forward.1} parent=0 // loop_exit
    _

</llo_original>
